<compile_context>
chip_gen: v7x
topology: tpu7x:2x2x1
jax: 0.10.0
libtpu: 0.0.40
codegen_flags: <defaults>
</compile_context>

<pallas_src>
import jax
import jax.numpy as jnp
from jax.experimental import pallas as pl
from jax.experimental.pallas import tpu as pltpu


# -----------------------------------------------------------------------------
# Fused BasicBlock kernel (one image per grid step)
# -----------------------------------------------------------------------------
def _make_basic_block_kernel(H, W, cin, cout, has_projection):
    Wp = W + 2
    P = (H + 2) * Wp            # rows of the zero-padded image, flattened row-major
    G = Wp + 1                  # max |flat tap offset| for a 3x3 kernel
    Mv = P - 2 * G              # rows for which all 9 taps stay in bounds
    offs = [(dy - 1) * Wp + (dx - 1) for dy in range(3) for dx in range(3)]

    def body(x_ref,             # (P, cin)   f32  padded input image (flat rows)
             w1_ref,            # (9, cin, cout)  bf16 conv1 taps
             w2_ref,            # (9, cout, cout) bf16 conv2 taps
             ws_ref,            # (cin, cout)     bf16 shortcut 1x1 (projection only)
             sb_ref,            # (6, cout)  f32  [s1, b1, s2, b2, ss, bs]
             mask_ref,          # (Mv, 1)    f32  interior-row mask
             o_ref,             # (P, cout)  f32  output on the padded grid
             h1_ref,            # scratch (P, cout)  f32  re-padded hidden act
             acc_ref):          # scratch (Mv, cout) f32  MXU accumulator
        # Zero only the 2*G halo rows of the hidden-activation scratch (tiny);
        # the per-image border rows inside [G, P-G) are zeroed via `mask` below,
        # so h1_ref is a correctly zero-padded conv2 input.  Done unconditionally
        # so each TensorCore's private scratch is initialized even when the batch
        # grid is sharded across cores (v7x megacore).
        zero_halo = jnp.zeros((G, cout), jnp.float32)
        h1_ref[0:G, :] = zero_halo
        h1_ref[P - G:P, :] = zero_halo

        # ---- conv1: 9 shifted (Mv, cin) @ (cin, cout) MXU matmuls ----
        acc_ref[...] = jnp.zeros_like(acc_ref)
        for k in range(9):
            patch = x_ref[pl.ds(G + offs[k], Mv), :].astype(jnp.bfloat16)
            acc_ref[...] += jnp.dot(patch, w1_ref[k],
                                    preferred_element_type=jnp.float32)

        # BN1 + ReLU (f32 epilogue); zero per-image borders; re-pad into scratch.
        h1 = jnp.maximum(acc_ref[...] * sb_ref[0:1, :] + sb_ref[1:2, :], 0.0)
        h1_ref[pl.ds(G, Mv), :] = h1 * mask_ref[...]

        # ---- conv2: 9 shifted (Mv, cout) @ (cout, cout) MXU matmuls ----
        acc_ref[...] = jnp.zeros_like(acc_ref)
        for k in range(9):
            patch = h1_ref[pl.ds(G + offs[k], Mv), :].astype(jnp.bfloat16)
            acc_ref[...] += jnp.dot(patch, w2_ref[k],
                                    preferred_element_type=jnp.float32)

        main = acc_ref[...] * sb_ref[2:3, :] + sb_ref[3:4, :]

        # ---- shortcut + residual add + ReLU (f32) ----
        if has_projection:
            xs = x_ref[pl.ds(G, Mv), :].astype(jnp.bfloat16)
            sc = jnp.dot(xs, ws_ref[...], preferred_element_type=jnp.float32)
            sc = sc * sb_ref[4:5, :] + sb_ref[5:6, :]
        else:
            sc = x_ref[pl.ds(G, Mv), :]          # exact f32 identity residual

        o_ref[pl.ds(G, Mv), :] = jnp.maximum(main + sc, 0.0).astype(o_ref.dtype)

    if has_projection:
        def kernel(x_ref, w1_ref, w2_ref, ws_ref, sb_ref, mask_ref,
                   o_ref, h1_ref, acc_ref):
            body(x_ref, w1_ref, w2_ref, ws_ref, sb_ref, mask_ref,
                 o_ref, h1_ref, acc_ref)
    else:
        def kernel(x_ref, w1_ref, w2_ref, sb_ref, mask_ref,
                   o_ref, h1_ref, acc_ref):
            body(x_ref, w1_ref, w2_ref, None, sb_ref, mask_ref,
                 o_ref, h1_ref, acc_ref)
    return kernel


def _basic_block_pallas(xp, w1, w2, ws, sb, *, H, W, cin, cout, has_projection):
    N, P, _ = xp.shape
    Wp = W + 2
    G = Wp + 1
    Mv = P - 2 * G

    # Interior-row mask for padded-grid rows r in [G, P-G): 1 where the row is a
    # real output pixel (1 <= y <= H, 1 <= x <= W), 0 on padded-border rows.
    r = jnp.arange(G, P - G)
    yy, xx = r // Wp, r % Wp
    mask = ((yy >= 1) & (yy <= H) & (xx >= 1) & (xx <= W)
            ).astype(jnp.float32)[:, None]

    kernel = _make_basic_block_kernel(H, W, cin, cout, has_projection)

    in_specs = [
        pl.BlockSpec((None, P, cin), lambda n: (n, 0, 0)),   # x (per image)
        pl.BlockSpec((9, cin, cout), lambda n: (0, 0, 0)),   # conv1 taps
        pl.BlockSpec((9, cout, cout), lambda n: (0, 0, 0)),  # conv2 taps
    ]
    operands = [xp, w1, w2]
    if has_projection:
        in_specs.append(pl.BlockSpec((cin, cout), lambda n: (0, 0)))  # shortcut 1x1
        operands.append(ws)
    in_specs += [
        pl.BlockSpec((6, cout), lambda n: (0, 0)),           # packed BN scale/shift
        pl.BlockSpec((Mv, 1), lambda n: (0, 0)),             # interior-row mask
    ]
    operands += [sb, mask]

    flops = 2 * N * Mv * 9 * (cin * cout + cout * cout)
    if has_projection:
        flops += 2 * N * Mv * cin * cout
    bytes_accessed = (4 * N * P * (cin + cout)            # activations in/out
                      + 2 * 9 * cout * (cin + cout)       # bf16 conv weights
                      + 2 * cin * cout + 4 * 6 * cout + 4 * Mv)

    return pl.pallas_call(
        kernel,
        out_shape=jax.ShapeDtypeStruct((N, P, cout), jnp.float32),
        grid_spec=pltpu.PrefetchScalarGridSpec(
            num_scalar_prefetch=0,
            grid=(N,),
            in_specs=in_specs,
            out_specs=pl.BlockSpec((None, P, cout), lambda n: (n, 0, 0)),
            scratch_shapes=[pltpu.VMEM((P, cout), jnp.float32),
                            pltpu.VMEM((Mv, cout), jnp.float32)],
        ),
        compiler_params=pltpu.CompilerParams(
            dimension_semantics=("parallel",),
        ),
        cost_estimate=pl.CostEstimate(flops=int(flops), transcendentals=0,
                                      bytes_accessed=int(bytes_accessed)),
    )(*operands)


# -----------------------------------------------------------------------------
# Host-side parameter folding / layout prep
# -----------------------------------------------------------------------------
def _fold_bn(gamma, beta, mean, var, eps):
    scale = gamma / jnp.sqrt(var + eps)
    shift = beta - mean * scale
    return scale, shift


def _conv3x3_taps(w):
    # torch OIHW (cout, cin, 3, 3) -> (9, cin, cout) bf16, tap k = dy*3 + dx
    cout, cin = w.shape[0], w.shape[1]
    return jnp.transpose(w, (2, 3, 1, 0)).reshape(9, cin, cout).astype(jnp.bfloat16)


class BasicBlock:
    """JAX/Pallas mirror of the PyTorch BasicBlock (eval-mode BN, stride=1)."""

    expansion = 1

    def __init__(self, in_planes, planes, stride=1, *, params, eps=1e-5):
        if stride != 1:
            # TODO(synk): stride != 1 (spatial downsampling) not lowered.
            raise NotImplementedError("stride != 1 is not supported by this kernel")
        self.in_planes = in_planes
        self.planes = planes
        self.stride = stride
        self.eps = eps
        self.params = params
        self.has_projection = (stride != 1) or (in_planes != self.expansion * planes)

    def forward(self, x_nchw):
        N, C, H, W = x_nchw.shape
        assert C == self.in_planes
        cin, cout = self.in_planes, self.planes
        p = self.params
        P = (H + 2) * (W + 2)

        # NCHW -> NHWC, zero-pad spatial by 1, flatten padded grid to rows
        # (channels land on the 128-lane axis).
        x_nhwc = jnp.transpose(x_nchw.astype(jnp.float32), (0, 2, 3, 1))
        xp = jnp.pad(x_nhwc, ((0, 0), (1, 1), (1, 1), (0, 0))).reshape(N, P, cin)

        w1 = _conv3x3_taps(p["w1"])
        w2 = _conv3x3_taps(p["w2"])
        s1, b1 = _fold_bn(*p["bn1"], self.eps)
        s2, b2 = _fold_bn(*p["bn2"], self.eps)

        if self.has_projection:
            ws = p["ws"][:, :, 0, 0].T.astype(jnp.bfloat16)       # (cin, cout)
            ss, bs = _fold_bn(*p["bns"], self.eps)
        else:
            ws = None
            ss = jnp.ones((cout,), jnp.float32)
            bs = jnp.zeros((cout,), jnp.float32)
        sb = jnp.stack([s1, b1, s2, b2, ss, bs]).astype(jnp.float32)  # (6, cout)

        out = _basic_block_pallas(xp, w1, w2, ws, sb, H=H, W=W, cin=cin,
                                  cout=cout, has_projection=self.has_projection)

        # (N, P, cout) padded grid -> drop borders -> NCHW
        out = out.reshape(N, H + 2, W + 2, cout)[:, 1:H + 1, 1:W + 1, :]
        return jnp.transpose(out, (0, 3, 1, 2))

    __call__ = forward


def init_basic_block_params(key, in_planes, planes, stride=1):
    ks = jax.random.split(key, 15)

    def bn(i, c):
        gamma = 1.0 + 0.1 * jax.random.normal(ks[i], (c,), jnp.float32)
        beta = 0.1 * jax.random.normal(ks[i + 1], (c,), jnp.float32)
        mean = 0.1 * jax.random.normal(ks[i + 2], (c,), jnp.float32)
        var = 0.5 + jax.random.uniform(ks[i + 3], (c,), jnp.float32)
        return (gamma, beta, mean, var)

    params = {
        "w1": 0.2 * jax.random.normal(ks[0], (planes, in_planes, 3, 3), jnp.float32),
        "bn1": bn(1, planes),
        "w2": 0.2 * jax.random.normal(ks[5], (planes, planes, 3, 3), jnp.float32),
        "bn2": bn(6, planes),
    }
    if stride != 1 or in_planes != BasicBlock.expansion * planes:
        params["ws"] = 0.3 * jax.random.normal(
            ks[10], (planes, in_planes, 1, 1), jnp.float32)
        params["bns"] = bn(11, planes)
    return params


# -----------------------------------------------------------------------------
# Pure-JAX reference (for correctness check)
# -----------------------------------------------------------------------------
def basic_block_reference(x, params, has_projection, eps=1e-5):
    hp = jax.lax.Precision.HIGHEST

    def conv(x, w, pad):
        return jax.lax.conv_general_dilated(
            x, w, window_strides=(1, 1),
            padding=((pad, pad), (pad, pad)),
            dimension_numbers=("NCHW", "OIHW", "NCHW"),
            precision=hp)

    def bn(x, stats):
        gamma, beta, mean, var = stats
        s = gamma / jnp.sqrt(var + eps)
        b = beta - mean * s
        return x * s[None, :, None, None] + b[None, :, None, None]

    out = jax.nn.relu(bn(conv(x, params["w1"], 1), params["bn1"]))
    out = bn(conv(out, params["w2"], 1), params["bn2"])
    sc = bn(conv(x, params["ws"], 0), params["bns"]) if has_projection else x
    return jax.nn.relu(out + sc)


if __name__ == "__main__":
    key = jax.random.PRNGKey(0)
    k_x, k_p1, k_p2 = jax.random.split(key, 3)

    # Small shapes consistent with the module: batch=2, channels=4, 16x16.
    x = jax.random.normal(k_x, (2, 4, 16, 16), dtype=jnp.float32)

    # Tolerance covers bf16 MXU operands (f32 accumulation) vs. the exact reference.
    TOL = dict(atol=5e-2, rtol=5e-2)

    # --- identity-shortcut block (in_planes == planes, stride=1) ---
    p1 = init_basic_block_params(k_p1, 4, 4)
    blk1 = BasicBlock(4, 4, stride=1, params=p1)
    y1 = jax.block_until_ready(blk1(x))
    r1 = basic_block_reference(x, p1, has_projection=False)
    assert y1.shape == (2, 4, 16, 16) and y1.dtype == jnp.float32
    assert bool(jnp.allclose(y1, r1, **TOL)), "identity-shortcut BasicBlock mismatch"

    # --- projection-shortcut block (in_planes != planes, 1x1 conv + BN) ---
    p2 = init_basic_block_params(k_p2, 4, 8)
    blk2 = BasicBlock(4, 8, stride=1, params=p2)
    y2 = jax.block_until_ready(blk2(x))
    r2 = basic_block_reference(x, p2, has_projection=True)
    assert y2.shape == (2, 8, 16, 16) and y2.dtype == jnp.float32
    assert bool(jnp.allclose(y2, r2, **TOL)), "projection-shortcut BasicBlock mismatch"

    print("KERNEL_OK")
</pallas_src>

<mosaic_0001>
module attributes {stable_mosaic.version = 11 : i64} {
  func.func @kernel(%arg0: i32, %arg1: memref<1x324x4xf32, #tpu.memory_space<vmem>>, %arg2: memref<9x4x4xbf16, #tpu.memory_space<vmem>>, %arg3: memref<9x4x4xbf16, #tpu.memory_space<vmem>>, %arg4: memref<6x4xf32, #tpu.memory_space<vmem>>, %arg5: memref<286x1xf32, #tpu.memory_space<vmem>>, %arg6: memref<1x324x4xf32, #tpu.memory_space<vmem>>, %arg7: memref<324x4xf32, #tpu.memory_space<vmem>>, %arg8: memref<286x4xf32, #tpu.memory_space<vmem>>) attributes {dimension_semantics = [#tpu.dimension_semantics<parallel>], iteration_bounds = array<i64: 2>, scalar_prefetch = 0 : i64, scratch_operands = 2 : i64, tpu.core_type = #tpu.core_type<tc>, window_params = [{transform_indices = @transform_0, window_bounds = array<i64: 1, 324, 4>}, {pipeline_mode = #tpu.pipeline_mode<synchronous>, transform_indices = @transform_1, window_bounds = array<i64: 9, 4, 4>}, {pipeline_mode = #tpu.pipeline_mode<synchronous>, transform_indices = @transform_2, window_bounds = array<i64: 9, 4, 4>}, {pipeline_mode = #tpu.pipeline_mode<synchronous>, transform_indices = @transform_3, window_bounds = array<i64: 6, 4>}, {pipeline_mode = #tpu.pipeline_mode<synchronous>, transform_indices = @transform_4, window_bounds = array<i64: 286, 1>}, {transform_indices = @transform_5, window_bounds = array<i64: 1, 324, 4>}]} {
    %cst = arith.constant 0.000000e+00 : f32
    %0 = vector.broadcast %cst : f32 to vector<19x4xf32>
    %c0 = arith.constant 0 : index
    %c0_0 = arith.constant 0 : index
    %1 = vector.load %arg7[%c0, %c0_0] : memref<324x4xf32, #tpu.memory_space<vmem>>, vector<19x4xf32>
    tpu.vector_store %arg7[%c0, %c0_0], %0 {strides = array<i32>} : memref<324x4xf32, #tpu.memory_space<vmem>>, vector<19x4xf32>,
    %c305 = arith.constant 305 : index
    %c0_1 = arith.constant 0 : index
    %2 = vector.load %arg7[%c305, %c0_1] : memref<324x4xf32, #tpu.memory_space<vmem>>, vector<19x4xf32>
    tpu.vector_store %arg7[%c305, %c0_1], %0 {strides = array<i32>} : memref<324x4xf32, #tpu.memory_space<vmem>>, vector<19x4xf32>,
    %cst_2 = arith.constant 0.000000e+00 : f32
    %3 = vector.broadcast %cst_2 : f32 to vector<286x4xf32>
    %c0_3 = arith.constant 0 : index
    %c0_4 = arith.constant 0 : index
    %4 = vector.load %arg8[%c0_3, %c0_4] : memref<286x4xf32, #tpu.memory_space<vmem>>, vector<286x4xf32>
    tpu.vector_store %arg8[%c0_3, %c0_4], %3 {strides = array<i32>} : memref<286x4xf32, #tpu.memory_space<vmem>>, vector<286x4xf32>,
    %c0_5 = arith.constant 0 : index
    %c0_6 = arith.constant 0 : index
    %c0_7 = arith.constant 0 : index
    %5 = vector.load %arg1[%c0_5, %c0_6, %c0_7] : memref<1x324x4xf32, #tpu.memory_space<vmem>>, vector<1x286x4xf32>
    %6 = vector.shape_cast %5 : vector<1x286x4xf32> to vector<286x4xf32>
    %7 = arith.truncf %6 : vector<286x4xf32> to vector<286x4xbf16>
    %c0_8 = arith.constant 0 : index
    %c0_9 = arith.constant 0 : index
    %8 = vector.load %arg8[%c0_8, %c0_9] : memref<286x4xf32, #tpu.memory_space<vmem>>, vector<286x4xf32>
    %c0_10 = arith.constant 0 : index
    %c0_11 = arith.constant 0 : index
    %c0_12 = arith.constant 0 : index
    %9 = vector.load %arg2[%c0_10, %c0_11, %c0_12] : memref<9x4x4xbf16, #tpu.memory_space<vmem>>, vector<1x4x4xbf16>
    %10 = vector.shape_cast %9 : vector<1x4x4xbf16> to vector<4x4xbf16>
    %cst_13 = arith.constant dense<0.000000e+00> : vector<286x4xf32>
    %11 = tpu.matmul %7, %10, %cst_13 {dimension_numbers = #tpu.dot_dimension_numbers<[1], [0], [0], [1], [0, 0, 1, 1], [], []>} : vector<286x4xbf16>, vector<4x4xbf16>, vector<286x4xf32> -> vector<286x4xf32>
    %12 = arith.addf %8, %11 : vector<286x4xf32>
    %c0_14 = arith.constant 0 : index
    %c0_15 = arith.constant 0 : index
    %13 = vector.load %arg8[%c0_14, %c0_15] : memref<286x4xf32, #tpu.memory_space<vmem>>, vector<286x4xf32>
    tpu.vector_store %arg8[%c0_14, %c0_15], %12 {strides = array<i32>} : memref<286x4xf32, #tpu.memory_space<vmem>>, vector<286x4xf32>,
    %c0_16 = arith.constant 0 : index
    %c1 = arith.constant 1 : index
    %c0_17 = arith.constant 0 : index
    %14 = vector.load %arg1[%c0_16, %c1, %c0_17] : memref<1x324x4xf32, #tpu.memory_space<vmem>>, vector<1x286x4xf32>
    %15 = vector.shape_cast %14 : vector<1x286x4xf32> to vector<286x4xf32>
    %16 = arith.truncf %15 : vector<286x4xf32> to vector<286x4xbf16>
    %c0_18 = arith.constant 0 : index
    %c0_19 = arith.constant 0 : index
    %17 = vector.load %arg8[%c0_18, %c0_19] : memref<286x4xf32, #tpu.memory_space<vmem>>, vector<286x4xf32>
    %c1_20 = arith.constant 1 : index
    %c0_21 = arith.constant 0 : index
    %c0_22 = arith.constant 0 : index
    %18 = vector.load %arg2[%c1_20, %c0_21, %c0_22] : memref<9x4x4xbf16, #tpu.memory_space<vmem>>, vector<1x4x4xbf16>
    %19 = vector.shape_cast %18 : vector<1x4x4xbf16> to vector<4x4xbf16>
    %cst_23 = arith.constant dense<0.000000e+00> : vector<286x4xf32>
    %20 = tpu.matmul %16, %19, %cst_23 {dimension_numbers = #tpu.dot_dimension_numbers<[1], [0], [0], [1], [0, 0, 1, 1], [], []>} : vector<286x4xbf16>, vector<4x4xbf16>, vector<286x4xf32> -> vector<286x4xf32>
    %21 = arith.addf %17, %20 : vector<286x4xf32>
    %c0_24 = arith.constant 0 : index
    %c0_25 = arith.constant 0 : index
    %22 = vector.load %arg8[%c0_24, %c0_25] : memref<286x4xf32, #tpu.memory_space<vmem>>, vector<286x4xf32>
    tpu.vector_store %arg8[%c0_24, %c0_25], %21 {strides = array<i32>} : memref<286x4xf32, #tpu.memory_space<vmem>>, vector<286x4xf32>,
    %c0_26 = arith.constant 0 : index
    %c2 = arith.constant 2 : index
    %c0_27 = arith.constant 0 : index
    %23 = vector.load %arg1[%c0_26, %c2, %c0_27] : memref<1x324x4xf32, #tpu.memory_space<vmem>>, vector<1x286x4xf32>
    %24 = vector.shape_cast %23 : vector<1x286x4xf32> to vector<286x4xf32>
    %25 = arith.truncf %24 : vector<286x4xf32> to vector<286x4xbf16>
    %c0_28 = arith.constant 0 : index
    %c0_29 = arith.constant 0 : index
    %26 = vector.load %arg8[%c0_28, %c0_29] : memref<286x4xf32, #tpu.memory_space<vmem>>, vector<286x4xf32>
    %c2_30 = arith.constant 2 : index
    %c0_31 = arith.constant 0 : index
    %c0_32 = arith.constant 0 : index
    %27 = vector.load %arg2[%c2_30, %c0_31, %c0_32] : memref<9x4x4xbf16, #tpu.memory_space<vmem>>, vector<1x4x4xbf16>
    %28 = vector.shape_cast %27 : vector<1x4x4xbf16> to vector<4x4xbf16>
    %cst_33 = arith.constant dense<0.000000e+00> : vector<286x4xf32>
    %29 = tpu.matmul %25, %28, %cst_33 {dimension_numbers = #tpu.dot_dimension_numbers<[1], [0], [0], [1], [0, 0, 1, 1], [], []>} : vector<286x4xbf16>, vector<4x4xbf16>, vector<286x4xf32> -> vector<286x4xf32>
    %30 = arith.addf %26, %29 : vector<286x4xf32>
    %c0_34 = arith.constant 0 : index
    %c0_35 = arith.constant 0 : index
    %31 = vector.load %arg8[%c0_34, %c0_35] : memref<286x4xf32, #tpu.memory_space<vmem>>, vector<286x4xf32>
    tpu.vector_store %arg8[%c0_34, %c0_35], %30 {strides = array<i32>} : memref<286x4xf32, #tpu.memory_space<vmem>>, vector<286x4xf32>,
    %c0_36 = arith.constant 0 : index
    %c18 = arith.constant 18 : index
    %c0_37 = arith.constant 0 : index
    %32 = vector.load %arg1[%c0_36, %c18, %c0_37] : memref<1x324x4xf32, #tpu.memory_space<vmem>>, vector<1x286x4xf32>
    %33 = vector.shape_cast %32 : vector<1x286x4xf32> to vector<286x4xf32>
    %34 = arith.truncf %33 : vector<286x4xf32> to vector<286x4xbf16>
    %c0_38 = arith.constant 0 : index
    %c0_39 = arith.constant 0 : index
    %35 = vector.load %arg8[%c0_38, %c0_39] : memref<286x4xf32, #tpu.memory_space<vmem>>, vector<286x4xf32>
    %c3 = arith.constant 3 : index
    %c0_40 = arith.constant 0 : index
    %c0_41 = arith.constant 0 : index
    %36 = vector.load %arg2[%c3, %c0_40, %c0_41] : memref<9x4x4xbf16, #tpu.memory_space<vmem>>, vector<1x4x4xbf16>
    %37 = vector.shape_cast %36 : vector<1x4x4xbf16> to vector<4x4xbf16>
    %cst_42 = arith.constant dense<0.000000e+00> : vector<286x4xf32>
    %38 = tpu.matmul %34, %37, %cst_42 {dimension_numbers = #tpu.dot_dimension_numbers<[1], [0], [0], [1], [0, 0, 1, 1], [], []>} : vector<286x4xbf16>, vector<4x4xbf16>, vector<286x4xf32> -> vector<286x4xf32>
    %39 = arith.addf %35, %38 : vector<286x4xf32>
    %c0_43 = arith.constant 0 : index
    %c0_44 = arith.constant 0 : index
    %40 = vector.load %arg8[%c0_43, %c0_44] : memref<286x4xf32, #tpu.memory_space<vmem>>, vector<286x4xf32>
    tpu.vector_store %arg8[%c0_43, %c0_44], %39 {strides = array<i32>} : memref<286x4xf32, #tpu.memory_space<vmem>>, vector<286x4xf32>,
    %c0_45 = arith.constant 0 : index
    %c19 = arith.constant 19 : index
    %c0_46 = arith.constant 0 : index
    %41 = vector.load %arg1[%c0_45, %c19, %c0_46] : memref<1x324x4xf32, #tpu.memory_space<vmem>>, vector<1x286x4xf32>
    %42 = vector.shape_cast %41 : vector<1x286x4xf32> to vector<286x4xf32>
    %43 = arith.truncf %42 : vector<286x4xf32> to vector<286x4xbf16>
    %c0_47 = arith.constant 0 : index
    %c0_48 = arith.constant 0 : index
    %44 = vector.load %arg8[%c0_47, %c0_48] : memref<286x4xf32, #tpu.memory_space<vmem>>, vector<286x4xf32>
    %c4 = arith.constant 4 : index
    %c0_49 = arith.constant 0 : index
    %c0_50 = arith.constant 0 : index
    %45 = vector.load %arg2[%c4, %c0_49, %c0_50] : memref<9x4x4xbf16, #tpu.memory_space<vmem>>, vector<1x4x4xbf16>
    %46 = vector.shape_cast %45 : vector<1x4x4xbf16> to vector<4x4xbf16>
    %cst_51 = arith.constant dense<0.000000e+00> : vector<286x4xf32>
    %47 = tpu.matmul %43, %46, %cst_51 {dimension_numbers = #tpu.dot_dimension_numbers<[1], [0], [0], [1], [0, 0, 1, 1], [], []>} : vector<286x4xbf16>, vector<4x4xbf16>, vector<286x4xf32> -> vector<286x4xf32>
    %48 = arith.addf %44, %47 : vector<286x4xf32>
    %c0_52 = arith.constant 0 : index
    %c0_53 = arith.constant 0 : index
    %49 = vector.load %arg8[%c0_52, %c0_53] : memref<286x4xf32, #tpu.memory_space<vmem>>, vector<286x4xf32>
    tpu.vector_store %arg8[%c0_52, %c0_53], %48 {strides = array<i32>} : memref<286x4xf32, #tpu.memory_space<vmem>>, vector<286x4xf32>,
    %c0_54 = arith.constant 0 : index
    %c20 = arith.constant 20 : index
    %c0_55 = arith.constant 0 : index
    %50 = vector.load %arg1[%c0_54, %c20, %c0_55] : memref<1x324x4xf32, #tpu.memory_space<vmem>>, vector<1x286x4xf32>
    %51 = vector.shape_cast %50 : vector<1x286x4xf32> to vector<286x4xf32>
    %52 = arith.truncf %51 : vector<286x4xf32> to vector<286x4xbf16>
    %c0_56 = arith.constant 0 : index
    %c0_57 = arith.constant 0 : index
    %53 = vector.load %arg8[%c0_56, %c0_57] : memref<286x4xf32, #tpu.memory_space<vmem>>, vector<286x4xf32>
    %c5 = arith.constant 5 : index
    %c0_58 = arith.constant 0 : index
    %c0_59 = arith.constant 0 : index
    %54 = vector.load %arg2[%c5, %c0_58, %c0_59] : memref<9x4x4xbf16, #tpu.memory_space<vmem>>, vector<1x4x4xbf16>
    %55 = vector.shape_cast %54 : vector<1x4x4xbf16> to vector<4x4xbf16>
    %cst_60 = arith.constant dense<0.000000e+00> : vector<286x4xf32>
    %56 = tpu.matmul %52, %55, %cst_60 {dimension_numbers = #tpu.dot_dimension_numbers<[1], [0], [0], [1], [0, 0, 1, 1], [], []>} : vector<286x4xbf16>, vector<4x4xbf16>, vector<286x4xf32> -> vector<286x4xf32>
    %57 = arith.addf %53, %56 : vector<286x4xf32>
    %c0_61 = arith.constant 0 : index
    %c0_62 = arith.constant 0 : index
    %58 = vector.load %arg8[%c0_61, %c0_62] : memref<286x4xf32, #tpu.memory_space<vmem>>, vector<286x4xf32>
    tpu.vector_store %arg8[%c0_61, %c0_62], %57 {strides = array<i32>} : memref<286x4xf32, #tpu.memory_space<vmem>>, vector<286x4xf32>,
    %c0_63 = arith.constant 0 : index
    %c36 = arith.constant 36 : index
    %c0_64 = arith.constant 0 : index
    %59 = vector.load %arg1[%c0_63, %c36, %c0_64] : memref<1x324x4xf32, #tpu.memory_space<vmem>>, vector<1x286x4xf32>
    %60 = vector.shape_cast %59 : vector<1x286x4xf32> to vector<286x4xf32>
    %61 = arith.truncf %60 : vector<286x4xf32> to vector<286x4xbf16>
    %c0_65 = arith.constant 0 : index
    %c0_66 = arith.constant 0 : index
    %62 = vector.load %arg8[%c0_65, %c0_66] : memref<286x4xf32, #tpu.memory_space<vmem>>, vector<286x4xf32>
    %c6 = arith.constant 6 : index
    %c0_67 = arith.constant 0 : index
    %c0_68 = arith.constant 0 : index
    %63 = vector.load %arg2[%c6, %c0_67, %c0_68] : memref<9x4x4xbf16, #tpu.memory_space<vmem>>, vector<1x4x4xbf16>
    %64 = vector.shape_cast %63 : vector<1x4x4xbf16> to vector<4x4xbf16>
    %cst_69 = arith.constant dense<0.000000e+00> : vector<286x4xf32>
    %65 = tpu.matmul %61, %64, %cst_69 {dimension_numbers = #tpu.dot_dimension_numbers<[1], [0], [0], [1], [0, 0, 1, 1], [], []>} : vector<286x4xbf16>, vector<4x4xbf16>, vector<286x4xf32> -> vector<286x4xf32>
    %66 = arith.addf %62, %65 : vector<286x4xf32>
    %c0_70 = arith.constant 0 : index
    %c0_71 = arith.constant 0 : index
    %67 = vector.load %arg8[%c0_70, %c0_71] : memref<286x4xf32, #tpu.memory_space<vmem>>, vector<286x4xf32>
    tpu.vector_store %arg8[%c0_70, %c0_71], %66 {strides = array<i32>} : memref<286x4xf32, #tpu.memory_space<vmem>>, vector<286x4xf32>,
    %c0_72 = arith.constant 0 : index
    %c37 = arith.constant 37 : index
    %c0_73 = arith.constant 0 : index
    %68 = vector.load %arg1[%c0_72, %c37, %c0_73] : memref<1x324x4xf32, #tpu.memory_space<vmem>>, vector<1x286x4xf32>
    %69 = vector.shape_cast %68 : vector<1x286x4xf32> to vector<286x4xf32>
    %70 = arith.truncf %69 : vector<286x4xf32> to vector<286x4xbf16>
    %c0_74 = arith.constant 0 : index
    %c0_75 = arith.constant 0 : index
    %71 = vector.load %arg8[%c0_74, %c0_75] : memref<286x4xf32, #tpu.memory_space<vmem>>, vector<286x4xf32>
    %c7 = arith.constant 7 : index
    %c0_76 = arith.constant 0 : index
    %c0_77 = arith.constant 0 : index
    %72 = vector.load %arg2[%c7, %c0_76, %c0_77] : memref<9x4x4xbf16, #tpu.memory_space<vmem>>, vector<1x4x4xbf16>
    %73 = vector.shape_cast %72 : vector<1x4x4xbf16> to vector<4x4xbf16>
    %cst_78 = arith.constant dense<0.000000e+00> : vector<286x4xf32>
    %74 = tpu.matmul %70, %73, %cst_78 {dimension_numbers = #tpu.dot_dimension_numbers<[1], [0], [0], [1], [0, 0, 1, 1], [], []>} : vector<286x4xbf16>, vector<4x4xbf16>, vector<286x4xf32> -> vector<286x4xf32>
    %75 = arith.addf %71, %74 : vector<286x4xf32>
    %c0_79 = arith.constant 0 : index
    %c0_80 = arith.constant 0 : index
    %76 = vector.load %arg8[%c0_79, %c0_80] : memref<286x4xf32, #tpu.memory_space<vmem>>, vector<286x4xf32>
    tpu.vector_store %arg8[%c0_79, %c0_80], %75 {strides = array<i32>} : memref<286x4xf32, #tpu.memory_space<vmem>>, vector<286x4xf32>,
    %c0_81 = arith.constant 0 : index
    %c38 = arith.constant 38 : index
    %c0_82 = arith.constant 0 : index
    %77 = vector.load %arg1[%c0_81, %c38, %c0_82] : memref<1x324x4xf32, #tpu.memory_space<vmem>>, vector<1x286x4xf32>
    %78 = vector.shape_cast %77 : vector<1x286x4xf32> to vector<286x4xf32>
    %79 = arith.truncf %78 : vector<286x4xf32> to vector<286x4xbf16>
    %c0_83 = arith.constant 0 : index
    %c0_84 = arith.constant 0 : index
    %80 = vector.load %arg8[%c0_83, %c0_84] : memref<286x4xf32, #tpu.memory_space<vmem>>, vector<286x4xf32>
    %c8 = arith.constant 8 : index
    %c0_85 = arith.constant 0 : index
    %c0_86 = arith.constant 0 : index
    %81 = vector.load %arg2[%c8, %c0_85, %c0_86] : memref<9x4x4xbf16, #tpu.memory_space<vmem>>, vector<1x4x4xbf16>
    %82 = vector.shape_cast %81 : vector<1x4x4xbf16> to vector<4x4xbf16>
    %cst_87 = arith.constant dense<0.000000e+00> : vector<286x4xf32>
    %83 = tpu.matmul %79, %82, %cst_87 {dimension_numbers = #tpu.dot_dimension_numbers<[1], [0], [0], [1], [0, 0, 1, 1], [], []>} : vector<286x4xbf16>, vector<4x4xbf16>, vector<286x4xf32> -> vector<286x4xf32>
    %84 = arith.addf %80, %83 : vector<286x4xf32>
    %c0_88 = arith.constant 0 : index
    %c0_89 = arith.constant 0 : index
    %85 = vector.load %arg8[%c0_88, %c0_89] : memref<286x4xf32, #tpu.memory_space<vmem>>, vector<286x4xf32>
    tpu.vector_store %arg8[%c0_88, %c0_89], %84 {strides = array<i32>} : memref<286x4xf32, #tpu.memory_space<vmem>>, vector<286x4xf32>,
    %c0_90 = arith.constant 0 : index
    %c0_91 = arith.constant 0 : index
    %86 = vector.load %arg8[%c0_90, %c0_91] : memref<286x4xf32, #tpu.memory_space<vmem>>, vector<286x4xf32>
    %c0_92 = arith.constant 0 : index
    %c0_93 = arith.constant 0 : index
    %87 = vector.load %arg4[%c0_92, %c0_93] : memref<6x4xf32, #tpu.memory_space<vmem>>, vector<1x4xf32>
    %88 = vector.broadcast %87 : vector<1x4xf32> to vector<286x4xf32>
    %89 = arith.mulf %86, %88 : vector<286x4xf32>
    %c1_94 = arith.constant 1 : index
    %c0_95 = arith.constant 0 : index
    %90 = vector.load %arg4[%c1_94, %c0_95] : memref<6x4xf32, #tpu.memory_space<vmem>>, vector<1x4xf32>
    %91 = vector.broadcast %90 : vector<1x4xf32> to vector<286x4xf32>
    %92 = arith.addf %89, %91 : vector<286x4xf32>
    %cst_96 = arith.constant 0.000000e+00 : f32
    %93 = vector.broadcast %cst_96 : f32 to vector<286x4xf32>
    %94 = arith.maximumf %92, %93 : vector<286x4xf32>
    %c0_97 = arith.constant 0 : index
    %c0_98 = arith.constant 0 : index
    %95 = vector.load %arg5[%c0_97, %c0_98] : memref<286x1xf32, #tpu.memory_space<vmem>>, vector<286x1xf32>
    %96 = vector.broadcast %95 : vector<286x1xf32> to vector<286x4xf32>
    %97 = arith.mulf %94, %96 : vector<286x4xf32>
    %c19_99 = arith.constant 19 : index
    %c0_100 = arith.constant 0 : index
    %98 = vector.load %arg7[%c19_99, %c0_100] : memref<324x4xf32, #tpu.memory_space<vmem>>, vector<286x4xf32>
    tpu.vector_store %arg7[%c19_99, %c0_100], %97 {strides = array<i32>} : memref<324x4xf32, #tpu.memory_space<vmem>>, vector<286x4xf32>,
    %cst_101 = arith.constant 0.000000e+00 : f32
    %99 = vector.broadcast %cst_101 : f32 to vector<286x4xf32>
    %c0_102 = arith.constant 0 : index
    %c0_103 = arith.constant 0 : index
    %100 = vector.load %arg8[%c0_102, %c0_103] : memref<286x4xf32, #tpu.memory_space<vmem>>, vector<286x4xf32>
    tpu.vector_store %arg8[%c0_102, %c0_103], %99 {strides = array<i32>} : memref<286x4xf32, #tpu.memory_space<vmem>>, vector<286x4xf32>,
    %c0_104 = arith.constant 0 : index
    %c0_105 = arith.constant 0 : index
    %101 = vector.load %arg7[%c0_104, %c0_105] : memref<324x4xf32, #tpu.memory_space<vmem>>, vector<286x4xf32>
    %102 = arith.truncf %101 : vector<286x4xf32> to vector<286x4xbf16>
    %c0_106 = arith.constant 0 : index
    %c0_107 = arith.constant 0 : index
    %103 = vector.load %arg8[%c0_106, %c0_107] : memref<286x4xf32, #tpu.memory_space<vmem>>, vector<286x4xf32>
    %c0_108 = arith.constant 0 : index
    %c0_109 = arith.constant 0 : index
    %c0_110 = arith.constant 0 : index
    %104 = vector.load %arg3[%c0_108, %c0_109, %c0_110] : memref<9x4x4xbf16, #tpu.memory_space<vmem>>, vector<1x4x4xbf16>
    %105 = vector.shape_cast %104 : vector<1x4x4xbf16> to vector<4x4xbf16>
    %cst_111 = arith.constant dense<0.000000e+00> : vector<286x4xf32>
    %106 = tpu.matmul %102, %105, %cst_111 {dimension_numbers = #tpu.dot_dimension_numbers<[1], [0], [0], [1], [0, 0, 1, 1], [], []>} : vector<286x4xbf16>, vector<4x4xbf16>, vector<286x4xf32> -> vector<286x4xf32>
    %107 = arith.addf %103, %106 : vector<286x4xf32>
    %c0_112 = arith.constant 0 : index
    %c0_113 = arith.constant 0 : index
    %108 = vector.load %arg8[%c0_112, %c0_113] : memref<286x4xf32, #tpu.memory_space<vmem>>, vector<286x4xf32>
    tpu.vector_store %arg8[%c0_112, %c0_113], %107 {strides = array<i32>} : memref<286x4xf32, #tpu.memory_space<vmem>>, vector<286x4xf32>,
    %c1_114 = arith.constant 1 : index
    %c0_115 = arith.constant 0 : index
    %109 = vector.load %arg7[%c1_114, %c0_115] : memref<324x4xf32, #tpu.memory_space<vmem>>, vector<286x4xf32>
    %110 = arith.truncf %109 : vector<286x4xf32> to vector<286x4xbf16>
    %c0_116 = arith.constant 0 : index
    %c0_117 = arith.constant 0 : index
    %111 = vector.load %arg8[%c0_116, %c0_117] : memref<286x4xf32, #tpu.memory_space<vmem>>, vector<286x4xf32>
    %c1_118 = arith.constant 1 : index
    %c0_119 = arith.constant 0 : index
    %c0_120 = arith.constant 0 : index
    %112 = vector.load %arg3[%c1_118, %c0_119, %c0_120] : memref<9x4x4xbf16, #tpu.memory_space<vmem>>, vector<1x4x4xbf16>
    %113 = vector.shape_cast %112 : vector<1x4x4xbf16> to vector<4x4xbf16>
    %cst_121 = arith.constant dense<0.000000e+00> : vector<286x4xf32>
    %114 = tpu.matmul %110, %113, %cst_121 {dimension_numbers = #tpu.dot_dimension_numbers<[1], [0], [0], [1], [0, 0, 1, 1], [], []>} : vector<286x4xbf16>, vector<4x4xbf16>, vector<286x4xf32> -> vector<286x4xf32>
    %115 = arith.addf %111, %114 : vector<286x4xf32>
    %c0_122 = arith.constant 0 : index
    %c0_123 = arith.constant 0 : index
    %116 = vector.load %arg8[%c0_122, %c0_123] : memref<286x4xf32, #tpu.memory_space<vmem>>, vector<286x4xf32>
    tpu.vector_store %arg8[%c0_122, %c0_123], %115 {strides = array<i32>} : memref<286x4xf32, #tpu.memory_space<vmem>>, vector<286x4xf32>,
    %c2_124 = arith.constant 2 : index
    %c0_125 = arith.constant 0 : index
    %117 = vector.load %arg7[%c2_124, %c0_125] : memref<324x4xf32, #tpu.memory_space<vmem>>, vector<286x4xf32>
    %118 = arith.truncf %117 : vector<286x4xf32> to vector<286x4xbf16>
    %c0_126 = arith.constant 0 : index
    %c0_127 = arith.constant 0 : index
    %119 = vector.load %arg8[%c0_126, %c0_127] : memref<286x4xf32, #tpu.memory_space<vmem>>, vector<286x4xf32>
    %c2_128 = arith.constant 2 : index
    %c0_129 = arith.constant 0 : index
    %c0_130 = arith.constant 0 : index
    %120 = vector.load %arg3[%c2_128, %c0_129, %c0_130] : memref<9x4x4xbf16, #tpu.memory_space<vmem>>, vector<1x4x4xbf16>
    %121 = vector.shape_cast %120 : vector<1x4x4xbf16> to vector<4x4xbf16>
    %cst_131 = arith.constant dense<0.000000e+00> : vector<286x4xf32>
    %122 = tpu.matmul %118, %121, %cst_131 {dimension_numbers = #tpu.dot_dimension_numbers<[1], [0], [0], [1], [0, 0, 1, 1], [], []>} : vector<286x4xbf16>, vector<4x4xbf16>, vector<286x4xf32> -> vector<286x4xf32>
    %123 = arith.addf %119, %122 : vector<286x4xf32>
    %c0_132 = arith.constant 0 : index
    %c0_133 = arith.constant 0 : index
    %124 = vector.load %arg8[%c0_132, %c0_133] : memref<286x4xf32, #tpu.memory_space<vmem>>, vector<286x4xf32>
    tpu.vector_store %arg8[%c0_132, %c0_133], %123 {strides = array<i32>} : memref<286x4xf32, #tpu.memory_space<vmem>>, vector<286x4xf32>,
    %c18_134 = arith.constant 18 : index
    %c0_135 = arith.constant 0 : index
    %125 = vector.load %arg7[%c18_134, %c0_135] : memref<324x4xf32, #tpu.memory_space<vmem>>, vector<286x4xf32>
    %126 = arith.truncf %125 : vector<286x4xf32> to vector<286x4xbf16>
    %c0_136 = arith.constant 0 : index
    %c0_137 = arith.constant 0 : index
    %127 = vector.load %arg8[%c0_136, %c0_137] : memref<286x4xf32, #tpu.memory_space<vmem>>, vector<286x4xf32>
    %c3_138 = arith.constant 3 : index
    %c0_139 = arith.constant 0 : index
    %c0_140 = arith.constant 0 : index
    %128 = vector.load %arg3[%c3_138, %c0_139, %c0_140] : memref<9x4x4xbf16, #tpu.memory_space<vmem>>, vector<1x4x4xbf16>
    %129 = vector.shape_cast %128 : vector<1x4x4xbf16> to vector<4x4xbf16>
    %cst_141 = arith.constant dense<0.000000e+00> : vector<286x4xf32>
    %130 = tpu.matmul %126, %129, %cst_141 {dimension_numbers = #tpu.dot_dimension_numbers<[1], [0], [0], [1], [0, 0, 1, 1], [], []>} : vector<286x4xbf16>, vector<4x4xbf16>, vector<286x4xf32> -> vector<286x4xf32>
    %131 = arith.addf %127, %130 : vector<286x4xf32>
    %c0_142 = arith.constant 0 : index
    %c0_143 = arith.constant 0 : index
    %132 = vector.load %arg8[%c0_142, %c0_143] : memref<286x4xf32, #tpu.memory_space<vmem>>, vector<286x4xf32>
    tpu.vector_store %arg8[%c0_142, %c0_143], %131 {strides = array<i32>} : memref<286x4xf32, #tpu.memory_space<vmem>>, vector<286x4xf32>,
    %c19_144 = arith.constant 19 : index
    %c0_145 = arith.constant 0 : index
    %133 = vector.load %arg7[%c19_144, %c0_145] : memref<324x4xf32, #tpu.memory_space<vmem>>, vector<286x4xf32>
    %134 = arith.truncf %133 : vector<286x4xf32> to vector<286x4xbf16>
    %c0_146 = arith.constant 0 : index
    %c0_147 = arith.constant 0 : index
    %135 = vector.load %arg8[%c0_146, %c0_147] : memref<286x4xf32, #tpu.memory_space<vmem>>, vector<286x4xf32>
    %c4_148 = arith.constant 4 : index
    %c0_149 = arith.constant 0 : index
    %c0_150 = arith.constant 0 : index
    %136 = vector.load %arg3[%c4_148, %c0_149, %c0_150] : memref<9x4x4xbf16, #tpu.memory_space<vmem>>, vector<1x4x4xbf16>
    %137 = vector.shape_cast %136 : vector<1x4x4xbf16> to vector<4x4xbf16>
    %cst_151 = arith.constant dense<0.000000e+00> : vector<286x4xf32>
    %138 = tpu.matmul %134, %137, %cst_151 {dimension_numbers = #tpu.dot_dimension_numbers<[1], [0], [0], [1], [0, 0, 1, 1], [], []>} : vector<286x4xbf16>, vector<4x4xbf16>, vector<286x4xf32> -> vector<286x4xf32>
    %139 = arith.addf %135, %138 : vector<286x4xf32>
    %c0_152 = arith.constant 0 : index
    %c0_153 = arith.constant 0 : index
    %140 = vector.load %arg8[%c0_152, %c0_153] : memref<286x4xf32, #tpu.memory_space<vmem>>, vector<286x4xf32>
    tpu.vector_store %arg8[%c0_152, %c0_153], %139 {strides = array<i32>} : memref<286x4xf32, #tpu.memory_space<vmem>>, vector<286x4xf32>,
    %c20_154 = arith.constant 20 : index
    %c0_155 = arith.constant 0 : index
    %141 = vector.load %arg7[%c20_154, %c0_155] : memref<324x4xf32, #tpu.memory_space<vmem>>, vector<286x4xf32>
    %142 = arith.truncf %141 : vector<286x4xf32> to vector<286x4xbf16>
    %c0_156 = arith.constant 0 : index
    %c0_157 = arith.constant 0 : index
    %143 = vector.load %arg8[%c0_156, %c0_157] : memref<286x4xf32, #tpu.memory_space<vmem>>, vector<286x4xf32>
    %c5_158 = arith.constant 5 : index
    %c0_159 = arith.constant 0 : index
    %c0_160 = arith.constant 0 : index
    %144 = vector.load %arg3[%c5_158, %c0_159, %c0_160] : memref<9x4x4xbf16, #tpu.memory_space<vmem>>, vector<1x4x4xbf16>
    %145 = vector.shape_cast %144 : vector<1x4x4xbf16> to vector<4x4xbf16>
    %cst_161 = arith.constant dense<0.000000e+00> : vector<286x4xf32>
    %146 = tpu.matmul %142, %145, %cst_161 {dimension_numbers = #tpu.dot_dimension_numbers<[1], [0], [0], [1], [0, 0, 1, 1], [], []>} : vector<286x4xbf16>, vector<4x4xbf16>, vector<286x4xf32> -> vector<286x4xf32>
    %147 = arith.addf %143, %146 : vector<286x4xf32>
    %c0_162 = arith.constant 0 : index
    %c0_163 = arith.constant 0 : index
    %148 = vector.load %arg8[%c0_162, %c0_163] : memref<286x4xf32, #tpu.memory_space<vmem>>, vector<286x4xf32>
    tpu.vector_store %arg8[%c0_162, %c0_163], %147 {strides = array<i32>} : memref<286x4xf32, #tpu.memory_space<vmem>>, vector<286x4xf32>,
    %c36_164 = arith.constant 36 : index
    %c0_165 = arith.constant 0 : index
    %149 = vector.load %arg7[%c36_164, %c0_165] : memref<324x4xf32, #tpu.memory_space<vmem>>, vector<286x4xf32>
    %150 = arith.truncf %149 : vector<286x4xf32> to vector<286x4xbf16>
    %c0_166 = arith.constant 0 : index
    %c0_167 = arith.constant 0 : index
    %151 = vector.load %arg8[%c0_166, %c0_167] : memref<286x4xf32, #tpu.memory_space<vmem>>, vector<286x4xf32>
    %c6_168 = arith.constant 6 : index
    %c0_169 = arith.constant 0 : index
    %c0_170 = arith.constant 0 : index
    %152 = vector.load %arg3[%c6_168, %c0_169, %c0_170] : memref<9x4x4xbf16, #tpu.memory_space<vmem>>, vector<1x4x4xbf16>
    %153 = vector.shape_cast %152 : vector<1x4x4xbf16> to vector<4x4xbf16>
    %cst_171 = arith.constant dense<0.000000e+00> : vector<286x4xf32>
    %154 = tpu.matmul %150, %153, %cst_171 {dimension_numbers = #tpu.dot_dimension_numbers<[1], [0], [0], [1], [0, 0, 1, 1], [], []>} : vector<286x4xbf16>, vector<4x4xbf16>, vector<286x4xf32> -> vector<286x4xf32>
    %155 = arith.addf %151, %154 : vector<286x4xf32>
    %c0_172 = arith.constant 0 : index
    %c0_173 = arith.constant 0 : index
    %156 = vector.load %arg8[%c0_172, %c0_173] : memref<286x4xf32, #tpu.memory_space<vmem>>, vector<286x4xf32>
    tpu.vector_store %arg8[%c0_172, %c0_173], %155 {strides = array<i32>} : memref<286x4xf32, #tpu.memory_space<vmem>>, vector<286x4xf32>,
    %c37_174 = arith.constant 37 : index
    %c0_175 = arith.constant 0 : index
    %157 = vector.load %arg7[%c37_174, %c0_175] : memref<324x4xf32, #tpu.memory_space<vmem>>, vector<286x4xf32>
    %158 = arith.truncf %157 : vector<286x4xf32> to vector<286x4xbf16>
    %c0_176 = arith.constant 0 : index
    %c0_177 = arith.constant 0 : index
    %159 = vector.load %arg8[%c0_176, %c0_177] : memref<286x4xf32, #tpu.memory_space<vmem>>, vector<286x4xf32>
    %c7_178 = arith.constant 7 : index
    %c0_179 = arith.constant 0 : index
    %c0_180 = arith.constant 0 : index
    %160 = vector.load %arg3[%c7_178, %c0_179, %c0_180] : memref<9x4x4xbf16, #tpu.memory_space<vmem>>, vector<1x4x4xbf16>
    %161 = vector.shape_cast %160 : vector<1x4x4xbf16> to vector<4x4xbf16>
    %cst_181 = arith.constant dense<0.000000e+00> : vector<286x4xf32>
    %162 = tpu.matmul %158, %161, %cst_181 {dimension_numbers = #tpu.dot_dimension_numbers<[1], [0], [0], [1], [0, 0, 1, 1], [], []>} : vector<286x4xbf16>, vector<4x4xbf16>, vector<286x4xf32> -> vector<286x4xf32>
    %163 = arith.addf %159, %162 : vector<286x4xf32>
    %c0_182 = arith.constant 0 : index
    %c0_183 = arith.constant 0 : index
    %164 = vector.load %arg8[%c0_182, %c0_183] : memref<286x4xf32, #tpu.memory_space<vmem>>, vector<286x4xf32>
    tpu.vector_store %arg8[%c0_182, %c0_183], %163 {strides = array<i32>} : memref<286x4xf32, #tpu.memory_space<vmem>>, vector<286x4xf32>,
    %c38_184 = arith.constant 38 : index
    %c0_185 = arith.constant 0 : index
    %165 = vector.load %arg7[%c38_184, %c0_185] : memref<324x4xf32, #tpu.memory_space<vmem>>, vector<286x4xf32>
    %166 = arith.truncf %165 : vector<286x4xf32> to vector<286x4xbf16>
    %c0_186 = arith.constant 0 : index
    %c0_187 = arith.constant 0 : index
    %167 = vector.load %arg8[%c0_186, %c0_187] : memref<286x4xf32, #tpu.memory_space<vmem>>, vector<286x4xf32>
    %c8_188 = arith.constant 8 : index
    %c0_189 = arith.constant 0 : index
    %c0_190 = arith.constant 0 : index
    %168 = vector.load %arg3[%c8_188, %c0_189, %c0_190] : memref<9x4x4xbf16, #tpu.memory_space<vmem>>, vector<1x4x4xbf16>
    %169 = vector.shape_cast %168 : vector<1x4x4xbf16> to vector<4x4xbf16>
    %cst_191 = arith.constant dense<0.000000e+00> : vector<286x4xf32>
    %170 = tpu.matmul %166, %169, %cst_191 {dimension_numbers = #tpu.dot_dimension_numbers<[1], [0], [0], [1], [0, 0, 1, 1], [], []>} : vector<286x4xbf16>, vector<4x4xbf16>, vector<286x4xf32> -> vector<286x4xf32>
    %171 = arith.addf %167, %170 : vector<286x4xf32>
    %c0_192 = arith.constant 0 : index
    %c0_193 = arith.constant 0 : index
    %172 = vector.load %arg8[%c0_192, %c0_193] : memref<286x4xf32, #tpu.memory_space<vmem>>, vector<286x4xf32>
    tpu.vector_store %arg8[%c0_192, %c0_193], %171 {strides = array<i32>} : memref<286x4xf32, #tpu.memory_space<vmem>>, vector<286x4xf32>,
    %c0_194 = arith.constant 0 : index
    %c0_195 = arith.constant 0 : index
    %173 = vector.load %arg8[%c0_194, %c0_195] : memref<286x4xf32, #tpu.memory_space<vmem>>, vector<286x4xf32>
    %c2_196 = arith.constant 2 : index
    %c0_197 = arith.constant 0 : index
    %174 = vector.load %arg4[%c2_196, %c0_197] : memref<6x4xf32, #tpu.memory_space<vmem>>, vector<1x4xf32>
    %175 = vector.broadcast %174 : vector<1x4xf32> to vector<286x4xf32>
    %176 = arith.mulf %173, %175 : vector<286x4xf32>
    %c3_198 = arith.constant 3 : index
    %c0_199 = arith.constant 0 : index
    %177 = vector.load %arg4[%c3_198, %c0_199] : memref<6x4xf32, #tpu.memory_space<vmem>>, vector<1x4xf32>
    %178 = vector.broadcast %177 : vector<1x4xf32> to vector<286x4xf32>
    %179 = arith.addf %176, %178 : vector<286x4xf32>
    %c0_200 = arith.constant 0 : index
    %c19_201 = arith.constant 19 : index
    %c0_202 = arith.constant 0 : index
    %180 = vector.load %arg1[%c0_200, %c19_201, %c0_202] : memref<1x324x4xf32, #tpu.memory_space<vmem>>, vector<1x286x4xf32>
    %181 = vector.shape_cast %180 : vector<1x286x4xf32> to vector<286x4xf32>
    %182 = arith.addf %179, %181 : vector<286x4xf32>
    %cst_203 = arith.constant 0.000000e+00 : f32
    %183 = vector.broadcast %cst_203 : f32 to vector<286x4xf32>
    %184 = arith.maximumf %182, %183 : vector<286x4xf32>
    %c0_204 = arith.constant 0 : index
    %c19_205 = arith.constant 19 : index
    %c0_206 = arith.constant 0 : index
    %185 = vector.load %arg6[%c0_204, %c19_205, %c0_206] : memref<1x324x4xf32, #tpu.memory_space<vmem>>, vector<1x286x4xf32>
    %186 = vector.shape_cast %185 : vector<1x286x4xf32> to vector<286x4xf32>
    %187 = vector.shape_cast %184 : vector<286x4xf32> to vector<1x286x4xf32>
    tpu.vector_store %arg6[%c0_204, %c19_205, %c0_206], %187 {strides = array<i32>} : memref<1x324x4xf32, #tpu.memory_space<vmem>>, vector<1x286x4xf32>,
    return
  }
  func.func @transform_0(%arg0: i32) -> (i32, i32, i32) {
    %c0_i32 = arith.constant 0 : i32
    %c0_i32_0 = arith.constant 0 : i32
    %c0_i32_1 = arith.constant 0 : i32
    return %arg0, %c0_i32, %c0_i32_0 : i32, i32, i32
  }
  func.func @transform_1(%arg0: i32) -> (i32, i32, i32) {
    %c0_i32 = arith.constant 0 : i32
    %c0_i32_0 = arith.constant 0 : i32
    %c0_i32_1 = arith.constant 0 : i32
    %c0_i32_2 = arith.constant 0 : i32
    return %c0_i32, %c0_i32_0, %c0_i32_1 : i32, i32, i32
  }
  func.func @transform_2(%arg0: i32) -> (i32, i32, i32) {
    %c0_i32 = arith.constant 0 : i32
    %c0_i32_0 = arith.constant 0 : i32
    %c0_i32_1 = arith.constant 0 : i32
    %c0_i32_2 = arith.constant 0 : i32
    return %c0_i32, %c0_i32_0, %c0_i32_1 : i32, i32, i32
  }
  func.func @transform_3(%arg0: i32) -> (i32, i32) {
    %c0_i32 = arith.constant 0 : i32
    %c0_i32_0 = arith.constant 0 : i32
    %c0_i32_1 = arith.constant 0 : i32
    return %c0_i32, %c0_i32_0 : i32, i32
  }
  func.func @transform_4(%arg0: i32) -> (i32, i32) {
    %c0_i32 = arith.constant 0 : i32
    %c0_i32_0 = arith.constant 0 : i32
    %c0_i32_1 = arith.constant 0 : i32
    return %c0_i32, %c0_i32_0 : i32, i32
  }
  func.func @transform_5(%arg0: i32) -> (i32, i32, i32) {
    %c0_i32 = arith.constant 0 : i32
    %c0_i32_0 = arith.constant 0 : i32
    %c0_i32_1 = arith.constant 0 : i32
    return %arg0, %c0_i32, %c0_i32_0 : i32, i32, i32
  }
}

</mosaic_0001>

<llo_original>
// kernel: tpu_custom_call.1
$region0: #{tpu_custom_call.1}
  #allocation0 [shape = 'u32[]', space=smem, size = 0x4, offset = 0x4, fixed_abs, tag = 'smem constant byte address 0x4 - core index']
  #allocation1 [shape = 'u32[144,128]{1,0:T(1,128)}', space=vmem, size = 0x12000, scoped, tag = 'internal scratch']
  #allocation2 [shape = 'f32[324,4]{1,0:T(8,128)}', space=vmem, size = 0x29000, scoped, tag = 'scratch operand']
  #allocation3 [shape = 'f32[286,4]{1,0:T(8,128)}', space=vmem, size = 0x24000, scoped, tag = 'scratch operand']
  %s0 = inlined_call_operand.vmem [shape: f32[2,324,4], index: 0, kind: input, shape index: {}]
  %s1 = inlined_call_operand.vmem [shape: bf16[9,4,4], index: 1, kind: input, shape index: {}]
  %s2 = inlined_call_operand.vmem [shape: bf16[9,4,4], index: 2, kind: input, shape index: {}]
  %s3 = inlined_call_operand.vmem [shape: f32[6,4], index: 3, kind: input, shape index: {}]
  %s4 = inlined_call_operand.vmem [shape: f32[286,1], index: 4, kind: input, shape index: {}]
  %s5 = inlined_call_operand.vmem [shape: f32[2,324,4], index: 5, kind: output, shape index: {}]
  %s6 = sld [smem:[#allocation0]]
  $region53: #{tpu_custom_call.1} parent=0
    _
  %s8 = ssub.s32 1, %s6
  %s9 = scalar_select 0, %s8, %s6
  loop: start=0, step=1, limit=4
  $region2: #{tpu_custom_call.1} parent=0 // loop_pre_header
    _
  $region3: #{tpu_custom_call.1} parent=0 // loop_header
    %s11 = sphi 0, %s15
    %p12 = scmp.ge.s32.totalorder %s11, 4
    %s21 = sphi 0, %s23
    %s24 = sphi 0, %s21
    %s25 = sphi 0, %s24
    %s41 = sphi 0, %s25
    %s45 = sphi 0, %s45
    %s47 = sphi 0, %s45
    %s48 = sphi 0, %s47
    %s62 = sphi 0, %s48
    %s66 = sphi 0, %s66
    %s68 = sphi 0, %s66
    %s69 = sphi 0, %s68
    %s83 = sphi 0, %s69
    %s87 = sphi 0, %s87
    %s89 = sphi 0, %s87
    %s90 = sphi 0, %s89
    %s104 = sphi 0, %s90
    %s108 = sphi 0, %s108
    %s110 = sphi 0, %s108
    %s111 = sphi 0, %s110
    %s125 = sphi 0, %s111
    %s131 = sphi 0, %s133
    %s134 = sphi 0, %s131
    %s135 = sphi 0, %s134
    %s151 = sphi 0, %s135
  $region4: #{tpu_custom_call.1} parent=0 // loop_header_branch
    %14 = sbr.rel (%p12) target = $region8
  $region5: #{tpu_custom_call.1} parent=0 // loop_body
    %s16 = ssub.s32 %s11, 1
    %s17 = ssub.s32 %s11, 2
    %s18 = sadd.s32 %s11, 1
    %s19 = ssub.s32 %s11, %s18
    %p20 = scmp.eq.s32.totalorder %s19, 0
    %s22 = sadd.s32 %s21, 1
    %s23 = scalar_select %p20, %s21, %s22
    %p26 = pneg %p20
    %p27 = scmp.eq.s32.totalorder %s11, 1
    %p28 = por %p26, %p27
    %p29 = scmp.ne.s32.totalorder %s21, %s24
    %p30 = scmp.eq.s32.totalorder %s11, 0
    %p31 = por %p29, %p30
    %p32 = scmp.ne.s32.totalorder %s21, %s24
    %p33 = scmp.eq.s32.totalorder %s16, 1
    %p34 = por %p32, %p33
    %p35 = scmp.ne.s32.totalorder %s24, %s25
    %p36 = scmp.eq.s32.totalorder %s16, 0
    %p37 = por %p35, %p36
    %p38 = scmp.ne.s32.totalorder %s24, %s25
    %p39 = scmp.eq.s32.totalorder %s17, 1
    %p40 = por %p38, %p39
    %p42 = scmp.ne.s32.totalorder %s25, %s41
    %p43 = scmp.eq.s32.totalorder %s17, 0
    %p44 = por %p42, %p43
    %s46 = sadd.s32 %s45, 1
    %p49 = scmp.eq.s32.totalorder %s11, 1
    %p50 = scmp.ne.s32.totalorder %s45, %s47
    %p51 = scmp.eq.s32.totalorder %s11, 0
    %p52 = por %p50, %p51
    %p53 = scmp.ne.s32.totalorder %s45, %s47
    %p54 = scmp.eq.s32.totalorder %s16, 1
    %p55 = por %p53, %p54
    %p56 = scmp.ne.s32.totalorder %s47, %s48
    %p57 = scmp.eq.s32.totalorder %s16, 0
    %p58 = por %p56, %p57
    %p59 = scmp.ne.s32.totalorder %s47, %s48
    %p60 = scmp.eq.s32.totalorder %s17, 1
    %p61 = por %p59, %p60
    %p63 = scmp.ne.s32.totalorder %s48, %s62
    %p64 = scmp.eq.s32.totalorder %s17, 0
    %p65 = por %p63, %p64
    %s67 = sadd.s32 %s66, 1
    %p70 = scmp.eq.s32.totalorder %s11, 1
    %p71 = scmp.ne.s32.totalorder %s66, %s68
    %p72 = scmp.eq.s32.totalorder %s11, 0
    %p73 = por %p71, %p72
    %p74 = scmp.ne.s32.totalorder %s66, %s68
    %p75 = scmp.eq.s32.totalorder %s16, 1
    %p76 = por %p74, %p75
    %p77 = scmp.ne.s32.totalorder %s68, %s69
    %p78 = scmp.eq.s32.totalorder %s16, 0
    %p79 = por %p77, %p78
    %p80 = scmp.ne.s32.totalorder %s68, %s69
    %p81 = scmp.eq.s32.totalorder %s17, 1
    %p82 = por %p80, %p81
    %p84 = scmp.ne.s32.totalorder %s69, %s83
    %p85 = scmp.eq.s32.totalorder %s17, 0
    %p86 = por %p84, %p85
    %s88 = sadd.s32 %s87, 1
    %p91 = scmp.eq.s32.totalorder %s11, 1
    %p92 = scmp.ne.s32.totalorder %s87, %s89
    %p93 = scmp.eq.s32.totalorder %s11, 0
    %p94 = por %p92, %p93
    %p95 = scmp.ne.s32.totalorder %s87, %s89
    %p96 = scmp.eq.s32.totalorder %s16, 1
    %p97 = por %p95, %p96
    %p98 = scmp.ne.s32.totalorder %s89, %s90
    %p99 = scmp.eq.s32.totalorder %s16, 0
    %p100 = por %p98, %p99
    %p101 = scmp.ne.s32.totalorder %s89, %s90
    %p102 = scmp.eq.s32.totalorder %s17, 1
    %p103 = por %p101, %p102
    %p105 = scmp.ne.s32.totalorder %s90, %s104
    %p106 = scmp.eq.s32.totalorder %s17, 0
    %p107 = por %p105, %p106
    %s109 = sadd.s32 %s108, 1
    %p112 = scmp.eq.s32.totalorder %s11, 1
    %p113 = scmp.ne.s32.totalorder %s108, %s110
    %p114 = scmp.eq.s32.totalorder %s11, 0
    %p115 = por %p113, %p114
    %p116 = scmp.ne.s32.totalorder %s108, %s110
    %p117 = scmp.eq.s32.totalorder %s16, 1
    %p118 = por %p116, %p117
    %p119 = scmp.ne.s32.totalorder %s110, %s111
    %p120 = scmp.eq.s32.totalorder %s16, 0
    %p121 = por %p119, %p120
    %p122 = scmp.ne.s32.totalorder %s110, %s111
    %p123 = scmp.eq.s32.totalorder %s17, 1
    %p124 = por %p122, %p123
    %p126 = scmp.ne.s32.totalorder %s111, %s125
    %p127 = scmp.eq.s32.totalorder %s17, 0
    %p128 = por %p126, %p127
    %s129 = ssub.s32 %s11, %s18
    %p130 = scmp.eq.s32.totalorder %s129, 0
    %s132 = sadd.s32 %s131, 1
    %s133 = scalar_select %p130, %s131, %s132
    %p136 = pneg %p130
    %p137 = scmp.eq.s32.totalorder %s11, 1
    %p138 = por %p136, %p137
    %p139 = scmp.ne.s32.totalorder %s131, %s134
    %p140 = scmp.eq.s32.totalorder %s11, 0
    %p141 = por %p139, %p140
    %p142 = scmp.ne.s32.totalorder %s131, %s134
    %p143 = scmp.eq.s32.totalorder %s16, 1
    %p144 = por %p142, %p143
    %p145 = scmp.ne.s32.totalorder %s134, %s135
    %p146 = scmp.eq.s32.totalorder %s16, 0
    %p147 = por %p145, %p146
    %p148 = scmp.ne.s32.totalorder %s134, %s135
    %p149 = scmp.eq.s32.totalorder %s17, 1
    %p150 = por %p148, %p149
    %p152 = scmp.ne.s32.totalorder %s135, %s151
    %p153 = scmp.eq.s32.totalorder %s17, 0
    %p154 = por %p152, %p153
    %p155 = scmp.le.s32.totalorder 1, %s11
    %p156 = scmp.lt.s32.totalorder %s11, 3
    %p157 = pnand %p155, %p156
    %p158 = pneg %p157
    // Predicated region
    $region9: #{tpu_custom_call.1} parent=5 // pred_check
      _
    $region10: #{tpu_custom_call.1} parent=5 // pred_check_branch
      %160 = sbr.rel (%p157) target = $region12
    $region11: #{tpu_custom_call.1} parent=5 // pred_region
      %s161 = ssub.s32 %s11, 1
      // Predicated region
      $region13: #{tpu_custom_call.1} parent=11 // pred_check
        %p162 = pneg %p58
      $region14: #{tpu_custom_call.1} parent=11 // pred_check_branch
        %164 = sbr.rel (%p162) target = $region16
      $region15: #{tpu_custom_call.1} parent=11 // pred_region
        _
      $region16: #{tpu_custom_call.1} parent=11 // pred_fallthru
        _
      // Predicated region
      $region17: #{tpu_custom_call.1} parent=11 // pred_check
        %p165 = pneg %p79
      $region18: #{tpu_custom_call.1} parent=11 // pred_check_branch
        %167 = sbr.rel (%p165) target = $region20
      $region19: #{tpu_custom_call.1} parent=11 // pred_region
        _
      $region20: #{tpu_custom_call.1} parent=11 // pred_fallthru
        _
      // Predicated region
      $region21: #{tpu_custom_call.1} parent=11 // pred_check
        %p168 = pneg %p100
      $region22: #{tpu_custom_call.1} parent=11 // pred_check_branch
        %170 = sbr.rel (%p168) target = $region24
      $region23: #{tpu_custom_call.1} parent=11 // pred_region
        _
      $region24: #{tpu_custom_call.1} parent=11 // pred_fallthru
        _
      // Predicated region
      $region25: #{tpu_custom_call.1} parent=11 // pred_check
        %p171 = pneg %p121
      $region26: #{tpu_custom_call.1} parent=11 // pred_check_branch
        %173 = sbr.rel (%p171) target = $region28
      $region27: #{tpu_custom_call.1} parent=11 // pred_region
        _
      $region28: #{tpu_custom_call.1} parent=11 // pred_fallthru
        _
    $region12: #{tpu_custom_call.1} parent=5 // pred_fallthru
      _
    %p174 = scmp.lt.s32.totalorder %s11, 2
    // Predicated region
    $region29: #{tpu_custom_call.1} parent=5 // pred_check
      %p175 = pneg %p174
    $region30: #{tpu_custom_call.1} parent=5 // pred_check_branch
      %177 = sbr.rel (%p175) target = $region32
    $region31: #{tpu_custom_call.1} parent=5 // pred_region
      // Predicated region
      $region33: #{tpu_custom_call.1} parent=31 // pred_check
        %p178 = pneg %p31
      $region34: #{tpu_custom_call.1} parent=31 // pred_check_branch
        %180 = sbr.rel (%p178) target = $region36
      $region35: #{tpu_custom_call.1} parent=31 // pred_region
        %p181 = scmp.lt.s32.totalorder %s11, 1
        %s182 = scalar_select %p181, %s11, 1
        %s183 = smul.addr %s182, 41
        %s184 = smul.addr %s183, 8
        %s185 = scalar_lea.vmem %s0, %s184
      $region36: #{tpu_custom_call.1} parent=31 // pred_fallthru
        _
    $region32: #{tpu_custom_call.1} parent=5 // pred_fallthru
      _
    %p186 = scmp.le.s32.totalorder 1, %s11
    %p187 = scmp.lt.s32.totalorder %s11, 3
    %p188 = pnand %p186, %p187
    %p189 = pneg %p188
    // Predicated region
    $region37: #{tpu_custom_call.1} parent=5 // pred_check
      _
    $region38: #{tpu_custom_call.1} parent=5 // pred_check_branch
      %191 = sbr.rel (%p188) target = $region40
    $region39: #{tpu_custom_call.1} parent=5 // pred_region
      %s192 = ssub.s32 %s11, 1
      %p193 = scmp.lt.s32.totalorder %s16, 1
      %s194 = scalar_select %p193, %s16, 1
      %s195 = smul.addr %s194, 41
      %s196 = smul.addr %s195, 8
      %s197 = scalar_lea.vmem %s0, %s196
      %p198 = pneg %p37
      %p199 = pneg %p34
      %p200 = pneg %p58
      %p201 = pneg %p55
      %p202 = pneg %p79
      %p203 = pneg %p76
      %p204 = pneg %p100
      %p205 = pneg %p97
      %p206 = pneg %p121
      %p207 = pneg %p118
      %p208 = pneg %p147
      %p209 = pneg %p144
      %p210 = scmp.lt.s32.totalorder %s16, 1
      %s211 = scalar_select %p210, %s16, 1
      %s212 = smul.addr %s211, 41
      %s213 = smul.addr %s212, 8
      %s214 = scalar_lea.vmem %s5, %s213
      %p215 = scmp.lt.s32.totalorder %s16, 1
      %s216 = scalar_select %p215, %s16, 1
      %s217 = smul.addr %s216, 41
      %s218 = smul.addr %s217, 8
      %s219 = scalar_lea.vmem %s0, %s218
      %p220 = scmp.lt.s32.totalorder %s16, 1
      %s221 = scalar_select %p220, %s16, 1
      %s222 = smul.addr %s221, 41
      %s223 = smul.addr %s222, 8
      %s224 = scalar_lea.vmem %s5, %s223
      %vm226 = vcmask 31744
      %227 = vst.msk [vmem:[#allocation2] sm:$0xff] %vm226, 0.0
      %228 = vst.msk [vmem:[#allocation2 + $0x8] sm:$0xff] %vm226, 0.0
      %vm229 = vcmask 26624
      %230 = vst.msk [vmem:[#allocation2 + $0x10] sm:$0x7] %vm229, 0.0
      %231 = vst.msk [vmem:[#allocation2 + $0x131] sm:$0xff] %vm226, 0.0
      %232 = vst.msk [vmem:[#allocation2 + $0x139] sm:$0xff] %vm226, 0.0
      %233 = vst.msk [vmem:[#allocation2 + $0x141] sm:$0x7] %vm229, 0.0
      %234 = vst.msk [vmem:[#allocation3] sm:$0xff] %vm226, 0.0
      %235 = vst.msk [vmem:[#allocation3 + $0x8] sm:$0xff] %vm226, 0.0
      %236 = vst.msk [vmem:[#allocation3 + $0x10] sm:$0xff] %vm226, 0.0
      %237 = vst.msk [vmem:[#allocation3 + $0x18] sm:$0xff] %vm226, 0.0
      %238 = vst.msk [vmem:[#allocation3 + $0x20] sm:$0xff] %vm226, 0.0
      %239 = vst.msk [vmem:[#allocation3 + $0x28] sm:$0xff] %vm226, 0.0
      %240 = vst.msk [vmem:[#allocation3 + $0x30] sm:$0xff] %vm226, 0.0
      %241 = vst.msk [vmem:[#allocation3 + $0x38] sm:$0xff] %vm226, 0.0
      %242 = vst.msk [vmem:[#allocation3 + $0x40] sm:$0xff] %vm226, 0.0
      %243 = vst.msk [vmem:[#allocation3 + $0x48] sm:$0xff] %vm226, 0.0
      %244 = vst.msk [vmem:[#allocation3 + $0x50] sm:$0xff] %vm226, 0.0
      %245 = vst.msk [vmem:[#allocation3 + $0x58] sm:$0xff] %vm226, 0.0
      %246 = vst.msk [vmem:[#allocation3 + $0x60] sm:$0xff] %vm226, 0.0
      %247 = vst.msk [vmem:[#allocation3 + $0x68] sm:$0xff] %vm226, 0.0
      %248 = vst.msk [vmem:[#allocation3 + $0x70] sm:$0xff] %vm226, 0.0
      %249 = vst.msk [vmem:[#allocation3 + $0x78] sm:$0xff] %vm226, 0.0
      %250 = vst.msk [vmem:[#allocation3 + $0x80] sm:$0xff] %vm226, 0.0
      %251 = vst.msk [vmem:[#allocation3 + $0x88] sm:$0xff] %vm226, 0.0
      %252 = vst.msk [vmem:[#allocation3 + $0x90] sm:$0xff] %vm226, 0.0
      %253 = vst.msk [vmem:[#allocation3 + $0x98] sm:$0xff] %vm226, 0.0
      %254 = vst.msk [vmem:[#allocation3 + $0xa0] sm:$0xff] %vm226, 0.0
      %255 = vst.msk [vmem:[#allocation3 + $0xa8] sm:$0xff] %vm226, 0.0
      %256 = vst.msk [vmem:[#allocation3 + $0xb0] sm:$0xff] %vm226, 0.0
      %257 = vst.msk [vmem:[#allocation3 + $0xb8] sm:$0xff] %vm226, 0.0
      %258 = vst.msk [vmem:[#allocation3 + $0xc0] sm:$0xff] %vm226, 0.0
      %259 = vst.msk [vmem:[#allocation3 + $0xc8] sm:$0xff] %vm226, 0.0
      %260 = vst.msk [vmem:[#allocation3 + $0xd0] sm:$0xff] %vm226, 0.0
      %261 = vst.msk [vmem:[#allocation3 + $0xd8] sm:$0xff] %vm226, 0.0
      %262 = vst.msk [vmem:[#allocation3 + $0xe0] sm:$0xff] %vm226, 0.0
      %263 = vst.msk [vmem:[#allocation3 + $0xe8] sm:$0xff] %vm226, 0.0
      %264 = vst.msk [vmem:[#allocation3 + $0xf0] sm:$0xff] %vm226, 0.0
      %265 = vst.msk [vmem:[#allocation3 + $0xf8] sm:$0xff] %vm226, 0.0
      %266 = vst.msk [vmem:[#allocation3 + $0x100] sm:$0xff] %vm226, 0.0
      %267 = vst.msk [vmem:[#allocation3 + $0x108] sm:$0xff] %vm226, 0.0
      %268 = vst.msk [vmem:[#allocation3 + $0x110] sm:$0xff] %vm226, 0.0
      %vm269 = vcmask 29696
      %270 = vst.msk [vmem:[#allocation3 + $0x118] sm:$0x3f] %vm269, 0.0
      %v271 = vld [vmem:[%s219] sm:$0xff]
      %v272 = vld [vmem:[%s219 + $0x8] sm:$0xff]
      %v273 = vld [vmem:[%s219 + $0x10] sm:$0xff]
      %v274 = vld [vmem:[%s219 + $0x18] sm:$0xff]
      %v275 = vld [vmem:[%s219 + $0x20] sm:$0xff]
      %v276 = vld [vmem:[%s219 + $0x28] sm:$0xff]
      %v277 = vld [vmem:[%s219 + $0x30] sm:$0xff]
      %v278 = vld [vmem:[%s219 + $0x38] sm:$0xff]
      %v279 = vld [vmem:[%s219 + $0x40] sm:$0xff]
      %v280 = vld [vmem:[%s219 + $0x48] sm:$0xff]
      %v281 = vld [vmem:[%s219 + $0x50] sm:$0xff]
      %v282 = vld [vmem:[%s219 + $0x58] sm:$0xff]
      %v283 = vld [vmem:[%s219 + $0x60] sm:$0xff]
      %v284 = vld [vmem:[%s219 + $0x68] sm:$0xff]
      %v285 = vld [vmem:[%s219 + $0x70] sm:$0xff]
      %v286 = vld [vmem:[%s219 + $0x78] sm:$0xff]
      %v287 = vld [vmem:[%s219 + $0x80] sm:$0xff]
      %v288 = vld [vmem:[%s219 + $0x88] sm:$0xff]
      %v289 = vld [vmem:[%s219 + $0x90] sm:$0xff]
      %v290 = vld [vmem:[%s219 + $0x98] sm:$0xff]
      %v291 = vld [vmem:[%s219 + $0xa0] sm:$0xff]
      %v292 = vld [vmem:[%s219 + $0xa8] sm:$0xff]
      %v293 = vld [vmem:[%s219 + $0xb0] sm:$0xff]
      %v294 = vld [vmem:[%s219 + $0xb8] sm:$0xff]
      %v295 = vld [vmem:[%s219 + $0xc0] sm:$0xff]
      %v296 = vld [vmem:[%s219 + $0xc8] sm:$0xff]
      %v297 = vld [vmem:[%s219 + $0xd0] sm:$0xff]
      %v298 = vld [vmem:[%s219 + $0xd8] sm:$0xff]
      %v299 = vld [vmem:[%s219 + $0xe0] sm:$0xff]
      %v300 = vld [vmem:[%s219 + $0xe8] sm:$0xff]
      %v301 = vld [vmem:[%s219 + $0xf0] sm:$0xff]
      %v302 = vld [vmem:[%s219 + $0xf8] sm:$0xff]
      %v303 = vld [vmem:[%s219 + $0x100] sm:$0xff]
      %v304 = vld [vmem:[%s219 + $0x108] sm:$0xff]
      %v305 = vld [vmem:[%s219 + $0x110] sm:$0xff]
      %v306 = vld [vmem:[%s219 + $0x118] sm:$0x3f]
      %v307 = vpack.c.bf16 %v272, %v271
      %v308 = vpack.c.bf16 %v274, %v273
      %v309 = vpack.c.bf16 %v276, %v275
      %v310 = vpack.c.bf16 %v278, %v277
      %v311 = vpack.c.bf16 %v280, %v279
      %v312 = vpack.c.bf16 %v282, %v281
      %v313 = vpack.c.bf16 %v284, %v283
      %v314 = vpack.c.bf16 %v286, %v285
      %v315 = vpack.c.bf16 %v288, %v287
      %v316 = vpack.c.bf16 %v290, %v289
      %v317 = vpack.c.bf16 %v292, %v291
      %v318 = vpack.c.bf16 %v294, %v293
      %v319 = vpack.c.bf16 %v296, %v295
      %v320 = vpack.c.bf16 %v298, %v297
      %v321 = vpack.c.bf16 %v300, %v299
      %v322 = vpack.c.bf16 %v302, %v301
      %v323 = vpack.c.bf16 %v304, %v303
      %v324 = vpack.c.bf16 %v306, %v305
      %v325 = vld [vmem:[#allocation3] sm:$0xff]
      %v326 = vld [vmem:[#allocation3 + $0x8] sm:$0xff]
      %v327 = vld [vmem:[#allocation3 + $0x10] sm:$0xff]
      %v328 = vld [vmem:[#allocation3 + $0x18] sm:$0xff]
      %v329 = vld [vmem:[#allocation3 + $0x20] sm:$0xff]
      %v330 = vld [vmem:[#allocation3 + $0x28] sm:$0xff]
      %v331 = vld [vmem:[#allocation3 + $0x30] sm:$0xff]
      %v332 = vld [vmem:[#allocation3 + $0x38] sm:$0xff]
      %v333 = vld [vmem:[#allocation3 + $0x40] sm:$0xff]
      %v334 = vld [vmem:[#allocation3 + $0x48] sm:$0xff]
      %v335 = vld [vmem:[#allocation3 + $0x50] sm:$0xff]
      %v336 = vld [vmem:[#allocation3 + $0x58] sm:$0xff]
      %v337 = vld [vmem:[#allocation3 + $0x60] sm:$0xff]
      %v338 = vld [vmem:[#allocation3 + $0x68] sm:$0xff]
      %v339 = vld [vmem:[#allocation3 + $0x70] sm:$0xff]
      %v340 = vld [vmem:[#allocation3 + $0x78] sm:$0xff]
      %v341 = vld [vmem:[#allocation3 + $0x80] sm:$0xff]
      %v342 = vld [vmem:[#allocation3 + $0x88] sm:$0xff]
      %v343 = vld [vmem:[#allocation3 + $0x90] sm:$0xff]
      %v344 = vld [vmem:[#allocation3 + $0x98] sm:$0xff]
      %v345 = vld [vmem:[#allocation3 + $0xa0] sm:$0xff]
      %v346 = vld [vmem:[#allocation3 + $0xa8] sm:$0xff]
      %v347 = vld [vmem:[#allocation3 + $0xb0] sm:$0xff]
      %v348 = vld [vmem:[#allocation3 + $0xb8] sm:$0xff]
      %v349 = vld [vmem:[#allocation3 + $0xc0] sm:$0xff]
      %v350 = vld [vmem:[#allocation3 + $0xc8] sm:$0xff]
      %v351 = vld [vmem:[#allocation3 + $0xd0] sm:$0xff]
      %v352 = vld [vmem:[#allocation3 + $0xd8] sm:$0xff]
      %v353 = vld [vmem:[#allocation3 + $0xe0] sm:$0xff]
      %v354 = vld [vmem:[#allocation3 + $0xe8] sm:$0xff]
      %v355 = vld [vmem:[#allocation3 + $0xf0] sm:$0xff]
      %v356 = vld [vmem:[#allocation3 + $0xf8] sm:$0xff]
      %v357 = vld [vmem:[#allocation3 + $0x100] sm:$0xff]
      %v358 = vld [vmem:[#allocation3 + $0x108] sm:$0xff]
      %v359 = vld [vmem:[#allocation3 + $0x110] sm:$0xff]
      %v360 = vld [vmem:[#allocation3 + $0x118] sm:$0x3f]
      %v361 = vld [vmem:[%s1] sm:$0x3]
      %v363 = vsel %vm226, %v307, 0
      %v366 = vsel %vm226, %v308, 0
      %v369 = vsel %vm226, %v309, 0
      %v372 = vsel %vm226, %v310, 0
      %v375 = vsel %vm226, %v311, 0
      %v378 = vsel %vm226, %v312, 0
      %v381 = vsel %vm226, %v313, 0
      %v384 = vsel %vm226, %v314, 0
      %v387 = vsel %vm226, %v315, 0
      %v390 = vsel %vm226, %v316, 0
      %v393 = vsel %vm226, %v317, 0
      %v396 = vsel %vm226, %v318, 0
      %v399 = vsel %vm226, %v319, 0
      %v402 = vsel %vm226, %v320, 0
      %v405 = vsel %vm226, %v321, 0
      %v408 = vsel %vm226, %v322, 0
      %v411 = vsel %vm226, %v323, 0
      %v414 = vsel %vm226, %v324, 0
      %vm416 = vcmask 1041408
      %v418 = vsel %vm416, %v361, 0
      %420 = vmatprep.subr.bf16.mxu0 0
      %421 = vmatpush1.bf16.msra.mxu0 %v418
      %422 = vmatprep.subr.bf16.mxu0 0
      %423 = vmatpush1.bf16.msra.mxu0 0
      %424 = vmatprep.subr.bf16.mxu0 0
      %425 = vmatpush1.bf16.msra.mxu0 0
      %426 = vmatprep.subr.bf16.mxu0 0
      %427 = vmatpush1.bf16.msra.mxu0 0
      %428 = vmatprep.subr.bf16.mxu0 0
      %429 = vmatpush1.bf16.msra.mxu0 0
      %430 = vmatprep.subr.bf16.mxu0 0
      %431 = vmatpush1.bf16.msra.mxu0 0
      %432 = vmatprep.subr.bf16.mxu0 0
      %433 = vmatpush1.bf16.msra.mxu0 0
      %434 = vmatprep.subr.bf16.mxu0 0
      %435 = vmatpush1.bf16.msra.mxu0 0
      %436 = vmatprep.subr.bf16.mxu0 0
      %437 = vmatpush1.bf16.msra.mxu0 0
      %438 = vmatprep.subr.bf16.mxu0 0
      %439 = vmatpush1.bf16.msra.mxu0 0
      %440 = vmatprep.subr.bf16.mxu0 0
      %441 = vmatpush1.bf16.msra.mxu0 0
      %442 = vmatprep.subr.bf16.mxu0 0
      %443 = vmatpush1.bf16.msra.mxu0 0
      %444 = vmatprep.subr.bf16.mxu0 0
      %445 = vmatpush1.bf16.msra.mxu0 0
      %446 = vmatprep.subr.bf16.mxu0 0
      %447 = vmatpush1.bf16.msra.mxu0 0
      %448 = vmatprep.subr.bf16.mxu0 0
      %449 = vmatpush1.bf16.msra.mxu0 0
      %450 = vmatprep.subr.bf16.mxu0 0
      %451 = vmatpush1.bf16.msra.mxu0 0
      %452 = vmatprep.mubr.bf16.mxu0 0
      %453 = vmatmul.mubr.bf16.gmra.mrb[0].mxu0 %v363
      %v454 = vpop.f32.mrb[0].mxu0
      %v455 = vadd.f32 0.0, %v454
      %v456 = vpop.f32.mrb[0].mxu0
      %v457 = vpop.f32.mrb[0].mxu0
      %v458 = vadd.f32 0.0, %v457
      %v459 = vpop.f32.mrb[0].mxu0
      %460 = vmatprep.mubr.bf16.mxu0 0
      %461 = vmatmul.mubr.bf16.gmra.mrb[0].mxu0 %v366
      %v462 = vpop.f32.mrb[0].mxu0
      %v463 = vadd.f32 0.0, %v462
      %v464 = vpop.f32.mrb[0].mxu0
      %v465 = vpop.f32.mrb[0].mxu0
      %v466 = vadd.f32 0.0, %v465
      %v467 = vpop.f32.mrb[0].mxu0
      %468 = vmatprep.mubr.bf16.mxu0 0
      %469 = vmatmul.mubr.bf16.gmra.mrb[0].mxu0 %v369
      %v470 = vpop.f32.mrb[0].mxu0
      %v471 = vadd.f32 0.0, %v470
      %v472 = vpop.f32.mrb[0].mxu0
      %v473 = vpop.f32.mrb[0].mxu0
      %v474 = vadd.f32 0.0, %v473
      %v475 = vpop.f32.mrb[0].mxu0
      %476 = vmatprep.mubr.bf16.mxu0 0
      %477 = vmatmul.mubr.bf16.gmra.mrb[0].mxu0 %v372
      %v478 = vpop.f32.mrb[0].mxu0
      %v479 = vadd.f32 0.0, %v478
      %v480 = vpop.f32.mrb[0].mxu0
      %v481 = vpop.f32.mrb[0].mxu0
      %v482 = vadd.f32 0.0, %v481
      %v483 = vpop.f32.mrb[0].mxu0
      %484 = vmatprep.mubr.bf16.mxu0 0
      %485 = vmatmul.mubr.bf16.gmra.mrb[0].mxu0 %v375
      %v486 = vpop.f32.mrb[0].mxu0
      %v487 = vadd.f32 0.0, %v486
      %v488 = vpop.f32.mrb[0].mxu0
      %v489 = vpop.f32.mrb[0].mxu0
      %v490 = vadd.f32 0.0, %v489
      %v491 = vpop.f32.mrb[0].mxu0
      %492 = vmatprep.mubr.bf16.mxu0 0
      %493 = vmatmul.mubr.bf16.gmra.mrb[0].mxu0 %v378
      %v494 = vpop.f32.mrb[0].mxu0
      %v495 = vadd.f32 0.0, %v494
      %v496 = vpop.f32.mrb[0].mxu0
      %v497 = vpop.f32.mrb[0].mxu0
      %v498 = vadd.f32 0.0, %v497
      %v499 = vpop.f32.mrb[0].mxu0
      %500 = vmatprep.mubr.bf16.mxu0 0
      %501 = vmatmul.mubr.bf16.gmra.mrb[0].mxu0 %v381
      %v502 = vpop.f32.mrb[0].mxu0
      %v503 = vadd.f32 0.0, %v502
      %v504 = vpop.f32.mrb[0].mxu0
      %v505 = vpop.f32.mrb[0].mxu0
      %v506 = vadd.f32 0.0, %v505
      %v507 = vpop.f32.mrb[0].mxu0
      %508 = vmatprep.mubr.bf16.mxu0 0
      %509 = vmatmul.mubr.bf16.gmra.mrb[0].mxu0 %v384
      %v510 = vpop.f32.mrb[0].mxu0
      %v511 = vadd.f32 0.0, %v510
      %v512 = vpop.f32.mrb[0].mxu0
      %v513 = vpop.f32.mrb[0].mxu0
      %v514 = vadd.f32 0.0, %v513
      %v515 = vpop.f32.mrb[0].mxu0
      %516 = vmatprep.mubr.bf16.mxu0 0
      %517 = vmatmul.mubr.bf16.gmra.mrb[0].mxu0 %v387
      %v518 = vpop.f32.mrb[0].mxu0
      %v519 = vadd.f32 0.0, %v518
      %v520 = vpop.f32.mrb[0].mxu0
      %v521 = vpop.f32.mrb[0].mxu0
      %v522 = vadd.f32 0.0, %v521
      %v523 = vpop.f32.mrb[0].mxu0
      %524 = vmatprep.mubr.bf16.mxu0 0
      %525 = vmatmul.mubr.bf16.gmra.mrb[0].mxu0 %v390
      %v526 = vpop.f32.mrb[0].mxu0
      %v527 = vadd.f32 0.0, %v526
      %v528 = vpop.f32.mrb[0].mxu0
      %v529 = vpop.f32.mrb[0].mxu0
      %v530 = vadd.f32 0.0, %v529
      %v531 = vpop.f32.mrb[0].mxu0
      %532 = vmatprep.mubr.bf16.mxu0 0
      %533 = vmatmul.mubr.bf16.gmra.mrb[0].mxu0 %v393
      %v534 = vpop.f32.mrb[0].mxu0
      %v535 = vadd.f32 0.0, %v534
      %v536 = vpop.f32.mrb[0].mxu0
      %v537 = vpop.f32.mrb[0].mxu0
      %v538 = vadd.f32 0.0, %v537
      %v539 = vpop.f32.mrb[0].mxu0
      %540 = vmatprep.mubr.bf16.mxu0 0
      %541 = vmatmul.mubr.bf16.gmra.mrb[0].mxu0 %v396
      %v542 = vpop.f32.mrb[0].mxu0
      %v543 = vadd.f32 0.0, %v542
      %v544 = vpop.f32.mrb[0].mxu0
      %v545 = vpop.f32.mrb[0].mxu0
      %v546 = vadd.f32 0.0, %v545
      %v547 = vpop.f32.mrb[0].mxu0
      %548 = vmatprep.mubr.bf16.mxu0 0
      %549 = vmatmul.mubr.bf16.gmra.mrb[0].mxu0 %v399
      %v550 = vpop.f32.mrb[0].mxu0
      %v551 = vadd.f32 0.0, %v550
      %v552 = vpop.f32.mrb[0].mxu0
      %v553 = vpop.f32.mrb[0].mxu0
      %v554 = vadd.f32 0.0, %v553
      %v555 = vpop.f32.mrb[0].mxu0
      %556 = vmatprep.mubr.bf16.mxu0 0
      %557 = vmatmul.mubr.bf16.gmra.mrb[0].mxu0 %v402
      %v558 = vpop.f32.mrb[0].mxu0
      %v559 = vadd.f32 0.0, %v558
      %v560 = vpop.f32.mrb[0].mxu0
      %v561 = vpop.f32.mrb[0].mxu0
      %v562 = vadd.f32 0.0, %v561
      %v563 = vpop.f32.mrb[0].mxu0
      %564 = vmatprep.mubr.bf16.mxu0 0
      %565 = vmatmul.mubr.bf16.gmra.mrb[0].mxu0 %v405
      %v566 = vpop.f32.mrb[0].mxu0
      %v567 = vadd.f32 0.0, %v566
      %v568 = vpop.f32.mrb[0].mxu0
      %v569 = vpop.f32.mrb[0].mxu0
      %v570 = vadd.f32 0.0, %v569
      %v571 = vpop.f32.mrb[0].mxu0
      %572 = vmatprep.mubr.bf16.mxu0 0
      %573 = vmatmul.mubr.bf16.gmra.mrb[0].mxu0 %v408
      %v574 = vpop.f32.mrb[0].mxu0
      %v575 = vadd.f32 0.0, %v574
      %v576 = vpop.f32.mrb[0].mxu0
      %v577 = vpop.f32.mrb[0].mxu0
      %v578 = vadd.f32 0.0, %v577
      %v579 = vpop.f32.mrb[0].mxu0
      %580 = vmatprep.mubr.bf16.mxu0 0
      %581 = vmatmul.mubr.bf16.gmra.mrb[0].mxu0 %v411
      %v582 = vpop.f32.mrb[0].mxu0
      %v583 = vadd.f32 0.0, %v582
      %v584 = vpop.f32.mrb[0].mxu0
      %v585 = vpop.f32.mrb[0].mxu0
      %v586 = vadd.f32 0.0, %v585
      %v587 = vpop.f32.mrb[0].mxu0
      %588 = vmatprep.mubr.bf16.mxu0 0
      %589 = vmatmul.mubr.bf16.gmra.mrb[0].mxu0 %v414
      %v590 = vpop.f32.mrb[0].mxu0
      %v591 = vadd.f32 0.0, %v590
      %v592 = vpop.f32.mrb[0].mxu0
      %v593 = vpop.f32.mrb[0].mxu0
      %v594 = vadd.f32 0.0, %v593
      %v595 = vpop.f32.mrb[0].mxu0
      %596 = vdwg.mxu0
      %v597 = vadd.f32 %v325, %v455
      %v598 = vadd.f32 %v326, %v458
      %v599 = vadd.f32 %v327, %v463
      %v600 = vadd.f32 %v328, %v466
      %v601 = vadd.f32 %v329, %v471
      %v602 = vadd.f32 %v330, %v474
      %v603 = vadd.f32 %v331, %v479
      %v604 = vadd.f32 %v332, %v482
      %v605 = vadd.f32 %v333, %v487
      %v606 = vadd.f32 %v334, %v490
      %v607 = vadd.f32 %v335, %v495
      %v608 = vadd.f32 %v336, %v498
      %v609 = vadd.f32 %v337, %v503
      %v610 = vadd.f32 %v338, %v506
      %v611 = vadd.f32 %v339, %v511
      %v612 = vadd.f32 %v340, %v514
      %v613 = vadd.f32 %v341, %v519
      %v614 = vadd.f32 %v342, %v522
      %v615 = vadd.f32 %v343, %v527
      %v616 = vadd.f32 %v344, %v530
      %v617 = vadd.f32 %v345, %v535
      %v618 = vadd.f32 %v346, %v538
      %v619 = vadd.f32 %v347, %v543
      %v620 = vadd.f32 %v348, %v546
      %v621 = vadd.f32 %v349, %v551
      %v622 = vadd.f32 %v350, %v554
      %v623 = vadd.f32 %v351, %v559
      %v624 = vadd.f32 %v352, %v562
      %v625 = vadd.f32 %v353, %v567
      %v626 = vadd.f32 %v354, %v570
      %v627 = vadd.f32 %v355, %v575
      %v628 = vadd.f32 %v356, %v578
      %v629 = vadd.f32 %v357, %v583
      %v630 = vadd.f32 %v358, %v586
      %v631 = vadd.f32 %v359, %v591
      %v632 = vadd.f32 %v360, %v594
      %633 = vst.msk [vmem:[#allocation3] sm:$0xff] %vm226, %v597
      %634 = vst.msk [vmem:[#allocation3 + $0x8] sm:$0xff] %vm226, %v598
      %635 = vst.msk [vmem:[#allocation3 + $0x10] sm:$0xff] %vm226, %v599
      %636 = vst.msk [vmem:[#allocation3 + $0x18] sm:$0xff] %vm226, %v600
      %637 = vst.msk [vmem:[#allocation3 + $0x20] sm:$0xff] %vm226, %v601
      %638 = vst.msk [vmem:[#allocation3 + $0x28] sm:$0xff] %vm226, %v602
      %639 = vst.msk [vmem:[#allocation3 + $0x30] sm:$0xff] %vm226, %v603
      %640 = vst.msk [vmem:[#allocation3 + $0x38] sm:$0xff] %vm226, %v604
      %641 = vst.msk [vmem:[#allocation3 + $0x40] sm:$0xff] %vm226, %v605
      %642 = vst.msk [vmem:[#allocation3 + $0x48] sm:$0xff] %vm226, %v606
      %643 = vst.msk [vmem:[#allocation3 + $0x50] sm:$0xff] %vm226, %v607
      %644 = vst.msk [vmem:[#allocation3 + $0x58] sm:$0xff] %vm226, %v608
      %645 = vst.msk [vmem:[#allocation3 + $0x60] sm:$0xff] %vm226, %v609
      %646 = vst.msk [vmem:[#allocation3 + $0x68] sm:$0xff] %vm226, %v610
      %647 = vst.msk [vmem:[#allocation3 + $0x70] sm:$0xff] %vm226, %v611
      %648 = vst.msk [vmem:[#allocation3 + $0x78] sm:$0xff] %vm226, %v612
      %649 = vst.msk [vmem:[#allocation3 + $0x80] sm:$0xff] %vm226, %v613
      %650 = vst.msk [vmem:[#allocation3 + $0x88] sm:$0xff] %vm226, %v614
      %651 = vst.msk [vmem:[#allocation3 + $0x90] sm:$0xff] %vm226, %v615
      %652 = vst.msk [vmem:[#allocation3 + $0x98] sm:$0xff] %vm226, %v616
      %653 = vst.msk [vmem:[#allocation3 + $0xa0] sm:$0xff] %vm226, %v617
      %654 = vst.msk [vmem:[#allocation3 + $0xa8] sm:$0xff] %vm226, %v618
      %655 = vst.msk [vmem:[#allocation3 + $0xb0] sm:$0xff] %vm226, %v619
      %656 = vst.msk [vmem:[#allocation3 + $0xb8] sm:$0xff] %vm226, %v620
      %657 = vst.msk [vmem:[#allocation3 + $0xc0] sm:$0xff] %vm226, %v621
      %658 = vst.msk [vmem:[#allocation3 + $0xc8] sm:$0xff] %vm226, %v622
      %659 = vst.msk [vmem:[#allocation3 + $0xd0] sm:$0xff] %vm226, %v623
      %660 = vst.msk [vmem:[#allocation3 + $0xd8] sm:$0xff] %vm226, %v624
      %661 = vst.msk [vmem:[#allocation3 + $0xe0] sm:$0xff] %vm226, %v625
      %662 = vst.msk [vmem:[#allocation3 + $0xe8] sm:$0xff] %vm226, %v626
      %663 = vst.msk [vmem:[#allocation3 + $0xf0] sm:$0xff] %vm226, %v627
      %664 = vst.msk [vmem:[#allocation3 + $0xf8] sm:$0xff] %vm226, %v628
      %665 = vst.msk [vmem:[#allocation3 + $0x100] sm:$0xff] %vm226, %v629
      %666 = vst.msk [vmem:[#allocation3 + $0x108] sm:$0xff] %vm226, %v630
      %667 = vst.msk [vmem:[#allocation3 + $0x110] sm:$0xff] %vm226, %v631
      %668 = vst.msk [vmem:[#allocation3 + $0x118] sm:$0x3f] %vm269, %v632
      %v669 = vld [vmem:[%s219 + $0x1] sm:$0xff]
      %v670 = vld [vmem:[%s219 + $0x9] sm:$0xff]
      %v671 = vld [vmem:[%s219 + $0x11] sm:$0xff]
      %v672 = vld [vmem:[%s219 + $0x19] sm:$0xff]
      %v673 = vld [vmem:[%s219 + $0x21] sm:$0xff]
      %v674 = vld [vmem:[%s219 + $0x29] sm:$0xff]
      %v675 = vld [vmem:[%s219 + $0x31] sm:$0xff]
      %v676 = vld [vmem:[%s219 + $0x39] sm:$0xff]
      %v677 = vld [vmem:[%s219 + $0x41] sm:$0xff]
      %v678 = vld [vmem:[%s219 + $0x49] sm:$0xff]
      %v679 = vld [vmem:[%s219 + $0x51] sm:$0xff]
      %v680 = vld [vmem:[%s219 + $0x59] sm:$0xff]
      %v681 = vld [vmem:[%s219 + $0x61] sm:$0xff]
      %v682 = vld [vmem:[%s219 + $0x69] sm:$0xff]
      %v683 = vld [vmem:[%s219 + $0x71] sm:$0xff]
      %v684 = vld [vmem:[%s219 + $0x79] sm:$0xff]
      %v685 = vld [vmem:[%s219 + $0x81] sm:$0xff]
      %v686 = vld [vmem:[%s219 + $0x89] sm:$0xff]
      %v687 = vld [vmem:[%s219 + $0x91] sm:$0xff]
      %v688 = vld [vmem:[%s219 + $0x99] sm:$0xff]
      %v689 = vld [vmem:[%s219 + $0xa1] sm:$0xff]
      %v690 = vld [vmem:[%s219 + $0xa9] sm:$0xff]
      %v691 = vld [vmem:[%s219 + $0xb1] sm:$0xff]
      %v692 = vld [vmem:[%s219 + $0xb9] sm:$0xff]
      %v693 = vld [vmem:[%s219 + $0xc1] sm:$0xff]
      %v694 = vld [vmem:[%s219 + $0xc9] sm:$0xff]
      %v695 = vld [vmem:[%s219 + $0xd1] sm:$0xff]
      %v696 = vld [vmem:[%s219 + $0xd9] sm:$0xff]
      %v697 = vld [vmem:[%s219 + $0xe1] sm:$0xff]
      %v698 = vld [vmem:[%s219 + $0xe9] sm:$0xff]
      %v699 = vld [vmem:[%s219 + $0xf1] sm:$0xff]
      %v700 = vld [vmem:[%s219 + $0xf9] sm:$0xff]
      %v701 = vld [vmem:[%s219 + $0x101] sm:$0xff]
      %v702 = vld [vmem:[%s219 + $0x109] sm:$0xff]
      %v703 = vld [vmem:[%s219 + $0x111] sm:$0xff]
      %v704 = vld [vmem:[%s219 + $0x119] sm:$0x3f]
      %v705 = vpack.c.bf16 %v670, %v669
      %v706 = vpack.c.bf16 %v672, %v671
      %v707 = vpack.c.bf16 %v674, %v673
      %v708 = vpack.c.bf16 %v676, %v675
      %v709 = vpack.c.bf16 %v678, %v677
      %v710 = vpack.c.bf16 %v680, %v679
      %v711 = vpack.c.bf16 %v682, %v681
      %v712 = vpack.c.bf16 %v684, %v683
      %v713 = vpack.c.bf16 %v686, %v685
      %v714 = vpack.c.bf16 %v688, %v687
      %v715 = vpack.c.bf16 %v690, %v689
      %v716 = vpack.c.bf16 %v692, %v691
      %v717 = vpack.c.bf16 %v694, %v693
      %v718 = vpack.c.bf16 %v696, %v695
      %v719 = vpack.c.bf16 %v698, %v697
      %v720 = vpack.c.bf16 %v700, %v699
      %v721 = vpack.c.bf16 %v702, %v701
      %v722 = vpack.c.bf16 %v704, %v703
      %v723 = vld [vmem:[#allocation3] sm:$0xff]
      %v724 = vld [vmem:[#allocation3 + $0x8] sm:$0xff]
      %v725 = vld [vmem:[#allocation3 + $0x10] sm:$0xff]
      %v726 = vld [vmem:[#allocation3 + $0x18] sm:$0xff]
      %v727 = vld [vmem:[#allocation3 + $0x20] sm:$0xff]
      %v728 = vld [vmem:[#allocation3 + $0x28] sm:$0xff]
      %v729 = vld [vmem:[#allocation3 + $0x30] sm:$0xff]
      %v730 = vld [vmem:[#allocation3 + $0x38] sm:$0xff]
      %v731 = vld [vmem:[#allocation3 + $0x40] sm:$0xff]
      %v732 = vld [vmem:[#allocation3 + $0x48] sm:$0xff]
      %v733 = vld [vmem:[#allocation3 + $0x50] sm:$0xff]
      %v734 = vld [vmem:[#allocation3 + $0x58] sm:$0xff]
      %v735 = vld [vmem:[#allocation3 + $0x60] sm:$0xff]
      %v736 = vld [vmem:[#allocation3 + $0x68] sm:$0xff]
      %v737 = vld [vmem:[#allocation3 + $0x70] sm:$0xff]
      %v738 = vld [vmem:[#allocation3 + $0x78] sm:$0xff]
      %v739 = vld [vmem:[#allocation3 + $0x80] sm:$0xff]
      %v740 = vld [vmem:[#allocation3 + $0x88] sm:$0xff]
      %v741 = vld [vmem:[#allocation3 + $0x90] sm:$0xff]
      %v742 = vld [vmem:[#allocation3 + $0x98] sm:$0xff]
      %v743 = vld [vmem:[#allocation3 + $0xa0] sm:$0xff]
      %v744 = vld [vmem:[#allocation3 + $0xa8] sm:$0xff]
      %v745 = vld [vmem:[#allocation3 + $0xb0] sm:$0xff]
      %v746 = vld [vmem:[#allocation3 + $0xb8] sm:$0xff]
      %v747 = vld [vmem:[#allocation3 + $0xc0] sm:$0xff]
      %v748 = vld [vmem:[#allocation3 + $0xc8] sm:$0xff]
      %v749 = vld [vmem:[#allocation3 + $0xd0] sm:$0xff]
      %v750 = vld [vmem:[#allocation3 + $0xd8] sm:$0xff]
      %v751 = vld [vmem:[#allocation3 + $0xe0] sm:$0xff]
      %v752 = vld [vmem:[#allocation3 + $0xe8] sm:$0xff]
      %v753 = vld [vmem:[#allocation3 + $0xf0] sm:$0xff]
      %v754 = vld [vmem:[#allocation3 + $0xf8] sm:$0xff]
      %v755 = vld [vmem:[#allocation3 + $0x100] sm:$0xff]
      %v756 = vld [vmem:[#allocation3 + $0x108] sm:$0xff]
      %v757 = vld [vmem:[#allocation3 + $0x110] sm:$0xff]
      %v758 = vld [vmem:[#allocation3 + $0x118] sm:$0x3f]
      %s759 = scalar_lea.vmem %s1, 2
      %v760 = vld [vmem:[%s759] sm:$0x3]
      %v762 = vsel %vm226, %v705, 0
      %v765 = vsel %vm226, %v706, 0
      %v768 = vsel %vm226, %v707, 0
      %v771 = vsel %vm226, %v708, 0
      %v774 = vsel %vm226, %v709, 0
      %v777 = vsel %vm226, %v710, 0
      %v780 = vsel %vm226, %v711, 0
      %v783 = vsel %vm226, %v712, 0
      %v786 = vsel %vm226, %v713, 0
      %v789 = vsel %vm226, %v714, 0
      %v792 = vsel %vm226, %v715, 0
      %v795 = vsel %vm226, %v716, 0
      %v798 = vsel %vm226, %v717, 0
      %v801 = vsel %vm226, %v718, 0
      %v804 = vsel %vm226, %v719, 0
      %v807 = vsel %vm226, %v720, 0
      %v810 = vsel %vm226, %v721, 0
      %v813 = vsel %vm226, %v722, 0
      %v816 = vsel %vm416, %v760, 0
      %818 = vmatprep.subr.bf16.mxu0 0
      %819 = vmatpush1.bf16.msra.mxu0 %v816
      %820 = vmatprep.subr.bf16.mxu0 0
      %821 = vmatpush1.bf16.msra.mxu0 0
      %822 = vmatprep.subr.bf16.mxu0 0
      %823 = vmatpush1.bf16.msra.mxu0 0
      %824 = vmatprep.subr.bf16.mxu0 0
      %825 = vmatpush1.bf16.msra.mxu0 0
      %826 = vmatprep.subr.bf16.mxu0 0
      %827 = vmatpush1.bf16.msra.mxu0 0
      %828 = vmatprep.subr.bf16.mxu0 0
      %829 = vmatpush1.bf16.msra.mxu0 0
      %830 = vmatprep.subr.bf16.mxu0 0
      %831 = vmatpush1.bf16.msra.mxu0 0
      %832 = vmatprep.subr.bf16.mxu0 0
      %833 = vmatpush1.bf16.msra.mxu0 0
      %834 = vmatprep.subr.bf16.mxu0 0
      %835 = vmatpush1.bf16.msra.mxu0 0
      %836 = vmatprep.subr.bf16.mxu0 0
      %837 = vmatpush1.bf16.msra.mxu0 0
      %838 = vmatprep.subr.bf16.mxu0 0
      %839 = vmatpush1.bf16.msra.mxu0 0
      %840 = vmatprep.subr.bf16.mxu0 0
      %841 = vmatpush1.bf16.msra.mxu0 0
      %842 = vmatprep.subr.bf16.mxu0 0
      %843 = vmatpush1.bf16.msra.mxu0 0
      %844 = vmatprep.subr.bf16.mxu0 0
      %845 = vmatpush1.bf16.msra.mxu0 0
      %846 = vmatprep.subr.bf16.mxu0 0
      %847 = vmatpush1.bf16.msra.mxu0 0
      %848 = vmatprep.subr.bf16.mxu0 0
      %849 = vmatpush1.bf16.msra.mxu0 0
      %850 = vmatprep.mubr.bf16.mxu0 0
      %851 = vmatmul.mubr.bf16.gmra.mrb[0].mxu0 %v762
      %v852 = vpop.f32.mrb[0].mxu0
      %v853 = vadd.f32 0.0, %v852
      %v854 = vpop.f32.mrb[0].mxu0
      %v855 = vpop.f32.mrb[0].mxu0
      %v856 = vadd.f32 0.0, %v855
      %v857 = vpop.f32.mrb[0].mxu0
      %858 = vmatprep.mubr.bf16.mxu0 0
      %859 = vmatmul.mubr.bf16.gmra.mrb[0].mxu0 %v765
      %v860 = vpop.f32.mrb[0].mxu0
      %v861 = vadd.f32 0.0, %v860
      %v862 = vpop.f32.mrb[0].mxu0
      %v863 = vpop.f32.mrb[0].mxu0
      %v864 = vadd.f32 0.0, %v863
      %v865 = vpop.f32.mrb[0].mxu0
      %866 = vmatprep.mubr.bf16.mxu0 0
      %867 = vmatmul.mubr.bf16.gmra.mrb[0].mxu0 %v768
      %v868 = vpop.f32.mrb[0].mxu0
      %v869 = vadd.f32 0.0, %v868
      %v870 = vpop.f32.mrb[0].mxu0
      %v871 = vpop.f32.mrb[0].mxu0
      %v872 = vadd.f32 0.0, %v871
      %v873 = vpop.f32.mrb[0].mxu0
      %874 = vmatprep.mubr.bf16.mxu0 0
      %875 = vmatmul.mubr.bf16.gmra.mrb[0].mxu0 %v771
      %v876 = vpop.f32.mrb[0].mxu0
      %v877 = vadd.f32 0.0, %v876
      %v878 = vpop.f32.mrb[0].mxu0
      %v879 = vpop.f32.mrb[0].mxu0
      %v880 = vadd.f32 0.0, %v879
      %v881 = vpop.f32.mrb[0].mxu0
      %882 = vmatprep.mubr.bf16.mxu0 0
      %883 = vmatmul.mubr.bf16.gmra.mrb[0].mxu0 %v774
      %v884 = vpop.f32.mrb[0].mxu0
      %v885 = vadd.f32 0.0, %v884
      %v886 = vpop.f32.mrb[0].mxu0
      %v887 = vpop.f32.mrb[0].mxu0
      %v888 = vadd.f32 0.0, %v887
      %v889 = vpop.f32.mrb[0].mxu0
      %890 = vmatprep.mubr.bf16.mxu0 0
      %891 = vmatmul.mubr.bf16.gmra.mrb[0].mxu0 %v777
      %v892 = vpop.f32.mrb[0].mxu0
      %v893 = vadd.f32 0.0, %v892
      %v894 = vpop.f32.mrb[0].mxu0
      %v895 = vpop.f32.mrb[0].mxu0
      %v896 = vadd.f32 0.0, %v895
      %v897 = vpop.f32.mrb[0].mxu0
      %898 = vmatprep.mubr.bf16.mxu0 0
      %899 = vmatmul.mubr.bf16.gmra.mrb[0].mxu0 %v780
      %v900 = vpop.f32.mrb[0].mxu0
      %v901 = vadd.f32 0.0, %v900
      %v902 = vpop.f32.mrb[0].mxu0
      %v903 = vpop.f32.mrb[0].mxu0
      %v904 = vadd.f32 0.0, %v903
      %v905 = vpop.f32.mrb[0].mxu0
      %906 = vmatprep.mubr.bf16.mxu0 0
      %907 = vmatmul.mubr.bf16.gmra.mrb[0].mxu0 %v783
      %v908 = vpop.f32.mrb[0].mxu0
      %v909 = vadd.f32 0.0, %v908
      %v910 = vpop.f32.mrb[0].mxu0
      %v911 = vpop.f32.mrb[0].mxu0
      %v912 = vadd.f32 0.0, %v911
      %v913 = vpop.f32.mrb[0].mxu0
      %914 = vmatprep.mubr.bf16.mxu0 0
      %915 = vmatmul.mubr.bf16.gmra.mrb[0].mxu0 %v786
      %v916 = vpop.f32.mrb[0].mxu0
      %v917 = vadd.f32 0.0, %v916
      %v918 = vpop.f32.mrb[0].mxu0
      %v919 = vpop.f32.mrb[0].mxu0
      %v920 = vadd.f32 0.0, %v919
      %v921 = vpop.f32.mrb[0].mxu0
      %922 = vmatprep.mubr.bf16.mxu0 0
      %923 = vmatmul.mubr.bf16.gmra.mrb[0].mxu0 %v789
      %v924 = vpop.f32.mrb[0].mxu0
      %v925 = vadd.f32 0.0, %v924
      %v926 = vpop.f32.mrb[0].mxu0
      %v927 = vpop.f32.mrb[0].mxu0
      %v928 = vadd.f32 0.0, %v927
      %v929 = vpop.f32.mrb[0].mxu0
      %930 = vmatprep.mubr.bf16.mxu0 0
      %931 = vmatmul.mubr.bf16.gmra.mrb[0].mxu0 %v792
      %v932 = vpop.f32.mrb[0].mxu0
      %v933 = vadd.f32 0.0, %v932
      %v934 = vpop.f32.mrb[0].mxu0
      %v935 = vpop.f32.mrb[0].mxu0
      %v936 = vadd.f32 0.0, %v935
      %v937 = vpop.f32.mrb[0].mxu0
      %938 = vmatprep.mubr.bf16.mxu0 0
      %939 = vmatmul.mubr.bf16.gmra.mrb[0].mxu0 %v795
      %v940 = vpop.f32.mrb[0].mxu0
      %v941 = vadd.f32 0.0, %v940
      %v942 = vpop.f32.mrb[0].mxu0
      %v943 = vpop.f32.mrb[0].mxu0
      %v944 = vadd.f32 0.0, %v943
      %v945 = vpop.f32.mrb[0].mxu0
      %946 = vmatprep.mubr.bf16.mxu0 0
      %947 = vmatmul.mubr.bf16.gmra.mrb[0].mxu0 %v798
      %v948 = vpop.f32.mrb[0].mxu0
      %v949 = vadd.f32 0.0, %v948
      %v950 = vpop.f32.mrb[0].mxu0
      %v951 = vpop.f32.mrb[0].mxu0
      %v952 = vadd.f32 0.0, %v951
      %v953 = vpop.f32.mrb[0].mxu0
      %954 = vmatprep.mubr.bf16.mxu0 0
      %955 = vmatmul.mubr.bf16.gmra.mrb[0].mxu0 %v801
      %v956 = vpop.f32.mrb[0].mxu0
      %v957 = vadd.f32 0.0, %v956
      %v958 = vpop.f32.mrb[0].mxu0
      %v959 = vpop.f32.mrb[0].mxu0
      %v960 = vadd.f32 0.0, %v959
      %v961 = vpop.f32.mrb[0].mxu0
      %962 = vmatprep.mubr.bf16.mxu0 0
      %963 = vmatmul.mubr.bf16.gmra.mrb[0].mxu0 %v804
      %v964 = vpop.f32.mrb[0].mxu0
      %v965 = vadd.f32 0.0, %v964
      %v966 = vpop.f32.mrb[0].mxu0
      %v967 = vpop.f32.mrb[0].mxu0
      %v968 = vadd.f32 0.0, %v967
      %v969 = vpop.f32.mrb[0].mxu0
      %970 = vmatprep.mubr.bf16.mxu0 0
      %971 = vmatmul.mubr.bf16.gmra.mrb[0].mxu0 %v807
      %v972 = vpop.f32.mrb[0].mxu0
      %v973 = vadd.f32 0.0, %v972
      %v974 = vpop.f32.mrb[0].mxu0
      %v975 = vpop.f32.mrb[0].mxu0
      %v976 = vadd.f32 0.0, %v975
      %v977 = vpop.f32.mrb[0].mxu0
      %978 = vmatprep.mubr.bf16.mxu0 0
      %979 = vmatmul.mubr.bf16.gmra.mrb[0].mxu0 %v810
      %v980 = vpop.f32.mrb[0].mxu0
      %v981 = vadd.f32 0.0, %v980
      %v982 = vpop.f32.mrb[0].mxu0
      %v983 = vpop.f32.mrb[0].mxu0
      %v984 = vadd.f32 0.0, %v983
      %v985 = vpop.f32.mrb[0].mxu0
      %986 = vmatprep.mubr.bf16.mxu0 0
      %987 = vmatmul.mubr.bf16.gmra.mrb[0].mxu0 %v813
      %v988 = vpop.f32.mrb[0].mxu0
      %v989 = vadd.f32 0.0, %v988
      %v990 = vpop.f32.mrb[0].mxu0
      %v991 = vpop.f32.mrb[0].mxu0
      %v992 = vadd.f32 0.0, %v991
      %v993 = vpop.f32.mrb[0].mxu0
      %994 = vdwg.mxu0
      %v995 = vadd.f32 %v723, %v853
      %v996 = vadd.f32 %v724, %v856
      %v997 = vadd.f32 %v725, %v861
      %v998 = vadd.f32 %v726, %v864
      %v999 = vadd.f32 %v727, %v869
      %v1000 = vadd.f32 %v728, %v872
      %v1001 = vadd.f32 %v729, %v877
      %v1002 = vadd.f32 %v730, %v880
      %v1003 = vadd.f32 %v731, %v885
      %v1004 = vadd.f32 %v732, %v888
      %v1005 = vadd.f32 %v733, %v893
      %v1006 = vadd.f32 %v734, %v896
      %v1007 = vadd.f32 %v735, %v901
      %v1008 = vadd.f32 %v736, %v904
      %v1009 = vadd.f32 %v737, %v909
      %v1010 = vadd.f32 %v738, %v912
      %v1011 = vadd.f32 %v739, %v917
      %v1012 = vadd.f32 %v740, %v920
      %v1013 = vadd.f32 %v741, %v925
      %v1014 = vadd.f32 %v742, %v928
      %v1015 = vadd.f32 %v743, %v933
      %v1016 = vadd.f32 %v744, %v936
      %v1017 = vadd.f32 %v745, %v941
      %v1018 = vadd.f32 %v746, %v944
      %v1019 = vadd.f32 %v747, %v949
      %v1020 = vadd.f32 %v748, %v952
      %v1021 = vadd.f32 %v749, %v957
      %v1022 = vadd.f32 %v750, %v960
      %v1023 = vadd.f32 %v751, %v965
      %v1024 = vadd.f32 %v752, %v968
      %v1025 = vadd.f32 %v753, %v973
      %v1026 = vadd.f32 %v754, %v976
      %v1027 = vadd.f32 %v755, %v981
      %v1028 = vadd.f32 %v756, %v984
      %v1029 = vadd.f32 %v757, %v989
      %v1030 = vadd.f32 %v758, %v992
      %1031 = vst.msk [vmem:[#allocation3] sm:$0xff] %vm226, %v995
      %1032 = vst.msk [vmem:[#allocation3 + $0x8] sm:$0xff] %vm226, %v996
      %1033 = vst.msk [vmem:[#allocation3 + $0x10] sm:$0xff] %vm226, %v997
      %1034 = vst.msk [vmem:[#allocation3 + $0x18] sm:$0xff] %vm226, %v998
      %1035 = vst.msk [vmem:[#allocation3 + $0x20] sm:$0xff] %vm226, %v999
      %1036 = vst.msk [vmem:[#allocation3 + $0x28] sm:$0xff] %vm226, %v1000
      %1037 = vst.msk [vmem:[#allocation3 + $0x30] sm:$0xff] %vm226, %v1001
      %1038 = vst.msk [vmem:[#allocation3 + $0x38] sm:$0xff] %vm226, %v1002
      %1039 = vst.msk [vmem:[#allocation3 + $0x40] sm:$0xff] %vm226, %v1003
      %1040 = vst.msk [vmem:[#allocation3 + $0x48] sm:$0xff] %vm226, %v1004
      %1041 = vst.msk [vmem:[#allocation3 + $0x50] sm:$0xff] %vm226, %v1005
      %1042 = vst.msk [vmem:[#allocation3 + $0x58] sm:$0xff] %vm226, %v1006
      %1043 = vst.msk [vmem:[#allocation3 + $0x60] sm:$0xff] %vm226, %v1007
      %1044 = vst.msk [vmem:[#allocation3 + $0x68] sm:$0xff] %vm226, %v1008
      %1045 = vst.msk [vmem:[#allocation3 + $0x70] sm:$0xff] %vm226, %v1009
      %1046 = vst.msk [vmem:[#allocation3 + $0x78] sm:$0xff] %vm226, %v1010
      %1047 = vst.msk [vmem:[#allocation3 + $0x80] sm:$0xff] %vm226, %v1011
      %1048 = vst.msk [vmem:[#allocation3 + $0x88] sm:$0xff] %vm226, %v1012
      %1049 = vst.msk [vmem:[#allocation3 + $0x90] sm:$0xff] %vm226, %v1013
      %1050 = vst.msk [vmem:[#allocation3 + $0x98] sm:$0xff] %vm226, %v1014
      %1051 = vst.msk [vmem:[#allocation3 + $0xa0] sm:$0xff] %vm226, %v1015
      %1052 = vst.msk [vmem:[#allocation3 + $0xa8] sm:$0xff] %vm226, %v1016
      %1053 = vst.msk [vmem:[#allocation3 + $0xb0] sm:$0xff] %vm226, %v1017
      %1054 = vst.msk [vmem:[#allocation3 + $0xb8] sm:$0xff] %vm226, %v1018
      %1055 = vst.msk [vmem:[#allocation3 + $0xc0] sm:$0xff] %vm226, %v1019
      %1056 = vst.msk [vmem:[#allocation3 + $0xc8] sm:$0xff] %vm226, %v1020
      %1057 = vst.msk [vmem:[#allocation3 + $0xd0] sm:$0xff] %vm226, %v1021
      %1058 = vst.msk [vmem:[#allocation3 + $0xd8] sm:$0xff] %vm226, %v1022
      %1059 = vst.msk [vmem:[#allocation3 + $0xe0] sm:$0xff] %vm226, %v1023
      %1060 = vst.msk [vmem:[#allocation3 + $0xe8] sm:$0xff] %vm226, %v1024
      %1061 = vst.msk [vmem:[#allocation3 + $0xf0] sm:$0xff] %vm226, %v1025
      %1062 = vst.msk [vmem:[#allocation3 + $0xf8] sm:$0xff] %vm226, %v1026
      %1063 = vst.msk [vmem:[#allocation3 + $0x100] sm:$0xff] %vm226, %v1027
      %1064 = vst.msk [vmem:[#allocation3 + $0x108] sm:$0xff] %vm226, %v1028
      %1065 = vst.msk [vmem:[#allocation3 + $0x110] sm:$0xff] %vm226, %v1029
      %1066 = vst.msk [vmem:[#allocation3 + $0x118] sm:$0x3f] %vm269, %v1030
      %v1067 = vld [vmem:[%s219 + $0x2] sm:$0xff]
      %v1068 = vld [vmem:[%s219 + $0xa] sm:$0xff]
      %v1069 = vld [vmem:[%s219 + $0x12] sm:$0xff]
      %v1070 = vld [vmem:[%s219 + $0x1a] sm:$0xff]
      %v1071 = vld [vmem:[%s219 + $0x22] sm:$0xff]
      %v1072 = vld [vmem:[%s219 + $0x2a] sm:$0xff]
      %v1073 = vld [vmem:[%s219 + $0x32] sm:$0xff]
      %v1074 = vld [vmem:[%s219 + $0x3a] sm:$0xff]
      %v1075 = vld [vmem:[%s219 + $0x42] sm:$0xff]
      %v1076 = vld [vmem:[%s219 + $0x4a] sm:$0xff]
      %v1077 = vld [vmem:[%s219 + $0x52] sm:$0xff]
      %v1078 = vld [vmem:[%s219 + $0x5a] sm:$0xff]
      %v1079 = vld [vmem:[%s219 + $0x62] sm:$0xff]
      %v1080 = vld [vmem:[%s219 + $0x6a] sm:$0xff]
      %v1081 = vld [vmem:[%s219 + $0x72] sm:$0xff]
      %v1082 = vld [vmem:[%s219 + $0x7a] sm:$0xff]
      %v1083 = vld [vmem:[%s219 + $0x82] sm:$0xff]
      %v1084 = vld [vmem:[%s219 + $0x8a] sm:$0xff]
      %v1085 = vld [vmem:[%s219 + $0x92] sm:$0xff]
      %v1086 = vld [vmem:[%s219 + $0x9a] sm:$0xff]
      %v1087 = vld [vmem:[%s219 + $0xa2] sm:$0xff]
      %v1088 = vld [vmem:[%s219 + $0xaa] sm:$0xff]
      %v1089 = vld [vmem:[%s219 + $0xb2] sm:$0xff]
      %v1090 = vld [vmem:[%s219 + $0xba] sm:$0xff]
      %v1091 = vld [vmem:[%s219 + $0xc2] sm:$0xff]
      %v1092 = vld [vmem:[%s219 + $0xca] sm:$0xff]
      %v1093 = vld [vmem:[%s219 + $0xd2] sm:$0xff]
      %v1094 = vld [vmem:[%s219 + $0xda] sm:$0xff]
      %v1095 = vld [vmem:[%s219 + $0xe2] sm:$0xff]
      %v1096 = vld [vmem:[%s219 + $0xea] sm:$0xff]
      %v1097 = vld [vmem:[%s219 + $0xf2] sm:$0xff]
      %v1098 = vld [vmem:[%s219 + $0xfa] sm:$0xff]
      %v1099 = vld [vmem:[%s219 + $0x102] sm:$0xff]
      %v1100 = vld [vmem:[%s219 + $0x10a] sm:$0xff]
      %v1101 = vld [vmem:[%s219 + $0x112] sm:$0xff]
      %v1102 = vld [vmem:[%s219 + $0x11a] sm:$0x3f]
      %v1103 = vpack.c.bf16 %v1068, %v1067
      %v1104 = vpack.c.bf16 %v1070, %v1069
      %v1105 = vpack.c.bf16 %v1072, %v1071
      %v1106 = vpack.c.bf16 %v1074, %v1073
      %v1107 = vpack.c.bf16 %v1076, %v1075
      %v1108 = vpack.c.bf16 %v1078, %v1077
      %v1109 = vpack.c.bf16 %v1080, %v1079
      %v1110 = vpack.c.bf16 %v1082, %v1081
      %v1111 = vpack.c.bf16 %v1084, %v1083
      %v1112 = vpack.c.bf16 %v1086, %v1085
      %v1113 = vpack.c.bf16 %v1088, %v1087
      %v1114 = vpack.c.bf16 %v1090, %v1089
      %v1115 = vpack.c.bf16 %v1092, %v1091
      %v1116 = vpack.c.bf16 %v1094, %v1093
      %v1117 = vpack.c.bf16 %v1096, %v1095
      %v1118 = vpack.c.bf16 %v1098, %v1097
      %v1119 = vpack.c.bf16 %v1100, %v1099
      %v1120 = vpack.c.bf16 %v1102, %v1101
      %v1121 = vld [vmem:[#allocation3] sm:$0xff]
      %v1122 = vld [vmem:[#allocation3 + $0x8] sm:$0xff]
      %v1123 = vld [vmem:[#allocation3 + $0x10] sm:$0xff]
      %v1124 = vld [vmem:[#allocation3 + $0x18] sm:$0xff]
      %v1125 = vld [vmem:[#allocation3 + $0x20] sm:$0xff]
      %v1126 = vld [vmem:[#allocation3 + $0x28] sm:$0xff]
      %v1127 = vld [vmem:[#allocation3 + $0x30] sm:$0xff]
      %v1128 = vld [vmem:[#allocation3 + $0x38] sm:$0xff]
      %v1129 = vld [vmem:[#allocation3 + $0x40] sm:$0xff]
      %v1130 = vld [vmem:[#allocation3 + $0x48] sm:$0xff]
      %v1131 = vld [vmem:[#allocation3 + $0x50] sm:$0xff]
      %v1132 = vld [vmem:[#allocation3 + $0x58] sm:$0xff]
      %v1133 = vld [vmem:[#allocation3 + $0x60] sm:$0xff]
      %v1134 = vld [vmem:[#allocation3 + $0x68] sm:$0xff]
      %v1135 = vld [vmem:[#allocation3 + $0x70] sm:$0xff]
      %v1136 = vld [vmem:[#allocation3 + $0x78] sm:$0xff]
      %v1137 = vld [vmem:[#allocation3 + $0x80] sm:$0xff]
      %v1138 = vld [vmem:[#allocation3 + $0x88] sm:$0xff]
      %v1139 = vld [vmem:[#allocation3 + $0x90] sm:$0xff]
      %v1140 = vld [vmem:[#allocation3 + $0x98] sm:$0xff]
      %v1141 = vld [vmem:[#allocation3 + $0xa0] sm:$0xff]
      %v1142 = vld [vmem:[#allocation3 + $0xa8] sm:$0xff]
      %v1143 = vld [vmem:[#allocation3 + $0xb0] sm:$0xff]
      %v1144 = vld [vmem:[#allocation3 + $0xb8] sm:$0xff]
      %v1145 = vld [vmem:[#allocation3 + $0xc0] sm:$0xff]
      %v1146 = vld [vmem:[#allocation3 + $0xc8] sm:$0xff]
      %v1147 = vld [vmem:[#allocation3 + $0xd0] sm:$0xff]
      %v1148 = vld [vmem:[#allocation3 + $0xd8] sm:$0xff]
      %v1149 = vld [vmem:[#allocation3 + $0xe0] sm:$0xff]
      %v1150 = vld [vmem:[#allocation3 + $0xe8] sm:$0xff]
      %v1151 = vld [vmem:[#allocation3 + $0xf0] sm:$0xff]
      %v1152 = vld [vmem:[#allocation3 + $0xf8] sm:$0xff]
      %v1153 = vld [vmem:[#allocation3 + $0x100] sm:$0xff]
      %v1154 = vld [vmem:[#allocation3 + $0x108] sm:$0xff]
      %v1155 = vld [vmem:[#allocation3 + $0x110] sm:$0xff]
      %v1156 = vld [vmem:[#allocation3 + $0x118] sm:$0x3f]
      %s1157 = scalar_lea.vmem %s1, 4
      %v1158 = vld [vmem:[%s1157] sm:$0x3]
      %v1160 = vsel %vm226, %v1103, 0
      %v1163 = vsel %vm226, %v1104, 0
      %v1166 = vsel %vm226, %v1105, 0
      %v1169 = vsel %vm226, %v1106, 0
      %v1172 = vsel %vm226, %v1107, 0
      %v1175 = vsel %vm226, %v1108, 0
      %v1178 = vsel %vm226, %v1109, 0
      %v1181 = vsel %vm226, %v1110, 0
      %v1184 = vsel %vm226, %v1111, 0
      %v1187 = vsel %vm226, %v1112, 0
      %v1190 = vsel %vm226, %v1113, 0
      %v1193 = vsel %vm226, %v1114, 0
      %v1196 = vsel %vm226, %v1115, 0
      %v1199 = vsel %vm226, %v1116, 0
      %v1202 = vsel %vm226, %v1117, 0
      %v1205 = vsel %vm226, %v1118, 0
      %v1208 = vsel %vm226, %v1119, 0
      %v1211 = vsel %vm226, %v1120, 0
      %v1214 = vsel %vm416, %v1158, 0
      %1216 = vmatprep.subr.bf16.mxu0 0
      %1217 = vmatpush1.bf16.msra.mxu0 %v1214
      %1218 = vmatprep.subr.bf16.mxu0 0
      %1219 = vmatpush1.bf16.msra.mxu0 0
      %1220 = vmatprep.subr.bf16.mxu0 0
      %1221 = vmatpush1.bf16.msra.mxu0 0
      %1222 = vmatprep.subr.bf16.mxu0 0
      %1223 = vmatpush1.bf16.msra.mxu0 0
      %1224 = vmatprep.subr.bf16.mxu0 0
      %1225 = vmatpush1.bf16.msra.mxu0 0
      %1226 = vmatprep.subr.bf16.mxu0 0
      %1227 = vmatpush1.bf16.msra.mxu0 0
      %1228 = vmatprep.subr.bf16.mxu0 0
      %1229 = vmatpush1.bf16.msra.mxu0 0
      %1230 = vmatprep.subr.bf16.mxu0 0
      %1231 = vmatpush1.bf16.msra.mxu0 0
      %1232 = vmatprep.subr.bf16.mxu0 0
      %1233 = vmatpush1.bf16.msra.mxu0 0
      %1234 = vmatprep.subr.bf16.mxu0 0
      %1235 = vmatpush1.bf16.msra.mxu0 0
      %1236 = vmatprep.subr.bf16.mxu0 0
      %1237 = vmatpush1.bf16.msra.mxu0 0
      %1238 = vmatprep.subr.bf16.mxu0 0
      %1239 = vmatpush1.bf16.msra.mxu0 0
      %1240 = vmatprep.subr.bf16.mxu0 0
      %1241 = vmatpush1.bf16.msra.mxu0 0
      %1242 = vmatprep.subr.bf16.mxu0 0
      %1243 = vmatpush1.bf16.msra.mxu0 0
      %1244 = vmatprep.subr.bf16.mxu0 0
      %1245 = vmatpush1.bf16.msra.mxu0 0
      %1246 = vmatprep.subr.bf16.mxu0 0
      %1247 = vmatpush1.bf16.msra.mxu0 0
      %1248 = vmatprep.mubr.bf16.mxu0 0
      %1249 = vmatmul.mubr.bf16.gmra.mrb[0].mxu0 %v1160
      %v1250 = vpop.f32.mrb[0].mxu0
      %v1251 = vadd.f32 0.0, %v1250
      %v1252 = vpop.f32.mrb[0].mxu0
      %v1253 = vpop.f32.mrb[0].mxu0
      %v1254 = vadd.f32 0.0, %v1253
      %v1255 = vpop.f32.mrb[0].mxu0
      %1256 = vmatprep.mubr.bf16.mxu0 0
      %1257 = vmatmul.mubr.bf16.gmra.mrb[0].mxu0 %v1163
      %v1258 = vpop.f32.mrb[0].mxu0
      %v1259 = vadd.f32 0.0, %v1258
      %v1260 = vpop.f32.mrb[0].mxu0
      %v1261 = vpop.f32.mrb[0].mxu0
      %v1262 = vadd.f32 0.0, %v1261
      %v1263 = vpop.f32.mrb[0].mxu0
      %1264 = vmatprep.mubr.bf16.mxu0 0
      %1265 = vmatmul.mubr.bf16.gmra.mrb[0].mxu0 %v1166
      %v1266 = vpop.f32.mrb[0].mxu0
      %v1267 = vadd.f32 0.0, %v1266
      %v1268 = vpop.f32.mrb[0].mxu0
      %v1269 = vpop.f32.mrb[0].mxu0
      %v1270 = vadd.f32 0.0, %v1269
      %v1271 = vpop.f32.mrb[0].mxu0
      %1272 = vmatprep.mubr.bf16.mxu0 0
      %1273 = vmatmul.mubr.bf16.gmra.mrb[0].mxu0 %v1169
      %v1274 = vpop.f32.mrb[0].mxu0
      %v1275 = vadd.f32 0.0, %v1274
      %v1276 = vpop.f32.mrb[0].mxu0
      %v1277 = vpop.f32.mrb[0].mxu0
      %v1278 = vadd.f32 0.0, %v1277
      %v1279 = vpop.f32.mrb[0].mxu0
      %1280 = vmatprep.mubr.bf16.mxu0 0
      %1281 = vmatmul.mubr.bf16.gmra.mrb[0].mxu0 %v1172
      %v1282 = vpop.f32.mrb[0].mxu0
      %v1283 = vadd.f32 0.0, %v1282
      %v1284 = vpop.f32.mrb[0].mxu0
      %v1285 = vpop.f32.mrb[0].mxu0
      %v1286 = vadd.f32 0.0, %v1285
      %v1287 = vpop.f32.mrb[0].mxu0
      %1288 = vmatprep.mubr.bf16.mxu0 0
      %1289 = vmatmul.mubr.bf16.gmra.mrb[0].mxu0 %v1175
      %v1290 = vpop.f32.mrb[0].mxu0
      %v1291 = vadd.f32 0.0, %v1290
      %v1292 = vpop.f32.mrb[0].mxu0
      %v1293 = vpop.f32.mrb[0].mxu0
      %v1294 = vadd.f32 0.0, %v1293
      %v1295 = vpop.f32.mrb[0].mxu0
      %1296 = vmatprep.mubr.bf16.mxu0 0
      %1297 = vmatmul.mubr.bf16.gmra.mrb[0].mxu0 %v1178
      %v1298 = vpop.f32.mrb[0].mxu0
      %v1299 = vadd.f32 0.0, %v1298
      %v1300 = vpop.f32.mrb[0].mxu0
      %v1301 = vpop.f32.mrb[0].mxu0
      %v1302 = vadd.f32 0.0, %v1301
      %v1303 = vpop.f32.mrb[0].mxu0
      %1304 = vmatprep.mubr.bf16.mxu0 0
      %1305 = vmatmul.mubr.bf16.gmra.mrb[0].mxu0 %v1181
      %v1306 = vpop.f32.mrb[0].mxu0
      %v1307 = vadd.f32 0.0, %v1306
      %v1308 = vpop.f32.mrb[0].mxu0
      %v1309 = vpop.f32.mrb[0].mxu0
      %v1310 = vadd.f32 0.0, %v1309
      %v1311 = vpop.f32.mrb[0].mxu0
      %1312 = vmatprep.mubr.bf16.mxu0 0
      %1313 = vmatmul.mubr.bf16.gmra.mrb[0].mxu0 %v1184
      %v1314 = vpop.f32.mrb[0].mxu0
      %v1315 = vadd.f32 0.0, %v1314
      %v1316 = vpop.f32.mrb[0].mxu0
      %v1317 = vpop.f32.mrb[0].mxu0
      %v1318 = vadd.f32 0.0, %v1317
      %v1319 = vpop.f32.mrb[0].mxu0
      %1320 = vmatprep.mubr.bf16.mxu0 0
      %1321 = vmatmul.mubr.bf16.gmra.mrb[0].mxu0 %v1187
      %v1322 = vpop.f32.mrb[0].mxu0
      %v1323 = vadd.f32 0.0, %v1322
      %v1324 = vpop.f32.mrb[0].mxu0
      %v1325 = vpop.f32.mrb[0].mxu0
      %v1326 = vadd.f32 0.0, %v1325
      %v1327 = vpop.f32.mrb[0].mxu0
      %1328 = vmatprep.mubr.bf16.mxu0 0
      %1329 = vmatmul.mubr.bf16.gmra.mrb[0].mxu0 %v1190
      %v1330 = vpop.f32.mrb[0].mxu0
      %v1331 = vadd.f32 0.0, %v1330
      %v1332 = vpop.f32.mrb[0].mxu0
      %v1333 = vpop.f32.mrb[0].mxu0
      %v1334 = vadd.f32 0.0, %v1333
      %v1335 = vpop.f32.mrb[0].mxu0
      %1336 = vmatprep.mubr.bf16.mxu0 0
      %1337 = vmatmul.mubr.bf16.gmra.mrb[0].mxu0 %v1193
      %v1338 = vpop.f32.mrb[0].mxu0
      %v1339 = vadd.f32 0.0, %v1338
      %v1340 = vpop.f32.mrb[0].mxu0
      %v1341 = vpop.f32.mrb[0].mxu0
      %v1342 = vadd.f32 0.0, %v1341
      %v1343 = vpop.f32.mrb[0].mxu0
      %1344 = vmatprep.mubr.bf16.mxu0 0
      %1345 = vmatmul.mubr.bf16.gmra.mrb[0].mxu0 %v1196
      %v1346 = vpop.f32.mrb[0].mxu0
      %v1347 = vadd.f32 0.0, %v1346
      %v1348 = vpop.f32.mrb[0].mxu0
      %v1349 = vpop.f32.mrb[0].mxu0
      %v1350 = vadd.f32 0.0, %v1349
      %v1351 = vpop.f32.mrb[0].mxu0
      %1352 = vmatprep.mubr.bf16.mxu0 0
      %1353 = vmatmul.mubr.bf16.gmra.mrb[0].mxu0 %v1199
      %v1354 = vpop.f32.mrb[0].mxu0
      %v1355 = vadd.f32 0.0, %v1354
      %v1356 = vpop.f32.mrb[0].mxu0
      %v1357 = vpop.f32.mrb[0].mxu0
      %v1358 = vadd.f32 0.0, %v1357
      %v1359 = vpop.f32.mrb[0].mxu0
      %1360 = vmatprep.mubr.bf16.mxu0 0
      %1361 = vmatmul.mubr.bf16.gmra.mrb[0].mxu0 %v1202
      %v1362 = vpop.f32.mrb[0].mxu0
      %v1363 = vadd.f32 0.0, %v1362
      %v1364 = vpop.f32.mrb[0].mxu0
      %v1365 = vpop.f32.mrb[0].mxu0
      %v1366 = vadd.f32 0.0, %v1365
      %v1367 = vpop.f32.mrb[0].mxu0
      %1368 = vmatprep.mubr.bf16.mxu0 0
      %1369 = vmatmul.mubr.bf16.gmra.mrb[0].mxu0 %v1205
      %v1370 = vpop.f32.mrb[0].mxu0
      %v1371 = vadd.f32 0.0, %v1370
      %v1372 = vpop.f32.mrb[0].mxu0
      %v1373 = vpop.f32.mrb[0].mxu0
      %v1374 = vadd.f32 0.0, %v1373
      %v1375 = vpop.f32.mrb[0].mxu0
      %1376 = vmatprep.mubr.bf16.mxu0 0
      %1377 = vmatmul.mubr.bf16.gmra.mrb[0].mxu0 %v1208
      %v1378 = vpop.f32.mrb[0].mxu0
      %v1379 = vadd.f32 0.0, %v1378
      %v1380 = vpop.f32.mrb[0].mxu0
      %v1381 = vpop.f32.mrb[0].mxu0
      %v1382 = vadd.f32 0.0, %v1381
      %v1383 = vpop.f32.mrb[0].mxu0
      %1384 = vmatprep.mubr.bf16.mxu0 0
      %1385 = vmatmul.mubr.bf16.gmra.mrb[0].mxu0 %v1211
      %v1386 = vpop.f32.mrb[0].mxu0
      %v1387 = vadd.f32 0.0, %v1386
      %v1388 = vpop.f32.mrb[0].mxu0
      %v1389 = vpop.f32.mrb[0].mxu0
      %v1390 = vadd.f32 0.0, %v1389
      %v1391 = vpop.f32.mrb[0].mxu0
      %1392 = vdwg.mxu0
      %v1393 = vadd.f32 %v1121, %v1251
      %v1394 = vadd.f32 %v1122, %v1254
      %v1395 = vadd.f32 %v1123, %v1259
      %v1396 = vadd.f32 %v1124, %v1262
      %v1397 = vadd.f32 %v1125, %v1267
      %v1398 = vadd.f32 %v1126, %v1270
      %v1399 = vadd.f32 %v1127, %v1275
      %v1400 = vadd.f32 %v1128, %v1278
      %v1401 = vadd.f32 %v1129, %v1283
      %v1402 = vadd.f32 %v1130, %v1286
      %v1403 = vadd.f32 %v1131, %v1291
      %v1404 = vadd.f32 %v1132, %v1294
      %v1405 = vadd.f32 %v1133, %v1299
      %v1406 = vadd.f32 %v1134, %v1302
      %v1407 = vadd.f32 %v1135, %v1307
      %v1408 = vadd.f32 %v1136, %v1310
      %v1409 = vadd.f32 %v1137, %v1315
      %v1410 = vadd.f32 %v1138, %v1318
      %v1411 = vadd.f32 %v1139, %v1323
      %v1412 = vadd.f32 %v1140, %v1326
      %v1413 = vadd.f32 %v1141, %v1331
      %v1414 = vadd.f32 %v1142, %v1334
      %v1415 = vadd.f32 %v1143, %v1339
      %v1416 = vadd.f32 %v1144, %v1342
      %v1417 = vadd.f32 %v1145, %v1347
      %v1418 = vadd.f32 %v1146, %v1350
      %v1419 = vadd.f32 %v1147, %v1355
      %v1420 = vadd.f32 %v1148, %v1358
      %v1421 = vadd.f32 %v1149, %v1363
      %v1422 = vadd.f32 %v1150, %v1366
      %v1423 = vadd.f32 %v1151, %v1371
      %v1424 = vadd.f32 %v1152, %v1374
      %v1425 = vadd.f32 %v1153, %v1379
      %v1426 = vadd.f32 %v1154, %v1382
      %v1427 = vadd.f32 %v1155, %v1387
      %v1428 = vadd.f32 %v1156, %v1390
      %1429 = vst.msk [vmem:[#allocation3] sm:$0xff] %vm226, %v1393
      %1430 = vst.msk [vmem:[#allocation3 + $0x8] sm:$0xff] %vm226, %v1394
      %1431 = vst.msk [vmem:[#allocation3 + $0x10] sm:$0xff] %vm226, %v1395
      %1432 = vst.msk [vmem:[#allocation3 + $0x18] sm:$0xff] %vm226, %v1396
      %1433 = vst.msk [vmem:[#allocation3 + $0x20] sm:$0xff] %vm226, %v1397
      %1434 = vst.msk [vmem:[#allocation3 + $0x28] sm:$0xff] %vm226, %v1398
      %1435 = vst.msk [vmem:[#allocation3 + $0x30] sm:$0xff] %vm226, %v1399
      %1436 = vst.msk [vmem:[#allocation3 + $0x38] sm:$0xff] %vm226, %v1400
      %1437 = vst.msk [vmem:[#allocation3 + $0x40] sm:$0xff] %vm226, %v1401
      %1438 = vst.msk [vmem:[#allocation3 + $0x48] sm:$0xff] %vm226, %v1402
      %1439 = vst.msk [vmem:[#allocation3 + $0x50] sm:$0xff] %vm226, %v1403
      %1440 = vst.msk [vmem:[#allocation3 + $0x58] sm:$0xff] %vm226, %v1404
      %1441 = vst.msk [vmem:[#allocation3 + $0x60] sm:$0xff] %vm226, %v1405
      %1442 = vst.msk [vmem:[#allocation3 + $0x68] sm:$0xff] %vm226, %v1406
      %1443 = vst.msk [vmem:[#allocation3 + $0x70] sm:$0xff] %vm226, %v1407
      %1444 = vst.msk [vmem:[#allocation3 + $0x78] sm:$0xff] %vm226, %v1408
      %1445 = vst.msk [vmem:[#allocation3 + $0x80] sm:$0xff] %vm226, %v1409
      %1446 = vst.msk [vmem:[#allocation3 + $0x88] sm:$0xff] %vm226, %v1410
      %1447 = vst.msk [vmem:[#allocation3 + $0x90] sm:$0xff] %vm226, %v1411
      %1448 = vst.msk [vmem:[#allocation3 + $0x98] sm:$0xff] %vm226, %v1412
      %1449 = vst.msk [vmem:[#allocation3 + $0xa0] sm:$0xff] %vm226, %v1413
      %1450 = vst.msk [vmem:[#allocation3 + $0xa8] sm:$0xff] %vm226, %v1414
      %1451 = vst.msk [vmem:[#allocation3 + $0xb0] sm:$0xff] %vm226, %v1415
      %1452 = vst.msk [vmem:[#allocation3 + $0xb8] sm:$0xff] %vm226, %v1416
      %1453 = vst.msk [vmem:[#allocation3 + $0xc0] sm:$0xff] %vm226, %v1417
      %1454 = vst.msk [vmem:[#allocation3 + $0xc8] sm:$0xff] %vm226, %v1418
      %1455 = vst.msk [vmem:[#allocation3 + $0xd0] sm:$0xff] %vm226, %v1419
      %1456 = vst.msk [vmem:[#allocation3 + $0xd8] sm:$0xff] %vm226, %v1420
      %1457 = vst.msk [vmem:[#allocation3 + $0xe0] sm:$0xff] %vm226, %v1421
      %1458 = vst.msk [vmem:[#allocation3 + $0xe8] sm:$0xff] %vm226, %v1422
      %1459 = vst.msk [vmem:[#allocation3 + $0xf0] sm:$0xff] %vm226, %v1423
      %1460 = vst.msk [vmem:[#allocation3 + $0xf8] sm:$0xff] %vm226, %v1424
      %1461 = vst.msk [vmem:[#allocation3 + $0x100] sm:$0xff] %vm226, %v1425
      %1462 = vst.msk [vmem:[#allocation3 + $0x108] sm:$0xff] %vm226, %v1426
      %1463 = vst.msk [vmem:[#allocation3 + $0x110] sm:$0xff] %vm226, %v1427
      %1464 = vst.msk [vmem:[#allocation3 + $0x118] sm:$0x3f] %vm269, %v1428
      %v1465 = vld [vmem:[%s219 + $0x12] sm:$0xff]
      %v1466 = vld [vmem:[%s219 + $0x1a] sm:$0xff]
      %v1467 = vld [vmem:[%s219 + $0x22] sm:$0xff]
      %v1468 = vld [vmem:[%s219 + $0x2a] sm:$0xff]
      %v1469 = vld [vmem:[%s219 + $0x32] sm:$0xff]
      %v1470 = vld [vmem:[%s219 + $0x3a] sm:$0xff]
      %v1471 = vld [vmem:[%s219 + $0x42] sm:$0xff]
      %v1472 = vld [vmem:[%s219 + $0x4a] sm:$0xff]
      %v1473 = vld [vmem:[%s219 + $0x52] sm:$0xff]
      %v1474 = vld [vmem:[%s219 + $0x5a] sm:$0xff]
      %v1475 = vld [vmem:[%s219 + $0x62] sm:$0xff]
      %v1476 = vld [vmem:[%s219 + $0x6a] sm:$0xff]
      %v1477 = vld [vmem:[%s219 + $0x72] sm:$0xff]
      %v1478 = vld [vmem:[%s219 + $0x7a] sm:$0xff]
      %v1479 = vld [vmem:[%s219 + $0x82] sm:$0xff]
      %v1480 = vld [vmem:[%s219 + $0x8a] sm:$0xff]
      %v1481 = vld [vmem:[%s219 + $0x92] sm:$0xff]
      %v1482 = vld [vmem:[%s219 + $0x9a] sm:$0xff]
      %v1483 = vld [vmem:[%s219 + $0xa2] sm:$0xff]
      %v1484 = vld [vmem:[%s219 + $0xaa] sm:$0xff]
      %v1485 = vld [vmem:[%s219 + $0xb2] sm:$0xff]
      %v1486 = vld [vmem:[%s219 + $0xba] sm:$0xff]
      %v1487 = vld [vmem:[%s219 + $0xc2] sm:$0xff]
      %v1488 = vld [vmem:[%s219 + $0xca] sm:$0xff]
      %v1489 = vld [vmem:[%s219 + $0xd2] sm:$0xff]
      %v1490 = vld [vmem:[%s219 + $0xda] sm:$0xff]
      %v1491 = vld [vmem:[%s219 + $0xe2] sm:$0xff]
      %v1492 = vld [vmem:[%s219 + $0xea] sm:$0xff]
      %v1493 = vld [vmem:[%s219 + $0xf2] sm:$0xff]
      %v1494 = vld [vmem:[%s219 + $0xfa] sm:$0xff]
      %v1495 = vld [vmem:[%s219 + $0x102] sm:$0xff]
      %v1496 = vld [vmem:[%s219 + $0x10a] sm:$0xff]
      %v1497 = vld [vmem:[%s219 + $0x112] sm:$0xff]
      %v1498 = vld [vmem:[%s219 + $0x11a] sm:$0xff]
      %v1499 = vld [vmem:[%s219 + $0x122] sm:$0xff]
      %v1500 = vld [vmem:[%s219 + $0x12a] sm:$0x3f]
      %v1501 = vpack.c.bf16 %v1466, %v1465
      %v1502 = vpack.c.bf16 %v1468, %v1467
      %v1503 = vpack.c.bf16 %v1470, %v1469
      %v1504 = vpack.c.bf16 %v1472, %v1471
      %v1505 = vpack.c.bf16 %v1474, %v1473
      %v1506 = vpack.c.bf16 %v1476, %v1475
      %v1507 = vpack.c.bf16 %v1478, %v1477
      %v1508 = vpack.c.bf16 %v1480, %v1479
      %v1509 = vpack.c.bf16 %v1482, %v1481
      %v1510 = vpack.c.bf16 %v1484, %v1483
      %v1511 = vpack.c.bf16 %v1486, %v1485
      %v1512 = vpack.c.bf16 %v1488, %v1487
      %v1513 = vpack.c.bf16 %v1490, %v1489
      %v1514 = vpack.c.bf16 %v1492, %v1491
      %v1515 = vpack.c.bf16 %v1494, %v1493
      %v1516 = vpack.c.bf16 %v1496, %v1495
      %v1517 = vpack.c.bf16 %v1498, %v1497
      %v1518 = vpack.c.bf16 %v1500, %v1499
      %v1519 = vld [vmem:[#allocation3] sm:$0xff]
      %v1520 = vld [vmem:[#allocation3 + $0x8] sm:$0xff]
      %v1521 = vld [vmem:[#allocation3 + $0x10] sm:$0xff]
      %v1522 = vld [vmem:[#allocation3 + $0x18] sm:$0xff]
      %v1523 = vld [vmem:[#allocation3 + $0x20] sm:$0xff]
      %v1524 = vld [vmem:[#allocation3 + $0x28] sm:$0xff]
      %v1525 = vld [vmem:[#allocation3 + $0x30] sm:$0xff]
      %v1526 = vld [vmem:[#allocation3 + $0x38] sm:$0xff]
      %v1527 = vld [vmem:[#allocation3 + $0x40] sm:$0xff]
      %v1528 = vld [vmem:[#allocation3 + $0x48] sm:$0xff]
      %v1529 = vld [vmem:[#allocation3 + $0x50] sm:$0xff]
      %v1530 = vld [vmem:[#allocation3 + $0x58] sm:$0xff]
      %v1531 = vld [vmem:[#allocation3 + $0x60] sm:$0xff]
      %v1532 = vld [vmem:[#allocation3 + $0x68] sm:$0xff]
      %v1533 = vld [vmem:[#allocation3 + $0x70] sm:$0xff]
      %v1534 = vld [vmem:[#allocation3 + $0x78] sm:$0xff]
      %v1535 = vld [vmem:[#allocation3 + $0x80] sm:$0xff]
      %v1536 = vld [vmem:[#allocation3 + $0x88] sm:$0xff]
      %v1537 = vld [vmem:[#allocation3 + $0x90] sm:$0xff]
      %v1538 = vld [vmem:[#allocation3 + $0x98] sm:$0xff]
      %v1539 = vld [vmem:[#allocation3 + $0xa0] sm:$0xff]
      %v1540 = vld [vmem:[#allocation3 + $0xa8] sm:$0xff]
      %v1541 = vld [vmem:[#allocation3 + $0xb0] sm:$0xff]
      %v1542 = vld [vmem:[#allocation3 + $0xb8] sm:$0xff]
      %v1543 = vld [vmem:[#allocation3 + $0xc0] sm:$0xff]
      %v1544 = vld [vmem:[#allocation3 + $0xc8] sm:$0xff]
      %v1545 = vld [vmem:[#allocation3 + $0xd0] sm:$0xff]
      %v1546 = vld [vmem:[#allocation3 + $0xd8] sm:$0xff]
      %v1547 = vld [vmem:[#allocation3 + $0xe0] sm:$0xff]
      %v1548 = vld [vmem:[#allocation3 + $0xe8] sm:$0xff]
      %v1549 = vld [vmem:[#allocation3 + $0xf0] sm:$0xff]
      %v1550 = vld [vmem:[#allocation3 + $0xf8] sm:$0xff]
      %v1551 = vld [vmem:[#allocation3 + $0x100] sm:$0xff]
      %v1552 = vld [vmem:[#allocation3 + $0x108] sm:$0xff]
      %v1553 = vld [vmem:[#allocation3 + $0x110] sm:$0xff]
      %v1554 = vld [vmem:[#allocation3 + $0x118] sm:$0x3f]
      %s1555 = scalar_lea.vmem %s1, 6
      %v1556 = vld [vmem:[%s1555] sm:$0x3]
      %v1558 = vsel %vm226, %v1501, 0
      %v1561 = vsel %vm226, %v1502, 0
      %v1564 = vsel %vm226, %v1503, 0
      %v1567 = vsel %vm226, %v1504, 0
      %v1570 = vsel %vm226, %v1505, 0
      %v1573 = vsel %vm226, %v1506, 0
      %v1576 = vsel %vm226, %v1507, 0
      %v1579 = vsel %vm226, %v1508, 0
      %v1582 = vsel %vm226, %v1509, 0
      %v1585 = vsel %vm226, %v1510, 0
      %v1588 = vsel %vm226, %v1511, 0
      %v1591 = vsel %vm226, %v1512, 0
      %v1594 = vsel %vm226, %v1513, 0
      %v1597 = vsel %vm226, %v1514, 0
      %v1600 = vsel %vm226, %v1515, 0
      %v1603 = vsel %vm226, %v1516, 0
      %v1606 = vsel %vm226, %v1517, 0
      %v1609 = vsel %vm226, %v1518, 0
      %v1612 = vsel %vm416, %v1556, 0
      %1614 = vmatprep.subr.bf16.mxu0 0
      %1615 = vmatpush1.bf16.msra.mxu0 %v1612
      %1616 = vmatprep.subr.bf16.mxu0 0
      %1617 = vmatpush1.bf16.msra.mxu0 0
      %1618 = vmatprep.subr.bf16.mxu0 0
      %1619 = vmatpush1.bf16.msra.mxu0 0
      %1620 = vmatprep.subr.bf16.mxu0 0
      %1621 = vmatpush1.bf16.msra.mxu0 0
      %1622 = vmatprep.subr.bf16.mxu0 0
      %1623 = vmatpush1.bf16.msra.mxu0 0
      %1624 = vmatprep.subr.bf16.mxu0 0
      %1625 = vmatpush1.bf16.msra.mxu0 0
      %1626 = vmatprep.subr.bf16.mxu0 0
      %1627 = vmatpush1.bf16.msra.mxu0 0
      %1628 = vmatprep.subr.bf16.mxu0 0
      %1629 = vmatpush1.bf16.msra.mxu0 0
      %1630 = vmatprep.subr.bf16.mxu0 0
      %1631 = vmatpush1.bf16.msra.mxu0 0
      %1632 = vmatprep.subr.bf16.mxu0 0
      %1633 = vmatpush1.bf16.msra.mxu0 0
      %1634 = vmatprep.subr.bf16.mxu0 0
      %1635 = vmatpush1.bf16.msra.mxu0 0
      %1636 = vmatprep.subr.bf16.mxu0 0
      %1637 = vmatpush1.bf16.msra.mxu0 0
      %1638 = vmatprep.subr.bf16.mxu0 0
      %1639 = vmatpush1.bf16.msra.mxu0 0
      %1640 = vmatprep.subr.bf16.mxu0 0
      %1641 = vmatpush1.bf16.msra.mxu0 0
      %1642 = vmatprep.subr.bf16.mxu0 0
      %1643 = vmatpush1.bf16.msra.mxu0 0
      %1644 = vmatprep.subr.bf16.mxu0 0
      %1645 = vmatpush1.bf16.msra.mxu0 0
      %1646 = vmatprep.mubr.bf16.mxu0 0
      %1647 = vmatmul.mubr.bf16.gmra.mrb[0].mxu0 %v1558
      %v1648 = vpop.f32.mrb[0].mxu0
      %v1649 = vadd.f32 0.0, %v1648
      %v1650 = vpop.f32.mrb[0].mxu0
      %v1651 = vpop.f32.mrb[0].mxu0
      %v1652 = vadd.f32 0.0, %v1651
      %v1653 = vpop.f32.mrb[0].mxu0
      %1654 = vmatprep.mubr.bf16.mxu0 0
      %1655 = vmatmul.mubr.bf16.gmra.mrb[0].mxu0 %v1561
      %v1656 = vpop.f32.mrb[0].mxu0
      %v1657 = vadd.f32 0.0, %v1656
      %v1658 = vpop.f32.mrb[0].mxu0
      %v1659 = vpop.f32.mrb[0].mxu0
      %v1660 = vadd.f32 0.0, %v1659
      %v1661 = vpop.f32.mrb[0].mxu0
      %1662 = vmatprep.mubr.bf16.mxu0 0
      %1663 = vmatmul.mubr.bf16.gmra.mrb[0].mxu0 %v1564
      %v1664 = vpop.f32.mrb[0].mxu0
      %v1665 = vadd.f32 0.0, %v1664
      %v1666 = vpop.f32.mrb[0].mxu0
      %v1667 = vpop.f32.mrb[0].mxu0
      %v1668 = vadd.f32 0.0, %v1667
      %v1669 = vpop.f32.mrb[0].mxu0
      %1670 = vmatprep.mubr.bf16.mxu0 0
      %1671 = vmatmul.mubr.bf16.gmra.mrb[0].mxu0 %v1567
      %v1672 = vpop.f32.mrb[0].mxu0
      %v1673 = vadd.f32 0.0, %v1672
      %v1674 = vpop.f32.mrb[0].mxu0
      %v1675 = vpop.f32.mrb[0].mxu0
      %v1676 = vadd.f32 0.0, %v1675
      %v1677 = vpop.f32.mrb[0].mxu0
      %1678 = vmatprep.mubr.bf16.mxu0 0
      %1679 = vmatmul.mubr.bf16.gmra.mrb[0].mxu0 %v1570
      %v1680 = vpop.f32.mrb[0].mxu0
      %v1681 = vadd.f32 0.0, %v1680
      %v1682 = vpop.f32.mrb[0].mxu0
      %v1683 = vpop.f32.mrb[0].mxu0
      %v1684 = vadd.f32 0.0, %v1683
      %v1685 = vpop.f32.mrb[0].mxu0
      %1686 = vmatprep.mubr.bf16.mxu0 0
      %1687 = vmatmul.mubr.bf16.gmra.mrb[0].mxu0 %v1573
      %v1688 = vpop.f32.mrb[0].mxu0
      %v1689 = vadd.f32 0.0, %v1688
      %v1690 = vpop.f32.mrb[0].mxu0
      %v1691 = vpop.f32.mrb[0].mxu0
      %v1692 = vadd.f32 0.0, %v1691
      %v1693 = vpop.f32.mrb[0].mxu0
      %1694 = vmatprep.mubr.bf16.mxu0 0
      %1695 = vmatmul.mubr.bf16.gmra.mrb[0].mxu0 %v1576
      %v1696 = vpop.f32.mrb[0].mxu0
      %v1697 = vadd.f32 0.0, %v1696
      %v1698 = vpop.f32.mrb[0].mxu0
      %v1699 = vpop.f32.mrb[0].mxu0
      %v1700 = vadd.f32 0.0, %v1699
      %v1701 = vpop.f32.mrb[0].mxu0
      %1702 = vmatprep.mubr.bf16.mxu0 0
      %1703 = vmatmul.mubr.bf16.gmra.mrb[0].mxu0 %v1579
      %v1704 = vpop.f32.mrb[0].mxu0
      %v1705 = vadd.f32 0.0, %v1704
      %v1706 = vpop.f32.mrb[0].mxu0
      %v1707 = vpop.f32.mrb[0].mxu0
      %v1708 = vadd.f32 0.0, %v1707
      %v1709 = vpop.f32.mrb[0].mxu0
      %1710 = vmatprep.mubr.bf16.mxu0 0
      %1711 = vmatmul.mubr.bf16.gmra.mrb[0].mxu0 %v1582
      %v1712 = vpop.f32.mrb[0].mxu0
      %v1713 = vadd.f32 0.0, %v1712
      %v1714 = vpop.f32.mrb[0].mxu0
      %v1715 = vpop.f32.mrb[0].mxu0
      %v1716 = vadd.f32 0.0, %v1715
      %v1717 = vpop.f32.mrb[0].mxu0
      %1718 = vmatprep.mubr.bf16.mxu0 0
      %1719 = vmatmul.mubr.bf16.gmra.mrb[0].mxu0 %v1585
      %v1720 = vpop.f32.mrb[0].mxu0
      %v1721 = vadd.f32 0.0, %v1720
      %v1722 = vpop.f32.mrb[0].mxu0
      %v1723 = vpop.f32.mrb[0].mxu0
      %v1724 = vadd.f32 0.0, %v1723
      %v1725 = vpop.f32.mrb[0].mxu0
      %1726 = vmatprep.mubr.bf16.mxu0 0
      %1727 = vmatmul.mubr.bf16.gmra.mrb[0].mxu0 %v1588
      %v1728 = vpop.f32.mrb[0].mxu0
      %v1729 = vadd.f32 0.0, %v1728
      %v1730 = vpop.f32.mrb[0].mxu0
      %v1731 = vpop.f32.mrb[0].mxu0
      %v1732 = vadd.f32 0.0, %v1731
      %v1733 = vpop.f32.mrb[0].mxu0
      %1734 = vmatprep.mubr.bf16.mxu0 0
      %1735 = vmatmul.mubr.bf16.gmra.mrb[0].mxu0 %v1591
      %v1736 = vpop.f32.mrb[0].mxu0
      %v1737 = vadd.f32 0.0, %v1736
      %v1738 = vpop.f32.mrb[0].mxu0
      %v1739 = vpop.f32.mrb[0].mxu0
      %v1740 = vadd.f32 0.0, %v1739
      %v1741 = vpop.f32.mrb[0].mxu0
      %1742 = vmatprep.mubr.bf16.mxu0 0
      %1743 = vmatmul.mubr.bf16.gmra.mrb[0].mxu0 %v1594
      %v1744 = vpop.f32.mrb[0].mxu0
      %v1745 = vadd.f32 0.0, %v1744
      %v1746 = vpop.f32.mrb[0].mxu0
      %v1747 = vpop.f32.mrb[0].mxu0
      %v1748 = vadd.f32 0.0, %v1747
      %v1749 = vpop.f32.mrb[0].mxu0
      %1750 = vmatprep.mubr.bf16.mxu0 0
      %1751 = vmatmul.mubr.bf16.gmra.mrb[0].mxu0 %v1597
      %v1752 = vpop.f32.mrb[0].mxu0
      %v1753 = vadd.f32 0.0, %v1752
      %v1754 = vpop.f32.mrb[0].mxu0
      %v1755 = vpop.f32.mrb[0].mxu0
      %v1756 = vadd.f32 0.0, %v1755
      %v1757 = vpop.f32.mrb[0].mxu0
      %1758 = vmatprep.mubr.bf16.mxu0 0
      %1759 = vmatmul.mubr.bf16.gmra.mrb[0].mxu0 %v1600
      %v1760 = vpop.f32.mrb[0].mxu0
      %v1761 = vadd.f32 0.0, %v1760
      %v1762 = vpop.f32.mrb[0].mxu0
      %v1763 = vpop.f32.mrb[0].mxu0
      %v1764 = vadd.f32 0.0, %v1763
      %v1765 = vpop.f32.mrb[0].mxu0
      %1766 = vmatprep.mubr.bf16.mxu0 0
      %1767 = vmatmul.mubr.bf16.gmra.mrb[0].mxu0 %v1603
      %v1768 = vpop.f32.mrb[0].mxu0
      %v1769 = vadd.f32 0.0, %v1768
      %v1770 = vpop.f32.mrb[0].mxu0
      %v1771 = vpop.f32.mrb[0].mxu0
      %v1772 = vadd.f32 0.0, %v1771
      %v1773 = vpop.f32.mrb[0].mxu0
      %1774 = vmatprep.mubr.bf16.mxu0 0
      %1775 = vmatmul.mubr.bf16.gmra.mrb[0].mxu0 %v1606
      %v1776 = vpop.f32.mrb[0].mxu0
      %v1777 = vadd.f32 0.0, %v1776
      %v1778 = vpop.f32.mrb[0].mxu0
      %v1779 = vpop.f32.mrb[0].mxu0
      %v1780 = vadd.f32 0.0, %v1779
      %v1781 = vpop.f32.mrb[0].mxu0
      %1782 = vmatprep.mubr.bf16.mxu0 0
      %1783 = vmatmul.mubr.bf16.gmra.mrb[0].mxu0 %v1609
      %v1784 = vpop.f32.mrb[0].mxu0
      %v1785 = vadd.f32 0.0, %v1784
      %v1786 = vpop.f32.mrb[0].mxu0
      %v1787 = vpop.f32.mrb[0].mxu0
      %v1788 = vadd.f32 0.0, %v1787
      %v1789 = vpop.f32.mrb[0].mxu0
      %1790 = vdwg.mxu0
      %v1791 = vadd.f32 %v1519, %v1649
      %v1792 = vadd.f32 %v1520, %v1652
      %v1793 = vadd.f32 %v1521, %v1657
      %v1794 = vadd.f32 %v1522, %v1660
      %v1795 = vadd.f32 %v1523, %v1665
      %v1796 = vadd.f32 %v1524, %v1668
      %v1797 = vadd.f32 %v1525, %v1673
      %v1798 = vadd.f32 %v1526, %v1676
      %v1799 = vadd.f32 %v1527, %v1681
      %v1800 = vadd.f32 %v1528, %v1684
      %v1801 = vadd.f32 %v1529, %v1689
      %v1802 = vadd.f32 %v1530, %v1692
      %v1803 = vadd.f32 %v1531, %v1697
      %v1804 = vadd.f32 %v1532, %v1700
      %v1805 = vadd.f32 %v1533, %v1705
      %v1806 = vadd.f32 %v1534, %v1708
      %v1807 = vadd.f32 %v1535, %v1713
      %v1808 = vadd.f32 %v1536, %v1716
      %v1809 = vadd.f32 %v1537, %v1721
      %v1810 = vadd.f32 %v1538, %v1724
      %v1811 = vadd.f32 %v1539, %v1729
      %v1812 = vadd.f32 %v1540, %v1732
      %v1813 = vadd.f32 %v1541, %v1737
      %v1814 = vadd.f32 %v1542, %v1740
      %v1815 = vadd.f32 %v1543, %v1745
      %v1816 = vadd.f32 %v1544, %v1748
      %v1817 = vadd.f32 %v1545, %v1753
      %v1818 = vadd.f32 %v1546, %v1756
      %v1819 = vadd.f32 %v1547, %v1761
      %v1820 = vadd.f32 %v1548, %v1764
      %v1821 = vadd.f32 %v1549, %v1769
      %v1822 = vadd.f32 %v1550, %v1772
      %v1823 = vadd.f32 %v1551, %v1777
      %v1824 = vadd.f32 %v1552, %v1780
      %v1825 = vadd.f32 %v1553, %v1785
      %v1826 = vadd.f32 %v1554, %v1788
      %1827 = vst.msk [vmem:[#allocation3] sm:$0xff] %vm226, %v1791
      %1828 = vst.msk [vmem:[#allocation3 + $0x8] sm:$0xff] %vm226, %v1792
      %1829 = vst.msk [vmem:[#allocation3 + $0x10] sm:$0xff] %vm226, %v1793
      %1830 = vst.msk [vmem:[#allocation3 + $0x18] sm:$0xff] %vm226, %v1794
      %1831 = vst.msk [vmem:[#allocation3 + $0x20] sm:$0xff] %vm226, %v1795
      %1832 = vst.msk [vmem:[#allocation3 + $0x28] sm:$0xff] %vm226, %v1796
      %1833 = vst.msk [vmem:[#allocation3 + $0x30] sm:$0xff] %vm226, %v1797
      %1834 = vst.msk [vmem:[#allocation3 + $0x38] sm:$0xff] %vm226, %v1798
      %1835 = vst.msk [vmem:[#allocation3 + $0x40] sm:$0xff] %vm226, %v1799
      %1836 = vst.msk [vmem:[#allocation3 + $0x48] sm:$0xff] %vm226, %v1800
      %1837 = vst.msk [vmem:[#allocation3 + $0x50] sm:$0xff] %vm226, %v1801
      %1838 = vst.msk [vmem:[#allocation3 + $0x58] sm:$0xff] %vm226, %v1802
      %1839 = vst.msk [vmem:[#allocation3 + $0x60] sm:$0xff] %vm226, %v1803
      %1840 = vst.msk [vmem:[#allocation3 + $0x68] sm:$0xff] %vm226, %v1804
      %1841 = vst.msk [vmem:[#allocation3 + $0x70] sm:$0xff] %vm226, %v1805
      %1842 = vst.msk [vmem:[#allocation3 + $0x78] sm:$0xff] %vm226, %v1806
      %1843 = vst.msk [vmem:[#allocation3 + $0x80] sm:$0xff] %vm226, %v1807
      %1844 = vst.msk [vmem:[#allocation3 + $0x88] sm:$0xff] %vm226, %v1808
      %1845 = vst.msk [vmem:[#allocation3 + $0x90] sm:$0xff] %vm226, %v1809
      %1846 = vst.msk [vmem:[#allocation3 + $0x98] sm:$0xff] %vm226, %v1810
      %1847 = vst.msk [vmem:[#allocation3 + $0xa0] sm:$0xff] %vm226, %v1811
      %1848 = vst.msk [vmem:[#allocation3 + $0xa8] sm:$0xff] %vm226, %v1812
      %1849 = vst.msk [vmem:[#allocation3 + $0xb0] sm:$0xff] %vm226, %v1813
      %1850 = vst.msk [vmem:[#allocation3 + $0xb8] sm:$0xff] %vm226, %v1814
      %1851 = vst.msk [vmem:[#allocation3 + $0xc0] sm:$0xff] %vm226, %v1815
      %1852 = vst.msk [vmem:[#allocation3 + $0xc8] sm:$0xff] %vm226, %v1816
      %1853 = vst.msk [vmem:[#allocation3 + $0xd0] sm:$0xff] %vm226, %v1817
      %1854 = vst.msk [vmem:[#allocation3 + $0xd8] sm:$0xff] %vm226, %v1818
      %1855 = vst.msk [vmem:[#allocation3 + $0xe0] sm:$0xff] %vm226, %v1819
      %1856 = vst.msk [vmem:[#allocation3 + $0xe8] sm:$0xff] %vm226, %v1820
      %1857 = vst.msk [vmem:[#allocation3 + $0xf0] sm:$0xff] %vm226, %v1821
      %1858 = vst.msk [vmem:[#allocation3 + $0xf8] sm:$0xff] %vm226, %v1822
      %1859 = vst.msk [vmem:[#allocation3 + $0x100] sm:$0xff] %vm226, %v1823
      %1860 = vst.msk [vmem:[#allocation3 + $0x108] sm:$0xff] %vm226, %v1824
      %1861 = vst.msk [vmem:[#allocation3 + $0x110] sm:$0xff] %vm226, %v1825
      %1862 = vst.msk [vmem:[#allocation3 + $0x118] sm:$0x3f] %vm269, %v1826
      %v1863 = vld [vmem:[%s219 + $0x13] sm:$0xff]
      %v1864 = vld [vmem:[%s219 + $0x1b] sm:$0xff]
      %v1865 = vld [vmem:[%s219 + $0x23] sm:$0xff]
      %v1866 = vld [vmem:[%s219 + $0x2b] sm:$0xff]
      %v1867 = vld [vmem:[%s219 + $0x33] sm:$0xff]
      %v1868 = vld [vmem:[%s219 + $0x3b] sm:$0xff]
      %v1869 = vld [vmem:[%s219 + $0x43] sm:$0xff]
      %v1870 = vld [vmem:[%s219 + $0x4b] sm:$0xff]
      %v1871 = vld [vmem:[%s219 + $0x53] sm:$0xff]
      %v1872 = vld [vmem:[%s219 + $0x5b] sm:$0xff]
      %v1873 = vld [vmem:[%s219 + $0x63] sm:$0xff]
      %v1874 = vld [vmem:[%s219 + $0x6b] sm:$0xff]
      %v1875 = vld [vmem:[%s219 + $0x73] sm:$0xff]
      %v1876 = vld [vmem:[%s219 + $0x7b] sm:$0xff]
      %v1877 = vld [vmem:[%s219 + $0x83] sm:$0xff]
      %v1878 = vld [vmem:[%s219 + $0x8b] sm:$0xff]
      %v1879 = vld [vmem:[%s219 + $0x93] sm:$0xff]
      %v1880 = vld [vmem:[%s219 + $0x9b] sm:$0xff]
      %v1881 = vld [vmem:[%s219 + $0xa3] sm:$0xff]
      %v1882 = vld [vmem:[%s219 + $0xab] sm:$0xff]
      %v1883 = vld [vmem:[%s219 + $0xb3] sm:$0xff]
      %v1884 = vld [vmem:[%s219 + $0xbb] sm:$0xff]
      %v1885 = vld [vmem:[%s219 + $0xc3] sm:$0xff]
      %v1886 = vld [vmem:[%s219 + $0xcb] sm:$0xff]
      %v1887 = vld [vmem:[%s219 + $0xd3] sm:$0xff]
      %v1888 = vld [vmem:[%s219 + $0xdb] sm:$0xff]
      %v1889 = vld [vmem:[%s219 + $0xe3] sm:$0xff]
      %v1890 = vld [vmem:[%s219 + $0xeb] sm:$0xff]
      %v1891 = vld [vmem:[%s219 + $0xf3] sm:$0xff]
      %v1892 = vld [vmem:[%s219 + $0xfb] sm:$0xff]
      %v1893 = vld [vmem:[%s219 + $0x103] sm:$0xff]
      %v1894 = vld [vmem:[%s219 + $0x10b] sm:$0xff]
      %v1895 = vld [vmem:[%s219 + $0x113] sm:$0xff]
      %v1896 = vld [vmem:[%s219 + $0x11b] sm:$0xff]
      %v1897 = vld [vmem:[%s219 + $0x123] sm:$0xff]
      %v1898 = vld [vmem:[%s219 + $0x12b] sm:$0x3f]
      %v1899 = vpack.c.bf16 %v1864, %v1863
      %v1900 = vpack.c.bf16 %v1866, %v1865
      %v1901 = vpack.c.bf16 %v1868, %v1867
      %v1902 = vpack.c.bf16 %v1870, %v1869
      %v1903 = vpack.c.bf16 %v1872, %v1871
      %v1904 = vpack.c.bf16 %v1874, %v1873
      %v1905 = vpack.c.bf16 %v1876, %v1875
      %v1906 = vpack.c.bf16 %v1878, %v1877
      %v1907 = vpack.c.bf16 %v1880, %v1879
      %v1908 = vpack.c.bf16 %v1882, %v1881
      %v1909 = vpack.c.bf16 %v1884, %v1883
      %v1910 = vpack.c.bf16 %v1886, %v1885
      %v1911 = vpack.c.bf16 %v1888, %v1887
      %v1912 = vpack.c.bf16 %v1890, %v1889
      %v1913 = vpack.c.bf16 %v1892, %v1891
      %v1914 = vpack.c.bf16 %v1894, %v1893
      %v1915 = vpack.c.bf16 %v1896, %v1895
      %v1916 = vpack.c.bf16 %v1898, %v1897
      %v1917 = vld [vmem:[#allocation3] sm:$0xff]
      %v1918 = vld [vmem:[#allocation3 + $0x8] sm:$0xff]
      %v1919 = vld [vmem:[#allocation3 + $0x10] sm:$0xff]
      %v1920 = vld [vmem:[#allocation3 + $0x18] sm:$0xff]
      %v1921 = vld [vmem:[#allocation3 + $0x20] sm:$0xff]
      %v1922 = vld [vmem:[#allocation3 + $0x28] sm:$0xff]
      %v1923 = vld [vmem:[#allocation3 + $0x30] sm:$0xff]
      %v1924 = vld [vmem:[#allocation3 + $0x38] sm:$0xff]
      %v1925 = vld [vmem:[#allocation3 + $0x40] sm:$0xff]
      %v1926 = vld [vmem:[#allocation3 + $0x48] sm:$0xff]
      %v1927 = vld [vmem:[#allocation3 + $0x50] sm:$0xff]
      %v1928 = vld [vmem:[#allocation3 + $0x58] sm:$0xff]
      %v1929 = vld [vmem:[#allocation3 + $0x60] sm:$0xff]
      %v1930 = vld [vmem:[#allocation3 + $0x68] sm:$0xff]
      %v1931 = vld [vmem:[#allocation3 + $0x70] sm:$0xff]
      %v1932 = vld [vmem:[#allocation3 + $0x78] sm:$0xff]
      %v1933 = vld [vmem:[#allocation3 + $0x80] sm:$0xff]
      %v1934 = vld [vmem:[#allocation3 + $0x88] sm:$0xff]
      %v1935 = vld [vmem:[#allocation3 + $0x90] sm:$0xff]
      %v1936 = vld [vmem:[#allocation3 + $0x98] sm:$0xff]
      %v1937 = vld [vmem:[#allocation3 + $0xa0] sm:$0xff]
      %v1938 = vld [vmem:[#allocation3 + $0xa8] sm:$0xff]
      %v1939 = vld [vmem:[#allocation3 + $0xb0] sm:$0xff]
      %v1940 = vld [vmem:[#allocation3 + $0xb8] sm:$0xff]
      %v1941 = vld [vmem:[#allocation3 + $0xc0] sm:$0xff]
      %v1942 = vld [vmem:[#allocation3 + $0xc8] sm:$0xff]
      %v1943 = vld [vmem:[#allocation3 + $0xd0] sm:$0xff]
      %v1944 = vld [vmem:[#allocation3 + $0xd8] sm:$0xff]
      %v1945 = vld [vmem:[#allocation3 + $0xe0] sm:$0xff]
      %v1946 = vld [vmem:[#allocation3 + $0xe8] sm:$0xff]
      %v1947 = vld [vmem:[#allocation3 + $0xf0] sm:$0xff]
      %v1948 = vld [vmem:[#allocation3 + $0xf8] sm:$0xff]
      %v1949 = vld [vmem:[#allocation3 + $0x100] sm:$0xff]
      %v1950 = vld [vmem:[#allocation3 + $0x108] sm:$0xff]
      %v1951 = vld [vmem:[#allocation3 + $0x110] sm:$0xff]
      %v1952 = vld [vmem:[#allocation3 + $0x118] sm:$0x3f]
      %s1953 = scalar_lea.vmem %s1, 8
      %v1954 = vld [vmem:[%s1953] sm:$0x3]
      %v1956 = vsel %vm226, %v1899, 0
      %v1959 = vsel %vm226, %v1900, 0
      %v1962 = vsel %vm226, %v1901, 0
      %v1965 = vsel %vm226, %v1902, 0
      %v1968 = vsel %vm226, %v1903, 0
      %v1971 = vsel %vm226, %v1904, 0
      %v1974 = vsel %vm226, %v1905, 0
      %v1977 = vsel %vm226, %v1906, 0
      %v1980 = vsel %vm226, %v1907, 0
      %v1983 = vsel %vm226, %v1908, 0
      %v1986 = vsel %vm226, %v1909, 0
      %v1989 = vsel %vm226, %v1910, 0
      %v1992 = vsel %vm226, %v1911, 0
      %v1995 = vsel %vm226, %v1912, 0
      %v1998 = vsel %vm226, %v1913, 0
      %v2001 = vsel %vm226, %v1914, 0
      %v2004 = vsel %vm226, %v1915, 0
      %v2007 = vsel %vm226, %v1916, 0
      %v2010 = vsel %vm416, %v1954, 0
      %2012 = vmatprep.subr.bf16.mxu0 0
      %2013 = vmatpush1.bf16.msra.mxu0 %v2010
      %2014 = vmatprep.subr.bf16.mxu0 0
      %2015 = vmatpush1.bf16.msra.mxu0 0
      %2016 = vmatprep.subr.bf16.mxu0 0
      %2017 = vmatpush1.bf16.msra.mxu0 0
      %2018 = vmatprep.subr.bf16.mxu0 0
      %2019 = vmatpush1.bf16.msra.mxu0 0
      %2020 = vmatprep.subr.bf16.mxu0 0
      %2021 = vmatpush1.bf16.msra.mxu0 0
      %2022 = vmatprep.subr.bf16.mxu0 0
      %2023 = vmatpush1.bf16.msra.mxu0 0
      %2024 = vmatprep.subr.bf16.mxu0 0
      %2025 = vmatpush1.bf16.msra.mxu0 0
      %2026 = vmatprep.subr.bf16.mxu0 0
      %2027 = vmatpush1.bf16.msra.mxu0 0
      %2028 = vmatprep.subr.bf16.mxu0 0
      %2029 = vmatpush1.bf16.msra.mxu0 0
      %2030 = vmatprep.subr.bf16.mxu0 0
      %2031 = vmatpush1.bf16.msra.mxu0 0
      %2032 = vmatprep.subr.bf16.mxu0 0
      %2033 = vmatpush1.bf16.msra.mxu0 0
      %2034 = vmatprep.subr.bf16.mxu0 0
      %2035 = vmatpush1.bf16.msra.mxu0 0
      %2036 = vmatprep.subr.bf16.mxu0 0
      %2037 = vmatpush1.bf16.msra.mxu0 0
      %2038 = vmatprep.subr.bf16.mxu0 0
      %2039 = vmatpush1.bf16.msra.mxu0 0
      %2040 = vmatprep.subr.bf16.mxu0 0
      %2041 = vmatpush1.bf16.msra.mxu0 0
      %2042 = vmatprep.subr.bf16.mxu0 0
      %2043 = vmatpush1.bf16.msra.mxu0 0
      %2044 = vmatprep.mubr.bf16.mxu0 0
      %2045 = vmatmul.mubr.bf16.gmra.mrb[0].mxu0 %v1956
      %v2046 = vpop.f32.mrb[0].mxu0
      %v2047 = vadd.f32 0.0, %v2046
      %v2048 = vpop.f32.mrb[0].mxu0
      %v2049 = vpop.f32.mrb[0].mxu0
      %v2050 = vadd.f32 0.0, %v2049
      %v2051 = vpop.f32.mrb[0].mxu0
      %2052 = vmatprep.mubr.bf16.mxu0 0
      %2053 = vmatmul.mubr.bf16.gmra.mrb[0].mxu0 %v1959
      %v2054 = vpop.f32.mrb[0].mxu0
      %v2055 = vadd.f32 0.0, %v2054
      %v2056 = vpop.f32.mrb[0].mxu0
      %v2057 = vpop.f32.mrb[0].mxu0
      %v2058 = vadd.f32 0.0, %v2057
      %v2059 = vpop.f32.mrb[0].mxu0
      %2060 = vmatprep.mubr.bf16.mxu0 0
      %2061 = vmatmul.mubr.bf16.gmra.mrb[0].mxu0 %v1962
      %v2062 = vpop.f32.mrb[0].mxu0
      %v2063 = vadd.f32 0.0, %v2062
      %v2064 = vpop.f32.mrb[0].mxu0
      %v2065 = vpop.f32.mrb[0].mxu0
      %v2066 = vadd.f32 0.0, %v2065
      %v2067 = vpop.f32.mrb[0].mxu0
      %2068 = vmatprep.mubr.bf16.mxu0 0
      %2069 = vmatmul.mubr.bf16.gmra.mrb[0].mxu0 %v1965
      %v2070 = vpop.f32.mrb[0].mxu0
      %v2071 = vadd.f32 0.0, %v2070
      %v2072 = vpop.f32.mrb[0].mxu0
      %v2073 = vpop.f32.mrb[0].mxu0
      %v2074 = vadd.f32 0.0, %v2073
      %v2075 = vpop.f32.mrb[0].mxu0
      %2076 = vmatprep.mubr.bf16.mxu0 0
      %2077 = vmatmul.mubr.bf16.gmra.mrb[0].mxu0 %v1968
      %v2078 = vpop.f32.mrb[0].mxu0
      %v2079 = vadd.f32 0.0, %v2078
      %v2080 = vpop.f32.mrb[0].mxu0
      %v2081 = vpop.f32.mrb[0].mxu0
      %v2082 = vadd.f32 0.0, %v2081
      %v2083 = vpop.f32.mrb[0].mxu0
      %2084 = vmatprep.mubr.bf16.mxu0 0
      %2085 = vmatmul.mubr.bf16.gmra.mrb[0].mxu0 %v1971
      %v2086 = vpop.f32.mrb[0].mxu0
      %v2087 = vadd.f32 0.0, %v2086
      %v2088 = vpop.f32.mrb[0].mxu0
      %v2089 = vpop.f32.mrb[0].mxu0
      %v2090 = vadd.f32 0.0, %v2089
      %v2091 = vpop.f32.mrb[0].mxu0
      %2092 = vmatprep.mubr.bf16.mxu0 0
      %2093 = vmatmul.mubr.bf16.gmra.mrb[0].mxu0 %v1974
      %v2094 = vpop.f32.mrb[0].mxu0
      %v2095 = vadd.f32 0.0, %v2094
      %v2096 = vpop.f32.mrb[0].mxu0
      %v2097 = vpop.f32.mrb[0].mxu0
      %v2098 = vadd.f32 0.0, %v2097
      %v2099 = vpop.f32.mrb[0].mxu0
      %2100 = vmatprep.mubr.bf16.mxu0 0
      %2101 = vmatmul.mubr.bf16.gmra.mrb[0].mxu0 %v1977
      %v2102 = vpop.f32.mrb[0].mxu0
      %v2103 = vadd.f32 0.0, %v2102
      %v2104 = vpop.f32.mrb[0].mxu0
      %v2105 = vpop.f32.mrb[0].mxu0
      %v2106 = vadd.f32 0.0, %v2105
      %v2107 = vpop.f32.mrb[0].mxu0
      %2108 = vmatprep.mubr.bf16.mxu0 0
      %2109 = vmatmul.mubr.bf16.gmra.mrb[0].mxu0 %v1980
      %v2110 = vpop.f32.mrb[0].mxu0
      %v2111 = vadd.f32 0.0, %v2110
      %v2112 = vpop.f32.mrb[0].mxu0
      %v2113 = vpop.f32.mrb[0].mxu0
      %v2114 = vadd.f32 0.0, %v2113
      %v2115 = vpop.f32.mrb[0].mxu0
      %2116 = vmatprep.mubr.bf16.mxu0 0
      %2117 = vmatmul.mubr.bf16.gmra.mrb[0].mxu0 %v1983
      %v2118 = vpop.f32.mrb[0].mxu0
      %v2119 = vadd.f32 0.0, %v2118
      %v2120 = vpop.f32.mrb[0].mxu0
      %v2121 = vpop.f32.mrb[0].mxu0
      %v2122 = vadd.f32 0.0, %v2121
      %v2123 = vpop.f32.mrb[0].mxu0
      %2124 = vmatprep.mubr.bf16.mxu0 0
      %2125 = vmatmul.mubr.bf16.gmra.mrb[0].mxu0 %v1986
      %v2126 = vpop.f32.mrb[0].mxu0
      %v2127 = vadd.f32 0.0, %v2126
      %v2128 = vpop.f32.mrb[0].mxu0
      %v2129 = vpop.f32.mrb[0].mxu0
      %v2130 = vadd.f32 0.0, %v2129
      %v2131 = vpop.f32.mrb[0].mxu0
      %2132 = vmatprep.mubr.bf16.mxu0 0
      %2133 = vmatmul.mubr.bf16.gmra.mrb[0].mxu0 %v1989
      %v2134 = vpop.f32.mrb[0].mxu0
      %v2135 = vadd.f32 0.0, %v2134
      %v2136 = vpop.f32.mrb[0].mxu0
      %v2137 = vpop.f32.mrb[0].mxu0
      %v2138 = vadd.f32 0.0, %v2137
      %v2139 = vpop.f32.mrb[0].mxu0
      %2140 = vmatprep.mubr.bf16.mxu0 0
      %2141 = vmatmul.mubr.bf16.gmra.mrb[0].mxu0 %v1992
      %v2142 = vpop.f32.mrb[0].mxu0
      %v2143 = vadd.f32 0.0, %v2142
      %v2144 = vpop.f32.mrb[0].mxu0
      %v2145 = vpop.f32.mrb[0].mxu0
      %v2146 = vadd.f32 0.0, %v2145
      %v2147 = vpop.f32.mrb[0].mxu0
      %2148 = vmatprep.mubr.bf16.mxu0 0
      %2149 = vmatmul.mubr.bf16.gmra.mrb[0].mxu0 %v1995
      %v2150 = vpop.f32.mrb[0].mxu0
      %v2151 = vadd.f32 0.0, %v2150
      %v2152 = vpop.f32.mrb[0].mxu0
      %v2153 = vpop.f32.mrb[0].mxu0
      %v2154 = vadd.f32 0.0, %v2153
      %v2155 = vpop.f32.mrb[0].mxu0
      %2156 = vmatprep.mubr.bf16.mxu0 0
      %2157 = vmatmul.mubr.bf16.gmra.mrb[0].mxu0 %v1998
      %v2158 = vpop.f32.mrb[0].mxu0
      %v2159 = vadd.f32 0.0, %v2158
      %v2160 = vpop.f32.mrb[0].mxu0
      %v2161 = vpop.f32.mrb[0].mxu0
      %v2162 = vadd.f32 0.0, %v2161
      %v2163 = vpop.f32.mrb[0].mxu0
      %2164 = vmatprep.mubr.bf16.mxu0 0
      %2165 = vmatmul.mubr.bf16.gmra.mrb[0].mxu0 %v2001
      %v2166 = vpop.f32.mrb[0].mxu0
      %v2167 = vadd.f32 0.0, %v2166
      %v2168 = vpop.f32.mrb[0].mxu0
      %v2169 = vpop.f32.mrb[0].mxu0
      %v2170 = vadd.f32 0.0, %v2169
      %v2171 = vpop.f32.mrb[0].mxu0
      %2172 = vmatprep.mubr.bf16.mxu0 0
      %2173 = vmatmul.mubr.bf16.gmra.mrb[0].mxu0 %v2004
      %v2174 = vpop.f32.mrb[0].mxu0
      %v2175 = vadd.f32 0.0, %v2174
      %v2176 = vpop.f32.mrb[0].mxu0
      %v2177 = vpop.f32.mrb[0].mxu0
      %v2178 = vadd.f32 0.0, %v2177
      %v2179 = vpop.f32.mrb[0].mxu0
      %2180 = vmatprep.mubr.bf16.mxu0 0
      %2181 = vmatmul.mubr.bf16.gmra.mrb[0].mxu0 %v2007
      %v2182 = vpop.f32.mrb[0].mxu0
      %v2183 = vadd.f32 0.0, %v2182
      %v2184 = vpop.f32.mrb[0].mxu0
      %v2185 = vpop.f32.mrb[0].mxu0
      %v2186 = vadd.f32 0.0, %v2185
      %v2187 = vpop.f32.mrb[0].mxu0
      %2188 = vdwg.mxu0
      %v2189 = vadd.f32 %v1917, %v2047
      %v2190 = vadd.f32 %v1918, %v2050
      %v2191 = vadd.f32 %v1919, %v2055
      %v2192 = vadd.f32 %v1920, %v2058
      %v2193 = vadd.f32 %v1921, %v2063
      %v2194 = vadd.f32 %v1922, %v2066
      %v2195 = vadd.f32 %v1923, %v2071
      %v2196 = vadd.f32 %v1924, %v2074
      %v2197 = vadd.f32 %v1925, %v2079
      %v2198 = vadd.f32 %v1926, %v2082
      %v2199 = vadd.f32 %v1927, %v2087
      %v2200 = vadd.f32 %v1928, %v2090
      %v2201 = vadd.f32 %v1929, %v2095
      %v2202 = vadd.f32 %v1930, %v2098
      %v2203 = vadd.f32 %v1931, %v2103
      %v2204 = vadd.f32 %v1932, %v2106
      %v2205 = vadd.f32 %v1933, %v2111
      %v2206 = vadd.f32 %v1934, %v2114
      %v2207 = vadd.f32 %v1935, %v2119
      %v2208 = vadd.f32 %v1936, %v2122
      %v2209 = vadd.f32 %v1937, %v2127
      %v2210 = vadd.f32 %v1938, %v2130
      %v2211 = vadd.f32 %v1939, %v2135
      %v2212 = vadd.f32 %v1940, %v2138
      %v2213 = vadd.f32 %v1941, %v2143
      %v2214 = vadd.f32 %v1942, %v2146
      %v2215 = vadd.f32 %v1943, %v2151
      %v2216 = vadd.f32 %v1944, %v2154
      %v2217 = vadd.f32 %v1945, %v2159
      %v2218 = vadd.f32 %v1946, %v2162
      %v2219 = vadd.f32 %v1947, %v2167
      %v2220 = vadd.f32 %v1948, %v2170
      %v2221 = vadd.f32 %v1949, %v2175
      %v2222 = vadd.f32 %v1950, %v2178
      %v2223 = vadd.f32 %v1951, %v2183
      %v2224 = vadd.f32 %v1952, %v2186
      %2225 = vst.msk [vmem:[#allocation3] sm:$0xff] %vm226, %v2189
      %2226 = vst.msk [vmem:[#allocation3 + $0x8] sm:$0xff] %vm226, %v2190
      %2227 = vst.msk [vmem:[#allocation3 + $0x10] sm:$0xff] %vm226, %v2191
      %2228 = vst.msk [vmem:[#allocation3 + $0x18] sm:$0xff] %vm226, %v2192
      %2229 = vst.msk [vmem:[#allocation3 + $0x20] sm:$0xff] %vm226, %v2193
      %2230 = vst.msk [vmem:[#allocation3 + $0x28] sm:$0xff] %vm226, %v2194
      %2231 = vst.msk [vmem:[#allocation3 + $0x30] sm:$0xff] %vm226, %v2195
      %2232 = vst.msk [vmem:[#allocation3 + $0x38] sm:$0xff] %vm226, %v2196
      %2233 = vst.msk [vmem:[#allocation3 + $0x40] sm:$0xff] %vm226, %v2197
      %2234 = vst.msk [vmem:[#allocation3 + $0x48] sm:$0xff] %vm226, %v2198
      %2235 = vst.msk [vmem:[#allocation3 + $0x50] sm:$0xff] %vm226, %v2199
      %2236 = vst.msk [vmem:[#allocation3 + $0x58] sm:$0xff] %vm226, %v2200
      %2237 = vst.msk [vmem:[#allocation3 + $0x60] sm:$0xff] %vm226, %v2201
      %2238 = vst.msk [vmem:[#allocation3 + $0x68] sm:$0xff] %vm226, %v2202
      %2239 = vst.msk [vmem:[#allocation3 + $0x70] sm:$0xff] %vm226, %v2203
      %2240 = vst.msk [vmem:[#allocation3 + $0x78] sm:$0xff] %vm226, %v2204
      %2241 = vst.msk [vmem:[#allocation3 + $0x80] sm:$0xff] %vm226, %v2205
      %2242 = vst.msk [vmem:[#allocation3 + $0x88] sm:$0xff] %vm226, %v2206
      %2243 = vst.msk [vmem:[#allocation3 + $0x90] sm:$0xff] %vm226, %v2207
      %2244 = vst.msk [vmem:[#allocation3 + $0x98] sm:$0xff] %vm226, %v2208
      %2245 = vst.msk [vmem:[#allocation3 + $0xa0] sm:$0xff] %vm226, %v2209
      %2246 = vst.msk [vmem:[#allocation3 + $0xa8] sm:$0xff] %vm226, %v2210
      %2247 = vst.msk [vmem:[#allocation3 + $0xb0] sm:$0xff] %vm226, %v2211
      %2248 = vst.msk [vmem:[#allocation3 + $0xb8] sm:$0xff] %vm226, %v2212
      %2249 = vst.msk [vmem:[#allocation3 + $0xc0] sm:$0xff] %vm226, %v2213
      %2250 = vst.msk [vmem:[#allocation3 + $0xc8] sm:$0xff] %vm226, %v2214
      %2251 = vst.msk [vmem:[#allocation3 + $0xd0] sm:$0xff] %vm226, %v2215
      %2252 = vst.msk [vmem:[#allocation3 + $0xd8] sm:$0xff] %vm226, %v2216
      %2253 = vst.msk [vmem:[#allocation3 + $0xe0] sm:$0xff] %vm226, %v2217
      %2254 = vst.msk [vmem:[#allocation3 + $0xe8] sm:$0xff] %vm226, %v2218
      %2255 = vst.msk [vmem:[#allocation3 + $0xf0] sm:$0xff] %vm226, %v2219
      %2256 = vst.msk [vmem:[#allocation3 + $0xf8] sm:$0xff] %vm226, %v2220
      %2257 = vst.msk [vmem:[#allocation3 + $0x100] sm:$0xff] %vm226, %v2221
      %2258 = vst.msk [vmem:[#allocation3 + $0x108] sm:$0xff] %vm226, %v2222
      %2259 = vst.msk [vmem:[#allocation3 + $0x110] sm:$0xff] %vm226, %v2223
      %2260 = vst.msk [vmem:[#allocation3 + $0x118] sm:$0x3f] %vm269, %v2224
      %v2261 = vld [vmem:[%s219 + $0x14] sm:$0xff]
      %v2262 = vld [vmem:[%s219 + $0x1c] sm:$0xff]
      %v2263 = vld [vmem:[%s219 + $0x24] sm:$0xff]
      %v2264 = vld [vmem:[%s219 + $0x2c] sm:$0xff]
      %v2265 = vld [vmem:[%s219 + $0x34] sm:$0xff]
      %v2266 = vld [vmem:[%s219 + $0x3c] sm:$0xff]
      %v2267 = vld [vmem:[%s219 + $0x44] sm:$0xff]
      %v2268 = vld [vmem:[%s219 + $0x4c] sm:$0xff]
      %v2269 = vld [vmem:[%s219 + $0x54] sm:$0xff]
      %v2270 = vld [vmem:[%s219 + $0x5c] sm:$0xff]
      %v2271 = vld [vmem:[%s219 + $0x64] sm:$0xff]
      %v2272 = vld [vmem:[%s219 + $0x6c] sm:$0xff]
      %v2273 = vld [vmem:[%s219 + $0x74] sm:$0xff]
      %v2274 = vld [vmem:[%s219 + $0x7c] sm:$0xff]
      %v2275 = vld [vmem:[%s219 + $0x84] sm:$0xff]
      %v2276 = vld [vmem:[%s219 + $0x8c] sm:$0xff]
      %v2277 = vld [vmem:[%s219 + $0x94] sm:$0xff]
      %v2278 = vld [vmem:[%s219 + $0x9c] sm:$0xff]
      %v2279 = vld [vmem:[%s219 + $0xa4] sm:$0xff]
      %v2280 = vld [vmem:[%s219 + $0xac] sm:$0xff]
      %v2281 = vld [vmem:[%s219 + $0xb4] sm:$0xff]
      %v2282 = vld [vmem:[%s219 + $0xbc] sm:$0xff]
      %v2283 = vld [vmem:[%s219 + $0xc4] sm:$0xff]
      %v2284 = vld [vmem:[%s219 + $0xcc] sm:$0xff]
      %v2285 = vld [vmem:[%s219 + $0xd4] sm:$0xff]
      %v2286 = vld [vmem:[%s219 + $0xdc] sm:$0xff]
      %v2287 = vld [vmem:[%s219 + $0xe4] sm:$0xff]
      %v2288 = vld [vmem:[%s219 + $0xec] sm:$0xff]
      %v2289 = vld [vmem:[%s219 + $0xf4] sm:$0xff]
      %v2290 = vld [vmem:[%s219 + $0xfc] sm:$0xff]
      %v2291 = vld [vmem:[%s219 + $0x104] sm:$0xff]
      %v2292 = vld [vmem:[%s219 + $0x10c] sm:$0xff]
      %v2293 = vld [vmem:[%s219 + $0x114] sm:$0xff]
      %v2294 = vld [vmem:[%s219 + $0x11c] sm:$0xff]
      %v2295 = vld [vmem:[%s219 + $0x124] sm:$0xff]
      %v2296 = vld [vmem:[%s219 + $0x12c] sm:$0x3f]
      %v2297 = vpack.c.bf16 %v2262, %v2261
      %v2298 = vpack.c.bf16 %v2264, %v2263
      %v2299 = vpack.c.bf16 %v2266, %v2265
      %v2300 = vpack.c.bf16 %v2268, %v2267
      %v2301 = vpack.c.bf16 %v2270, %v2269
      %v2302 = vpack.c.bf16 %v2272, %v2271
      %v2303 = vpack.c.bf16 %v2274, %v2273
      %v2304 = vpack.c.bf16 %v2276, %v2275
      %v2305 = vpack.c.bf16 %v2278, %v2277
      %v2306 = vpack.c.bf16 %v2280, %v2279
      %v2307 = vpack.c.bf16 %v2282, %v2281
      %v2308 = vpack.c.bf16 %v2284, %v2283
      %v2309 = vpack.c.bf16 %v2286, %v2285
      %v2310 = vpack.c.bf16 %v2288, %v2287
      %v2311 = vpack.c.bf16 %v2290, %v2289
      %v2312 = vpack.c.bf16 %v2292, %v2291
      %v2313 = vpack.c.bf16 %v2294, %v2293
      %v2314 = vpack.c.bf16 %v2296, %v2295
      %v2315 = vld [vmem:[#allocation3] sm:$0xff]
      %v2316 = vld [vmem:[#allocation3 + $0x8] sm:$0xff]
      %v2317 = vld [vmem:[#allocation3 + $0x10] sm:$0xff]
      %v2318 = vld [vmem:[#allocation3 + $0x18] sm:$0xff]
      %v2319 = vld [vmem:[#allocation3 + $0x20] sm:$0xff]
      %v2320 = vld [vmem:[#allocation3 + $0x28] sm:$0xff]
      %v2321 = vld [vmem:[#allocation3 + $0x30] sm:$0xff]
      %v2322 = vld [vmem:[#allocation3 + $0x38] sm:$0xff]
      %v2323 = vld [vmem:[#allocation3 + $0x40] sm:$0xff]
      %v2324 = vld [vmem:[#allocation3 + $0x48] sm:$0xff]
      %v2325 = vld [vmem:[#allocation3 + $0x50] sm:$0xff]
      %v2326 = vld [vmem:[#allocation3 + $0x58] sm:$0xff]
      %v2327 = vld [vmem:[#allocation3 + $0x60] sm:$0xff]
      %v2328 = vld [vmem:[#allocation3 + $0x68] sm:$0xff]
      %v2329 = vld [vmem:[#allocation3 + $0x70] sm:$0xff]
      %v2330 = vld [vmem:[#allocation3 + $0x78] sm:$0xff]
      %v2331 = vld [vmem:[#allocation3 + $0x80] sm:$0xff]
      %v2332 = vld [vmem:[#allocation3 + $0x88] sm:$0xff]
      %v2333 = vld [vmem:[#allocation3 + $0x90] sm:$0xff]
      %v2334 = vld [vmem:[#allocation3 + $0x98] sm:$0xff]
      %v2335 = vld [vmem:[#allocation3 + $0xa0] sm:$0xff]
      %v2336 = vld [vmem:[#allocation3 + $0xa8] sm:$0xff]
      %v2337 = vld [vmem:[#allocation3 + $0xb0] sm:$0xff]
      %v2338 = vld [vmem:[#allocation3 + $0xb8] sm:$0xff]
      %v2339 = vld [vmem:[#allocation3 + $0xc0] sm:$0xff]
      %v2340 = vld [vmem:[#allocation3 + $0xc8] sm:$0xff]
      %v2341 = vld [vmem:[#allocation3 + $0xd0] sm:$0xff]
      %v2342 = vld [vmem:[#allocation3 + $0xd8] sm:$0xff]
      %v2343 = vld [vmem:[#allocation3 + $0xe0] sm:$0xff]
      %v2344 = vld [vmem:[#allocation3 + $0xe8] sm:$0xff]
      %v2345 = vld [vmem:[#allocation3 + $0xf0] sm:$0xff]
      %v2346 = vld [vmem:[#allocation3 + $0xf8] sm:$0xff]
      %v2347 = vld [vmem:[#allocation3 + $0x100] sm:$0xff]
      %v2348 = vld [vmem:[#allocation3 + $0x108] sm:$0xff]
      %v2349 = vld [vmem:[#allocation3 + $0x110] sm:$0xff]
      %v2350 = vld [vmem:[#allocation3 + $0x118] sm:$0x3f]
      %s2351 = scalar_lea.vmem %s1, 10
      %v2352 = vld [vmem:[%s2351] sm:$0x3]
      %v2354 = vsel %vm226, %v2297, 0
      %v2357 = vsel %vm226, %v2298, 0
      %v2360 = vsel %vm226, %v2299, 0
      %v2363 = vsel %vm226, %v2300, 0
      %v2366 = vsel %vm226, %v2301, 0
      %v2369 = vsel %vm226, %v2302, 0
      %v2372 = vsel %vm226, %v2303, 0
      %v2375 = vsel %vm226, %v2304, 0
      %v2378 = vsel %vm226, %v2305, 0
      %v2381 = vsel %vm226, %v2306, 0
      %v2384 = vsel %vm226, %v2307, 0
      %v2387 = vsel %vm226, %v2308, 0
      %v2390 = vsel %vm226, %v2309, 0
      %v2393 = vsel %vm226, %v2310, 0
      %v2396 = vsel %vm226, %v2311, 0
      %v2399 = vsel %vm226, %v2312, 0
      %v2402 = vsel %vm226, %v2313, 0
      %v2405 = vsel %vm226, %v2314, 0
      %v2408 = vsel %vm416, %v2352, 0
      %2410 = vmatprep.subr.bf16.mxu0 0
      %2411 = vmatpush1.bf16.msra.mxu0 %v2408
      %2412 = vmatprep.subr.bf16.mxu0 0
      %2413 = vmatpush1.bf16.msra.mxu0 0
      %2414 = vmatprep.subr.bf16.mxu0 0
      %2415 = vmatpush1.bf16.msra.mxu0 0
      %2416 = vmatprep.subr.bf16.mxu0 0
      %2417 = vmatpush1.bf16.msra.mxu0 0
      %2418 = vmatprep.subr.bf16.mxu0 0
      %2419 = vmatpush1.bf16.msra.mxu0 0
      %2420 = vmatprep.subr.bf16.mxu0 0
      %2421 = vmatpush1.bf16.msra.mxu0 0
      %2422 = vmatprep.subr.bf16.mxu0 0
      %2423 = vmatpush1.bf16.msra.mxu0 0
      %2424 = vmatprep.subr.bf16.mxu0 0
      %2425 = vmatpush1.bf16.msra.mxu0 0
      %2426 = vmatprep.subr.bf16.mxu0 0
      %2427 = vmatpush1.bf16.msra.mxu0 0
      %2428 = vmatprep.subr.bf16.mxu0 0
      %2429 = vmatpush1.bf16.msra.mxu0 0
      %2430 = vmatprep.subr.bf16.mxu0 0
      %2431 = vmatpush1.bf16.msra.mxu0 0
      %2432 = vmatprep.subr.bf16.mxu0 0
      %2433 = vmatpush1.bf16.msra.mxu0 0
      %2434 = vmatprep.subr.bf16.mxu0 0
      %2435 = vmatpush1.bf16.msra.mxu0 0
      %2436 = vmatprep.subr.bf16.mxu0 0
      %2437 = vmatpush1.bf16.msra.mxu0 0
      %2438 = vmatprep.subr.bf16.mxu0 0
      %2439 = vmatpush1.bf16.msra.mxu0 0
      %2440 = vmatprep.subr.bf16.mxu0 0
      %2441 = vmatpush1.bf16.msra.mxu0 0
      %2442 = vmatprep.mubr.bf16.mxu0 0
      %2443 = vmatmul.mubr.bf16.gmra.mrb[0].mxu0 %v2354
      %v2444 = vpop.f32.mrb[0].mxu0
      %v2445 = vadd.f32 0.0, %v2444
      %v2446 = vpop.f32.mrb[0].mxu0
      %v2447 = vpop.f32.mrb[0].mxu0
      %v2448 = vadd.f32 0.0, %v2447
      %v2449 = vpop.f32.mrb[0].mxu0
      %2450 = vmatprep.mubr.bf16.mxu0 0
      %2451 = vmatmul.mubr.bf16.gmra.mrb[0].mxu0 %v2357
      %v2452 = vpop.f32.mrb[0].mxu0
      %v2453 = vadd.f32 0.0, %v2452
      %v2454 = vpop.f32.mrb[0].mxu0
      %v2455 = vpop.f32.mrb[0].mxu0
      %v2456 = vadd.f32 0.0, %v2455
      %v2457 = vpop.f32.mrb[0].mxu0
      %2458 = vmatprep.mubr.bf16.mxu0 0
      %2459 = vmatmul.mubr.bf16.gmra.mrb[0].mxu0 %v2360
      %v2460 = vpop.f32.mrb[0].mxu0
      %v2461 = vadd.f32 0.0, %v2460
      %v2462 = vpop.f32.mrb[0].mxu0
      %v2463 = vpop.f32.mrb[0].mxu0
      %v2464 = vadd.f32 0.0, %v2463
      %v2465 = vpop.f32.mrb[0].mxu0
      %2466 = vmatprep.mubr.bf16.mxu0 0
      %2467 = vmatmul.mubr.bf16.gmra.mrb[0].mxu0 %v2363
      %v2468 = vpop.f32.mrb[0].mxu0
      %v2469 = vadd.f32 0.0, %v2468
      %v2470 = vpop.f32.mrb[0].mxu0
      %v2471 = vpop.f32.mrb[0].mxu0
      %v2472 = vadd.f32 0.0, %v2471
      %v2473 = vpop.f32.mrb[0].mxu0
      %2474 = vmatprep.mubr.bf16.mxu0 0
      %2475 = vmatmul.mubr.bf16.gmra.mrb[0].mxu0 %v2366
      %v2476 = vpop.f32.mrb[0].mxu0
      %v2477 = vadd.f32 0.0, %v2476
      %v2478 = vpop.f32.mrb[0].mxu0
      %v2479 = vpop.f32.mrb[0].mxu0
      %v2480 = vadd.f32 0.0, %v2479
      %v2481 = vpop.f32.mrb[0].mxu0
      %2482 = vmatprep.mubr.bf16.mxu0 0
      %2483 = vmatmul.mubr.bf16.gmra.mrb[0].mxu0 %v2369
      %v2484 = vpop.f32.mrb[0].mxu0
      %v2485 = vadd.f32 0.0, %v2484
      %v2486 = vpop.f32.mrb[0].mxu0
      %v2487 = vpop.f32.mrb[0].mxu0
      %v2488 = vadd.f32 0.0, %v2487
      %v2489 = vpop.f32.mrb[0].mxu0
      %2490 = vmatprep.mubr.bf16.mxu0 0
      %2491 = vmatmul.mubr.bf16.gmra.mrb[0].mxu0 %v2372
      %v2492 = vpop.f32.mrb[0].mxu0
      %v2493 = vadd.f32 0.0, %v2492
      %v2494 = vpop.f32.mrb[0].mxu0
      %v2495 = vpop.f32.mrb[0].mxu0
      %v2496 = vadd.f32 0.0, %v2495
      %v2497 = vpop.f32.mrb[0].mxu0
      %2498 = vmatprep.mubr.bf16.mxu0 0
      %2499 = vmatmul.mubr.bf16.gmra.mrb[0].mxu0 %v2375
      %v2500 = vpop.f32.mrb[0].mxu0
      %v2501 = vadd.f32 0.0, %v2500
      %v2502 = vpop.f32.mrb[0].mxu0
      %v2503 = vpop.f32.mrb[0].mxu0
      %v2504 = vadd.f32 0.0, %v2503
      %v2505 = vpop.f32.mrb[0].mxu0
      %2506 = vmatprep.mubr.bf16.mxu0 0
      %2507 = vmatmul.mubr.bf16.gmra.mrb[0].mxu0 %v2378
      %v2508 = vpop.f32.mrb[0].mxu0
      %v2509 = vadd.f32 0.0, %v2508
      %v2510 = vpop.f32.mrb[0].mxu0
      %v2511 = vpop.f32.mrb[0].mxu0
      %v2512 = vadd.f32 0.0, %v2511
      %v2513 = vpop.f32.mrb[0].mxu0
      %2514 = vmatprep.mubr.bf16.mxu0 0
      %2515 = vmatmul.mubr.bf16.gmra.mrb[0].mxu0 %v2381
      %v2516 = vpop.f32.mrb[0].mxu0
      %v2517 = vadd.f32 0.0, %v2516
      %v2518 = vpop.f32.mrb[0].mxu0
      %v2519 = vpop.f32.mrb[0].mxu0
      %v2520 = vadd.f32 0.0, %v2519
      %v2521 = vpop.f32.mrb[0].mxu0
      %2522 = vmatprep.mubr.bf16.mxu0 0
      %2523 = vmatmul.mubr.bf16.gmra.mrb[0].mxu0 %v2384
      %v2524 = vpop.f32.mrb[0].mxu0
      %v2525 = vadd.f32 0.0, %v2524
      %v2526 = vpop.f32.mrb[0].mxu0
      %v2527 = vpop.f32.mrb[0].mxu0
      %v2528 = vadd.f32 0.0, %v2527
      %v2529 = vpop.f32.mrb[0].mxu0
      %2530 = vmatprep.mubr.bf16.mxu0 0
      %2531 = vmatmul.mubr.bf16.gmra.mrb[0].mxu0 %v2387
      %v2532 = vpop.f32.mrb[0].mxu0
      %v2533 = vadd.f32 0.0, %v2532
      %v2534 = vpop.f32.mrb[0].mxu0
      %v2535 = vpop.f32.mrb[0].mxu0
      %v2536 = vadd.f32 0.0, %v2535
      %v2537 = vpop.f32.mrb[0].mxu0
      %2538 = vmatprep.mubr.bf16.mxu0 0
      %2539 = vmatmul.mubr.bf16.gmra.mrb[0].mxu0 %v2390
      %v2540 = vpop.f32.mrb[0].mxu0
      %v2541 = vadd.f32 0.0, %v2540
      %v2542 = vpop.f32.mrb[0].mxu0
      %v2543 = vpop.f32.mrb[0].mxu0
      %v2544 = vadd.f32 0.0, %v2543
      %v2545 = vpop.f32.mrb[0].mxu0
      %2546 = vmatprep.mubr.bf16.mxu0 0
      %2547 = vmatmul.mubr.bf16.gmra.mrb[0].mxu0 %v2393
      %v2548 = vpop.f32.mrb[0].mxu0
      %v2549 = vadd.f32 0.0, %v2548
      %v2550 = vpop.f32.mrb[0].mxu0
      %v2551 = vpop.f32.mrb[0].mxu0
      %v2552 = vadd.f32 0.0, %v2551
      %v2553 = vpop.f32.mrb[0].mxu0
      %2554 = vmatprep.mubr.bf16.mxu0 0
      %2555 = vmatmul.mubr.bf16.gmra.mrb[0].mxu0 %v2396
      %v2556 = vpop.f32.mrb[0].mxu0
      %v2557 = vadd.f32 0.0, %v2556
      %v2558 = vpop.f32.mrb[0].mxu0
      %v2559 = vpop.f32.mrb[0].mxu0
      %v2560 = vadd.f32 0.0, %v2559
      %v2561 = vpop.f32.mrb[0].mxu0
      %2562 = vmatprep.mubr.bf16.mxu0 0
      %2563 = vmatmul.mubr.bf16.gmra.mrb[0].mxu0 %v2399
      %v2564 = vpop.f32.mrb[0].mxu0
      %v2565 = vadd.f32 0.0, %v2564
      %v2566 = vpop.f32.mrb[0].mxu0
      %v2567 = vpop.f32.mrb[0].mxu0
      %v2568 = vadd.f32 0.0, %v2567
      %v2569 = vpop.f32.mrb[0].mxu0
      %2570 = vmatprep.mubr.bf16.mxu0 0
      %2571 = vmatmul.mubr.bf16.gmra.mrb[0].mxu0 %v2402
      %v2572 = vpop.f32.mrb[0].mxu0
      %v2573 = vadd.f32 0.0, %v2572
      %v2574 = vpop.f32.mrb[0].mxu0
      %v2575 = vpop.f32.mrb[0].mxu0
      %v2576 = vadd.f32 0.0, %v2575
      %v2577 = vpop.f32.mrb[0].mxu0
      %2578 = vmatprep.mubr.bf16.mxu0 0
      %2579 = vmatmul.mubr.bf16.gmra.mrb[0].mxu0 %v2405
      %v2580 = vpop.f32.mrb[0].mxu0
      %v2581 = vadd.f32 0.0, %v2580
      %v2582 = vpop.f32.mrb[0].mxu0
      %v2583 = vpop.f32.mrb[0].mxu0
      %v2584 = vadd.f32 0.0, %v2583
      %v2585 = vpop.f32.mrb[0].mxu0
      %2586 = vdwg.mxu0
      %v2587 = vadd.f32 %v2315, %v2445
      %v2588 = vadd.f32 %v2316, %v2448
      %v2589 = vadd.f32 %v2317, %v2453
      %v2590 = vadd.f32 %v2318, %v2456
      %v2591 = vadd.f32 %v2319, %v2461
      %v2592 = vadd.f32 %v2320, %v2464
      %v2593 = vadd.f32 %v2321, %v2469
      %v2594 = vadd.f32 %v2322, %v2472
      %v2595 = vadd.f32 %v2323, %v2477
      %v2596 = vadd.f32 %v2324, %v2480
      %v2597 = vadd.f32 %v2325, %v2485
      %v2598 = vadd.f32 %v2326, %v2488
      %v2599 = vadd.f32 %v2327, %v2493
      %v2600 = vadd.f32 %v2328, %v2496
      %v2601 = vadd.f32 %v2329, %v2501
      %v2602 = vadd.f32 %v2330, %v2504
      %v2603 = vadd.f32 %v2331, %v2509
      %v2604 = vadd.f32 %v2332, %v2512
      %v2605 = vadd.f32 %v2333, %v2517
      %v2606 = vadd.f32 %v2334, %v2520
      %v2607 = vadd.f32 %v2335, %v2525
      %v2608 = vadd.f32 %v2336, %v2528
      %v2609 = vadd.f32 %v2337, %v2533
      %v2610 = vadd.f32 %v2338, %v2536
      %v2611 = vadd.f32 %v2339, %v2541
      %v2612 = vadd.f32 %v2340, %v2544
      %v2613 = vadd.f32 %v2341, %v2549
      %v2614 = vadd.f32 %v2342, %v2552
      %v2615 = vadd.f32 %v2343, %v2557
      %v2616 = vadd.f32 %v2344, %v2560
      %v2617 = vadd.f32 %v2345, %v2565
      %v2618 = vadd.f32 %v2346, %v2568
      %v2619 = vadd.f32 %v2347, %v2573
      %v2620 = vadd.f32 %v2348, %v2576
      %v2621 = vadd.f32 %v2349, %v2581
      %v2622 = vadd.f32 %v2350, %v2584
      %2623 = vst.msk [vmem:[#allocation3] sm:$0xff] %vm226, %v2587
      %2624 = vst.msk [vmem:[#allocation3 + $0x8] sm:$0xff] %vm226, %v2588
      %2625 = vst.msk [vmem:[#allocation3 + $0x10] sm:$0xff] %vm226, %v2589
      %2626 = vst.msk [vmem:[#allocation3 + $0x18] sm:$0xff] %vm226, %v2590
      %2627 = vst.msk [vmem:[#allocation3 + $0x20] sm:$0xff] %vm226, %v2591
      %2628 = vst.msk [vmem:[#allocation3 + $0x28] sm:$0xff] %vm226, %v2592
      %2629 = vst.msk [vmem:[#allocation3 + $0x30] sm:$0xff] %vm226, %v2593
      %2630 = vst.msk [vmem:[#allocation3 + $0x38] sm:$0xff] %vm226, %v2594
      %2631 = vst.msk [vmem:[#allocation3 + $0x40] sm:$0xff] %vm226, %v2595
      %2632 = vst.msk [vmem:[#allocation3 + $0x48] sm:$0xff] %vm226, %v2596
      %2633 = vst.msk [vmem:[#allocation3 + $0x50] sm:$0xff] %vm226, %v2597
      %2634 = vst.msk [vmem:[#allocation3 + $0x58] sm:$0xff] %vm226, %v2598
      %2635 = vst.msk [vmem:[#allocation3 + $0x60] sm:$0xff] %vm226, %v2599
      %2636 = vst.msk [vmem:[#allocation3 + $0x68] sm:$0xff] %vm226, %v2600
      %2637 = vst.msk [vmem:[#allocation3 + $0x70] sm:$0xff] %vm226, %v2601
      %2638 = vst.msk [vmem:[#allocation3 + $0x78] sm:$0xff] %vm226, %v2602
      %2639 = vst.msk [vmem:[#allocation3 + $0x80] sm:$0xff] %vm226, %v2603
      %2640 = vst.msk [vmem:[#allocation3 + $0x88] sm:$0xff] %vm226, %v2604
      %2641 = vst.msk [vmem:[#allocation3 + $0x90] sm:$0xff] %vm226, %v2605
      %2642 = vst.msk [vmem:[#allocation3 + $0x98] sm:$0xff] %vm226, %v2606
      %2643 = vst.msk [vmem:[#allocation3 + $0xa0] sm:$0xff] %vm226, %v2607
      %2644 = vst.msk [vmem:[#allocation3 + $0xa8] sm:$0xff] %vm226, %v2608
      %2645 = vst.msk [vmem:[#allocation3 + $0xb0] sm:$0xff] %vm226, %v2609
      %2646 = vst.msk [vmem:[#allocation3 + $0xb8] sm:$0xff] %vm226, %v2610
      %2647 = vst.msk [vmem:[#allocation3 + $0xc0] sm:$0xff] %vm226, %v2611
      %2648 = vst.msk [vmem:[#allocation3 + $0xc8] sm:$0xff] %vm226, %v2612
      %2649 = vst.msk [vmem:[#allocation3 + $0xd0] sm:$0xff] %vm226, %v2613
      %2650 = vst.msk [vmem:[#allocation3 + $0xd8] sm:$0xff] %vm226, %v2614
      %2651 = vst.msk [vmem:[#allocation3 + $0xe0] sm:$0xff] %vm226, %v2615
      %2652 = vst.msk [vmem:[#allocation3 + $0xe8] sm:$0xff] %vm226, %v2616
      %2653 = vst.msk [vmem:[#allocation3 + $0xf0] sm:$0xff] %vm226, %v2617
      %2654 = vst.msk [vmem:[#allocation3 + $0xf8] sm:$0xff] %vm226, %v2618
      %2655 = vst.msk [vmem:[#allocation3 + $0x100] sm:$0xff] %vm226, %v2619
      %2656 = vst.msk [vmem:[#allocation3 + $0x108] sm:$0xff] %vm226, %v2620
      %2657 = vst.msk [vmem:[#allocation3 + $0x110] sm:$0xff] %vm226, %v2621
      %2658 = vst.msk [vmem:[#allocation3 + $0x118] sm:$0x3f] %vm269, %v2622
      %v2659 = vld [vmem:[%s219 + $0x24] sm:$0xff]
      %v2660 = vld [vmem:[%s219 + $0x2c] sm:$0xff]
      %v2661 = vld [vmem:[%s219 + $0x34] sm:$0xff]
      %v2662 = vld [vmem:[%s219 + $0x3c] sm:$0xff]
      %v2663 = vld [vmem:[%s219 + $0x44] sm:$0xff]
      %v2664 = vld [vmem:[%s219 + $0x4c] sm:$0xff]
      %v2665 = vld [vmem:[%s219 + $0x54] sm:$0xff]
      %v2666 = vld [vmem:[%s219 + $0x5c] sm:$0xff]
      %v2667 = vld [vmem:[%s219 + $0x64] sm:$0xff]
      %v2668 = vld [vmem:[%s219 + $0x6c] sm:$0xff]
      %v2669 = vld [vmem:[%s219 + $0x74] sm:$0xff]
      %v2670 = vld [vmem:[%s219 + $0x7c] sm:$0xff]
      %v2671 = vld [vmem:[%s219 + $0x84] sm:$0xff]
      %v2672 = vld [vmem:[%s219 + $0x8c] sm:$0xff]
      %v2673 = vld [vmem:[%s219 + $0x94] sm:$0xff]
      %v2674 = vld [vmem:[%s219 + $0x9c] sm:$0xff]
      %v2675 = vld [vmem:[%s219 + $0xa4] sm:$0xff]
      %v2676 = vld [vmem:[%s219 + $0xac] sm:$0xff]
      %v2677 = vld [vmem:[%s219 + $0xb4] sm:$0xff]
      %v2678 = vld [vmem:[%s219 + $0xbc] sm:$0xff]
      %v2679 = vld [vmem:[%s219 + $0xc4] sm:$0xff]
      %v2680 = vld [vmem:[%s219 + $0xcc] sm:$0xff]
      %v2681 = vld [vmem:[%s219 + $0xd4] sm:$0xff]
      %v2682 = vld [vmem:[%s219 + $0xdc] sm:$0xff]
      %v2683 = vld [vmem:[%s219 + $0xe4] sm:$0xff]
      %v2684 = vld [vmem:[%s219 + $0xec] sm:$0xff]
      %v2685 = vld [vmem:[%s219 + $0xf4] sm:$0xff]
      %v2686 = vld [vmem:[%s219 + $0xfc] sm:$0xff]
      %v2687 = vld [vmem:[%s219 + $0x104] sm:$0xff]
      %v2688 = vld [vmem:[%s219 + $0x10c] sm:$0xff]
      %v2689 = vld [vmem:[%s219 + $0x114] sm:$0xff]
      %v2690 = vld [vmem:[%s219 + $0x11c] sm:$0xff]
      %v2691 = vld [vmem:[%s219 + $0x124] sm:$0xff]
      %v2692 = vld [vmem:[%s219 + $0x12c] sm:$0xff]
      %v2693 = vld [vmem:[%s219 + $0x134] sm:$0xff]
      %v2694 = vld [vmem:[%s219 + $0x13c] sm:$0x3f]
      %v2695 = vpack.c.bf16 %v2660, %v2659
      %v2696 = vpack.c.bf16 %v2662, %v2661
      %v2697 = vpack.c.bf16 %v2664, %v2663
      %v2698 = vpack.c.bf16 %v2666, %v2665
      %v2699 = vpack.c.bf16 %v2668, %v2667
      %v2700 = vpack.c.bf16 %v2670, %v2669
      %v2701 = vpack.c.bf16 %v2672, %v2671
      %v2702 = vpack.c.bf16 %v2674, %v2673
      %v2703 = vpack.c.bf16 %v2676, %v2675
      %v2704 = vpack.c.bf16 %v2678, %v2677
      %v2705 = vpack.c.bf16 %v2680, %v2679
      %v2706 = vpack.c.bf16 %v2682, %v2681
      %v2707 = vpack.c.bf16 %v2684, %v2683
      %v2708 = vpack.c.bf16 %v2686, %v2685
      %v2709 = vpack.c.bf16 %v2688, %v2687
      %v2710 = vpack.c.bf16 %v2690, %v2689
      %v2711 = vpack.c.bf16 %v2692, %v2691
      %v2712 = vpack.c.bf16 %v2694, %v2693
      %v2713 = vld [vmem:[#allocation3] sm:$0xff]
      %v2714 = vld [vmem:[#allocation3 + $0x8] sm:$0xff]
      %v2715 = vld [vmem:[#allocation3 + $0x10] sm:$0xff]
      %v2716 = vld [vmem:[#allocation3 + $0x18] sm:$0xff]
      %v2717 = vld [vmem:[#allocation3 + $0x20] sm:$0xff]
      %v2718 = vld [vmem:[#allocation3 + $0x28] sm:$0xff]
      %v2719 = vld [vmem:[#allocation3 + $0x30] sm:$0xff]
      %v2720 = vld [vmem:[#allocation3 + $0x38] sm:$0xff]
      %v2721 = vld [vmem:[#allocation3 + $0x40] sm:$0xff]
      %v2722 = vld [vmem:[#allocation3 + $0x48] sm:$0xff]
      %v2723 = vld [vmem:[#allocation3 + $0x50] sm:$0xff]
      %v2724 = vld [vmem:[#allocation3 + $0x58] sm:$0xff]
      %v2725 = vld [vmem:[#allocation3 + $0x60] sm:$0xff]
      %v2726 = vld [vmem:[#allocation3 + $0x68] sm:$0xff]
      %v2727 = vld [vmem:[#allocation3 + $0x70] sm:$0xff]
      %v2728 = vld [vmem:[#allocation3 + $0x78] sm:$0xff]
      %v2729 = vld [vmem:[#allocation3 + $0x80] sm:$0xff]
      %v2730 = vld [vmem:[#allocation3 + $0x88] sm:$0xff]
      %v2731 = vld [vmem:[#allocation3 + $0x90] sm:$0xff]
      %v2732 = vld [vmem:[#allocation3 + $0x98] sm:$0xff]
      %v2733 = vld [vmem:[#allocation3 + $0xa0] sm:$0xff]
      %v2734 = vld [vmem:[#allocation3 + $0xa8] sm:$0xff]
      %v2735 = vld [vmem:[#allocation3 + $0xb0] sm:$0xff]
      %v2736 = vld [vmem:[#allocation3 + $0xb8] sm:$0xff]
      %v2737 = vld [vmem:[#allocation3 + $0xc0] sm:$0xff]
      %v2738 = vld [vmem:[#allocation3 + $0xc8] sm:$0xff]
      %v2739 = vld [vmem:[#allocation3 + $0xd0] sm:$0xff]
      %v2740 = vld [vmem:[#allocation3 + $0xd8] sm:$0xff]
      %v2741 = vld [vmem:[#allocation3 + $0xe0] sm:$0xff]
      %v2742 = vld [vmem:[#allocation3 + $0xe8] sm:$0xff]
      %v2743 = vld [vmem:[#allocation3 + $0xf0] sm:$0xff]
      %v2744 = vld [vmem:[#allocation3 + $0xf8] sm:$0xff]
      %v2745 = vld [vmem:[#allocation3 + $0x100] sm:$0xff]
      %v2746 = vld [vmem:[#allocation3 + $0x108] sm:$0xff]
      %v2747 = vld [vmem:[#allocation3 + $0x110] sm:$0xff]
      %v2748 = vld [vmem:[#allocation3 + $0x118] sm:$0x3f]
      %s2749 = scalar_lea.vmem %s1, 12
      %v2750 = vld [vmem:[%s2749] sm:$0x3]
      %v2752 = vsel %vm226, %v2695, 0
      %v2755 = vsel %vm226, %v2696, 0
      %v2758 = vsel %vm226, %v2697, 0
      %v2761 = vsel %vm226, %v2698, 0
      %v2764 = vsel %vm226, %v2699, 0
      %v2767 = vsel %vm226, %v2700, 0
      %v2770 = vsel %vm226, %v2701, 0
      %v2773 = vsel %vm226, %v2702, 0
      %v2776 = vsel %vm226, %v2703, 0
      %v2779 = vsel %vm226, %v2704, 0
      %v2782 = vsel %vm226, %v2705, 0
      %v2785 = vsel %vm226, %v2706, 0
      %v2788 = vsel %vm226, %v2707, 0
      %v2791 = vsel %vm226, %v2708, 0
      %v2794 = vsel %vm226, %v2709, 0
      %v2797 = vsel %vm226, %v2710, 0
      %v2800 = vsel %vm226, %v2711, 0
      %v2803 = vsel %vm226, %v2712, 0
      %v2806 = vsel %vm416, %v2750, 0
      %2808 = vmatprep.subr.bf16.mxu0 0
      %2809 = vmatpush1.bf16.msra.mxu0 %v2806
      %2810 = vmatprep.subr.bf16.mxu0 0
      %2811 = vmatpush1.bf16.msra.mxu0 0
      %2812 = vmatprep.subr.bf16.mxu0 0
      %2813 = vmatpush1.bf16.msra.mxu0 0
      %2814 = vmatprep.subr.bf16.mxu0 0
      %2815 = vmatpush1.bf16.msra.mxu0 0
      %2816 = vmatprep.subr.bf16.mxu0 0
      %2817 = vmatpush1.bf16.msra.mxu0 0
      %2818 = vmatprep.subr.bf16.mxu0 0
      %2819 = vmatpush1.bf16.msra.mxu0 0
      %2820 = vmatprep.subr.bf16.mxu0 0
      %2821 = vmatpush1.bf16.msra.mxu0 0
      %2822 = vmatprep.subr.bf16.mxu0 0
      %2823 = vmatpush1.bf16.msra.mxu0 0
      %2824 = vmatprep.subr.bf16.mxu0 0
      %2825 = vmatpush1.bf16.msra.mxu0 0
      %2826 = vmatprep.subr.bf16.mxu0 0
      %2827 = vmatpush1.bf16.msra.mxu0 0
      %2828 = vmatprep.subr.bf16.mxu0 0
      %2829 = vmatpush1.bf16.msra.mxu0 0
      %2830 = vmatprep.subr.bf16.mxu0 0
      %2831 = vmatpush1.bf16.msra.mxu0 0
      %2832 = vmatprep.subr.bf16.mxu0 0
      %2833 = vmatpush1.bf16.msra.mxu0 0
      %2834 = vmatprep.subr.bf16.mxu0 0
      %2835 = vmatpush1.bf16.msra.mxu0 0
      %2836 = vmatprep.subr.bf16.mxu0 0
      %2837 = vmatpush1.bf16.msra.mxu0 0
      %2838 = vmatprep.subr.bf16.mxu0 0
      %2839 = vmatpush1.bf16.msra.mxu0 0
      %2840 = vmatprep.mubr.bf16.mxu0 0
      %2841 = vmatmul.mubr.bf16.gmra.mrb[0].mxu0 %v2752
      %v2842 = vpop.f32.mrb[0].mxu0
      %v2843 = vadd.f32 0.0, %v2842
      %v2844 = vpop.f32.mrb[0].mxu0
      %v2845 = vpop.f32.mrb[0].mxu0
      %v2846 = vadd.f32 0.0, %v2845
      %v2847 = vpop.f32.mrb[0].mxu0
      %2848 = vmatprep.mubr.bf16.mxu0 0
      %2849 = vmatmul.mubr.bf16.gmra.mrb[0].mxu0 %v2755
      %v2850 = vpop.f32.mrb[0].mxu0
      %v2851 = vadd.f32 0.0, %v2850
      %v2852 = vpop.f32.mrb[0].mxu0
      %v2853 = vpop.f32.mrb[0].mxu0
      %v2854 = vadd.f32 0.0, %v2853
      %v2855 = vpop.f32.mrb[0].mxu0
      %2856 = vmatprep.mubr.bf16.mxu0 0
      %2857 = vmatmul.mubr.bf16.gmra.mrb[0].mxu0 %v2758
      %v2858 = vpop.f32.mrb[0].mxu0
      %v2859 = vadd.f32 0.0, %v2858
      %v2860 = vpop.f32.mrb[0].mxu0
      %v2861 = vpop.f32.mrb[0].mxu0
      %v2862 = vadd.f32 0.0, %v2861
      %v2863 = vpop.f32.mrb[0].mxu0
      %2864 = vmatprep.mubr.bf16.mxu0 0
      %2865 = vmatmul.mubr.bf16.gmra.mrb[0].mxu0 %v2761
      %v2866 = vpop.f32.mrb[0].mxu0
      %v2867 = vadd.f32 0.0, %v2866
      %v2868 = vpop.f32.mrb[0].mxu0
      %v2869 = vpop.f32.mrb[0].mxu0
      %v2870 = vadd.f32 0.0, %v2869
      %v2871 = vpop.f32.mrb[0].mxu0
      %2872 = vmatprep.mubr.bf16.mxu0 0
      %2873 = vmatmul.mubr.bf16.gmra.mrb[0].mxu0 %v2764
      %v2874 = vpop.f32.mrb[0].mxu0
      %v2875 = vadd.f32 0.0, %v2874
      %v2876 = vpop.f32.mrb[0].mxu0
      %v2877 = vpop.f32.mrb[0].mxu0
      %v2878 = vadd.f32 0.0, %v2877
      %v2879 = vpop.f32.mrb[0].mxu0
      %2880 = vmatprep.mubr.bf16.mxu0 0
      %2881 = vmatmul.mubr.bf16.gmra.mrb[0].mxu0 %v2767
      %v2882 = vpop.f32.mrb[0].mxu0
      %v2883 = vadd.f32 0.0, %v2882
      %v2884 = vpop.f32.mrb[0].mxu0
      %v2885 = vpop.f32.mrb[0].mxu0
      %v2886 = vadd.f32 0.0, %v2885
      %v2887 = vpop.f32.mrb[0].mxu0
      %2888 = vmatprep.mubr.bf16.mxu0 0
      %2889 = vmatmul.mubr.bf16.gmra.mrb[0].mxu0 %v2770
      %v2890 = vpop.f32.mrb[0].mxu0
      %v2891 = vadd.f32 0.0, %v2890
      %v2892 = vpop.f32.mrb[0].mxu0
      %v2893 = vpop.f32.mrb[0].mxu0
      %v2894 = vadd.f32 0.0, %v2893
      %v2895 = vpop.f32.mrb[0].mxu0
      %2896 = vmatprep.mubr.bf16.mxu0 0
      %2897 = vmatmul.mubr.bf16.gmra.mrb[0].mxu0 %v2773
      %v2898 = vpop.f32.mrb[0].mxu0
      %v2899 = vadd.f32 0.0, %v2898
      %v2900 = vpop.f32.mrb[0].mxu0
      %v2901 = vpop.f32.mrb[0].mxu0
      %v2902 = vadd.f32 0.0, %v2901
      %v2903 = vpop.f32.mrb[0].mxu0
      %2904 = vmatprep.mubr.bf16.mxu0 0
      %2905 = vmatmul.mubr.bf16.gmra.mrb[0].mxu0 %v2776
      %v2906 = vpop.f32.mrb[0].mxu0
      %v2907 = vadd.f32 0.0, %v2906
      %v2908 = vpop.f32.mrb[0].mxu0
      %v2909 = vpop.f32.mrb[0].mxu0
      %v2910 = vadd.f32 0.0, %v2909
      %v2911 = vpop.f32.mrb[0].mxu0
      %2912 = vmatprep.mubr.bf16.mxu0 0
      %2913 = vmatmul.mubr.bf16.gmra.mrb[0].mxu0 %v2779
      %v2914 = vpop.f32.mrb[0].mxu0
      %v2915 = vadd.f32 0.0, %v2914
      %v2916 = vpop.f32.mrb[0].mxu0
      %v2917 = vpop.f32.mrb[0].mxu0
      %v2918 = vadd.f32 0.0, %v2917
      %v2919 = vpop.f32.mrb[0].mxu0
      %2920 = vmatprep.mubr.bf16.mxu0 0
      %2921 = vmatmul.mubr.bf16.gmra.mrb[0].mxu0 %v2782
      %v2922 = vpop.f32.mrb[0].mxu0
      %v2923 = vadd.f32 0.0, %v2922
      %v2924 = vpop.f32.mrb[0].mxu0
      %v2925 = vpop.f32.mrb[0].mxu0
      %v2926 = vadd.f32 0.0, %v2925
      %v2927 = vpop.f32.mrb[0].mxu0
      %2928 = vmatprep.mubr.bf16.mxu0 0
      %2929 = vmatmul.mubr.bf16.gmra.mrb[0].mxu0 %v2785
      %v2930 = vpop.f32.mrb[0].mxu0
      %v2931 = vadd.f32 0.0, %v2930
      %v2932 = vpop.f32.mrb[0].mxu0
      %v2933 = vpop.f32.mrb[0].mxu0
      %v2934 = vadd.f32 0.0, %v2933
      %v2935 = vpop.f32.mrb[0].mxu0
      %2936 = vmatprep.mubr.bf16.mxu0 0
      %2937 = vmatmul.mubr.bf16.gmra.mrb[0].mxu0 %v2788
      %v2938 = vpop.f32.mrb[0].mxu0
      %v2939 = vadd.f32 0.0, %v2938
      %v2940 = vpop.f32.mrb[0].mxu0
      %v2941 = vpop.f32.mrb[0].mxu0
      %v2942 = vadd.f32 0.0, %v2941
      %v2943 = vpop.f32.mrb[0].mxu0
      %2944 = vmatprep.mubr.bf16.mxu0 0
      %2945 = vmatmul.mubr.bf16.gmra.mrb[0].mxu0 %v2791
      %v2946 = vpop.f32.mrb[0].mxu0
      %v2947 = vadd.f32 0.0, %v2946
      %v2948 = vpop.f32.mrb[0].mxu0
      %v2949 = vpop.f32.mrb[0].mxu0
      %v2950 = vadd.f32 0.0, %v2949
      %v2951 = vpop.f32.mrb[0].mxu0
      %2952 = vmatprep.mubr.bf16.mxu0 0
      %2953 = vmatmul.mubr.bf16.gmra.mrb[0].mxu0 %v2794
      %v2954 = vpop.f32.mrb[0].mxu0
      %v2955 = vadd.f32 0.0, %v2954
      %v2956 = vpop.f32.mrb[0].mxu0
      %v2957 = vpop.f32.mrb[0].mxu0
      %v2958 = vadd.f32 0.0, %v2957
      %v2959 = vpop.f32.mrb[0].mxu0
      %2960 = vmatprep.mubr.bf16.mxu0 0
      %2961 = vmatmul.mubr.bf16.gmra.mrb[0].mxu0 %v2797
      %v2962 = vpop.f32.mrb[0].mxu0
      %v2963 = vadd.f32 0.0, %v2962
      %v2964 = vpop.f32.mrb[0].mxu0
      %v2965 = vpop.f32.mrb[0].mxu0
      %v2966 = vadd.f32 0.0, %v2965
      %v2967 = vpop.f32.mrb[0].mxu0
      %2968 = vmatprep.mubr.bf16.mxu0 0
      %2969 = vmatmul.mubr.bf16.gmra.mrb[0].mxu0 %v2800
      %v2970 = vpop.f32.mrb[0].mxu0
      %v2971 = vadd.f32 0.0, %v2970
      %v2972 = vpop.f32.mrb[0].mxu0
      %v2973 = vpop.f32.mrb[0].mxu0
      %v2974 = vadd.f32 0.0, %v2973
      %v2975 = vpop.f32.mrb[0].mxu0
      %2976 = vmatprep.mubr.bf16.mxu0 0
      %2977 = vmatmul.mubr.bf16.gmra.mrb[0].mxu0 %v2803
      %v2978 = vpop.f32.mrb[0].mxu0
      %v2979 = vadd.f32 0.0, %v2978
      %v2980 = vpop.f32.mrb[0].mxu0
      %v2981 = vpop.f32.mrb[0].mxu0
      %v2982 = vadd.f32 0.0, %v2981
      %v2983 = vpop.f32.mrb[0].mxu0
      %2984 = vdwg.mxu0
      %v2985 = vadd.f32 %v2713, %v2843
      %v2986 = vadd.f32 %v2714, %v2846
      %v2987 = vadd.f32 %v2715, %v2851
      %v2988 = vadd.f32 %v2716, %v2854
      %v2989 = vadd.f32 %v2717, %v2859
      %v2990 = vadd.f32 %v2718, %v2862
      %v2991 = vadd.f32 %v2719, %v2867
      %v2992 = vadd.f32 %v2720, %v2870
      %v2993 = vadd.f32 %v2721, %v2875
      %v2994 = vadd.f32 %v2722, %v2878
      %v2995 = vadd.f32 %v2723, %v2883
      %v2996 = vadd.f32 %v2724, %v2886
      %v2997 = vadd.f32 %v2725, %v2891
      %v2998 = vadd.f32 %v2726, %v2894
      %v2999 = vadd.f32 %v2727, %v2899
      %v3000 = vadd.f32 %v2728, %v2902
      %v3001 = vadd.f32 %v2729, %v2907
      %v3002 = vadd.f32 %v2730, %v2910
      %v3003 = vadd.f32 %v2731, %v2915
      %v3004 = vadd.f32 %v2732, %v2918
      %v3005 = vadd.f32 %v2733, %v2923
      %v3006 = vadd.f32 %v2734, %v2926
      %v3007 = vadd.f32 %v2735, %v2931
      %v3008 = vadd.f32 %v2736, %v2934
      %v3009 = vadd.f32 %v2737, %v2939
      %v3010 = vadd.f32 %v2738, %v2942
      %v3011 = vadd.f32 %v2739, %v2947
      %v3012 = vadd.f32 %v2740, %v2950
      %v3013 = vadd.f32 %v2741, %v2955
      %v3014 = vadd.f32 %v2742, %v2958
      %v3015 = vadd.f32 %v2743, %v2963
      %v3016 = vadd.f32 %v2744, %v2966
      %v3017 = vadd.f32 %v2745, %v2971
      %v3018 = vadd.f32 %v2746, %v2974
      %v3019 = vadd.f32 %v2747, %v2979
      %v3020 = vadd.f32 %v2748, %v2982
      %3021 = vst.msk [vmem:[#allocation3] sm:$0xff] %vm226, %v2985
      %3022 = vst.msk [vmem:[#allocation3 + $0x8] sm:$0xff] %vm226, %v2986
      %3023 = vst.msk [vmem:[#allocation3 + $0x10] sm:$0xff] %vm226, %v2987
      %3024 = vst.msk [vmem:[#allocation3 + $0x18] sm:$0xff] %vm226, %v2988
      %3025 = vst.msk [vmem:[#allocation3 + $0x20] sm:$0xff] %vm226, %v2989
      %3026 = vst.msk [vmem:[#allocation3 + $0x28] sm:$0xff] %vm226, %v2990
      %3027 = vst.msk [vmem:[#allocation3 + $0x30] sm:$0xff] %vm226, %v2991
      %3028 = vst.msk [vmem:[#allocation3 + $0x38] sm:$0xff] %vm226, %v2992
      %3029 = vst.msk [vmem:[#allocation3 + $0x40] sm:$0xff] %vm226, %v2993
      %3030 = vst.msk [vmem:[#allocation3 + $0x48] sm:$0xff] %vm226, %v2994
      %3031 = vst.msk [vmem:[#allocation3 + $0x50] sm:$0xff] %vm226, %v2995
      %3032 = vst.msk [vmem:[#allocation3 + $0x58] sm:$0xff] %vm226, %v2996
      %3033 = vst.msk [vmem:[#allocation3 + $0x60] sm:$0xff] %vm226, %v2997
      %3034 = vst.msk [vmem:[#allocation3 + $0x68] sm:$0xff] %vm226, %v2998
      %3035 = vst.msk [vmem:[#allocation3 + $0x70] sm:$0xff] %vm226, %v2999
      %3036 = vst.msk [vmem:[#allocation3 + $0x78] sm:$0xff] %vm226, %v3000
      %3037 = vst.msk [vmem:[#allocation3 + $0x80] sm:$0xff] %vm226, %v3001
      %3038 = vst.msk [vmem:[#allocation3 + $0x88] sm:$0xff] %vm226, %v3002
      %3039 = vst.msk [vmem:[#allocation3 + $0x90] sm:$0xff] %vm226, %v3003
      %3040 = vst.msk [vmem:[#allocation3 + $0x98] sm:$0xff] %vm226, %v3004
      %3041 = vst.msk [vmem:[#allocation3 + $0xa0] sm:$0xff] %vm226, %v3005
      %3042 = vst.msk [vmem:[#allocation3 + $0xa8] sm:$0xff] %vm226, %v3006
      %3043 = vst.msk [vmem:[#allocation3 + $0xb0] sm:$0xff] %vm226, %v3007
      %3044 = vst.msk [vmem:[#allocation3 + $0xb8] sm:$0xff] %vm226, %v3008
      %3045 = vst.msk [vmem:[#allocation3 + $0xc0] sm:$0xff] %vm226, %v3009
      %3046 = vst.msk [vmem:[#allocation3 + $0xc8] sm:$0xff] %vm226, %v3010
      %3047 = vst.msk [vmem:[#allocation3 + $0xd0] sm:$0xff] %vm226, %v3011
      %3048 = vst.msk [vmem:[#allocation3 + $0xd8] sm:$0xff] %vm226, %v3012
      %3049 = vst.msk [vmem:[#allocation3 + $0xe0] sm:$0xff] %vm226, %v3013
      %3050 = vst.msk [vmem:[#allocation3 + $0xe8] sm:$0xff] %vm226, %v3014
      %3051 = vst.msk [vmem:[#allocation3 + $0xf0] sm:$0xff] %vm226, %v3015
      %3052 = vst.msk [vmem:[#allocation3 + $0xf8] sm:$0xff] %vm226, %v3016
      %3053 = vst.msk [vmem:[#allocation3 + $0x100] sm:$0xff] %vm226, %v3017
      %3054 = vst.msk [vmem:[#allocation3 + $0x108] sm:$0xff] %vm226, %v3018
      %3055 = vst.msk [vmem:[#allocation3 + $0x110] sm:$0xff] %vm226, %v3019
      %3056 = vst.msk [vmem:[#allocation3 + $0x118] sm:$0x3f] %vm269, %v3020
      %v3057 = vld [vmem:[%s219 + $0x25] sm:$0xff]
      %v3058 = vld [vmem:[%s219 + $0x2d] sm:$0xff]
      %v3059 = vld [vmem:[%s219 + $0x35] sm:$0xff]
      %v3060 = vld [vmem:[%s219 + $0x3d] sm:$0xff]
      %v3061 = vld [vmem:[%s219 + $0x45] sm:$0xff]
      %v3062 = vld [vmem:[%s219 + $0x4d] sm:$0xff]
      %v3063 = vld [vmem:[%s219 + $0x55] sm:$0xff]
      %v3064 = vld [vmem:[%s219 + $0x5d] sm:$0xff]
      %v3065 = vld [vmem:[%s219 + $0x65] sm:$0xff]
      %v3066 = vld [vmem:[%s219 + $0x6d] sm:$0xff]
      %v3067 = vld [vmem:[%s219 + $0x75] sm:$0xff]
      %v3068 = vld [vmem:[%s219 + $0x7d] sm:$0xff]
      %v3069 = vld [vmem:[%s219 + $0x85] sm:$0xff]
      %v3070 = vld [vmem:[%s219 + $0x8d] sm:$0xff]
      %v3071 = vld [vmem:[%s219 + $0x95] sm:$0xff]
      %v3072 = vld [vmem:[%s219 + $0x9d] sm:$0xff]
      %v3073 = vld [vmem:[%s219 + $0xa5] sm:$0xff]
      %v3074 = vld [vmem:[%s219 + $0xad] sm:$0xff]
      %v3075 = vld [vmem:[%s219 + $0xb5] sm:$0xff]
      %v3076 = vld [vmem:[%s219 + $0xbd] sm:$0xff]
      %v3077 = vld [vmem:[%s219 + $0xc5] sm:$0xff]
      %v3078 = vld [vmem:[%s219 + $0xcd] sm:$0xff]
      %v3079 = vld [vmem:[%s219 + $0xd5] sm:$0xff]
      %v3080 = vld [vmem:[%s219 + $0xdd] sm:$0xff]
      %v3081 = vld [vmem:[%s219 + $0xe5] sm:$0xff]
      %v3082 = vld [vmem:[%s219 + $0xed] sm:$0xff]
      %v3083 = vld [vmem:[%s219 + $0xf5] sm:$0xff]
      %v3084 = vld [vmem:[%s219 + $0xfd] sm:$0xff]
      %v3085 = vld [vmem:[%s219 + $0x105] sm:$0xff]
      %v3086 = vld [vmem:[%s219 + $0x10d] sm:$0xff]
      %v3087 = vld [vmem:[%s219 + $0x115] sm:$0xff]
      %v3088 = vld [vmem:[%s219 + $0x11d] sm:$0xff]
      %v3089 = vld [vmem:[%s219 + $0x125] sm:$0xff]
      %v3090 = vld [vmem:[%s219 + $0x12d] sm:$0xff]
      %v3091 = vld [vmem:[%s219 + $0x135] sm:$0xff]
      %v3092 = vld [vmem:[%s219 + $0x13d] sm:$0x3f]
      %v3093 = vpack.c.bf16 %v3058, %v3057
      %v3094 = vpack.c.bf16 %v3060, %v3059
      %v3095 = vpack.c.bf16 %v3062, %v3061
      %v3096 = vpack.c.bf16 %v3064, %v3063
      %v3097 = vpack.c.bf16 %v3066, %v3065
      %v3098 = vpack.c.bf16 %v3068, %v3067
      %v3099 = vpack.c.bf16 %v3070, %v3069
      %v3100 = vpack.c.bf16 %v3072, %v3071
      %v3101 = vpack.c.bf16 %v3074, %v3073
      %v3102 = vpack.c.bf16 %v3076, %v3075
      %v3103 = vpack.c.bf16 %v3078, %v3077
      %v3104 = vpack.c.bf16 %v3080, %v3079
      %v3105 = vpack.c.bf16 %v3082, %v3081
      %v3106 = vpack.c.bf16 %v3084, %v3083
      %v3107 = vpack.c.bf16 %v3086, %v3085
      %v3108 = vpack.c.bf16 %v3088, %v3087
      %v3109 = vpack.c.bf16 %v3090, %v3089
      %v3110 = vpack.c.bf16 %v3092, %v3091
      %v3111 = vld [vmem:[#allocation3] sm:$0xff]
      %v3112 = vld [vmem:[#allocation3 + $0x8] sm:$0xff]
      %v3113 = vld [vmem:[#allocation3 + $0x10] sm:$0xff]
      %v3114 = vld [vmem:[#allocation3 + $0x18] sm:$0xff]
      %v3115 = vld [vmem:[#allocation3 + $0x20] sm:$0xff]
      %v3116 = vld [vmem:[#allocation3 + $0x28] sm:$0xff]
      %v3117 = vld [vmem:[#allocation3 + $0x30] sm:$0xff]
      %v3118 = vld [vmem:[#allocation3 + $0x38] sm:$0xff]
      %v3119 = vld [vmem:[#allocation3 + $0x40] sm:$0xff]
      %v3120 = vld [vmem:[#allocation3 + $0x48] sm:$0xff]
      %v3121 = vld [vmem:[#allocation3 + $0x50] sm:$0xff]
      %v3122 = vld [vmem:[#allocation3 + $0x58] sm:$0xff]
      %v3123 = vld [vmem:[#allocation3 + $0x60] sm:$0xff]
      %v3124 = vld [vmem:[#allocation3 + $0x68] sm:$0xff]
      %v3125 = vld [vmem:[#allocation3 + $0x70] sm:$0xff]
      %v3126 = vld [vmem:[#allocation3 + $0x78] sm:$0xff]
      %v3127 = vld [vmem:[#allocation3 + $0x80] sm:$0xff]
      %v3128 = vld [vmem:[#allocation3 + $0x88] sm:$0xff]
      %v3129 = vld [vmem:[#allocation3 + $0x90] sm:$0xff]
      %v3130 = vld [vmem:[#allocation3 + $0x98] sm:$0xff]
      %v3131 = vld [vmem:[#allocation3 + $0xa0] sm:$0xff]
      %v3132 = vld [vmem:[#allocation3 + $0xa8] sm:$0xff]
      %v3133 = vld [vmem:[#allocation3 + $0xb0] sm:$0xff]
      %v3134 = vld [vmem:[#allocation3 + $0xb8] sm:$0xff]
      %v3135 = vld [vmem:[#allocation3 + $0xc0] sm:$0xff]
      %v3136 = vld [vmem:[#allocation3 + $0xc8] sm:$0xff]
      %v3137 = vld [vmem:[#allocation3 + $0xd0] sm:$0xff]
      %v3138 = vld [vmem:[#allocation3 + $0xd8] sm:$0xff]
      %v3139 = vld [vmem:[#allocation3 + $0xe0] sm:$0xff]
      %v3140 = vld [vmem:[#allocation3 + $0xe8] sm:$0xff]
      %v3141 = vld [vmem:[#allocation3 + $0xf0] sm:$0xff]
      %v3142 = vld [vmem:[#allocation3 + $0xf8] sm:$0xff]
      %v3143 = vld [vmem:[#allocation3 + $0x100] sm:$0xff]
      %v3144 = vld [vmem:[#allocation3 + $0x108] sm:$0xff]
      %v3145 = vld [vmem:[#allocation3 + $0x110] sm:$0xff]
      %v3146 = vld [vmem:[#allocation3 + $0x118] sm:$0x3f]
      %s3147 = scalar_lea.vmem %s1, 14
      %v3148 = vld [vmem:[%s3147] sm:$0x3]
      %v3150 = vsel %vm226, %v3093, 0
      %v3153 = vsel %vm226, %v3094, 0
      %v3156 = vsel %vm226, %v3095, 0
      %v3159 = vsel %vm226, %v3096, 0
      %v3162 = vsel %vm226, %v3097, 0
      %v3165 = vsel %vm226, %v3098, 0
      %v3168 = vsel %vm226, %v3099, 0
      %v3171 = vsel %vm226, %v3100, 0
      %v3174 = vsel %vm226, %v3101, 0
      %v3177 = vsel %vm226, %v3102, 0
      %v3180 = vsel %vm226, %v3103, 0
      %v3183 = vsel %vm226, %v3104, 0
      %v3186 = vsel %vm226, %v3105, 0
      %v3189 = vsel %vm226, %v3106, 0
      %v3192 = vsel %vm226, %v3107, 0
      %v3195 = vsel %vm226, %v3108, 0
      %v3198 = vsel %vm226, %v3109, 0
      %v3201 = vsel %vm226, %v3110, 0
      %v3204 = vsel %vm416, %v3148, 0
      %3206 = vmatprep.subr.bf16.mxu0 0
      %3207 = vmatpush1.bf16.msra.mxu0 %v3204
      %3208 = vmatprep.subr.bf16.mxu0 0
      %3209 = vmatpush1.bf16.msra.mxu0 0
      %3210 = vmatprep.subr.bf16.mxu0 0
      %3211 = vmatpush1.bf16.msra.mxu0 0
      %3212 = vmatprep.subr.bf16.mxu0 0
      %3213 = vmatpush1.bf16.msra.mxu0 0
      %3214 = vmatprep.subr.bf16.mxu0 0
      %3215 = vmatpush1.bf16.msra.mxu0 0
      %3216 = vmatprep.subr.bf16.mxu0 0
      %3217 = vmatpush1.bf16.msra.mxu0 0
      %3218 = vmatprep.subr.bf16.mxu0 0
      %3219 = vmatpush1.bf16.msra.mxu0 0
      %3220 = vmatprep.subr.bf16.mxu0 0
      %3221 = vmatpush1.bf16.msra.mxu0 0
      %3222 = vmatprep.subr.bf16.mxu0 0
      %3223 = vmatpush1.bf16.msra.mxu0 0
      %3224 = vmatprep.subr.bf16.mxu0 0
      %3225 = vmatpush1.bf16.msra.mxu0 0
      %3226 = vmatprep.subr.bf16.mxu0 0
      %3227 = vmatpush1.bf16.msra.mxu0 0
      %3228 = vmatprep.subr.bf16.mxu0 0
      %3229 = vmatpush1.bf16.msra.mxu0 0
      %3230 = vmatprep.subr.bf16.mxu0 0
      %3231 = vmatpush1.bf16.msra.mxu0 0
      %3232 = vmatprep.subr.bf16.mxu0 0
      %3233 = vmatpush1.bf16.msra.mxu0 0
      %3234 = vmatprep.subr.bf16.mxu0 0
      %3235 = vmatpush1.bf16.msra.mxu0 0
      %3236 = vmatprep.subr.bf16.mxu0 0
      %3237 = vmatpush1.bf16.msra.mxu0 0
      %3238 = vmatprep.mubr.bf16.mxu0 0
      %3239 = vmatmul.mubr.bf16.gmra.mrb[0].mxu0 %v3150
      %v3240 = vpop.f32.mrb[0].mxu0
      %v3241 = vadd.f32 0.0, %v3240
      %v3242 = vpop.f32.mrb[0].mxu0
      %v3243 = vpop.f32.mrb[0].mxu0
      %v3244 = vadd.f32 0.0, %v3243
      %v3245 = vpop.f32.mrb[0].mxu0
      %3246 = vmatprep.mubr.bf16.mxu0 0
      %3247 = vmatmul.mubr.bf16.gmra.mrb[0].mxu0 %v3153
      %v3248 = vpop.f32.mrb[0].mxu0
      %v3249 = vadd.f32 0.0, %v3248
      %v3250 = vpop.f32.mrb[0].mxu0
      %v3251 = vpop.f32.mrb[0].mxu0
      %v3252 = vadd.f32 0.0, %v3251
      %v3253 = vpop.f32.mrb[0].mxu0
      %3254 = vmatprep.mubr.bf16.mxu0 0
      %3255 = vmatmul.mubr.bf16.gmra.mrb[0].mxu0 %v3156
      %v3256 = vpop.f32.mrb[0].mxu0
      %v3257 = vadd.f32 0.0, %v3256
      %v3258 = vpop.f32.mrb[0].mxu0
      %v3259 = vpop.f32.mrb[0].mxu0
      %v3260 = vadd.f32 0.0, %v3259
      %v3261 = vpop.f32.mrb[0].mxu0
      %3262 = vmatprep.mubr.bf16.mxu0 0
      %3263 = vmatmul.mubr.bf16.gmra.mrb[0].mxu0 %v3159
      %v3264 = vpop.f32.mrb[0].mxu0
      %v3265 = vadd.f32 0.0, %v3264
      %v3266 = vpop.f32.mrb[0].mxu0
      %v3267 = vpop.f32.mrb[0].mxu0
      %v3268 = vadd.f32 0.0, %v3267
      %v3269 = vpop.f32.mrb[0].mxu0
      %3270 = vmatprep.mubr.bf16.mxu0 0
      %3271 = vmatmul.mubr.bf16.gmra.mrb[0].mxu0 %v3162
      %v3272 = vpop.f32.mrb[0].mxu0
      %v3273 = vadd.f32 0.0, %v3272
      %v3274 = vpop.f32.mrb[0].mxu0
      %v3275 = vpop.f32.mrb[0].mxu0
      %v3276 = vadd.f32 0.0, %v3275
      %v3277 = vpop.f32.mrb[0].mxu0
      %3278 = vmatprep.mubr.bf16.mxu0 0
      %3279 = vmatmul.mubr.bf16.gmra.mrb[0].mxu0 %v3165
      %v3280 = vpop.f32.mrb[0].mxu0
      %v3281 = vadd.f32 0.0, %v3280
      %v3282 = vpop.f32.mrb[0].mxu0
      %v3283 = vpop.f32.mrb[0].mxu0
      %v3284 = vadd.f32 0.0, %v3283
      %v3285 = vpop.f32.mrb[0].mxu0
      %3286 = vmatprep.mubr.bf16.mxu0 0
      %3287 = vmatmul.mubr.bf16.gmra.mrb[0].mxu0 %v3168
      %v3288 = vpop.f32.mrb[0].mxu0
      %v3289 = vadd.f32 0.0, %v3288
      %v3290 = vpop.f32.mrb[0].mxu0
      %v3291 = vpop.f32.mrb[0].mxu0
      %v3292 = vadd.f32 0.0, %v3291
      %v3293 = vpop.f32.mrb[0].mxu0
      %3294 = vmatprep.mubr.bf16.mxu0 0
      %3295 = vmatmul.mubr.bf16.gmra.mrb[0].mxu0 %v3171
      %v3296 = vpop.f32.mrb[0].mxu0
      %v3297 = vadd.f32 0.0, %v3296
      %v3298 = vpop.f32.mrb[0].mxu0
      %v3299 = vpop.f32.mrb[0].mxu0
      %v3300 = vadd.f32 0.0, %v3299
      %v3301 = vpop.f32.mrb[0].mxu0
      %3302 = vmatprep.mubr.bf16.mxu0 0
      %3303 = vmatmul.mubr.bf16.gmra.mrb[0].mxu0 %v3174
      %v3304 = vpop.f32.mrb[0].mxu0
      %v3305 = vadd.f32 0.0, %v3304
      %v3306 = vpop.f32.mrb[0].mxu0
      %v3307 = vpop.f32.mrb[0].mxu0
      %v3308 = vadd.f32 0.0, %v3307
      %v3309 = vpop.f32.mrb[0].mxu0
      %3310 = vmatprep.mubr.bf16.mxu0 0
      %3311 = vmatmul.mubr.bf16.gmra.mrb[0].mxu0 %v3177
      %v3312 = vpop.f32.mrb[0].mxu0
      %v3313 = vadd.f32 0.0, %v3312
      %v3314 = vpop.f32.mrb[0].mxu0
      %v3315 = vpop.f32.mrb[0].mxu0
      %v3316 = vadd.f32 0.0, %v3315
      %v3317 = vpop.f32.mrb[0].mxu0
      %3318 = vmatprep.mubr.bf16.mxu0 0
      %3319 = vmatmul.mubr.bf16.gmra.mrb[0].mxu0 %v3180
      %v3320 = vpop.f32.mrb[0].mxu0
      %v3321 = vadd.f32 0.0, %v3320
      %v3322 = vpop.f32.mrb[0].mxu0
      %v3323 = vpop.f32.mrb[0].mxu0
      %v3324 = vadd.f32 0.0, %v3323
      %v3325 = vpop.f32.mrb[0].mxu0
      %3326 = vmatprep.mubr.bf16.mxu0 0
      %3327 = vmatmul.mubr.bf16.gmra.mrb[0].mxu0 %v3183
      %v3328 = vpop.f32.mrb[0].mxu0
      %v3329 = vadd.f32 0.0, %v3328
      %v3330 = vpop.f32.mrb[0].mxu0
      %v3331 = vpop.f32.mrb[0].mxu0
      %v3332 = vadd.f32 0.0, %v3331
      %v3333 = vpop.f32.mrb[0].mxu0
      %3334 = vmatprep.mubr.bf16.mxu0 0
      %3335 = vmatmul.mubr.bf16.gmra.mrb[0].mxu0 %v3186
      %v3336 = vpop.f32.mrb[0].mxu0
      %v3337 = vadd.f32 0.0, %v3336
      %v3338 = vpop.f32.mrb[0].mxu0
      %v3339 = vpop.f32.mrb[0].mxu0
      %v3340 = vadd.f32 0.0, %v3339
      %v3341 = vpop.f32.mrb[0].mxu0
      %3342 = vmatprep.mubr.bf16.mxu0 0
      %3343 = vmatmul.mubr.bf16.gmra.mrb[0].mxu0 %v3189
      %v3344 = vpop.f32.mrb[0].mxu0
      %v3345 = vadd.f32 0.0, %v3344
      %v3346 = vpop.f32.mrb[0].mxu0
      %v3347 = vpop.f32.mrb[0].mxu0
      %v3348 = vadd.f32 0.0, %v3347
      %v3349 = vpop.f32.mrb[0].mxu0
      %3350 = vmatprep.mubr.bf16.mxu0 0
      %3351 = vmatmul.mubr.bf16.gmra.mrb[0].mxu0 %v3192
      %v3352 = vpop.f32.mrb[0].mxu0
      %v3353 = vadd.f32 0.0, %v3352
      %v3354 = vpop.f32.mrb[0].mxu0
      %v3355 = vpop.f32.mrb[0].mxu0
      %v3356 = vadd.f32 0.0, %v3355
      %v3357 = vpop.f32.mrb[0].mxu0
      %3358 = vmatprep.mubr.bf16.mxu0 0
      %3359 = vmatmul.mubr.bf16.gmra.mrb[0].mxu0 %v3195
      %v3360 = vpop.f32.mrb[0].mxu0
      %v3361 = vadd.f32 0.0, %v3360
      %v3362 = vpop.f32.mrb[0].mxu0
      %v3363 = vpop.f32.mrb[0].mxu0
      %v3364 = vadd.f32 0.0, %v3363
      %v3365 = vpop.f32.mrb[0].mxu0
      %3366 = vmatprep.mubr.bf16.mxu0 0
      %3367 = vmatmul.mubr.bf16.gmra.mrb[0].mxu0 %v3198
      %v3368 = vpop.f32.mrb[0].mxu0
      %v3369 = vadd.f32 0.0, %v3368
      %v3370 = vpop.f32.mrb[0].mxu0
      %v3371 = vpop.f32.mrb[0].mxu0
      %v3372 = vadd.f32 0.0, %v3371
      %v3373 = vpop.f32.mrb[0].mxu0
      %3374 = vmatprep.mubr.bf16.mxu0 0
      %3375 = vmatmul.mubr.bf16.gmra.mrb[0].mxu0 %v3201
      %v3376 = vpop.f32.mrb[0].mxu0
      %v3377 = vadd.f32 0.0, %v3376
      %v3378 = vpop.f32.mrb[0].mxu0
      %v3379 = vpop.f32.mrb[0].mxu0
      %v3380 = vadd.f32 0.0, %v3379
      %v3381 = vpop.f32.mrb[0].mxu0
      %3382 = vdwg.mxu0
      %v3383 = vadd.f32 %v3111, %v3241
      %v3384 = vadd.f32 %v3112, %v3244
      %v3385 = vadd.f32 %v3113, %v3249
      %v3386 = vadd.f32 %v3114, %v3252
      %v3387 = vadd.f32 %v3115, %v3257
      %v3388 = vadd.f32 %v3116, %v3260
      %v3389 = vadd.f32 %v3117, %v3265
      %v3390 = vadd.f32 %v3118, %v3268
      %v3391 = vadd.f32 %v3119, %v3273
      %v3392 = vadd.f32 %v3120, %v3276
      %v3393 = vadd.f32 %v3121, %v3281
      %v3394 = vadd.f32 %v3122, %v3284
      %v3395 = vadd.f32 %v3123, %v3289
      %v3396 = vadd.f32 %v3124, %v3292
      %v3397 = vadd.f32 %v3125, %v3297
      %v3398 = vadd.f32 %v3126, %v3300
      %v3399 = vadd.f32 %v3127, %v3305
      %v3400 = vadd.f32 %v3128, %v3308
      %v3401 = vadd.f32 %v3129, %v3313
      %v3402 = vadd.f32 %v3130, %v3316
      %v3403 = vadd.f32 %v3131, %v3321
      %v3404 = vadd.f32 %v3132, %v3324
      %v3405 = vadd.f32 %v3133, %v3329
      %v3406 = vadd.f32 %v3134, %v3332
      %v3407 = vadd.f32 %v3135, %v3337
      %v3408 = vadd.f32 %v3136, %v3340
      %v3409 = vadd.f32 %v3137, %v3345
      %v3410 = vadd.f32 %v3138, %v3348
      %v3411 = vadd.f32 %v3139, %v3353
      %v3412 = vadd.f32 %v3140, %v3356
      %v3413 = vadd.f32 %v3141, %v3361
      %v3414 = vadd.f32 %v3142, %v3364
      %v3415 = vadd.f32 %v3143, %v3369
      %v3416 = vadd.f32 %v3144, %v3372
      %v3417 = vadd.f32 %v3145, %v3377
      %v3418 = vadd.f32 %v3146, %v3380
      %3419 = vst.msk [vmem:[#allocation3] sm:$0xff] %vm226, %v3383
      %3420 = vst.msk [vmem:[#allocation3 + $0x8] sm:$0xff] %vm226, %v3384
      %3421 = vst.msk [vmem:[#allocation3 + $0x10] sm:$0xff] %vm226, %v3385
      %3422 = vst.msk [vmem:[#allocation3 + $0x18] sm:$0xff] %vm226, %v3386
      %3423 = vst.msk [vmem:[#allocation3 + $0x20] sm:$0xff] %vm226, %v3387
      %3424 = vst.msk [vmem:[#allocation3 + $0x28] sm:$0xff] %vm226, %v3388
      %3425 = vst.msk [vmem:[#allocation3 + $0x30] sm:$0xff] %vm226, %v3389
      %3426 = vst.msk [vmem:[#allocation3 + $0x38] sm:$0xff] %vm226, %v3390
      %3427 = vst.msk [vmem:[#allocation3 + $0x40] sm:$0xff] %vm226, %v3391
      %3428 = vst.msk [vmem:[#allocation3 + $0x48] sm:$0xff] %vm226, %v3392
      %3429 = vst.msk [vmem:[#allocation3 + $0x50] sm:$0xff] %vm226, %v3393
      %3430 = vst.msk [vmem:[#allocation3 + $0x58] sm:$0xff] %vm226, %v3394
      %3431 = vst.msk [vmem:[#allocation3 + $0x60] sm:$0xff] %vm226, %v3395
      %3432 = vst.msk [vmem:[#allocation3 + $0x68] sm:$0xff] %vm226, %v3396
      %3433 = vst.msk [vmem:[#allocation3 + $0x70] sm:$0xff] %vm226, %v3397
      %3434 = vst.msk [vmem:[#allocation3 + $0x78] sm:$0xff] %vm226, %v3398
      %3435 = vst.msk [vmem:[#allocation3 + $0x80] sm:$0xff] %vm226, %v3399
      %3436 = vst.msk [vmem:[#allocation3 + $0x88] sm:$0xff] %vm226, %v3400
      %3437 = vst.msk [vmem:[#allocation3 + $0x90] sm:$0xff] %vm226, %v3401
      %3438 = vst.msk [vmem:[#allocation3 + $0x98] sm:$0xff] %vm226, %v3402
      %3439 = vst.msk [vmem:[#allocation3 + $0xa0] sm:$0xff] %vm226, %v3403
      %3440 = vst.msk [vmem:[#allocation3 + $0xa8] sm:$0xff] %vm226, %v3404
      %3441 = vst.msk [vmem:[#allocation3 + $0xb0] sm:$0xff] %vm226, %v3405
      %3442 = vst.msk [vmem:[#allocation3 + $0xb8] sm:$0xff] %vm226, %v3406
      %3443 = vst.msk [vmem:[#allocation3 + $0xc0] sm:$0xff] %vm226, %v3407
      %3444 = vst.msk [vmem:[#allocation3 + $0xc8] sm:$0xff] %vm226, %v3408
      %3445 = vst.msk [vmem:[#allocation3 + $0xd0] sm:$0xff] %vm226, %v3409
      %3446 = vst.msk [vmem:[#allocation3 + $0xd8] sm:$0xff] %vm226, %v3410
      %3447 = vst.msk [vmem:[#allocation3 + $0xe0] sm:$0xff] %vm226, %v3411
      %3448 = vst.msk [vmem:[#allocation3 + $0xe8] sm:$0xff] %vm226, %v3412
      %3449 = vst.msk [vmem:[#allocation3 + $0xf0] sm:$0xff] %vm226, %v3413
      %3450 = vst.msk [vmem:[#allocation3 + $0xf8] sm:$0xff] %vm226, %v3414
      %3451 = vst.msk [vmem:[#allocation3 + $0x100] sm:$0xff] %vm226, %v3415
      %3452 = vst.msk [vmem:[#allocation3 + $0x108] sm:$0xff] %vm226, %v3416
      %3453 = vst.msk [vmem:[#allocation3 + $0x110] sm:$0xff] %vm226, %v3417
      %3454 = vst.msk [vmem:[#allocation3 + $0x118] sm:$0x3f] %vm269, %v3418
      %v3455 = vld [vmem:[%s219 + $0x26] sm:$0xff]
      %v3456 = vld [vmem:[%s219 + $0x2e] sm:$0xff]
      %v3457 = vld [vmem:[%s219 + $0x36] sm:$0xff]
      %v3458 = vld [vmem:[%s219 + $0x3e] sm:$0xff]
      %v3459 = vld [vmem:[%s219 + $0x46] sm:$0xff]
      %v3460 = vld [vmem:[%s219 + $0x4e] sm:$0xff]
      %v3461 = vld [vmem:[%s219 + $0x56] sm:$0xff]
      %v3462 = vld [vmem:[%s219 + $0x5e] sm:$0xff]
      %v3463 = vld [vmem:[%s219 + $0x66] sm:$0xff]
      %v3464 = vld [vmem:[%s219 + $0x6e] sm:$0xff]
      %v3465 = vld [vmem:[%s219 + $0x76] sm:$0xff]
      %v3466 = vld [vmem:[%s219 + $0x7e] sm:$0xff]
      %v3467 = vld [vmem:[%s219 + $0x86] sm:$0xff]
      %v3468 = vld [vmem:[%s219 + $0x8e] sm:$0xff]
      %v3469 = vld [vmem:[%s219 + $0x96] sm:$0xff]
      %v3470 = vld [vmem:[%s219 + $0x9e] sm:$0xff]
      %v3471 = vld [vmem:[%s219 + $0xa6] sm:$0xff]
      %v3472 = vld [vmem:[%s219 + $0xae] sm:$0xff]
      %v3473 = vld [vmem:[%s219 + $0xb6] sm:$0xff]
      %v3474 = vld [vmem:[%s219 + $0xbe] sm:$0xff]
      %v3475 = vld [vmem:[%s219 + $0xc6] sm:$0xff]
      %v3476 = vld [vmem:[%s219 + $0xce] sm:$0xff]
      %v3477 = vld [vmem:[%s219 + $0xd6] sm:$0xff]
      %v3478 = vld [vmem:[%s219 + $0xde] sm:$0xff]
      %v3479 = vld [vmem:[%s219 + $0xe6] sm:$0xff]
      %v3480 = vld [vmem:[%s219 + $0xee] sm:$0xff]
      %v3481 = vld [vmem:[%s219 + $0xf6] sm:$0xff]
      %v3482 = vld [vmem:[%s219 + $0xfe] sm:$0xff]
      %v3483 = vld [vmem:[%s219 + $0x106] sm:$0xff]
      %v3484 = vld [vmem:[%s219 + $0x10e] sm:$0xff]
      %v3485 = vld [vmem:[%s219 + $0x116] sm:$0xff]
      %v3486 = vld [vmem:[%s219 + $0x11e] sm:$0xff]
      %v3487 = vld [vmem:[%s219 + $0x126] sm:$0xff]
      %v3488 = vld [vmem:[%s219 + $0x12e] sm:$0xff]
      %v3489 = vld [vmem:[%s219 + $0x136] sm:$0xff]
      %v3490 = vld [vmem:[%s219 + $0x13e] sm:$0x3f]
      %v3491 = vpack.c.bf16 %v3456, %v3455
      %v3492 = vpack.c.bf16 %v3458, %v3457
      %v3493 = vpack.c.bf16 %v3460, %v3459
      %v3494 = vpack.c.bf16 %v3462, %v3461
      %v3495 = vpack.c.bf16 %v3464, %v3463
      %v3496 = vpack.c.bf16 %v3466, %v3465
      %v3497 = vpack.c.bf16 %v3468, %v3467
      %v3498 = vpack.c.bf16 %v3470, %v3469
      %v3499 = vpack.c.bf16 %v3472, %v3471
      %v3500 = vpack.c.bf16 %v3474, %v3473
      %v3501 = vpack.c.bf16 %v3476, %v3475
      %v3502 = vpack.c.bf16 %v3478, %v3477
      %v3503 = vpack.c.bf16 %v3480, %v3479
      %v3504 = vpack.c.bf16 %v3482, %v3481
      %v3505 = vpack.c.bf16 %v3484, %v3483
      %v3506 = vpack.c.bf16 %v3486, %v3485
      %v3507 = vpack.c.bf16 %v3488, %v3487
      %v3508 = vpack.c.bf16 %v3490, %v3489
      %v3509 = vld [vmem:[#allocation3] sm:$0xff]
      %v3510 = vld [vmem:[#allocation3 + $0x8] sm:$0xff]
      %v3511 = vld [vmem:[#allocation3 + $0x10] sm:$0xff]
      %v3512 = vld [vmem:[#allocation3 + $0x18] sm:$0xff]
      %v3513 = vld [vmem:[#allocation3 + $0x20] sm:$0xff]
      %v3514 = vld [vmem:[#allocation3 + $0x28] sm:$0xff]
      %v3515 = vld [vmem:[#allocation3 + $0x30] sm:$0xff]
      %v3516 = vld [vmem:[#allocation3 + $0x38] sm:$0xff]
      %v3517 = vld [vmem:[#allocation3 + $0x40] sm:$0xff]
      %v3518 = vld [vmem:[#allocation3 + $0x48] sm:$0xff]
      %v3519 = vld [vmem:[#allocation3 + $0x50] sm:$0xff]
      %v3520 = vld [vmem:[#allocation3 + $0x58] sm:$0xff]
      %v3521 = vld [vmem:[#allocation3 + $0x60] sm:$0xff]
      %v3522 = vld [vmem:[#allocation3 + $0x68] sm:$0xff]
      %v3523 = vld [vmem:[#allocation3 + $0x70] sm:$0xff]
      %v3524 = vld [vmem:[#allocation3 + $0x78] sm:$0xff]
      %v3525 = vld [vmem:[#allocation3 + $0x80] sm:$0xff]
      %v3526 = vld [vmem:[#allocation3 + $0x88] sm:$0xff]
      %v3527 = vld [vmem:[#allocation3 + $0x90] sm:$0xff]
      %v3528 = vld [vmem:[#allocation3 + $0x98] sm:$0xff]
      %v3529 = vld [vmem:[#allocation3 + $0xa0] sm:$0xff]
      %v3530 = vld [vmem:[#allocation3 + $0xa8] sm:$0xff]
      %v3531 = vld [vmem:[#allocation3 + $0xb0] sm:$0xff]
      %v3532 = vld [vmem:[#allocation3 + $0xb8] sm:$0xff]
      %v3533 = vld [vmem:[#allocation3 + $0xc0] sm:$0xff]
      %v3534 = vld [vmem:[#allocation3 + $0xc8] sm:$0xff]
      %v3535 = vld [vmem:[#allocation3 + $0xd0] sm:$0xff]
      %v3536 = vld [vmem:[#allocation3 + $0xd8] sm:$0xff]
      %v3537 = vld [vmem:[#allocation3 + $0xe0] sm:$0xff]
      %v3538 = vld [vmem:[#allocation3 + $0xe8] sm:$0xff]
      %v3539 = vld [vmem:[#allocation3 + $0xf0] sm:$0xff]
      %v3540 = vld [vmem:[#allocation3 + $0xf8] sm:$0xff]
      %v3541 = vld [vmem:[#allocation3 + $0x100] sm:$0xff]
      %v3542 = vld [vmem:[#allocation3 + $0x108] sm:$0xff]
      %v3543 = vld [vmem:[#allocation3 + $0x110] sm:$0xff]
      %v3544 = vld [vmem:[#allocation3 + $0x118] sm:$0x3f]
      %s3545 = scalar_lea.vmem %s1, 16
      %v3546 = vld [vmem:[%s3545] sm:$0x3]
      %v3548 = vsel %vm226, %v3491, 0
      %v3551 = vsel %vm226, %v3492, 0
      %v3554 = vsel %vm226, %v3493, 0
      %v3557 = vsel %vm226, %v3494, 0
      %v3560 = vsel %vm226, %v3495, 0
      %v3563 = vsel %vm226, %v3496, 0
      %v3566 = vsel %vm226, %v3497, 0
      %v3569 = vsel %vm226, %v3498, 0
      %v3572 = vsel %vm226, %v3499, 0
      %v3575 = vsel %vm226, %v3500, 0
      %v3578 = vsel %vm226, %v3501, 0
      %v3581 = vsel %vm226, %v3502, 0
      %v3584 = vsel %vm226, %v3503, 0
      %v3587 = vsel %vm226, %v3504, 0
      %v3590 = vsel %vm226, %v3505, 0
      %v3593 = vsel %vm226, %v3506, 0
      %v3596 = vsel %vm226, %v3507, 0
      %v3599 = vsel %vm226, %v3508, 0
      %v3602 = vsel %vm416, %v3546, 0
      %3604 = vmatprep.subr.bf16.mxu0 0
      %3605 = vmatpush1.bf16.msra.mxu0 %v3602
      %3606 = vmatprep.subr.bf16.mxu0 0
      %3607 = vmatpush1.bf16.msra.mxu0 0
      %3608 = vmatprep.subr.bf16.mxu0 0
      %3609 = vmatpush1.bf16.msra.mxu0 0
      %3610 = vmatprep.subr.bf16.mxu0 0
      %3611 = vmatpush1.bf16.msra.mxu0 0
      %3612 = vmatprep.subr.bf16.mxu0 0
      %3613 = vmatpush1.bf16.msra.mxu0 0
      %3614 = vmatprep.subr.bf16.mxu0 0
      %3615 = vmatpush1.bf16.msra.mxu0 0
      %3616 = vmatprep.subr.bf16.mxu0 0
      %3617 = vmatpush1.bf16.msra.mxu0 0
      %3618 = vmatprep.subr.bf16.mxu0 0
      %3619 = vmatpush1.bf16.msra.mxu0 0
      %3620 = vmatprep.subr.bf16.mxu0 0
      %3621 = vmatpush1.bf16.msra.mxu0 0
      %3622 = vmatprep.subr.bf16.mxu0 0
      %3623 = vmatpush1.bf16.msra.mxu0 0
      %3624 = vmatprep.subr.bf16.mxu0 0
      %3625 = vmatpush1.bf16.msra.mxu0 0
      %3626 = vmatprep.subr.bf16.mxu0 0
      %3627 = vmatpush1.bf16.msra.mxu0 0
      %3628 = vmatprep.subr.bf16.mxu0 0
      %3629 = vmatpush1.bf16.msra.mxu0 0
      %3630 = vmatprep.subr.bf16.mxu0 0
      %3631 = vmatpush1.bf16.msra.mxu0 0
      %3632 = vmatprep.subr.bf16.mxu0 0
      %3633 = vmatpush1.bf16.msra.mxu0 0
      %3634 = vmatprep.subr.bf16.mxu0 0
      %3635 = vmatpush1.bf16.msra.mxu0 0
      %3636 = vmatprep.mubr.bf16.mxu0 0
      %3637 = vmatmul.mubr.bf16.gmra.mrb[0].mxu0 %v3548
      %v3638 = vpop.f32.mrb[0].mxu0
      %v3639 = vadd.f32 0.0, %v3638
      %v3640 = vpop.f32.mrb[0].mxu0
      %v3641 = vpop.f32.mrb[0].mxu0
      %v3642 = vadd.f32 0.0, %v3641
      %v3643 = vpop.f32.mrb[0].mxu0
      %3644 = vmatprep.mubr.bf16.mxu0 0
      %3645 = vmatmul.mubr.bf16.gmra.mrb[0].mxu0 %v3551
      %v3646 = vpop.f32.mrb[0].mxu0
      %v3647 = vadd.f32 0.0, %v3646
      %v3648 = vpop.f32.mrb[0].mxu0
      %v3649 = vpop.f32.mrb[0].mxu0
      %v3650 = vadd.f32 0.0, %v3649
      %v3651 = vpop.f32.mrb[0].mxu0
      %3652 = vmatprep.mubr.bf16.mxu0 0
      %3653 = vmatmul.mubr.bf16.gmra.mrb[0].mxu0 %v3554
      %v3654 = vpop.f32.mrb[0].mxu0
      %v3655 = vadd.f32 0.0, %v3654
      %v3656 = vpop.f32.mrb[0].mxu0
      %v3657 = vpop.f32.mrb[0].mxu0
      %v3658 = vadd.f32 0.0, %v3657
      %v3659 = vpop.f32.mrb[0].mxu0
      %3660 = vmatprep.mubr.bf16.mxu0 0
      %3661 = vmatmul.mubr.bf16.gmra.mrb[0].mxu0 %v3557
      %v3662 = vpop.f32.mrb[0].mxu0
      %v3663 = vadd.f32 0.0, %v3662
      %v3664 = vpop.f32.mrb[0].mxu0
      %v3665 = vpop.f32.mrb[0].mxu0
      %v3666 = vadd.f32 0.0, %v3665
      %v3667 = vpop.f32.mrb[0].mxu0
      %3668 = vmatprep.mubr.bf16.mxu0 0
      %3669 = vmatmul.mubr.bf16.gmra.mrb[0].mxu0 %v3560
      %v3670 = vpop.f32.mrb[0].mxu0
      %v3671 = vadd.f32 0.0, %v3670
      %v3672 = vpop.f32.mrb[0].mxu0
      %v3673 = vpop.f32.mrb[0].mxu0
      %v3674 = vadd.f32 0.0, %v3673
      %v3675 = vpop.f32.mrb[0].mxu0
      %3676 = vmatprep.mubr.bf16.mxu0 0
      %3677 = vmatmul.mubr.bf16.gmra.mrb[0].mxu0 %v3563
      %v3678 = vpop.f32.mrb[0].mxu0
      %v3679 = vadd.f32 0.0, %v3678
      %v3680 = vpop.f32.mrb[0].mxu0
      %v3681 = vpop.f32.mrb[0].mxu0
      %v3682 = vadd.f32 0.0, %v3681
      %v3683 = vpop.f32.mrb[0].mxu0
      %3684 = vmatprep.mubr.bf16.mxu0 0
      %3685 = vmatmul.mubr.bf16.gmra.mrb[0].mxu0 %v3566
      %v3686 = vpop.f32.mrb[0].mxu0
      %v3687 = vadd.f32 0.0, %v3686
      %v3688 = vpop.f32.mrb[0].mxu0
      %v3689 = vpop.f32.mrb[0].mxu0
      %v3690 = vadd.f32 0.0, %v3689
      %v3691 = vpop.f32.mrb[0].mxu0
      %3692 = vmatprep.mubr.bf16.mxu0 0
      %3693 = vmatmul.mubr.bf16.gmra.mrb[0].mxu0 %v3569
      %v3694 = vpop.f32.mrb[0].mxu0
      %v3695 = vadd.f32 0.0, %v3694
      %v3696 = vpop.f32.mrb[0].mxu0
      %v3697 = vpop.f32.mrb[0].mxu0
      %v3698 = vadd.f32 0.0, %v3697
      %v3699 = vpop.f32.mrb[0].mxu0
      %3700 = vmatprep.mubr.bf16.mxu0 0
      %3701 = vmatmul.mubr.bf16.gmra.mrb[0].mxu0 %v3572
      %v3702 = vpop.f32.mrb[0].mxu0
      %v3703 = vadd.f32 0.0, %v3702
      %v3704 = vpop.f32.mrb[0].mxu0
      %v3705 = vpop.f32.mrb[0].mxu0
      %v3706 = vadd.f32 0.0, %v3705
      %v3707 = vpop.f32.mrb[0].mxu0
      %3708 = vmatprep.mubr.bf16.mxu0 0
      %3709 = vmatmul.mubr.bf16.gmra.mrb[0].mxu0 %v3575
      %v3710 = vpop.f32.mrb[0].mxu0
      %v3711 = vadd.f32 0.0, %v3710
      %v3712 = vpop.f32.mrb[0].mxu0
      %v3713 = vpop.f32.mrb[0].mxu0
      %v3714 = vadd.f32 0.0, %v3713
      %v3715 = vpop.f32.mrb[0].mxu0
      %3716 = vmatprep.mubr.bf16.mxu0 0
      %3717 = vmatmul.mubr.bf16.gmra.mrb[0].mxu0 %v3578
      %v3718 = vpop.f32.mrb[0].mxu0
      %v3719 = vadd.f32 0.0, %v3718
      %v3720 = vpop.f32.mrb[0].mxu0
      %v3721 = vpop.f32.mrb[0].mxu0
      %v3722 = vadd.f32 0.0, %v3721
      %v3723 = vpop.f32.mrb[0].mxu0
      %3724 = vmatprep.mubr.bf16.mxu0 0
      %3725 = vmatmul.mubr.bf16.gmra.mrb[0].mxu0 %v3581
      %v3726 = vpop.f32.mrb[0].mxu0
      %v3727 = vadd.f32 0.0, %v3726
      %v3728 = vpop.f32.mrb[0].mxu0
      %v3729 = vpop.f32.mrb[0].mxu0
      %v3730 = vadd.f32 0.0, %v3729
      %v3731 = vpop.f32.mrb[0].mxu0
      %3732 = vmatprep.mubr.bf16.mxu0 0
      %3733 = vmatmul.mubr.bf16.gmra.mrb[0].mxu0 %v3584
      %v3734 = vpop.f32.mrb[0].mxu0
      %v3735 = vadd.f32 0.0, %v3734
      %v3736 = vpop.f32.mrb[0].mxu0
      %v3737 = vpop.f32.mrb[0].mxu0
      %v3738 = vadd.f32 0.0, %v3737
      %v3739 = vpop.f32.mrb[0].mxu0
      %3740 = vmatprep.mubr.bf16.mxu0 0
      %3741 = vmatmul.mubr.bf16.gmra.mrb[0].mxu0 %v3587
      %v3742 = vpop.f32.mrb[0].mxu0
      %v3743 = vadd.f32 0.0, %v3742
      %v3744 = vpop.f32.mrb[0].mxu0
      %v3745 = vpop.f32.mrb[0].mxu0
      %v3746 = vadd.f32 0.0, %v3745
      %v3747 = vpop.f32.mrb[0].mxu0
      %3748 = vmatprep.mubr.bf16.mxu0 0
      %3749 = vmatmul.mubr.bf16.gmra.mrb[0].mxu0 %v3590
      %v3750 = vpop.f32.mrb[0].mxu0
      %v3751 = vadd.f32 0.0, %v3750
      %v3752 = vpop.f32.mrb[0].mxu0
      %v3753 = vpop.f32.mrb[0].mxu0
      %v3754 = vadd.f32 0.0, %v3753
      %v3755 = vpop.f32.mrb[0].mxu0
      %3756 = vmatprep.mubr.bf16.mxu0 0
      %3757 = vmatmul.mubr.bf16.gmra.mrb[0].mxu0 %v3593
      %v3758 = vpop.f32.mrb[0].mxu0
      %v3759 = vadd.f32 0.0, %v3758
      %v3760 = vpop.f32.mrb[0].mxu0
      %v3761 = vpop.f32.mrb[0].mxu0
      %v3762 = vadd.f32 0.0, %v3761
      %v3763 = vpop.f32.mrb[0].mxu0
      %3764 = vmatprep.mubr.bf16.mxu0 0
      %3765 = vmatmul.mubr.bf16.gmra.mrb[0].mxu0 %v3596
      %v3766 = vpop.f32.mrb[0].mxu0
      %v3767 = vadd.f32 0.0, %v3766
      %v3768 = vpop.f32.mrb[0].mxu0
      %v3769 = vpop.f32.mrb[0].mxu0
      %v3770 = vadd.f32 0.0, %v3769
      %v3771 = vpop.f32.mrb[0].mxu0
      %3772 = vmatprep.mubr.bf16.mxu0 0
      %3773 = vmatmul.mubr.bf16.gmra.mrb[0].mxu0 %v3599
      %v3774 = vpop.f32.mrb[0].mxu0
      %v3775 = vadd.f32 0.0, %v3774
      %v3776 = vpop.f32.mrb[0].mxu0
      %v3777 = vpop.f32.mrb[0].mxu0
      %v3778 = vadd.f32 0.0, %v3777
      %v3779 = vpop.f32.mrb[0].mxu0
      %3780 = vdwg.mxu0
      %v3781 = vadd.f32 %v3509, %v3639
      %v3782 = vadd.f32 %v3510, %v3642
      %v3783 = vadd.f32 %v3511, %v3647
      %v3784 = vadd.f32 %v3512, %v3650
      %v3785 = vadd.f32 %v3513, %v3655
      %v3786 = vadd.f32 %v3514, %v3658
      %v3787 = vadd.f32 %v3515, %v3663
      %v3788 = vadd.f32 %v3516, %v3666
      %v3789 = vadd.f32 %v3517, %v3671
      %v3790 = vadd.f32 %v3518, %v3674
      %v3791 = vadd.f32 %v3519, %v3679
      %v3792 = vadd.f32 %v3520, %v3682
      %v3793 = vadd.f32 %v3521, %v3687
      %v3794 = vadd.f32 %v3522, %v3690
      %v3795 = vadd.f32 %v3523, %v3695
      %v3796 = vadd.f32 %v3524, %v3698
      %v3797 = vadd.f32 %v3525, %v3703
      %v3798 = vadd.f32 %v3526, %v3706
      %v3799 = vadd.f32 %v3527, %v3711
      %v3800 = vadd.f32 %v3528, %v3714
      %v3801 = vadd.f32 %v3529, %v3719
      %v3802 = vadd.f32 %v3530, %v3722
      %v3803 = vadd.f32 %v3531, %v3727
      %v3804 = vadd.f32 %v3532, %v3730
      %v3805 = vadd.f32 %v3533, %v3735
      %v3806 = vadd.f32 %v3534, %v3738
      %v3807 = vadd.f32 %v3535, %v3743
      %v3808 = vadd.f32 %v3536, %v3746
      %v3809 = vadd.f32 %v3537, %v3751
      %v3810 = vadd.f32 %v3538, %v3754
      %v3811 = vadd.f32 %v3539, %v3759
      %v3812 = vadd.f32 %v3540, %v3762
      %v3813 = vadd.f32 %v3541, %v3767
      %v3814 = vadd.f32 %v3542, %v3770
      %v3815 = vadd.f32 %v3543, %v3775
      %v3816 = vadd.f32 %v3544, %v3778
      %3817 = vst.msk [vmem:[#allocation3] sm:$0xff] %vm226, %v3781
      %3818 = vst.msk [vmem:[#allocation3 + $0x8] sm:$0xff] %vm226, %v3782
      %3819 = vst.msk [vmem:[#allocation3 + $0x10] sm:$0xff] %vm226, %v3783
      %3820 = vst.msk [vmem:[#allocation3 + $0x18] sm:$0xff] %vm226, %v3784
      %3821 = vst.msk [vmem:[#allocation3 + $0x20] sm:$0xff] %vm226, %v3785
      %3822 = vst.msk [vmem:[#allocation3 + $0x28] sm:$0xff] %vm226, %v3786
      %3823 = vst.msk [vmem:[#allocation3 + $0x30] sm:$0xff] %vm226, %v3787
      %3824 = vst.msk [vmem:[#allocation3 + $0x38] sm:$0xff] %vm226, %v3788
      %3825 = vst.msk [vmem:[#allocation3 + $0x40] sm:$0xff] %vm226, %v3789
      %3826 = vst.msk [vmem:[#allocation3 + $0x48] sm:$0xff] %vm226, %v3790
      %3827 = vst.msk [vmem:[#allocation3 + $0x50] sm:$0xff] %vm226, %v3791
      %3828 = vst.msk [vmem:[#allocation3 + $0x58] sm:$0xff] %vm226, %v3792
      %3829 = vst.msk [vmem:[#allocation3 + $0x60] sm:$0xff] %vm226, %v3793
      %3830 = vst.msk [vmem:[#allocation3 + $0x68] sm:$0xff] %vm226, %v3794
      %3831 = vst.msk [vmem:[#allocation3 + $0x70] sm:$0xff] %vm226, %v3795
      %3832 = vst.msk [vmem:[#allocation3 + $0x78] sm:$0xff] %vm226, %v3796
      %3833 = vst.msk [vmem:[#allocation3 + $0x80] sm:$0xff] %vm226, %v3797
      %3834 = vst.msk [vmem:[#allocation3 + $0x88] sm:$0xff] %vm226, %v3798
      %3835 = vst.msk [vmem:[#allocation3 + $0x90] sm:$0xff] %vm226, %v3799
      %3836 = vst.msk [vmem:[#allocation3 + $0x98] sm:$0xff] %vm226, %v3800
      %3837 = vst.msk [vmem:[#allocation3 + $0xa0] sm:$0xff] %vm226, %v3801
      %3838 = vst.msk [vmem:[#allocation3 + $0xa8] sm:$0xff] %vm226, %v3802
      %3839 = vst.msk [vmem:[#allocation3 + $0xb0] sm:$0xff] %vm226, %v3803
      %3840 = vst.msk [vmem:[#allocation3 + $0xb8] sm:$0xff] %vm226, %v3804
      %3841 = vst.msk [vmem:[#allocation3 + $0xc0] sm:$0xff] %vm226, %v3805
      %3842 = vst.msk [vmem:[#allocation3 + $0xc8] sm:$0xff] %vm226, %v3806
      %3843 = vst.msk [vmem:[#allocation3 + $0xd0] sm:$0xff] %vm226, %v3807
      %3844 = vst.msk [vmem:[#allocation3 + $0xd8] sm:$0xff] %vm226, %v3808
      %3845 = vst.msk [vmem:[#allocation3 + $0xe0] sm:$0xff] %vm226, %v3809
      %3846 = vst.msk [vmem:[#allocation3 + $0xe8] sm:$0xff] %vm226, %v3810
      %3847 = vst.msk [vmem:[#allocation3 + $0xf0] sm:$0xff] %vm226, %v3811
      %3848 = vst.msk [vmem:[#allocation3 + $0xf8] sm:$0xff] %vm226, %v3812
      %3849 = vst.msk [vmem:[#allocation3 + $0x100] sm:$0xff] %vm226, %v3813
      %3850 = vst.msk [vmem:[#allocation3 + $0x108] sm:$0xff] %vm226, %v3814
      %3851 = vst.msk [vmem:[#allocation3 + $0x110] sm:$0xff] %vm226, %v3815
      %3852 = vst.msk [vmem:[#allocation3 + $0x118] sm:$0x3f] %vm269, %v3816
      %v3853 = vld [vmem:[#allocation3] sm:$0xff]
      %v3854 = vld [vmem:[#allocation3 + $0x8] sm:$0xff]
      %v3855 = vld [vmem:[#allocation3 + $0x10] sm:$0xff]
      %v3856 = vld [vmem:[#allocation3 + $0x18] sm:$0xff]
      %v3857 = vld [vmem:[#allocation3 + $0x20] sm:$0xff]
      %v3858 = vld [vmem:[#allocation3 + $0x28] sm:$0xff]
      %v3859 = vld [vmem:[#allocation3 + $0x30] sm:$0xff]
      %v3860 = vld [vmem:[#allocation3 + $0x38] sm:$0xff]
      %v3861 = vld [vmem:[#allocation3 + $0x40] sm:$0xff]
      %v3862 = vld [vmem:[#allocation3 + $0x48] sm:$0xff]
      %v3863 = vld [vmem:[#allocation3 + $0x50] sm:$0xff]
      %v3864 = vld [vmem:[#allocation3 + $0x58] sm:$0xff]
      %v3865 = vld [vmem:[#allocation3 + $0x60] sm:$0xff]
      %v3866 = vld [vmem:[#allocation3 + $0x68] sm:$0xff]
      %v3867 = vld [vmem:[#allocation3 + $0x70] sm:$0xff]
      %v3868 = vld [vmem:[#allocation3 + $0x78] sm:$0xff]
      %v3869 = vld [vmem:[#allocation3 + $0x80] sm:$0xff]
      %v3870 = vld [vmem:[#allocation3 + $0x88] sm:$0xff]
      %v3871 = vld [vmem:[#allocation3 + $0x90] sm:$0xff]
      %v3872 = vld [vmem:[#allocation3 + $0x98] sm:$0xff]
      %v3873 = vld [vmem:[#allocation3 + $0xa0] sm:$0xff]
      %v3874 = vld [vmem:[#allocation3 + $0xa8] sm:$0xff]
      %v3875 = vld [vmem:[#allocation3 + $0xb0] sm:$0xff]
      %v3876 = vld [vmem:[#allocation3 + $0xb8] sm:$0xff]
      %v3877 = vld [vmem:[#allocation3 + $0xc0] sm:$0xff]
      %v3878 = vld [vmem:[#allocation3 + $0xc8] sm:$0xff]
      %v3879 = vld [vmem:[#allocation3 + $0xd0] sm:$0xff]
      %v3880 = vld [vmem:[#allocation3 + $0xd8] sm:$0xff]
      %v3881 = vld [vmem:[#allocation3 + $0xe0] sm:$0xff]
      %v3882 = vld [vmem:[#allocation3 + $0xe8] sm:$0xff]
      %v3883 = vld [vmem:[#allocation3 + $0xf0] sm:$0xff]
      %v3884 = vld [vmem:[#allocation3 + $0xf8] sm:$0xff]
      %v3885 = vld [vmem:[#allocation3 + $0x100] sm:$0xff]
      %v3886 = vld [vmem:[#allocation3 + $0x108] sm:$0xff]
      %v3887 = vld [vmem:[#allocation3 + $0x110] sm:$0xff]
      %v3888 = vld [vmem:[#allocation3 + $0x118] sm:$0x3f]
      %v3889 = vld [vmem:[%s3] sm:$0x1]
      %v3890 = vlaneseq
      %v3891 = vshrl.u32 %v3890, 7
      %v3892 = vsub.s32 0, %v3891
      %v3893 = vrot.slane %v3889, %v3892
      %v3894 = vmul.f32 %v3853, %v3893
      %v3895 = vmul.f32 %v3854, %v3893
      %v3896 = vmul.f32 %v3855, %v3893
      %v3897 = vmul.f32 %v3856, %v3893
      %v3898 = vmul.f32 %v3857, %v3893
      %v3899 = vmul.f32 %v3858, %v3893
      %v3900 = vmul.f32 %v3859, %v3893
      %v3901 = vmul.f32 %v3860, %v3893
      %v3902 = vmul.f32 %v3861, %v3893
      %v3903 = vmul.f32 %v3862, %v3893
      %v3904 = vmul.f32 %v3863, %v3893
      %v3905 = vmul.f32 %v3864, %v3893
      %v3906 = vmul.f32 %v3865, %v3893
      %v3907 = vmul.f32 %v3866, %v3893
      %v3908 = vmul.f32 %v3867, %v3893
      %v3909 = vmul.f32 %v3868, %v3893
      %v3910 = vmul.f32 %v3869, %v3893
      %v3911 = vmul.f32 %v3870, %v3893
      %v3912 = vmul.f32 %v3871, %v3893
      %v3913 = vmul.f32 %v3872, %v3893
      %v3914 = vmul.f32 %v3873, %v3893
      %v3915 = vmul.f32 %v3874, %v3893
      %v3916 = vmul.f32 %v3875, %v3893
      %v3917 = vmul.f32 %v3876, %v3893
      %v3918 = vmul.f32 %v3877, %v3893
      %v3919 = vmul.f32 %v3878, %v3893
      %v3920 = vmul.f32 %v3879, %v3893
      %v3921 = vmul.f32 %v3880, %v3893
      %v3922 = vmul.f32 %v3881, %v3893
      %v3923 = vmul.f32 %v3882, %v3893
      %v3924 = vmul.f32 %v3883, %v3893
      %v3925 = vmul.f32 %v3884, %v3893
      %v3926 = vmul.f32 %v3885, %v3893
      %v3927 = vmul.f32 %v3886, %v3893
      %v3928 = vmul.f32 %v3887, %v3893
      %v3929 = vmul.f32 %v3888, %v3893
      %v3930 = vld [vmem:[%s3 + $0x1] sm:$0x1]
      %v3931 = vlaneseq
      %v3932 = vshrl.u32 %v3931, 7
      %v3933 = vsub.s32 0, %v3932
      %v3934 = vrot.slane %v3930, %v3933
      %v3935 = vadd.f32 %v3894, %v3934
      %v3936 = vadd.f32 %v3895, %v3934
      %v3937 = vadd.f32 %v3896, %v3934
      %v3938 = vadd.f32 %v3897, %v3934
      %v3939 = vadd.f32 %v3898, %v3934
      %v3940 = vadd.f32 %v3899, %v3934
      %v3941 = vadd.f32 %v3900, %v3934
      %v3942 = vadd.f32 %v3901, %v3934
      %v3943 = vadd.f32 %v3902, %v3934
      %v3944 = vadd.f32 %v3903, %v3934
      %v3945 = vadd.f32 %v3904, %v3934
      %v3946 = vadd.f32 %v3905, %v3934
      %v3947 = vadd.f32 %v3906, %v3934
      %v3948 = vadd.f32 %v3907, %v3934
      %v3949 = vadd.f32 %v3908, %v3934
      %v3950 = vadd.f32 %v3909, %v3934
      %v3951 = vadd.f32 %v3910, %v3934
      %v3952 = vadd.f32 %v3911, %v3934
      %v3953 = vadd.f32 %v3912, %v3934
      %v3954 = vadd.f32 %v3913, %v3934
      %v3955 = vadd.f32 %v3914, %v3934
      %v3956 = vadd.f32 %v3915, %v3934
      %v3957 = vadd.f32 %v3916, %v3934
      %v3958 = vadd.f32 %v3917, %v3934
      %v3959 = vadd.f32 %v3918, %v3934
      %v3960 = vadd.f32 %v3919, %v3934
      %v3961 = vadd.f32 %v3920, %v3934
      %v3962 = vadd.f32 %v3921, %v3934
      %v3963 = vadd.f32 %v3922, %v3934
      %v3964 = vadd.f32 %v3923, %v3934
      %v3965 = vadd.f32 %v3924, %v3934
      %v3966 = vadd.f32 %v3925, %v3934
      %v3967 = vadd.f32 %v3926, %v3934
      %v3968 = vadd.f32 %v3927, %v3934
      %v3969 = vadd.f32 %v3928, %v3934
      %v3970 = vadd.f32 %v3929, %v3934
      %v3971 = vmax.f32 %v3935, 0.0
      %v3972 = vmax.f32 %v3936, 0.0
      %v3973 = vmax.f32 %v3937, 0.0
      %v3974 = vmax.f32 %v3938, 0.0
      %v3975 = vmax.f32 %v3939, 0.0
      %v3976 = vmax.f32 %v3940, 0.0
      %v3977 = vmax.f32 %v3941, 0.0
      %v3978 = vmax.f32 %v3942, 0.0
      %v3979 = vmax.f32 %v3943, 0.0
      %v3980 = vmax.f32 %v3944, 0.0
      %v3981 = vmax.f32 %v3945, 0.0
      %v3982 = vmax.f32 %v3946, 0.0
      %v3983 = vmax.f32 %v3947, 0.0
      %v3984 = vmax.f32 %v3948, 0.0
      %v3985 = vmax.f32 %v3949, 0.0
      %v3986 = vmax.f32 %v3950, 0.0
      %v3987 = vmax.f32 %v3951, 0.0
      %v3988 = vmax.f32 %v3952, 0.0
      %v3989 = vmax.f32 %v3953, 0.0
      %v3990 = vmax.f32 %v3954, 0.0
      %v3991 = vmax.f32 %v3955, 0.0
      %v3992 = vmax.f32 %v3956, 0.0
      %v3993 = vmax.f32 %v3957, 0.0
      %v3994 = vmax.f32 %v3958, 0.0
      %v3995 = vmax.f32 %v3959, 0.0
      %v3996 = vmax.f32 %v3960, 0.0
      %v3997 = vmax.f32 %v3961, 0.0
      %v3998 = vmax.f32 %v3962, 0.0
      %v3999 = vmax.f32 %v3963, 0.0
      %v4000 = vmax.f32 %v3964, 0.0
      %v4001 = vmax.f32 %v3965, 0.0
      %v4002 = vmax.f32 %v3966, 0.0
      %v4003 = vmax.f32 %v3967, 0.0
      %v4004 = vmax.f32 %v3968, 0.0
      %v4005 = vmax.f32 %v3969, 0.0
      %v4006 = vmax.f32 %v3970, 0.0
      %v4007 = vld [vmem:[%s4] sm:$0xff]
      %v4008 = vld [vmem:[%s4 + $0x8] sm:$0xff]
      %v4009 = vld [vmem:[%s4 + $0x10] sm:$0xff]
      %v4010 = vld [vmem:[%s4 + $0x18] sm:$0xff]
      %v4011 = vld [vmem:[%s4 + $0x20] sm:$0xff]
      %v4012 = vld [vmem:[%s4 + $0x28] sm:$0xff]
      %v4013 = vld [vmem:[%s4 + $0x30] sm:$0xff]
      %v4014 = vld [vmem:[%s4 + $0x38] sm:$0xff]
      %v4015 = vld [vmem:[%s4 + $0x40] sm:$0xff]
      %v4016 = vld [vmem:[%s4 + $0x48] sm:$0xff]
      %v4017 = vld [vmem:[%s4 + $0x50] sm:$0xff]
      %v4018 = vld [vmem:[%s4 + $0x58] sm:$0xff]
      %v4019 = vld [vmem:[%s4 + $0x60] sm:$0xff]
      %v4020 = vld [vmem:[%s4 + $0x68] sm:$0xff]
      %v4021 = vld [vmem:[%s4 + $0x70] sm:$0xff]
      %v4022 = vld [vmem:[%s4 + $0x78] sm:$0xff]
      %v4023 = vld [vmem:[%s4 + $0x80] sm:$0xff]
      %v4024 = vld [vmem:[%s4 + $0x88] sm:$0xff]
      %v4025 = vld [vmem:[%s4 + $0x90] sm:$0xff]
      %v4026 = vld [vmem:[%s4 + $0x98] sm:$0xff]
      %v4027 = vld [vmem:[%s4 + $0xa0] sm:$0xff]
      %v4028 = vld [vmem:[%s4 + $0xa8] sm:$0xff]
      %v4029 = vld [vmem:[%s4 + $0xb0] sm:$0xff]
      %v4030 = vld [vmem:[%s4 + $0xb8] sm:$0xff]
      %v4031 = vld [vmem:[%s4 + $0xc0] sm:$0xff]
      %v4032 = vld [vmem:[%s4 + $0xc8] sm:$0xff]
      %v4033 = vld [vmem:[%s4 + $0xd0] sm:$0xff]
      %v4034 = vld [vmem:[%s4 + $0xd8] sm:$0xff]
      %v4035 = vld [vmem:[%s4 + $0xe0] sm:$0xff]
      %v4036 = vld [vmem:[%s4 + $0xe8] sm:$0xff]
      %v4037 = vld [vmem:[%s4 + $0xf0] sm:$0xff]
      %v4038 = vld [vmem:[%s4 + $0xf8] sm:$0xff]
      %v4039 = vld [vmem:[%s4 + $0x100] sm:$0xff]
      %v4040 = vld [vmem:[%s4 + $0x108] sm:$0xff]
      %v4041 = vld [vmem:[%s4 + $0x110] sm:$0xff]
      %v4042 = vld [vmem:[%s4 + $0x118] sm:$0x3f]
      %4044 = vset.pattern.permute.xlu0 0
      %4045 = vperm.xlu0 %4044, %v4007
      %v4046 = vpop.permute.xlu0 %4045
      %4049 = vset.pattern.permute.xlu0 0
      %4050 = vperm.xlu0 %4049, %v4008
      %v4051 = vpop.permute.xlu0 %4050
      %4054 = vset.pattern.permute.xlu0 0
      %4055 = vperm.xlu0 %4054, %v4009
      %v4056 = vpop.permute.xlu0 %4055
      %4059 = vset.pattern.permute.xlu0 0
      %4060 = vperm.xlu0 %4059, %v4010
      %v4061 = vpop.permute.xlu0 %4060
      %4064 = vset.pattern.permute.xlu0 0
      %4065 = vperm.xlu0 %4064, %v4011
      %v4066 = vpop.permute.xlu0 %4065
      %4069 = vset.pattern.permute.xlu0 0
      %4070 = vperm.xlu0 %4069, %v4012
      %v4071 = vpop.permute.xlu0 %4070
      %4074 = vset.pattern.permute.xlu0 0
      %4075 = vperm.xlu0 %4074, %v4013
      %v4076 = vpop.permute.xlu0 %4075
      %4079 = vset.pattern.permute.xlu0 0
      %4080 = vperm.xlu0 %4079, %v4014
      %v4081 = vpop.permute.xlu0 %4080
      %4084 = vset.pattern.permute.xlu0 0
      %4085 = vperm.xlu0 %4084, %v4015
      %v4086 = vpop.permute.xlu0 %4085
      %4089 = vset.pattern.permute.xlu0 0
      %4090 = vperm.xlu0 %4089, %v4016
      %v4091 = vpop.permute.xlu0 %4090
      %4094 = vset.pattern.permute.xlu0 0
      %4095 = vperm.xlu0 %4094, %v4017
      %v4096 = vpop.permute.xlu0 %4095
      %4099 = vset.pattern.permute.xlu0 0
      %4100 = vperm.xlu0 %4099, %v4018
      %v4101 = vpop.permute.xlu0 %4100
      %4104 = vset.pattern.permute.xlu0 0
      %4105 = vperm.xlu0 %4104, %v4019
      %v4106 = vpop.permute.xlu0 %4105
      %4109 = vset.pattern.permute.xlu0 0
      %4110 = vperm.xlu0 %4109, %v4020
      %v4111 = vpop.permute.xlu0 %4110
      %4114 = vset.pattern.permute.xlu0 0
      %4115 = vperm.xlu0 %4114, %v4021
      %v4116 = vpop.permute.xlu0 %4115
      %4119 = vset.pattern.permute.xlu0 0
      %4120 = vperm.xlu0 %4119, %v4022
      %v4121 = vpop.permute.xlu0 %4120
      %4124 = vset.pattern.permute.xlu0 0
      %4125 = vperm.xlu0 %4124, %v4023
      %v4126 = vpop.permute.xlu0 %4125
      %4129 = vset.pattern.permute.xlu0 0
      %4130 = vperm.xlu0 %4129, %v4024
      %v4131 = vpop.permute.xlu0 %4130
      %4134 = vset.pattern.permute.xlu0 0
      %4135 = vperm.xlu0 %4134, %v4025
      %v4136 = vpop.permute.xlu0 %4135
      %4139 = vset.pattern.permute.xlu0 0
      %4140 = vperm.xlu0 %4139, %v4026
      %v4141 = vpop.permute.xlu0 %4140
      %4144 = vset.pattern.permute.xlu0 0
      %4145 = vperm.xlu0 %4144, %v4027
      %v4146 = vpop.permute.xlu0 %4145
      %4149 = vset.pattern.permute.xlu0 0
      %4150 = vperm.xlu0 %4149, %v4028
      %v4151 = vpop.permute.xlu0 %4150
      %4154 = vset.pattern.permute.xlu0 0
      %4155 = vperm.xlu0 %4154, %v4029
      %v4156 = vpop.permute.xlu0 %4155
      %4159 = vset.pattern.permute.xlu0 0
      %4160 = vperm.xlu0 %4159, %v4030
      %v4161 = vpop.permute.xlu0 %4160
      %4164 = vset.pattern.permute.xlu0 0
      %4165 = vperm.xlu0 %4164, %v4031
      %v4166 = vpop.permute.xlu0 %4165
      %4169 = vset.pattern.permute.xlu0 0
      %4170 = vperm.xlu0 %4169, %v4032
      %v4171 = vpop.permute.xlu0 %4170
      %4174 = vset.pattern.permute.xlu0 0
      %4175 = vperm.xlu0 %4174, %v4033
      %v4176 = vpop.permute.xlu0 %4175
      %4179 = vset.pattern.permute.xlu0 0
      %4180 = vperm.xlu0 %4179, %v4034
      %v4181 = vpop.permute.xlu0 %4180
      %4184 = vset.pattern.permute.xlu0 0
      %4185 = vperm.xlu0 %4184, %v4035
      %v4186 = vpop.permute.xlu0 %4185
      %4189 = vset.pattern.permute.xlu0 0
      %4190 = vperm.xlu0 %4189, %v4036
      %v4191 = vpop.permute.xlu0 %4190
      %4194 = vset.pattern.permute.xlu0 0
      %4195 = vperm.xlu0 %4194, %v4037
      %v4196 = vpop.permute.xlu0 %4195
      %4199 = vset.pattern.permute.xlu0 0
      %4200 = vperm.xlu0 %4199, %v4038
      %v4201 = vpop.permute.xlu0 %4200
      %4204 = vset.pattern.permute.xlu0 0
      %4205 = vperm.xlu0 %4204, %v4039
      %v4206 = vpop.permute.xlu0 %4205
      %4209 = vset.pattern.permute.xlu0 0
      %4210 = vperm.xlu0 %4209, %v4040
      %v4211 = vpop.permute.xlu0 %4210
      %4214 = vset.pattern.permute.xlu0 0
      %4215 = vperm.xlu0 %4214, %v4041
      %v4216 = vpop.permute.xlu0 %4215
      %4219 = vset.pattern.permute.xlu0 0
      %4220 = vperm.xlu0 %4219, %v4042
      %v4221 = vpop.permute.xlu0 %4220
      %v4223 = vmul.f32 %v3971, %v4046
      %v4224 = vmul.f32 %v3972, %v4051
      %v4225 = vmul.f32 %v3973, %v4056
      %v4226 = vmul.f32 %v3974, %v4061
      %v4227 = vmul.f32 %v3975, %v4066
      %v4228 = vmul.f32 %v3976, %v4071
      %v4229 = vmul.f32 %v3977, %v4076
      %v4230 = vmul.f32 %v3978, %v4081
      %v4231 = vmul.f32 %v3979, %v4086
      %v4232 = vmul.f32 %v3980, %v4091
      %v4233 = vmul.f32 %v3981, %v4096
      %v4234 = vmul.f32 %v3982, %v4101
      %v4235 = vmul.f32 %v3983, %v4106
      %v4236 = vmul.f32 %v3984, %v4111
      %v4237 = vmul.f32 %v3985, %v4116
      %v4238 = vmul.f32 %v3986, %v4121
      %v4239 = vmul.f32 %v3987, %v4126
      %v4240 = vmul.f32 %v3988, %v4131
      %v4241 = vmul.f32 %v3989, %v4136
      %v4242 = vmul.f32 %v3990, %v4141
      %v4243 = vmul.f32 %v3991, %v4146
      %v4244 = vmul.f32 %v3992, %v4151
      %v4245 = vmul.f32 %v3993, %v4156
      %v4246 = vmul.f32 %v3994, %v4161
      %v4247 = vmul.f32 %v3995, %v4166
      %v4248 = vmul.f32 %v3996, %v4171
      %v4249 = vmul.f32 %v3997, %v4176
      %v4250 = vmul.f32 %v3998, %v4181
      %v4251 = vmul.f32 %v3999, %v4186
      %v4252 = vmul.f32 %v4000, %v4191
      %v4253 = vmul.f32 %v4001, %v4196
      %v4254 = vmul.f32 %v4002, %v4201
      %v4255 = vmul.f32 %v4003, %v4206
      %v4256 = vmul.f32 %v4004, %v4211
      %v4257 = vmul.f32 %v4005, %v4216
      %v4258 = vmul.f32 %v4006, %v4221
      %4259 = vst.msk [vmem:[#allocation2 + $0x13] sm:$0xff] %vm226, %v4223
      %4260 = vst.msk [vmem:[#allocation2 + $0x1b] sm:$0xff] %vm226, %v4224
      %4261 = vst.msk [vmem:[#allocation2 + $0x23] sm:$0xff] %vm226, %v4225
      %4262 = vst.msk [vmem:[#allocation2 + $0x2b] sm:$0xff] %vm226, %v4226
      %4263 = vst.msk [vmem:[#allocation2 + $0x33] sm:$0xff] %vm226, %v4227
      %4264 = vst.msk [vmem:[#allocation2 + $0x3b] sm:$0xff] %vm226, %v4228
      %4265 = vst.msk [vmem:[#allocation2 + $0x43] sm:$0xff] %vm226, %v4229
      %4266 = vst.msk [vmem:[#allocation2 + $0x4b] sm:$0xff] %vm226, %v4230
      %4267 = vst.msk [vmem:[#allocation2 + $0x53] sm:$0xff] %vm226, %v4231
      %4268 = vst.msk [vmem:[#allocation2 + $0x5b] sm:$0xff] %vm226, %v4232
      %4269 = vst.msk [vmem:[#allocation2 + $0x63] sm:$0xff] %vm226, %v4233
      %4270 = vst.msk [vmem:[#allocation2 + $0x6b] sm:$0xff] %vm226, %v4234
      %4271 = vst.msk [vmem:[#allocation2 + $0x73] sm:$0xff] %vm226, %v4235
      %4272 = vst.msk [vmem:[#allocation2 + $0x7b] sm:$0xff] %vm226, %v4236
      %4273 = vst.msk [vmem:[#allocation2 + $0x83] sm:$0xff] %vm226, %v4237
      %4274 = vst.msk [vmem:[#allocation2 + $0x8b] sm:$0xff] %vm226, %v4238
      %4275 = vst.msk [vmem:[#allocation2 + $0x93] sm:$0xff] %vm226, %v4239
      %4276 = vst.msk [vmem:[#allocation2 + $0x9b] sm:$0xff] %vm226, %v4240
      %4277 = vst.msk [vmem:[#allocation2 + $0xa3] sm:$0xff] %vm226, %v4241
      %4278 = vst.msk [vmem:[#allocation2 + $0xab] sm:$0xff] %vm226, %v4242
      %4279 = vst.msk [vmem:[#allocation2 + $0xb3] sm:$0xff] %vm226, %v4243
      %4280 = vst.msk [vmem:[#allocation2 + $0xbb] sm:$0xff] %vm226, %v4244
      %4281 = vst.msk [vmem:[#allocation2 + $0xc3] sm:$0xff] %vm226, %v4245
      %4282 = vst.msk [vmem:[#allocation2 + $0xcb] sm:$0xff] %vm226, %v4246
      %4283 = vst.msk [vmem:[#allocation2 + $0xd3] sm:$0xff] %vm226, %v4247
      %4284 = vst.msk [vmem:[#allocation2 + $0xdb] sm:$0xff] %vm226, %v4248
      %4285 = vst.msk [vmem:[#allocation2 + $0xe3] sm:$0xff] %vm226, %v4249
      %4286 = vst.msk [vmem:[#allocation2 + $0xeb] sm:$0xff] %vm226, %v4250
      %4287 = vst.msk [vmem:[#allocation2 + $0xf3] sm:$0xff] %vm226, %v4251
      %4288 = vst.msk [vmem:[#allocation2 + $0xfb] sm:$0xff] %vm226, %v4252
      %4289 = vst.msk [vmem:[#allocation2 + $0x103] sm:$0xff] %vm226, %v4253
      %4290 = vst.msk [vmem:[#allocation2 + $0x10b] sm:$0xff] %vm226, %v4254
      %4291 = vst.msk [vmem:[#allocation2 + $0x113] sm:$0xff] %vm226, %v4255
      %4292 = vst.msk [vmem:[#allocation2 + $0x11b] sm:$0xff] %vm226, %v4256
      %4293 = vst.msk [vmem:[#allocation2 + $0x123] sm:$0xff] %vm226, %v4257
      %4294 = vst.msk [vmem:[#allocation2 + $0x12b] sm:$0x3f] %vm269, %v4258
      %4295 = vst.msk [vmem:[#allocation3] sm:$0xff] %vm226, 0.0
      %4296 = vst.msk [vmem:[#allocation3 + $0x8] sm:$0xff] %vm226, 0.0
      %4297 = vst.msk [vmem:[#allocation3 + $0x10] sm:$0xff] %vm226, 0.0
      %4298 = vst.msk [vmem:[#allocation3 + $0x18] sm:$0xff] %vm226, 0.0
      %4299 = vst.msk [vmem:[#allocation3 + $0x20] sm:$0xff] %vm226, 0.0
      %4300 = vst.msk [vmem:[#allocation3 + $0x28] sm:$0xff] %vm226, 0.0
      %4301 = vst.msk [vmem:[#allocation3 + $0x30] sm:$0xff] %vm226, 0.0
      %4302 = vst.msk [vmem:[#allocation3 + $0x38] sm:$0xff] %vm226, 0.0
      %4303 = vst.msk [vmem:[#allocation3 + $0x40] sm:$0xff] %vm226, 0.0
      %4304 = vst.msk [vmem:[#allocation3 + $0x48] sm:$0xff] %vm226, 0.0
      %4305 = vst.msk [vmem:[#allocation3 + $0x50] sm:$0xff] %vm226, 0.0
      %4306 = vst.msk [vmem:[#allocation3 + $0x58] sm:$0xff] %vm226, 0.0
      %4307 = vst.msk [vmem:[#allocation3 + $0x60] sm:$0xff] %vm226, 0.0
      %4308 = vst.msk [vmem:[#allocation3 + $0x68] sm:$0xff] %vm226, 0.0
      %4309 = vst.msk [vmem:[#allocation3 + $0x70] sm:$0xff] %vm226, 0.0
      %4310 = vst.msk [vmem:[#allocation3 + $0x78] sm:$0xff] %vm226, 0.0
      %4311 = vst.msk [vmem:[#allocation3 + $0x80] sm:$0xff] %vm226, 0.0
      %4312 = vst.msk [vmem:[#allocation3 + $0x88] sm:$0xff] %vm226, 0.0
      %4313 = vst.msk [vmem:[#allocation3 + $0x90] sm:$0xff] %vm226, 0.0
      %4314 = vst.msk [vmem:[#allocation3 + $0x98] sm:$0xff] %vm226, 0.0
      %4315 = vst.msk [vmem:[#allocation3 + $0xa0] sm:$0xff] %vm226, 0.0
      %4316 = vst.msk [vmem:[#allocation3 + $0xa8] sm:$0xff] %vm226, 0.0
      %4317 = vst.msk [vmem:[#allocation3 + $0xb0] sm:$0xff] %vm226, 0.0
      %4318 = vst.msk [vmem:[#allocation3 + $0xb8] sm:$0xff] %vm226, 0.0
      %4319 = vst.msk [vmem:[#allocation3 + $0xc0] sm:$0xff] %vm226, 0.0
      %4320 = vst.msk [vmem:[#allocation3 + $0xc8] sm:$0xff] %vm226, 0.0
      %4321 = vst.msk [vmem:[#allocation3 + $0xd0] sm:$0xff] %vm226, 0.0
      %4322 = vst.msk [vmem:[#allocation3 + $0xd8] sm:$0xff] %vm226, 0.0
      %4323 = vst.msk [vmem:[#allocation3 + $0xe0] sm:$0xff] %vm226, 0.0
      %4324 = vst.msk [vmem:[#allocation3 + $0xe8] sm:$0xff] %vm226, 0.0
      %4325 = vst.msk [vmem:[#allocation3 + $0xf0] sm:$0xff] %vm226, 0.0
      %4326 = vst.msk [vmem:[#allocation3 + $0xf8] sm:$0xff] %vm226, 0.0
      %4327 = vst.msk [vmem:[#allocation3 + $0x100] sm:$0xff] %vm226, 0.0
      %4328 = vst.msk [vmem:[#allocation3 + $0x108] sm:$0xff] %vm226, 0.0
      %4329 = vst.msk [vmem:[#allocation3 + $0x110] sm:$0xff] %vm226, 0.0
      %4330 = vst.msk [vmem:[#allocation3 + $0x118] sm:$0x3f] %vm269, 0.0
      %v4331 = vld [vmem:[#allocation2] sm:$0xff]
      %v4332 = vld [vmem:[#allocation2 + $0x8] sm:$0xff]
      %v4333 = vld [vmem:[#allocation2 + $0x10] sm:$0xff]
      %v4334 = vld [vmem:[#allocation2 + $0x18] sm:$0xff]
      %v4335 = vld [vmem:[#allocation2 + $0x20] sm:$0xff]
      %v4336 = vld [vmem:[#allocation2 + $0x28] sm:$0xff]
      %v4337 = vld [vmem:[#allocation2 + $0x30] sm:$0xff]
      %v4338 = vld [vmem:[#allocation2 + $0x38] sm:$0xff]
      %v4339 = vld [vmem:[#allocation2 + $0x40] sm:$0xff]
      %v4340 = vld [vmem:[#allocation2 + $0x48] sm:$0xff]
      %v4341 = vld [vmem:[#allocation2 + $0x50] sm:$0xff]
      %v4342 = vld [vmem:[#allocation2 + $0x58] sm:$0xff]
      %v4343 = vld [vmem:[#allocation2 + $0x60] sm:$0xff]
      %v4344 = vld [vmem:[#allocation2 + $0x68] sm:$0xff]
      %v4345 = vld [vmem:[#allocation2 + $0x70] sm:$0xff]
      %v4346 = vld [vmem:[#allocation2 + $0x78] sm:$0xff]
      %v4347 = vld [vmem:[#allocation2 + $0x80] sm:$0xff]
      %v4348 = vld [vmem:[#allocation2 + $0x88] sm:$0xff]
      %v4349 = vld [vmem:[#allocation2 + $0x90] sm:$0xff]
      %v4350 = vld [vmem:[#allocation2 + $0x98] sm:$0xff]
      %v4351 = vld [vmem:[#allocation2 + $0xa0] sm:$0xff]
      %v4352 = vld [vmem:[#allocation2 + $0xa8] sm:$0xff]
      %v4353 = vld [vmem:[#allocation2 + $0xb0] sm:$0xff]
      %v4354 = vld [vmem:[#allocation2 + $0xb8] sm:$0xff]
      %v4355 = vld [vmem:[#allocation2 + $0xc0] sm:$0xff]
      %v4356 = vld [vmem:[#allocation2 + $0xc8] sm:$0xff]
      %v4357 = vld [vmem:[#allocation2 + $0xd0] sm:$0xff]
      %v4358 = vld [vmem:[#allocation2 + $0xd8] sm:$0xff]
      %v4359 = vld [vmem:[#allocation2 + $0xe0] sm:$0xff]
      %v4360 = vld [vmem:[#allocation2 + $0xe8] sm:$0xff]
      %v4361 = vld [vmem:[#allocation2 + $0xf0] sm:$0xff]
      %v4362 = vld [vmem:[#allocation2 + $0xf8] sm:$0xff]
      %v4363 = vld [vmem:[#allocation2 + $0x100] sm:$0xff]
      %v4364 = vld [vmem:[#allocation2 + $0x108] sm:$0xff]
      %v4365 = vld [vmem:[#allocation2 + $0x110] sm:$0xff]
      %v4366 = vld [vmem:[#allocation2 + $0x118] sm:$0x3f]
      %v4367 = vpack.c.bf16 %v4332, %v4331
      %v4368 = vpack.c.bf16 %v4334, %v4333
      %v4369 = vpack.c.bf16 %v4336, %v4335
      %v4370 = vpack.c.bf16 %v4338, %v4337
      %v4371 = vpack.c.bf16 %v4340, %v4339
      %v4372 = vpack.c.bf16 %v4342, %v4341
      %v4373 = vpack.c.bf16 %v4344, %v4343
      %v4374 = vpack.c.bf16 %v4346, %v4345
      %v4375 = vpack.c.bf16 %v4348, %v4347
      %v4376 = vpack.c.bf16 %v4350, %v4349
      %v4377 = vpack.c.bf16 %v4352, %v4351
      %v4378 = vpack.c.bf16 %v4354, %v4353
      %v4379 = vpack.c.bf16 %v4356, %v4355
      %v4380 = vpack.c.bf16 %v4358, %v4357
      %v4381 = vpack.c.bf16 %v4360, %v4359
      %v4382 = vpack.c.bf16 %v4362, %v4361
      %v4383 = vpack.c.bf16 %v4364, %v4363
      %v4384 = vpack.c.bf16 %v4366, %v4365
      %v4385 = vld [vmem:[#allocation3] sm:$0xff]
      %v4386 = vld [vmem:[#allocation3 + $0x8] sm:$0xff]
      %v4387 = vld [vmem:[#allocation3 + $0x10] sm:$0xff]
      %v4388 = vld [vmem:[#allocation3 + $0x18] sm:$0xff]
      %v4389 = vld [vmem:[#allocation3 + $0x20] sm:$0xff]
      %v4390 = vld [vmem:[#allocation3 + $0x28] sm:$0xff]
      %v4391 = vld [vmem:[#allocation3 + $0x30] sm:$0xff]
      %v4392 = vld [vmem:[#allocation3 + $0x38] sm:$0xff]
      %v4393 = vld [vmem:[#allocation3 + $0x40] sm:$0xff]
      %v4394 = vld [vmem:[#allocation3 + $0x48] sm:$0xff]
      %v4395 = vld [vmem:[#allocation3 + $0x50] sm:$0xff]
      %v4396 = vld [vmem:[#allocation3 + $0x58] sm:$0xff]
      %v4397 = vld [vmem:[#allocation3 + $0x60] sm:$0xff]
      %v4398 = vld [vmem:[#allocation3 + $0x68] sm:$0xff]
      %v4399 = vld [vmem:[#allocation3 + $0x70] sm:$0xff]
      %v4400 = vld [vmem:[#allocation3 + $0x78] sm:$0xff]
      %v4401 = vld [vmem:[#allocation3 + $0x80] sm:$0xff]
      %v4402 = vld [vmem:[#allocation3 + $0x88] sm:$0xff]
      %v4403 = vld [vmem:[#allocation3 + $0x90] sm:$0xff]
      %v4404 = vld [vmem:[#allocation3 + $0x98] sm:$0xff]
      %v4405 = vld [vmem:[#allocation3 + $0xa0] sm:$0xff]
      %v4406 = vld [vmem:[#allocation3 + $0xa8] sm:$0xff]
      %v4407 = vld [vmem:[#allocation3 + $0xb0] sm:$0xff]
      %v4408 = vld [vmem:[#allocation3 + $0xb8] sm:$0xff]
      %v4409 = vld [vmem:[#allocation3 + $0xc0] sm:$0xff]
      %v4410 = vld [vmem:[#allocation3 + $0xc8] sm:$0xff]
      %v4411 = vld [vmem:[#allocation3 + $0xd0] sm:$0xff]
      %v4412 = vld [vmem:[#allocation3 + $0xd8] sm:$0xff]
      %v4413 = vld [vmem:[#allocation3 + $0xe0] sm:$0xff]
      %v4414 = vld [vmem:[#allocation3 + $0xe8] sm:$0xff]
      %v4415 = vld [vmem:[#allocation3 + $0xf0] sm:$0xff]
      %v4416 = vld [vmem:[#allocation3 + $0xf8] sm:$0xff]
      %v4417 = vld [vmem:[#allocation3 + $0x100] sm:$0xff]
      %v4418 = vld [vmem:[#allocation3 + $0x108] sm:$0xff]
      %v4419 = vld [vmem:[#allocation3 + $0x110] sm:$0xff]
      %v4420 = vld [vmem:[#allocation3 + $0x118] sm:$0x3f]
      %v4421 = vld [vmem:[%s2] sm:$0x3]
      %v4423 = vsel %vm226, %v4367, 0
      %v4426 = vsel %vm226, %v4368, 0
      %v4429 = vsel %vm226, %v4369, 0
      %v4432 = vsel %vm226, %v4370, 0
      %v4435 = vsel %vm226, %v4371, 0
      %v4438 = vsel %vm226, %v4372, 0
      %v4441 = vsel %vm226, %v4373, 0
      %v4444 = vsel %vm226, %v4374, 0
      %v4447 = vsel %vm226, %v4375, 0
      %v4450 = vsel %vm226, %v4376, 0
      %v4453 = vsel %vm226, %v4377, 0
      %v4456 = vsel %vm226, %v4378, 0
      %v4459 = vsel %vm226, %v4379, 0
      %v4462 = vsel %vm226, %v4380, 0
      %v4465 = vsel %vm226, %v4381, 0
      %v4468 = vsel %vm226, %v4382, 0
      %v4471 = vsel %vm226, %v4383, 0
      %v4474 = vsel %vm226, %v4384, 0
      %v4477 = vsel %vm416, %v4421, 0
      %4479 = vmatprep.subr.bf16.mxu0 0
      %4480 = vmatpush1.bf16.msra.mxu0 %v4477
      %4481 = vmatprep.subr.bf16.mxu0 0
      %4482 = vmatpush1.bf16.msra.mxu0 0
      %4483 = vmatprep.subr.bf16.mxu0 0
      %4484 = vmatpush1.bf16.msra.mxu0 0
      %4485 = vmatprep.subr.bf16.mxu0 0
      %4486 = vmatpush1.bf16.msra.mxu0 0
      %4487 = vmatprep.subr.bf16.mxu0 0
      %4488 = vmatpush1.bf16.msra.mxu0 0
      %4489 = vmatprep.subr.bf16.mxu0 0
      %4490 = vmatpush1.bf16.msra.mxu0 0
      %4491 = vmatprep.subr.bf16.mxu0 0
      %4492 = vmatpush1.bf16.msra.mxu0 0
      %4493 = vmatprep.subr.bf16.mxu0 0
      %4494 = vmatpush1.bf16.msra.mxu0 0
      %4495 = vmatprep.subr.bf16.mxu0 0
      %4496 = vmatpush1.bf16.msra.mxu0 0
      %4497 = vmatprep.subr.bf16.mxu0 0
      %4498 = vmatpush1.bf16.msra.mxu0 0
      %4499 = vmatprep.subr.bf16.mxu0 0
      %4500 = vmatpush1.bf16.msra.mxu0 0
      %4501 = vmatprep.subr.bf16.mxu0 0
      %4502 = vmatpush1.bf16.msra.mxu0 0
      %4503 = vmatprep.subr.bf16.mxu0 0
      %4504 = vmatpush1.bf16.msra.mxu0 0
      %4505 = vmatprep.subr.bf16.mxu0 0
      %4506 = vmatpush1.bf16.msra.mxu0 0
      %4507 = vmatprep.subr.bf16.mxu0 0
      %4508 = vmatpush1.bf16.msra.mxu0 0
      %4509 = vmatprep.subr.bf16.mxu0 0
      %4510 = vmatpush1.bf16.msra.mxu0 0
      %4511 = vmatprep.mubr.bf16.mxu0 0
      %4512 = vmatmul.mubr.bf16.gmra.mrb[0].mxu0 %v4423
      %v4513 = vpop.f32.mrb[0].mxu0
      %v4514 = vadd.f32 0.0, %v4513
      %v4515 = vpop.f32.mrb[0].mxu0
      %v4516 = vpop.f32.mrb[0].mxu0
      %v4517 = vadd.f32 0.0, %v4516
      %v4518 = vpop.f32.mrb[0].mxu0
      %4519 = vmatprep.mubr.bf16.mxu0 0
      %4520 = vmatmul.mubr.bf16.gmra.mrb[0].mxu0 %v4426
      %v4521 = vpop.f32.mrb[0].mxu0
      %v4522 = vadd.f32 0.0, %v4521
      %v4523 = vpop.f32.mrb[0].mxu0
      %v4524 = vpop.f32.mrb[0].mxu0
      %v4525 = vadd.f32 0.0, %v4524
      %v4526 = vpop.f32.mrb[0].mxu0
      %4527 = vmatprep.mubr.bf16.mxu0 0
      %4528 = vmatmul.mubr.bf16.gmra.mrb[0].mxu0 %v4429
      %v4529 = vpop.f32.mrb[0].mxu0
      %v4530 = vadd.f32 0.0, %v4529
      %v4531 = vpop.f32.mrb[0].mxu0
      %v4532 = vpop.f32.mrb[0].mxu0
      %v4533 = vadd.f32 0.0, %v4532
      %v4534 = vpop.f32.mrb[0].mxu0
      %4535 = vmatprep.mubr.bf16.mxu0 0
      %4536 = vmatmul.mubr.bf16.gmra.mrb[0].mxu0 %v4432
      %v4537 = vpop.f32.mrb[0].mxu0
      %v4538 = vadd.f32 0.0, %v4537
      %v4539 = vpop.f32.mrb[0].mxu0
      %v4540 = vpop.f32.mrb[0].mxu0
      %v4541 = vadd.f32 0.0, %v4540
      %v4542 = vpop.f32.mrb[0].mxu0
      %4543 = vmatprep.mubr.bf16.mxu0 0
      %4544 = vmatmul.mubr.bf16.gmra.mrb[0].mxu0 %v4435
      %v4545 = vpop.f32.mrb[0].mxu0
      %v4546 = vadd.f32 0.0, %v4545
      %v4547 = vpop.f32.mrb[0].mxu0
      %v4548 = vpop.f32.mrb[0].mxu0
      %v4549 = vadd.f32 0.0, %v4548
      %v4550 = vpop.f32.mrb[0].mxu0
      %4551 = vmatprep.mubr.bf16.mxu0 0
      %4552 = vmatmul.mubr.bf16.gmra.mrb[0].mxu0 %v4438
      %v4553 = vpop.f32.mrb[0].mxu0
      %v4554 = vadd.f32 0.0, %v4553
      %v4555 = vpop.f32.mrb[0].mxu0
      %v4556 = vpop.f32.mrb[0].mxu0
      %v4557 = vadd.f32 0.0, %v4556
      %v4558 = vpop.f32.mrb[0].mxu0
      %4559 = vmatprep.mubr.bf16.mxu0 0
      %4560 = vmatmul.mubr.bf16.gmra.mrb[0].mxu0 %v4441
      %v4561 = vpop.f32.mrb[0].mxu0
      %v4562 = vadd.f32 0.0, %v4561
      %v4563 = vpop.f32.mrb[0].mxu0
      %v4564 = vpop.f32.mrb[0].mxu0
      %v4565 = vadd.f32 0.0, %v4564
      %v4566 = vpop.f32.mrb[0].mxu0
      %4567 = vmatprep.mubr.bf16.mxu0 0
      %4568 = vmatmul.mubr.bf16.gmra.mrb[0].mxu0 %v4444
      %v4569 = vpop.f32.mrb[0].mxu0
      %v4570 = vadd.f32 0.0, %v4569
      %v4571 = vpop.f32.mrb[0].mxu0
      %v4572 = vpop.f32.mrb[0].mxu0
      %v4573 = vadd.f32 0.0, %v4572
      %v4574 = vpop.f32.mrb[0].mxu0
      %4575 = vmatprep.mubr.bf16.mxu0 0
      %4576 = vmatmul.mubr.bf16.gmra.mrb[0].mxu0 %v4447
      %v4577 = vpop.f32.mrb[0].mxu0
      %v4578 = vadd.f32 0.0, %v4577
      %v4579 = vpop.f32.mrb[0].mxu0
      %v4580 = vpop.f32.mrb[0].mxu0
      %v4581 = vadd.f32 0.0, %v4580
      %v4582 = vpop.f32.mrb[0].mxu0
      %4583 = vmatprep.mubr.bf16.mxu0 0
      %4584 = vmatmul.mubr.bf16.gmra.mrb[0].mxu0 %v4450
      %v4585 = vpop.f32.mrb[0].mxu0
      %v4586 = vadd.f32 0.0, %v4585
      %v4587 = vpop.f32.mrb[0].mxu0
      %v4588 = vpop.f32.mrb[0].mxu0
      %v4589 = vadd.f32 0.0, %v4588
      %v4590 = vpop.f32.mrb[0].mxu0
      %4591 = vmatprep.mubr.bf16.mxu0 0
      %4592 = vmatmul.mubr.bf16.gmra.mrb[0].mxu0 %v4453
      %v4593 = vpop.f32.mrb[0].mxu0
      %v4594 = vadd.f32 0.0, %v4593
      %v4595 = vpop.f32.mrb[0].mxu0
      %v4596 = vpop.f32.mrb[0].mxu0
      %v4597 = vadd.f32 0.0, %v4596
      %v4598 = vpop.f32.mrb[0].mxu0
      %4599 = vmatprep.mubr.bf16.mxu0 0
      %4600 = vmatmul.mubr.bf16.gmra.mrb[0].mxu0 %v4456
      %v4601 = vpop.f32.mrb[0].mxu0
      %v4602 = vadd.f32 0.0, %v4601
      %v4603 = vpop.f32.mrb[0].mxu0
      %v4604 = vpop.f32.mrb[0].mxu0
      %v4605 = vadd.f32 0.0, %v4604
      %v4606 = vpop.f32.mrb[0].mxu0
      %4607 = vmatprep.mubr.bf16.mxu0 0
      %4608 = vmatmul.mubr.bf16.gmra.mrb[0].mxu0 %v4459
      %v4609 = vpop.f32.mrb[0].mxu0
      %v4610 = vadd.f32 0.0, %v4609
      %v4611 = vpop.f32.mrb[0].mxu0
      %v4612 = vpop.f32.mrb[0].mxu0
      %v4613 = vadd.f32 0.0, %v4612
      %v4614 = vpop.f32.mrb[0].mxu0
      %4615 = vmatprep.mubr.bf16.mxu0 0
      %4616 = vmatmul.mubr.bf16.gmra.mrb[0].mxu0 %v4462
      %v4617 = vpop.f32.mrb[0].mxu0
      %v4618 = vadd.f32 0.0, %v4617
      %v4619 = vpop.f32.mrb[0].mxu0
      %v4620 = vpop.f32.mrb[0].mxu0
      %v4621 = vadd.f32 0.0, %v4620
      %v4622 = vpop.f32.mrb[0].mxu0
      %4623 = vmatprep.mubr.bf16.mxu0 0
      %4624 = vmatmul.mubr.bf16.gmra.mrb[0].mxu0 %v4465
      %v4625 = vpop.f32.mrb[0].mxu0
      %v4626 = vadd.f32 0.0, %v4625
      %v4627 = vpop.f32.mrb[0].mxu0
      %v4628 = vpop.f32.mrb[0].mxu0
      %v4629 = vadd.f32 0.0, %v4628
      %v4630 = vpop.f32.mrb[0].mxu0
      %4631 = vmatprep.mubr.bf16.mxu0 0
      %4632 = vmatmul.mubr.bf16.gmra.mrb[0].mxu0 %v4468
      %v4633 = vpop.f32.mrb[0].mxu0
      %v4634 = vadd.f32 0.0, %v4633
      %v4635 = vpop.f32.mrb[0].mxu0
      %v4636 = vpop.f32.mrb[0].mxu0
      %v4637 = vadd.f32 0.0, %v4636
      %v4638 = vpop.f32.mrb[0].mxu0
      %4639 = vmatprep.mubr.bf16.mxu0 0
      %4640 = vmatmul.mubr.bf16.gmra.mrb[0].mxu0 %v4471
      %v4641 = vpop.f32.mrb[0].mxu0
      %v4642 = vadd.f32 0.0, %v4641
      %v4643 = vpop.f32.mrb[0].mxu0
      %v4644 = vpop.f32.mrb[0].mxu0
      %v4645 = vadd.f32 0.0, %v4644
      %v4646 = vpop.f32.mrb[0].mxu0
      %4647 = vmatprep.mubr.bf16.mxu0 0
      %4648 = vmatmul.mubr.bf16.gmra.mrb[0].mxu0 %v4474
      %v4649 = vpop.f32.mrb[0].mxu0
      %v4650 = vadd.f32 0.0, %v4649
      %v4651 = vpop.f32.mrb[0].mxu0
      %v4652 = vpop.f32.mrb[0].mxu0
      %v4653 = vadd.f32 0.0, %v4652
      %v4654 = vpop.f32.mrb[0].mxu0
      %4655 = vdwg.mxu0
      %v4656 = vadd.f32 %v4385, %v4514
      %v4657 = vadd.f32 %v4386, %v4517
      %v4658 = vadd.f32 %v4387, %v4522
      %v4659 = vadd.f32 %v4388, %v4525
      %v4660 = vadd.f32 %v4389, %v4530
      %v4661 = vadd.f32 %v4390, %v4533
      %v4662 = vadd.f32 %v4391, %v4538
      %v4663 = vadd.f32 %v4392, %v4541
      %v4664 = vadd.f32 %v4393, %v4546
      %v4665 = vadd.f32 %v4394, %v4549
      %v4666 = vadd.f32 %v4395, %v4554
      %v4667 = vadd.f32 %v4396, %v4557
      %v4668 = vadd.f32 %v4397, %v4562
      %v4669 = vadd.f32 %v4398, %v4565
      %v4670 = vadd.f32 %v4399, %v4570
      %v4671 = vadd.f32 %v4400, %v4573
      %v4672 = vadd.f32 %v4401, %v4578
      %v4673 = vadd.f32 %v4402, %v4581
      %v4674 = vadd.f32 %v4403, %v4586
      %v4675 = vadd.f32 %v4404, %v4589
      %v4676 = vadd.f32 %v4405, %v4594
      %v4677 = vadd.f32 %v4406, %v4597
      %v4678 = vadd.f32 %v4407, %v4602
      %v4679 = vadd.f32 %v4408, %v4605
      %v4680 = vadd.f32 %v4409, %v4610
      %v4681 = vadd.f32 %v4410, %v4613
      %v4682 = vadd.f32 %v4411, %v4618
      %v4683 = vadd.f32 %v4412, %v4621
      %v4684 = vadd.f32 %v4413, %v4626
      %v4685 = vadd.f32 %v4414, %v4629
      %v4686 = vadd.f32 %v4415, %v4634
      %v4687 = vadd.f32 %v4416, %v4637
      %v4688 = vadd.f32 %v4417, %v4642
      %v4689 = vadd.f32 %v4418, %v4645
      %v4690 = vadd.f32 %v4419, %v4650
      %v4691 = vadd.f32 %v4420, %v4653
      %4692 = vst.msk [vmem:[#allocation3] sm:$0xff] %vm226, %v4656
      %4693 = vst.msk [vmem:[#allocation3 + $0x8] sm:$0xff] %vm226, %v4657
      %4694 = vst.msk [vmem:[#allocation3 + $0x10] sm:$0xff] %vm226, %v4658
      %4695 = vst.msk [vmem:[#allocation3 + $0x18] sm:$0xff] %vm226, %v4659
      %4696 = vst.msk [vmem:[#allocation3 + $0x20] sm:$0xff] %vm226, %v4660
      %4697 = vst.msk [vmem:[#allocation3 + $0x28] sm:$0xff] %vm226, %v4661
      %4698 = vst.msk [vmem:[#allocation3 + $0x30] sm:$0xff] %vm226, %v4662
      %4699 = vst.msk [vmem:[#allocation3 + $0x38] sm:$0xff] %vm226, %v4663
      %4700 = vst.msk [vmem:[#allocation3 + $0x40] sm:$0xff] %vm226, %v4664
      %4701 = vst.msk [vmem:[#allocation3 + $0x48] sm:$0xff] %vm226, %v4665
      %4702 = vst.msk [vmem:[#allocation3 + $0x50] sm:$0xff] %vm226, %v4666
      %4703 = vst.msk [vmem:[#allocation3 + $0x58] sm:$0xff] %vm226, %v4667
      %4704 = vst.msk [vmem:[#allocation3 + $0x60] sm:$0xff] %vm226, %v4668
      %4705 = vst.msk [vmem:[#allocation3 + $0x68] sm:$0xff] %vm226, %v4669
      %4706 = vst.msk [vmem:[#allocation3 + $0x70] sm:$0xff] %vm226, %v4670
      %4707 = vst.msk [vmem:[#allocation3 + $0x78] sm:$0xff] %vm226, %v4671
      %4708 = vst.msk [vmem:[#allocation3 + $0x80] sm:$0xff] %vm226, %v4672
      %4709 = vst.msk [vmem:[#allocation3 + $0x88] sm:$0xff] %vm226, %v4673
      %4710 = vst.msk [vmem:[#allocation3 + $0x90] sm:$0xff] %vm226, %v4674
      %4711 = vst.msk [vmem:[#allocation3 + $0x98] sm:$0xff] %vm226, %v4675
      %4712 = vst.msk [vmem:[#allocation3 + $0xa0] sm:$0xff] %vm226, %v4676
      %4713 = vst.msk [vmem:[#allocation3 + $0xa8] sm:$0xff] %vm226, %v4677
      %4714 = vst.msk [vmem:[#allocation3 + $0xb0] sm:$0xff] %vm226, %v4678
      %4715 = vst.msk [vmem:[#allocation3 + $0xb8] sm:$0xff] %vm226, %v4679
      %4716 = vst.msk [vmem:[#allocation3 + $0xc0] sm:$0xff] %vm226, %v4680
      %4717 = vst.msk [vmem:[#allocation3 + $0xc8] sm:$0xff] %vm226, %v4681
      %4718 = vst.msk [vmem:[#allocation3 + $0xd0] sm:$0xff] %vm226, %v4682
      %4719 = vst.msk [vmem:[#allocation3 + $0xd8] sm:$0xff] %vm226, %v4683
      %4720 = vst.msk [vmem:[#allocation3 + $0xe0] sm:$0xff] %vm226, %v4684
      %4721 = vst.msk [vmem:[#allocation3 + $0xe8] sm:$0xff] %vm226, %v4685
      %4722 = vst.msk [vmem:[#allocation3 + $0xf0] sm:$0xff] %vm226, %v4686
      %4723 = vst.msk [vmem:[#allocation3 + $0xf8] sm:$0xff] %vm226, %v4687
      %4724 = vst.msk [vmem:[#allocation3 + $0x100] sm:$0xff] %vm226, %v4688
      %4725 = vst.msk [vmem:[#allocation3 + $0x108] sm:$0xff] %vm226, %v4689
      %4726 = vst.msk [vmem:[#allocation3 + $0x110] sm:$0xff] %vm226, %v4690
      %4727 = vst.msk [vmem:[#allocation3 + $0x118] sm:$0x3f] %vm269, %v4691
      %v4728 = vld [vmem:[#allocation2 + $0x1] sm:$0xff]
      %v4729 = vld [vmem:[#allocation2 + $0x9] sm:$0xff]
      %v4730 = vld [vmem:[#allocation2 + $0x11] sm:$0xff]
      %v4731 = vld [vmem:[#allocation2 + $0x19] sm:$0xff]
      %v4732 = vld [vmem:[#allocation2 + $0x21] sm:$0xff]
      %v4733 = vld [vmem:[#allocation2 + $0x29] sm:$0xff]
      %v4734 = vld [vmem:[#allocation2 + $0x31] sm:$0xff]
      %v4735 = vld [vmem:[#allocation2 + $0x39] sm:$0xff]
      %v4736 = vld [vmem:[#allocation2 + $0x41] sm:$0xff]
      %v4737 = vld [vmem:[#allocation2 + $0x49] sm:$0xff]
      %v4738 = vld [vmem:[#allocation2 + $0x51] sm:$0xff]
      %v4739 = vld [vmem:[#allocation2 + $0x59] sm:$0xff]
      %v4740 = vld [vmem:[#allocation2 + $0x61] sm:$0xff]
      %v4741 = vld [vmem:[#allocation2 + $0x69] sm:$0xff]
      %v4742 = vld [vmem:[#allocation2 + $0x71] sm:$0xff]
      %v4743 = vld [vmem:[#allocation2 + $0x79] sm:$0xff]
      %v4744 = vld [vmem:[#allocation2 + $0x81] sm:$0xff]
      %v4745 = vld [vmem:[#allocation2 + $0x89] sm:$0xff]
      %v4746 = vld [vmem:[#allocation2 + $0x91] sm:$0xff]
      %v4747 = vld [vmem:[#allocation2 + $0x99] sm:$0xff]
      %v4748 = vld [vmem:[#allocation2 + $0xa1] sm:$0xff]
      %v4749 = vld [vmem:[#allocation2 + $0xa9] sm:$0xff]
      %v4750 = vld [vmem:[#allocation2 + $0xb1] sm:$0xff]
      %v4751 = vld [vmem:[#allocation2 + $0xb9] sm:$0xff]
      %v4752 = vld [vmem:[#allocation2 + $0xc1] sm:$0xff]
      %v4753 = vld [vmem:[#allocation2 + $0xc9] sm:$0xff]
      %v4754 = vld [vmem:[#allocation2 + $0xd1] sm:$0xff]
      %v4755 = vld [vmem:[#allocation2 + $0xd9] sm:$0xff]
      %v4756 = vld [vmem:[#allocation2 + $0xe1] sm:$0xff]
      %v4757 = vld [vmem:[#allocation2 + $0xe9] sm:$0xff]
      %v4758 = vld [vmem:[#allocation2 + $0xf1] sm:$0xff]
      %v4759 = vld [vmem:[#allocation2 + $0xf9] sm:$0xff]
      %v4760 = vld [vmem:[#allocation2 + $0x101] sm:$0xff]
      %v4761 = vld [vmem:[#allocation2 + $0x109] sm:$0xff]
      %v4762 = vld [vmem:[#allocation2 + $0x111] sm:$0xff]
      %v4763 = vld [vmem:[#allocation2 + $0x119] sm:$0x3f]
      %v4764 = vpack.c.bf16 %v4729, %v4728
      %v4765 = vpack.c.bf16 %v4731, %v4730
      %v4766 = vpack.c.bf16 %v4733, %v4732
      %v4767 = vpack.c.bf16 %v4735, %v4734
      %v4768 = vpack.c.bf16 %v4737, %v4736
      %v4769 = vpack.c.bf16 %v4739, %v4738
      %v4770 = vpack.c.bf16 %v4741, %v4740
      %v4771 = vpack.c.bf16 %v4743, %v4742
      %v4772 = vpack.c.bf16 %v4745, %v4744
      %v4773 = vpack.c.bf16 %v4747, %v4746
      %v4774 = vpack.c.bf16 %v4749, %v4748
      %v4775 = vpack.c.bf16 %v4751, %v4750
      %v4776 = vpack.c.bf16 %v4753, %v4752
      %v4777 = vpack.c.bf16 %v4755, %v4754
      %v4778 = vpack.c.bf16 %v4757, %v4756
      %v4779 = vpack.c.bf16 %v4759, %v4758
      %v4780 = vpack.c.bf16 %v4761, %v4760
      %v4781 = vpack.c.bf16 %v4763, %v4762
      %v4782 = vld [vmem:[#allocation3] sm:$0xff]
      %v4783 = vld [vmem:[#allocation3 + $0x8] sm:$0xff]
      %v4784 = vld [vmem:[#allocation3 + $0x10] sm:$0xff]
      %v4785 = vld [vmem:[#allocation3 + $0x18] sm:$0xff]
      %v4786 = vld [vmem:[#allocation3 + $0x20] sm:$0xff]
      %v4787 = vld [vmem:[#allocation3 + $0x28] sm:$0xff]
      %v4788 = vld [vmem:[#allocation3 + $0x30] sm:$0xff]
      %v4789 = vld [vmem:[#allocation3 + $0x38] sm:$0xff]
      %v4790 = vld [vmem:[#allocation3 + $0x40] sm:$0xff]
      %v4791 = vld [vmem:[#allocation3 + $0x48] sm:$0xff]
      %v4792 = vld [vmem:[#allocation3 + $0x50] sm:$0xff]
      %v4793 = vld [vmem:[#allocation3 + $0x58] sm:$0xff]
      %v4794 = vld [vmem:[#allocation3 + $0x60] sm:$0xff]
      %v4795 = vld [vmem:[#allocation3 + $0x68] sm:$0xff]
      %v4796 = vld [vmem:[#allocation3 + $0x70] sm:$0xff]
      %v4797 = vld [vmem:[#allocation3 + $0x78] sm:$0xff]
      %v4798 = vld [vmem:[#allocation3 + $0x80] sm:$0xff]
      %v4799 = vld [vmem:[#allocation3 + $0x88] sm:$0xff]
      %v4800 = vld [vmem:[#allocation3 + $0x90] sm:$0xff]
      %v4801 = vld [vmem:[#allocation3 + $0x98] sm:$0xff]
      %v4802 = vld [vmem:[#allocation3 + $0xa0] sm:$0xff]
      %v4803 = vld [vmem:[#allocation3 + $0xa8] sm:$0xff]
      %v4804 = vld [vmem:[#allocation3 + $0xb0] sm:$0xff]
      %v4805 = vld [vmem:[#allocation3 + $0xb8] sm:$0xff]
      %v4806 = vld [vmem:[#allocation3 + $0xc0] sm:$0xff]
      %v4807 = vld [vmem:[#allocation3 + $0xc8] sm:$0xff]
      %v4808 = vld [vmem:[#allocation3 + $0xd0] sm:$0xff]
      %v4809 = vld [vmem:[#allocation3 + $0xd8] sm:$0xff]
      %v4810 = vld [vmem:[#allocation3 + $0xe0] sm:$0xff]
      %v4811 = vld [vmem:[#allocation3 + $0xe8] sm:$0xff]
      %v4812 = vld [vmem:[#allocation3 + $0xf0] sm:$0xff]
      %v4813 = vld [vmem:[#allocation3 + $0xf8] sm:$0xff]
      %v4814 = vld [vmem:[#allocation3 + $0x100] sm:$0xff]
      %v4815 = vld [vmem:[#allocation3 + $0x108] sm:$0xff]
      %v4816 = vld [vmem:[#allocation3 + $0x110] sm:$0xff]
      %v4817 = vld [vmem:[#allocation3 + $0x118] sm:$0x3f]
      %s4818 = scalar_lea.vmem %s2, 2
      %v4819 = vld [vmem:[%s4818] sm:$0x3]
      %v4821 = vsel %vm226, %v4764, 0
      %v4824 = vsel %vm226, %v4765, 0
      %v4827 = vsel %vm226, %v4766, 0
      %v4830 = vsel %vm226, %v4767, 0
      %v4833 = vsel %vm226, %v4768, 0
      %v4836 = vsel %vm226, %v4769, 0
      %v4839 = vsel %vm226, %v4770, 0
      %v4842 = vsel %vm226, %v4771, 0
      %v4845 = vsel %vm226, %v4772, 0
      %v4848 = vsel %vm226, %v4773, 0
      %v4851 = vsel %vm226, %v4774, 0
      %v4854 = vsel %vm226, %v4775, 0
      %v4857 = vsel %vm226, %v4776, 0
      %v4860 = vsel %vm226, %v4777, 0
      %v4863 = vsel %vm226, %v4778, 0
      %v4866 = vsel %vm226, %v4779, 0
      %v4869 = vsel %vm226, %v4780, 0
      %v4872 = vsel %vm226, %v4781, 0
      %v4875 = vsel %vm416, %v4819, 0
      %4877 = vmatprep.subr.bf16.mxu0 0
      %4878 = vmatpush1.bf16.msra.mxu0 %v4875
      %4879 = vmatprep.subr.bf16.mxu0 0
      %4880 = vmatpush1.bf16.msra.mxu0 0
      %4881 = vmatprep.subr.bf16.mxu0 0
      %4882 = vmatpush1.bf16.msra.mxu0 0
      %4883 = vmatprep.subr.bf16.mxu0 0
      %4884 = vmatpush1.bf16.msra.mxu0 0
      %4885 = vmatprep.subr.bf16.mxu0 0
      %4886 = vmatpush1.bf16.msra.mxu0 0
      %4887 = vmatprep.subr.bf16.mxu0 0
      %4888 = vmatpush1.bf16.msra.mxu0 0
      %4889 = vmatprep.subr.bf16.mxu0 0
      %4890 = vmatpush1.bf16.msra.mxu0 0
      %4891 = vmatprep.subr.bf16.mxu0 0
      %4892 = vmatpush1.bf16.msra.mxu0 0
      %4893 = vmatprep.subr.bf16.mxu0 0
      %4894 = vmatpush1.bf16.msra.mxu0 0
      %4895 = vmatprep.subr.bf16.mxu0 0
      %4896 = vmatpush1.bf16.msra.mxu0 0
      %4897 = vmatprep.subr.bf16.mxu0 0
      %4898 = vmatpush1.bf16.msra.mxu0 0
      %4899 = vmatprep.subr.bf16.mxu0 0
      %4900 = vmatpush1.bf16.msra.mxu0 0
      %4901 = vmatprep.subr.bf16.mxu0 0
      %4902 = vmatpush1.bf16.msra.mxu0 0
      %4903 = vmatprep.subr.bf16.mxu0 0
      %4904 = vmatpush1.bf16.msra.mxu0 0
      %4905 = vmatprep.subr.bf16.mxu0 0
      %4906 = vmatpush1.bf16.msra.mxu0 0
      %4907 = vmatprep.subr.bf16.mxu0 0
      %4908 = vmatpush1.bf16.msra.mxu0 0
      %4909 = vmatprep.mubr.bf16.mxu0 0
      %4910 = vmatmul.mubr.bf16.gmra.mrb[0].mxu0 %v4821
      %v4911 = vpop.f32.mrb[0].mxu0
      %v4912 = vadd.f32 0.0, %v4911
      %v4913 = vpop.f32.mrb[0].mxu0
      %v4914 = vpop.f32.mrb[0].mxu0
      %v4915 = vadd.f32 0.0, %v4914
      %v4916 = vpop.f32.mrb[0].mxu0
      %4917 = vmatprep.mubr.bf16.mxu0 0
      %4918 = vmatmul.mubr.bf16.gmra.mrb[0].mxu0 %v4824
      %v4919 = vpop.f32.mrb[0].mxu0
      %v4920 = vadd.f32 0.0, %v4919
      %v4921 = vpop.f32.mrb[0].mxu0
      %v4922 = vpop.f32.mrb[0].mxu0
      %v4923 = vadd.f32 0.0, %v4922
      %v4924 = vpop.f32.mrb[0].mxu0
      %4925 = vmatprep.mubr.bf16.mxu0 0
      %4926 = vmatmul.mubr.bf16.gmra.mrb[0].mxu0 %v4827
      %v4927 = vpop.f32.mrb[0].mxu0
      %v4928 = vadd.f32 0.0, %v4927
      %v4929 = vpop.f32.mrb[0].mxu0
      %v4930 = vpop.f32.mrb[0].mxu0
      %v4931 = vadd.f32 0.0, %v4930
      %v4932 = vpop.f32.mrb[0].mxu0
      %4933 = vmatprep.mubr.bf16.mxu0 0
      %4934 = vmatmul.mubr.bf16.gmra.mrb[0].mxu0 %v4830
      %v4935 = vpop.f32.mrb[0].mxu0
      %v4936 = vadd.f32 0.0, %v4935
      %v4937 = vpop.f32.mrb[0].mxu0
      %v4938 = vpop.f32.mrb[0].mxu0
      %v4939 = vadd.f32 0.0, %v4938
      %v4940 = vpop.f32.mrb[0].mxu0
      %4941 = vmatprep.mubr.bf16.mxu0 0
      %4942 = vmatmul.mubr.bf16.gmra.mrb[0].mxu0 %v4833
      %v4943 = vpop.f32.mrb[0].mxu0
      %v4944 = vadd.f32 0.0, %v4943
      %v4945 = vpop.f32.mrb[0].mxu0
      %v4946 = vpop.f32.mrb[0].mxu0
      %v4947 = vadd.f32 0.0, %v4946
      %v4948 = vpop.f32.mrb[0].mxu0
      %4949 = vmatprep.mubr.bf16.mxu0 0
      %4950 = vmatmul.mubr.bf16.gmra.mrb[0].mxu0 %v4836
      %v4951 = vpop.f32.mrb[0].mxu0
      %v4952 = vadd.f32 0.0, %v4951
      %v4953 = vpop.f32.mrb[0].mxu0
      %v4954 = vpop.f32.mrb[0].mxu0
      %v4955 = vadd.f32 0.0, %v4954
      %v4956 = vpop.f32.mrb[0].mxu0
      %4957 = vmatprep.mubr.bf16.mxu0 0
      %4958 = vmatmul.mubr.bf16.gmra.mrb[0].mxu0 %v4839
      %v4959 = vpop.f32.mrb[0].mxu0
      %v4960 = vadd.f32 0.0, %v4959
      %v4961 = vpop.f32.mrb[0].mxu0
      %v4962 = vpop.f32.mrb[0].mxu0
      %v4963 = vadd.f32 0.0, %v4962
      %v4964 = vpop.f32.mrb[0].mxu0
      %4965 = vmatprep.mubr.bf16.mxu0 0
      %4966 = vmatmul.mubr.bf16.gmra.mrb[0].mxu0 %v4842
      %v4967 = vpop.f32.mrb[0].mxu0
      %v4968 = vadd.f32 0.0, %v4967
      %v4969 = vpop.f32.mrb[0].mxu0
      %v4970 = vpop.f32.mrb[0].mxu0
      %v4971 = vadd.f32 0.0, %v4970
      %v4972 = vpop.f32.mrb[0].mxu0
      %4973 = vmatprep.mubr.bf16.mxu0 0
      %4974 = vmatmul.mubr.bf16.gmra.mrb[0].mxu0 %v4845
      %v4975 = vpop.f32.mrb[0].mxu0
      %v4976 = vadd.f32 0.0, %v4975
      %v4977 = vpop.f32.mrb[0].mxu0
      %v4978 = vpop.f32.mrb[0].mxu0
      %v4979 = vadd.f32 0.0, %v4978
      %v4980 = vpop.f32.mrb[0].mxu0
      %4981 = vmatprep.mubr.bf16.mxu0 0
      %4982 = vmatmul.mubr.bf16.gmra.mrb[0].mxu0 %v4848
      %v4983 = vpop.f32.mrb[0].mxu0
      %v4984 = vadd.f32 0.0, %v4983
      %v4985 = vpop.f32.mrb[0].mxu0
      %v4986 = vpop.f32.mrb[0].mxu0
      %v4987 = vadd.f32 0.0, %v4986
      %v4988 = vpop.f32.mrb[0].mxu0
      %4989 = vmatprep.mubr.bf16.mxu0 0
      %4990 = vmatmul.mubr.bf16.gmra.mrb[0].mxu0 %v4851
      %v4991 = vpop.f32.mrb[0].mxu0
      %v4992 = vadd.f32 0.0, %v4991
      %v4993 = vpop.f32.mrb[0].mxu0
      %v4994 = vpop.f32.mrb[0].mxu0
      %v4995 = vadd.f32 0.0, %v4994
      %v4996 = vpop.f32.mrb[0].mxu0
      %4997 = vmatprep.mubr.bf16.mxu0 0
      %4998 = vmatmul.mubr.bf16.gmra.mrb[0].mxu0 %v4854
      %v4999 = vpop.f32.mrb[0].mxu0
      %v5000 = vadd.f32 0.0, %v4999
      %v5001 = vpop.f32.mrb[0].mxu0
      %v5002 = vpop.f32.mrb[0].mxu0
      %v5003 = vadd.f32 0.0, %v5002
      %v5004 = vpop.f32.mrb[0].mxu0
      %5005 = vmatprep.mubr.bf16.mxu0 0
      %5006 = vmatmul.mubr.bf16.gmra.mrb[0].mxu0 %v4857
      %v5007 = vpop.f32.mrb[0].mxu0
      %v5008 = vadd.f32 0.0, %v5007
      %v5009 = vpop.f32.mrb[0].mxu0
      %v5010 = vpop.f32.mrb[0].mxu0
      %v5011 = vadd.f32 0.0, %v5010
      %v5012 = vpop.f32.mrb[0].mxu0
      %5013 = vmatprep.mubr.bf16.mxu0 0
      %5014 = vmatmul.mubr.bf16.gmra.mrb[0].mxu0 %v4860
      %v5015 = vpop.f32.mrb[0].mxu0
      %v5016 = vadd.f32 0.0, %v5015
      %v5017 = vpop.f32.mrb[0].mxu0
      %v5018 = vpop.f32.mrb[0].mxu0
      %v5019 = vadd.f32 0.0, %v5018
      %v5020 = vpop.f32.mrb[0].mxu0
      %5021 = vmatprep.mubr.bf16.mxu0 0
      %5022 = vmatmul.mubr.bf16.gmra.mrb[0].mxu0 %v4863
      %v5023 = vpop.f32.mrb[0].mxu0
      %v5024 = vadd.f32 0.0, %v5023
      %v5025 = vpop.f32.mrb[0].mxu0
      %v5026 = vpop.f32.mrb[0].mxu0
      %v5027 = vadd.f32 0.0, %v5026
      %v5028 = vpop.f32.mrb[0].mxu0
      %5029 = vmatprep.mubr.bf16.mxu0 0
      %5030 = vmatmul.mubr.bf16.gmra.mrb[0].mxu0 %v4866
      %v5031 = vpop.f32.mrb[0].mxu0
      %v5032 = vadd.f32 0.0, %v5031
      %v5033 = vpop.f32.mrb[0].mxu0
      %v5034 = vpop.f32.mrb[0].mxu0
      %v5035 = vadd.f32 0.0, %v5034
      %v5036 = vpop.f32.mrb[0].mxu0
      %5037 = vmatprep.mubr.bf16.mxu0 0
      %5038 = vmatmul.mubr.bf16.gmra.mrb[0].mxu0 %v4869
      %v5039 = vpop.f32.mrb[0].mxu0
      %v5040 = vadd.f32 0.0, %v5039
      %v5041 = vpop.f32.mrb[0].mxu0
      %v5042 = vpop.f32.mrb[0].mxu0
      %v5043 = vadd.f32 0.0, %v5042
      %v5044 = vpop.f32.mrb[0].mxu0
      %5045 = vmatprep.mubr.bf16.mxu0 0
      %5046 = vmatmul.mubr.bf16.gmra.mrb[0].mxu0 %v4872
      %v5047 = vpop.f32.mrb[0].mxu0
      %v5048 = vadd.f32 0.0, %v5047
      %v5049 = vpop.f32.mrb[0].mxu0
      %v5050 = vpop.f32.mrb[0].mxu0
      %v5051 = vadd.f32 0.0, %v5050
      %v5052 = vpop.f32.mrb[0].mxu0
      %5053 = vdwg.mxu0
      %v5054 = vadd.f32 %v4782, %v4912
      %v5055 = vadd.f32 %v4783, %v4915
      %v5056 = vadd.f32 %v4784, %v4920
      %v5057 = vadd.f32 %v4785, %v4923
      %v5058 = vadd.f32 %v4786, %v4928
      %v5059 = vadd.f32 %v4787, %v4931
      %v5060 = vadd.f32 %v4788, %v4936
      %v5061 = vadd.f32 %v4789, %v4939
      %v5062 = vadd.f32 %v4790, %v4944
      %v5063 = vadd.f32 %v4791, %v4947
      %v5064 = vadd.f32 %v4792, %v4952
      %v5065 = vadd.f32 %v4793, %v4955
      %v5066 = vadd.f32 %v4794, %v4960
      %v5067 = vadd.f32 %v4795, %v4963
      %v5068 = vadd.f32 %v4796, %v4968
      %v5069 = vadd.f32 %v4797, %v4971
      %v5070 = vadd.f32 %v4798, %v4976
      %v5071 = vadd.f32 %v4799, %v4979
      %v5072 = vadd.f32 %v4800, %v4984
      %v5073 = vadd.f32 %v4801, %v4987
      %v5074 = vadd.f32 %v4802, %v4992
      %v5075 = vadd.f32 %v4803, %v4995
      %v5076 = vadd.f32 %v4804, %v5000
      %v5077 = vadd.f32 %v4805, %v5003
      %v5078 = vadd.f32 %v4806, %v5008
      %v5079 = vadd.f32 %v4807, %v5011
      %v5080 = vadd.f32 %v4808, %v5016
      %v5081 = vadd.f32 %v4809, %v5019
      %v5082 = vadd.f32 %v4810, %v5024
      %v5083 = vadd.f32 %v4811, %v5027
      %v5084 = vadd.f32 %v4812, %v5032
      %v5085 = vadd.f32 %v4813, %v5035
      %v5086 = vadd.f32 %v4814, %v5040
      %v5087 = vadd.f32 %v4815, %v5043
      %v5088 = vadd.f32 %v4816, %v5048
      %v5089 = vadd.f32 %v4817, %v5051
      %5090 = vst.msk [vmem:[#allocation3] sm:$0xff] %vm226, %v5054
      %5091 = vst.msk [vmem:[#allocation3 + $0x8] sm:$0xff] %vm226, %v5055
      %5092 = vst.msk [vmem:[#allocation3 + $0x10] sm:$0xff] %vm226, %v5056
      %5093 = vst.msk [vmem:[#allocation3 + $0x18] sm:$0xff] %vm226, %v5057
      %5094 = vst.msk [vmem:[#allocation3 + $0x20] sm:$0xff] %vm226, %v5058
      %5095 = vst.msk [vmem:[#allocation3 + $0x28] sm:$0xff] %vm226, %v5059
      %5096 = vst.msk [vmem:[#allocation3 + $0x30] sm:$0xff] %vm226, %v5060
      %5097 = vst.msk [vmem:[#allocation3 + $0x38] sm:$0xff] %vm226, %v5061
      %5098 = vst.msk [vmem:[#allocation3 + $0x40] sm:$0xff] %vm226, %v5062
      %5099 = vst.msk [vmem:[#allocation3 + $0x48] sm:$0xff] %vm226, %v5063
      %5100 = vst.msk [vmem:[#allocation3 + $0x50] sm:$0xff] %vm226, %v5064
      %5101 = vst.msk [vmem:[#allocation3 + $0x58] sm:$0xff] %vm226, %v5065
      %5102 = vst.msk [vmem:[#allocation3 + $0x60] sm:$0xff] %vm226, %v5066
      %5103 = vst.msk [vmem:[#allocation3 + $0x68] sm:$0xff] %vm226, %v5067
      %5104 = vst.msk [vmem:[#allocation3 + $0x70] sm:$0xff] %vm226, %v5068
      %5105 = vst.msk [vmem:[#allocation3 + $0x78] sm:$0xff] %vm226, %v5069
      %5106 = vst.msk [vmem:[#allocation3 + $0x80] sm:$0xff] %vm226, %v5070
      %5107 = vst.msk [vmem:[#allocation3 + $0x88] sm:$0xff] %vm226, %v5071
      %5108 = vst.msk [vmem:[#allocation3 + $0x90] sm:$0xff] %vm226, %v5072
      %5109 = vst.msk [vmem:[#allocation3 + $0x98] sm:$0xff] %vm226, %v5073
      %5110 = vst.msk [vmem:[#allocation3 + $0xa0] sm:$0xff] %vm226, %v5074
      %5111 = vst.msk [vmem:[#allocation3 + $0xa8] sm:$0xff] %vm226, %v5075
      %5112 = vst.msk [vmem:[#allocation3 + $0xb0] sm:$0xff] %vm226, %v5076
      %5113 = vst.msk [vmem:[#allocation3 + $0xb8] sm:$0xff] %vm226, %v5077
      %5114 = vst.msk [vmem:[#allocation3 + $0xc0] sm:$0xff] %vm226, %v5078
      %5115 = vst.msk [vmem:[#allocation3 + $0xc8] sm:$0xff] %vm226, %v5079
      %5116 = vst.msk [vmem:[#allocation3 + $0xd0] sm:$0xff] %vm226, %v5080
      %5117 = vst.msk [vmem:[#allocation3 + $0xd8] sm:$0xff] %vm226, %v5081
      %5118 = vst.msk [vmem:[#allocation3 + $0xe0] sm:$0xff] %vm226, %v5082
      %5119 = vst.msk [vmem:[#allocation3 + $0xe8] sm:$0xff] %vm226, %v5083
      %5120 = vst.msk [vmem:[#allocation3 + $0xf0] sm:$0xff] %vm226, %v5084
      %5121 = vst.msk [vmem:[#allocation3 + $0xf8] sm:$0xff] %vm226, %v5085
      %5122 = vst.msk [vmem:[#allocation3 + $0x100] sm:$0xff] %vm226, %v5086
      %5123 = vst.msk [vmem:[#allocation3 + $0x108] sm:$0xff] %vm226, %v5087
      %5124 = vst.msk [vmem:[#allocation3 + $0x110] sm:$0xff] %vm226, %v5088
      %5125 = vst.msk [vmem:[#allocation3 + $0x118] sm:$0x3f] %vm269, %v5089
      %v5126 = vld [vmem:[#allocation2 + $0x2] sm:$0xff]
      %v5127 = vld [vmem:[#allocation2 + $0xa] sm:$0xff]
      %v5128 = vld [vmem:[#allocation2 + $0x12] sm:$0xff]
      %v5129 = vld [vmem:[#allocation2 + $0x1a] sm:$0xff]
      %v5130 = vld [vmem:[#allocation2 + $0x22] sm:$0xff]
      %v5131 = vld [vmem:[#allocation2 + $0x2a] sm:$0xff]
      %v5132 = vld [vmem:[#allocation2 + $0x32] sm:$0xff]
      %v5133 = vld [vmem:[#allocation2 + $0x3a] sm:$0xff]
      %v5134 = vld [vmem:[#allocation2 + $0x42] sm:$0xff]
      %v5135 = vld [vmem:[#allocation2 + $0x4a] sm:$0xff]
      %v5136 = vld [vmem:[#allocation2 + $0x52] sm:$0xff]
      %v5137 = vld [vmem:[#allocation2 + $0x5a] sm:$0xff]
      %v5138 = vld [vmem:[#allocation2 + $0x62] sm:$0xff]
      %v5139 = vld [vmem:[#allocation2 + $0x6a] sm:$0xff]
      %v5140 = vld [vmem:[#allocation2 + $0x72] sm:$0xff]
      %v5141 = vld [vmem:[#allocation2 + $0x7a] sm:$0xff]
      %v5142 = vld [vmem:[#allocation2 + $0x82] sm:$0xff]
      %v5143 = vld [vmem:[#allocation2 + $0x8a] sm:$0xff]
      %v5144 = vld [vmem:[#allocation2 + $0x92] sm:$0xff]
      %v5145 = vld [vmem:[#allocation2 + $0x9a] sm:$0xff]
      %v5146 = vld [vmem:[#allocation2 + $0xa2] sm:$0xff]
      %v5147 = vld [vmem:[#allocation2 + $0xaa] sm:$0xff]
      %v5148 = vld [vmem:[#allocation2 + $0xb2] sm:$0xff]
      %v5149 = vld [vmem:[#allocation2 + $0xba] sm:$0xff]
      %v5150 = vld [vmem:[#allocation2 + $0xc2] sm:$0xff]
      %v5151 = vld [vmem:[#allocation2 + $0xca] sm:$0xff]
      %v5152 = vld [vmem:[#allocation2 + $0xd2] sm:$0xff]
      %v5153 = vld [vmem:[#allocation2 + $0xda] sm:$0xff]
      %v5154 = vld [vmem:[#allocation2 + $0xe2] sm:$0xff]
      %v5155 = vld [vmem:[#allocation2 + $0xea] sm:$0xff]
      %v5156 = vld [vmem:[#allocation2 + $0xf2] sm:$0xff]
      %v5157 = vld [vmem:[#allocation2 + $0xfa] sm:$0xff]
      %v5158 = vld [vmem:[#allocation2 + $0x102] sm:$0xff]
      %v5159 = vld [vmem:[#allocation2 + $0x10a] sm:$0xff]
      %v5160 = vld [vmem:[#allocation2 + $0x112] sm:$0xff]
      %v5161 = vld [vmem:[#allocation2 + $0x11a] sm:$0x3f]
      %v5162 = vpack.c.bf16 %v5127, %v5126
      %v5163 = vpack.c.bf16 %v5129, %v5128
      %v5164 = vpack.c.bf16 %v5131, %v5130
      %v5165 = vpack.c.bf16 %v5133, %v5132
      %v5166 = vpack.c.bf16 %v5135, %v5134
      %v5167 = vpack.c.bf16 %v5137, %v5136
      %v5168 = vpack.c.bf16 %v5139, %v5138
      %v5169 = vpack.c.bf16 %v5141, %v5140
      %v5170 = vpack.c.bf16 %v5143, %v5142
      %v5171 = vpack.c.bf16 %v5145, %v5144
      %v5172 = vpack.c.bf16 %v5147, %v5146
      %v5173 = vpack.c.bf16 %v5149, %v5148
      %v5174 = vpack.c.bf16 %v5151, %v5150
      %v5175 = vpack.c.bf16 %v5153, %v5152
      %v5176 = vpack.c.bf16 %v5155, %v5154
      %v5177 = vpack.c.bf16 %v5157, %v5156
      %v5178 = vpack.c.bf16 %v5159, %v5158
      %v5179 = vpack.c.bf16 %v5161, %v5160
      %v5180 = vld [vmem:[#allocation3] sm:$0xff]
      %v5181 = vld [vmem:[#allocation3 + $0x8] sm:$0xff]
      %v5182 = vld [vmem:[#allocation3 + $0x10] sm:$0xff]
      %v5183 = vld [vmem:[#allocation3 + $0x18] sm:$0xff]
      %v5184 = vld [vmem:[#allocation3 + $0x20] sm:$0xff]
      %v5185 = vld [vmem:[#allocation3 + $0x28] sm:$0xff]
      %v5186 = vld [vmem:[#allocation3 + $0x30] sm:$0xff]
      %v5187 = vld [vmem:[#allocation3 + $0x38] sm:$0xff]
      %v5188 = vld [vmem:[#allocation3 + $0x40] sm:$0xff]
      %v5189 = vld [vmem:[#allocation3 + $0x48] sm:$0xff]
      %v5190 = vld [vmem:[#allocation3 + $0x50] sm:$0xff]
      %v5191 = vld [vmem:[#allocation3 + $0x58] sm:$0xff]
      %v5192 = vld [vmem:[#allocation3 + $0x60] sm:$0xff]
      %v5193 = vld [vmem:[#allocation3 + $0x68] sm:$0xff]
      %v5194 = vld [vmem:[#allocation3 + $0x70] sm:$0xff]
      %v5195 = vld [vmem:[#allocation3 + $0x78] sm:$0xff]
      %v5196 = vld [vmem:[#allocation3 + $0x80] sm:$0xff]
      %v5197 = vld [vmem:[#allocation3 + $0x88] sm:$0xff]
      %v5198 = vld [vmem:[#allocation3 + $0x90] sm:$0xff]
      %v5199 = vld [vmem:[#allocation3 + $0x98] sm:$0xff]
      %v5200 = vld [vmem:[#allocation3 + $0xa0] sm:$0xff]
      %v5201 = vld [vmem:[#allocation3 + $0xa8] sm:$0xff]
      %v5202 = vld [vmem:[#allocation3 + $0xb0] sm:$0xff]
      %v5203 = vld [vmem:[#allocation3 + $0xb8] sm:$0xff]
      %v5204 = vld [vmem:[#allocation3 + $0xc0] sm:$0xff]
      %v5205 = vld [vmem:[#allocation3 + $0xc8] sm:$0xff]
      %v5206 = vld [vmem:[#allocation3 + $0xd0] sm:$0xff]
      %v5207 = vld [vmem:[#allocation3 + $0xd8] sm:$0xff]
      %v5208 = vld [vmem:[#allocation3 + $0xe0] sm:$0xff]
      %v5209 = vld [vmem:[#allocation3 + $0xe8] sm:$0xff]
      %v5210 = vld [vmem:[#allocation3 + $0xf0] sm:$0xff]
      %v5211 = vld [vmem:[#allocation3 + $0xf8] sm:$0xff]
      %v5212 = vld [vmem:[#allocation3 + $0x100] sm:$0xff]
      %v5213 = vld [vmem:[#allocation3 + $0x108] sm:$0xff]
      %v5214 = vld [vmem:[#allocation3 + $0x110] sm:$0xff]
      %v5215 = vld [vmem:[#allocation3 + $0x118] sm:$0x3f]
      %s5216 = scalar_lea.vmem %s2, 4
      %v5217 = vld [vmem:[%s5216] sm:$0x3]
      %v5219 = vsel %vm226, %v5162, 0
      %v5222 = vsel %vm226, %v5163, 0
      %v5225 = vsel %vm226, %v5164, 0
      %v5228 = vsel %vm226, %v5165, 0
      %v5231 = vsel %vm226, %v5166, 0
      %v5234 = vsel %vm226, %v5167, 0
      %v5237 = vsel %vm226, %v5168, 0
      %v5240 = vsel %vm226, %v5169, 0
      %v5243 = vsel %vm226, %v5170, 0
      %v5246 = vsel %vm226, %v5171, 0
      %v5249 = vsel %vm226, %v5172, 0
      %v5252 = vsel %vm226, %v5173, 0
      %v5255 = vsel %vm226, %v5174, 0
      %v5258 = vsel %vm226, %v5175, 0
      %v5261 = vsel %vm226, %v5176, 0
      %v5264 = vsel %vm226, %v5177, 0
      %v5267 = vsel %vm226, %v5178, 0
      %v5270 = vsel %vm226, %v5179, 0
      %v5273 = vsel %vm416, %v5217, 0
      %5275 = vmatprep.subr.bf16.mxu0 0
      %5276 = vmatpush1.bf16.msra.mxu0 %v5273
      %5277 = vmatprep.subr.bf16.mxu0 0
      %5278 = vmatpush1.bf16.msra.mxu0 0
      %5279 = vmatprep.subr.bf16.mxu0 0
      %5280 = vmatpush1.bf16.msra.mxu0 0
      %5281 = vmatprep.subr.bf16.mxu0 0
      %5282 = vmatpush1.bf16.msra.mxu0 0
      %5283 = vmatprep.subr.bf16.mxu0 0
      %5284 = vmatpush1.bf16.msra.mxu0 0
      %5285 = vmatprep.subr.bf16.mxu0 0
      %5286 = vmatpush1.bf16.msra.mxu0 0
      %5287 = vmatprep.subr.bf16.mxu0 0
      %5288 = vmatpush1.bf16.msra.mxu0 0
      %5289 = vmatprep.subr.bf16.mxu0 0
      %5290 = vmatpush1.bf16.msra.mxu0 0
      %5291 = vmatprep.subr.bf16.mxu0 0
      %5292 = vmatpush1.bf16.msra.mxu0 0
      %5293 = vmatprep.subr.bf16.mxu0 0
      %5294 = vmatpush1.bf16.msra.mxu0 0
      %5295 = vmatprep.subr.bf16.mxu0 0
      %5296 = vmatpush1.bf16.msra.mxu0 0
      %5297 = vmatprep.subr.bf16.mxu0 0
      %5298 = vmatpush1.bf16.msra.mxu0 0
      %5299 = vmatprep.subr.bf16.mxu0 0
      %5300 = vmatpush1.bf16.msra.mxu0 0
      %5301 = vmatprep.subr.bf16.mxu0 0
      %5302 = vmatpush1.bf16.msra.mxu0 0
      %5303 = vmatprep.subr.bf16.mxu0 0
      %5304 = vmatpush1.bf16.msra.mxu0 0
      %5305 = vmatprep.subr.bf16.mxu0 0
      %5306 = vmatpush1.bf16.msra.mxu0 0
      %5307 = vmatprep.mubr.bf16.mxu0 0
      %5308 = vmatmul.mubr.bf16.gmra.mrb[0].mxu0 %v5219
      %v5309 = vpop.f32.mrb[0].mxu0
      %v5310 = vadd.f32 0.0, %v5309
      %v5311 = vpop.f32.mrb[0].mxu0
      %v5312 = vpop.f32.mrb[0].mxu0
      %v5313 = vadd.f32 0.0, %v5312
      %v5314 = vpop.f32.mrb[0].mxu0
      %5315 = vmatprep.mubr.bf16.mxu0 0
      %5316 = vmatmul.mubr.bf16.gmra.mrb[0].mxu0 %v5222
      %v5317 = vpop.f32.mrb[0].mxu0
      %v5318 = vadd.f32 0.0, %v5317
      %v5319 = vpop.f32.mrb[0].mxu0
      %v5320 = vpop.f32.mrb[0].mxu0
      %v5321 = vadd.f32 0.0, %v5320
      %v5322 = vpop.f32.mrb[0].mxu0
      %5323 = vmatprep.mubr.bf16.mxu0 0
      %5324 = vmatmul.mubr.bf16.gmra.mrb[0].mxu0 %v5225
      %v5325 = vpop.f32.mrb[0].mxu0
      %v5326 = vadd.f32 0.0, %v5325
      %v5327 = vpop.f32.mrb[0].mxu0
      %v5328 = vpop.f32.mrb[0].mxu0
      %v5329 = vadd.f32 0.0, %v5328
      %v5330 = vpop.f32.mrb[0].mxu0
      %5331 = vmatprep.mubr.bf16.mxu0 0
      %5332 = vmatmul.mubr.bf16.gmra.mrb[0].mxu0 %v5228
      %v5333 = vpop.f32.mrb[0].mxu0
      %v5334 = vadd.f32 0.0, %v5333
      %v5335 = vpop.f32.mrb[0].mxu0
      %v5336 = vpop.f32.mrb[0].mxu0
      %v5337 = vadd.f32 0.0, %v5336
      %v5338 = vpop.f32.mrb[0].mxu0
      %5339 = vmatprep.mubr.bf16.mxu0 0
      %5340 = vmatmul.mubr.bf16.gmra.mrb[0].mxu0 %v5231
      %v5341 = vpop.f32.mrb[0].mxu0
      %v5342 = vadd.f32 0.0, %v5341
      %v5343 = vpop.f32.mrb[0].mxu0
      %v5344 = vpop.f32.mrb[0].mxu0
      %v5345 = vadd.f32 0.0, %v5344
      %v5346 = vpop.f32.mrb[0].mxu0
      %5347 = vmatprep.mubr.bf16.mxu0 0
      %5348 = vmatmul.mubr.bf16.gmra.mrb[0].mxu0 %v5234
      %v5349 = vpop.f32.mrb[0].mxu0
      %v5350 = vadd.f32 0.0, %v5349
      %v5351 = vpop.f32.mrb[0].mxu0
      %v5352 = vpop.f32.mrb[0].mxu0
      %v5353 = vadd.f32 0.0, %v5352
      %v5354 = vpop.f32.mrb[0].mxu0
      %5355 = vmatprep.mubr.bf16.mxu0 0
      %5356 = vmatmul.mubr.bf16.gmra.mrb[0].mxu0 %v5237
      %v5357 = vpop.f32.mrb[0].mxu0
      %v5358 = vadd.f32 0.0, %v5357
      %v5359 = vpop.f32.mrb[0].mxu0
      %v5360 = vpop.f32.mrb[0].mxu0
      %v5361 = vadd.f32 0.0, %v5360
      %v5362 = vpop.f32.mrb[0].mxu0
      %5363 = vmatprep.mubr.bf16.mxu0 0
      %5364 = vmatmul.mubr.bf16.gmra.mrb[0].mxu0 %v5240
      %v5365 = vpop.f32.mrb[0].mxu0
      %v5366 = vadd.f32 0.0, %v5365
      %v5367 = vpop.f32.mrb[0].mxu0
      %v5368 = vpop.f32.mrb[0].mxu0
      %v5369 = vadd.f32 0.0, %v5368
      %v5370 = vpop.f32.mrb[0].mxu0
      %5371 = vmatprep.mubr.bf16.mxu0 0
      %5372 = vmatmul.mubr.bf16.gmra.mrb[0].mxu0 %v5243
      %v5373 = vpop.f32.mrb[0].mxu0
      %v5374 = vadd.f32 0.0, %v5373
      %v5375 = vpop.f32.mrb[0].mxu0
      %v5376 = vpop.f32.mrb[0].mxu0
      %v5377 = vadd.f32 0.0, %v5376
      %v5378 = vpop.f32.mrb[0].mxu0
      %5379 = vmatprep.mubr.bf16.mxu0 0
      %5380 = vmatmul.mubr.bf16.gmra.mrb[0].mxu0 %v5246
      %v5381 = vpop.f32.mrb[0].mxu0
      %v5382 = vadd.f32 0.0, %v5381
      %v5383 = vpop.f32.mrb[0].mxu0
      %v5384 = vpop.f32.mrb[0].mxu0
      %v5385 = vadd.f32 0.0, %v5384
      %v5386 = vpop.f32.mrb[0].mxu0
      %5387 = vmatprep.mubr.bf16.mxu0 0
      %5388 = vmatmul.mubr.bf16.gmra.mrb[0].mxu0 %v5249
      %v5389 = vpop.f32.mrb[0].mxu0
      %v5390 = vadd.f32 0.0, %v5389
      %v5391 = vpop.f32.mrb[0].mxu0
      %v5392 = vpop.f32.mrb[0].mxu0
      %v5393 = vadd.f32 0.0, %v5392
      %v5394 = vpop.f32.mrb[0].mxu0
      %5395 = vmatprep.mubr.bf16.mxu0 0
      %5396 = vmatmul.mubr.bf16.gmra.mrb[0].mxu0 %v5252
      %v5397 = vpop.f32.mrb[0].mxu0
      %v5398 = vadd.f32 0.0, %v5397
      %v5399 = vpop.f32.mrb[0].mxu0
      %v5400 = vpop.f32.mrb[0].mxu0
      %v5401 = vadd.f32 0.0, %v5400
      %v5402 = vpop.f32.mrb[0].mxu0
      %5403 = vmatprep.mubr.bf16.mxu0 0
      %5404 = vmatmul.mubr.bf16.gmra.mrb[0].mxu0 %v5255
      %v5405 = vpop.f32.mrb[0].mxu0
      %v5406 = vadd.f32 0.0, %v5405
      %v5407 = vpop.f32.mrb[0].mxu0
      %v5408 = vpop.f32.mrb[0].mxu0
      %v5409 = vadd.f32 0.0, %v5408
      %v5410 = vpop.f32.mrb[0].mxu0
      %5411 = vmatprep.mubr.bf16.mxu0 0
      %5412 = vmatmul.mubr.bf16.gmra.mrb[0].mxu0 %v5258
      %v5413 = vpop.f32.mrb[0].mxu0
      %v5414 = vadd.f32 0.0, %v5413
      %v5415 = vpop.f32.mrb[0].mxu0
      %v5416 = vpop.f32.mrb[0].mxu0
      %v5417 = vadd.f32 0.0, %v5416
      %v5418 = vpop.f32.mrb[0].mxu0
      %5419 = vmatprep.mubr.bf16.mxu0 0
      %5420 = vmatmul.mubr.bf16.gmra.mrb[0].mxu0 %v5261
      %v5421 = vpop.f32.mrb[0].mxu0
      %v5422 = vadd.f32 0.0, %v5421
      %v5423 = vpop.f32.mrb[0].mxu0
      %v5424 = vpop.f32.mrb[0].mxu0
      %v5425 = vadd.f32 0.0, %v5424
      %v5426 = vpop.f32.mrb[0].mxu0
      %5427 = vmatprep.mubr.bf16.mxu0 0
      %5428 = vmatmul.mubr.bf16.gmra.mrb[0].mxu0 %v5264
      %v5429 = vpop.f32.mrb[0].mxu0
      %v5430 = vadd.f32 0.0, %v5429
      %v5431 = vpop.f32.mrb[0].mxu0
      %v5432 = vpop.f32.mrb[0].mxu0
      %v5433 = vadd.f32 0.0, %v5432
      %v5434 = vpop.f32.mrb[0].mxu0
      %5435 = vmatprep.mubr.bf16.mxu0 0
      %5436 = vmatmul.mubr.bf16.gmra.mrb[0].mxu0 %v5267
      %v5437 = vpop.f32.mrb[0].mxu0
      %v5438 = vadd.f32 0.0, %v5437
      %v5439 = vpop.f32.mrb[0].mxu0
      %v5440 = vpop.f32.mrb[0].mxu0
      %v5441 = vadd.f32 0.0, %v5440
      %v5442 = vpop.f32.mrb[0].mxu0
      %5443 = vmatprep.mubr.bf16.mxu0 0
      %5444 = vmatmul.mubr.bf16.gmra.mrb[0].mxu0 %v5270
      %v5445 = vpop.f32.mrb[0].mxu0
      %v5446 = vadd.f32 0.0, %v5445
      %v5447 = vpop.f32.mrb[0].mxu0
      %v5448 = vpop.f32.mrb[0].mxu0
      %v5449 = vadd.f32 0.0, %v5448
      %v5450 = vpop.f32.mrb[0].mxu0
      %5451 = vdwg.mxu0
      %v5452 = vadd.f32 %v5180, %v5310
      %v5453 = vadd.f32 %v5181, %v5313
      %v5454 = vadd.f32 %v5182, %v5318
      %v5455 = vadd.f32 %v5183, %v5321
      %v5456 = vadd.f32 %v5184, %v5326
      %v5457 = vadd.f32 %v5185, %v5329
      %v5458 = vadd.f32 %v5186, %v5334
      %v5459 = vadd.f32 %v5187, %v5337
      %v5460 = vadd.f32 %v5188, %v5342
      %v5461 = vadd.f32 %v5189, %v5345
      %v5462 = vadd.f32 %v5190, %v5350
      %v5463 = vadd.f32 %v5191, %v5353
      %v5464 = vadd.f32 %v5192, %v5358
      %v5465 = vadd.f32 %v5193, %v5361
      %v5466 = vadd.f32 %v5194, %v5366
      %v5467 = vadd.f32 %v5195, %v5369
      %v5468 = vadd.f32 %v5196, %v5374
      %v5469 = vadd.f32 %v5197, %v5377
      %v5470 = vadd.f32 %v5198, %v5382
      %v5471 = vadd.f32 %v5199, %v5385
      %v5472 = vadd.f32 %v5200, %v5390
      %v5473 = vadd.f32 %v5201, %v5393
      %v5474 = vadd.f32 %v5202, %v5398
      %v5475 = vadd.f32 %v5203, %v5401
      %v5476 = vadd.f32 %v5204, %v5406
      %v5477 = vadd.f32 %v5205, %v5409
      %v5478 = vadd.f32 %v5206, %v5414
      %v5479 = vadd.f32 %v5207, %v5417
      %v5480 = vadd.f32 %v5208, %v5422
      %v5481 = vadd.f32 %v5209, %v5425
      %v5482 = vadd.f32 %v5210, %v5430
      %v5483 = vadd.f32 %v5211, %v5433
      %v5484 = vadd.f32 %v5212, %v5438
      %v5485 = vadd.f32 %v5213, %v5441
      %v5486 = vadd.f32 %v5214, %v5446
      %v5487 = vadd.f32 %v5215, %v5449
      %5488 = vst.msk [vmem:[#allocation3] sm:$0xff] %vm226, %v5452
      %5489 = vst.msk [vmem:[#allocation3 + $0x8] sm:$0xff] %vm226, %v5453
      %5490 = vst.msk [vmem:[#allocation3 + $0x10] sm:$0xff] %vm226, %v5454
      %5491 = vst.msk [vmem:[#allocation3 + $0x18] sm:$0xff] %vm226, %v5455
      %5492 = vst.msk [vmem:[#allocation3 + $0x20] sm:$0xff] %vm226, %v5456
      %5493 = vst.msk [vmem:[#allocation3 + $0x28] sm:$0xff] %vm226, %v5457
      %5494 = vst.msk [vmem:[#allocation3 + $0x30] sm:$0xff] %vm226, %v5458
      %5495 = vst.msk [vmem:[#allocation3 + $0x38] sm:$0xff] %vm226, %v5459
      %5496 = vst.msk [vmem:[#allocation3 + $0x40] sm:$0xff] %vm226, %v5460
      %5497 = vst.msk [vmem:[#allocation3 + $0x48] sm:$0xff] %vm226, %v5461
      %5498 = vst.msk [vmem:[#allocation3 + $0x50] sm:$0xff] %vm226, %v5462
      %5499 = vst.msk [vmem:[#allocation3 + $0x58] sm:$0xff] %vm226, %v5463
      %5500 = vst.msk [vmem:[#allocation3 + $0x60] sm:$0xff] %vm226, %v5464
      %5501 = vst.msk [vmem:[#allocation3 + $0x68] sm:$0xff] %vm226, %v5465
      %5502 = vst.msk [vmem:[#allocation3 + $0x70] sm:$0xff] %vm226, %v5466
      %5503 = vst.msk [vmem:[#allocation3 + $0x78] sm:$0xff] %vm226, %v5467
      %5504 = vst.msk [vmem:[#allocation3 + $0x80] sm:$0xff] %vm226, %v5468
      %5505 = vst.msk [vmem:[#allocation3 + $0x88] sm:$0xff] %vm226, %v5469
      %5506 = vst.msk [vmem:[#allocation3 + $0x90] sm:$0xff] %vm226, %v5470
      %5507 = vst.msk [vmem:[#allocation3 + $0x98] sm:$0xff] %vm226, %v5471
      %5508 = vst.msk [vmem:[#allocation3 + $0xa0] sm:$0xff] %vm226, %v5472
      %5509 = vst.msk [vmem:[#allocation3 + $0xa8] sm:$0xff] %vm226, %v5473
      %5510 = vst.msk [vmem:[#allocation3 + $0xb0] sm:$0xff] %vm226, %v5474
      %5511 = vst.msk [vmem:[#allocation3 + $0xb8] sm:$0xff] %vm226, %v5475
      %5512 = vst.msk [vmem:[#allocation3 + $0xc0] sm:$0xff] %vm226, %v5476
      %5513 = vst.msk [vmem:[#allocation3 + $0xc8] sm:$0xff] %vm226, %v5477
      %5514 = vst.msk [vmem:[#allocation3 + $0xd0] sm:$0xff] %vm226, %v5478
      %5515 = vst.msk [vmem:[#allocation3 + $0xd8] sm:$0xff] %vm226, %v5479
      %5516 = vst.msk [vmem:[#allocation3 + $0xe0] sm:$0xff] %vm226, %v5480
      %5517 = vst.msk [vmem:[#allocation3 + $0xe8] sm:$0xff] %vm226, %v5481
      %5518 = vst.msk [vmem:[#allocation3 + $0xf0] sm:$0xff] %vm226, %v5482
      %5519 = vst.msk [vmem:[#allocation3 + $0xf8] sm:$0xff] %vm226, %v5483
      %5520 = vst.msk [vmem:[#allocation3 + $0x100] sm:$0xff] %vm226, %v5484
      %5521 = vst.msk [vmem:[#allocation3 + $0x108] sm:$0xff] %vm226, %v5485
      %5522 = vst.msk [vmem:[#allocation3 + $0x110] sm:$0xff] %vm226, %v5486
      %5523 = vst.msk [vmem:[#allocation3 + $0x118] sm:$0x3f] %vm269, %v5487
      %v5524 = vld [vmem:[#allocation2 + $0x12] sm:$0xff]
      %v5525 = vld [vmem:[#allocation2 + $0x1a] sm:$0xff]
      %v5526 = vld [vmem:[#allocation2 + $0x22] sm:$0xff]
      %v5527 = vld [vmem:[#allocation2 + $0x2a] sm:$0xff]
      %v5528 = vld [vmem:[#allocation2 + $0x32] sm:$0xff]
      %v5529 = vld [vmem:[#allocation2 + $0x3a] sm:$0xff]
      %v5530 = vld [vmem:[#allocation2 + $0x42] sm:$0xff]
      %v5531 = vld [vmem:[#allocation2 + $0x4a] sm:$0xff]
      %v5532 = vld [vmem:[#allocation2 + $0x52] sm:$0xff]
      %v5533 = vld [vmem:[#allocation2 + $0x5a] sm:$0xff]
      %v5534 = vld [vmem:[#allocation2 + $0x62] sm:$0xff]
      %v5535 = vld [vmem:[#allocation2 + $0x6a] sm:$0xff]
      %v5536 = vld [vmem:[#allocation2 + $0x72] sm:$0xff]
      %v5537 = vld [vmem:[#allocation2 + $0x7a] sm:$0xff]
      %v5538 = vld [vmem:[#allocation2 + $0x82] sm:$0xff]
      %v5539 = vld [vmem:[#allocation2 + $0x8a] sm:$0xff]
      %v5540 = vld [vmem:[#allocation2 + $0x92] sm:$0xff]
      %v5541 = vld [vmem:[#allocation2 + $0x9a] sm:$0xff]
      %v5542 = vld [vmem:[#allocation2 + $0xa2] sm:$0xff]
      %v5543 = vld [vmem:[#allocation2 + $0xaa] sm:$0xff]
      %v5544 = vld [vmem:[#allocation2 + $0xb2] sm:$0xff]
      %v5545 = vld [vmem:[#allocation2 + $0xba] sm:$0xff]
      %v5546 = vld [vmem:[#allocation2 + $0xc2] sm:$0xff]
      %v5547 = vld [vmem:[#allocation2 + $0xca] sm:$0xff]
      %v5548 = vld [vmem:[#allocation2 + $0xd2] sm:$0xff]
      %v5549 = vld [vmem:[#allocation2 + $0xda] sm:$0xff]
      %v5550 = vld [vmem:[#allocation2 + $0xe2] sm:$0xff]
      %v5551 = vld [vmem:[#allocation2 + $0xea] sm:$0xff]
      %v5552 = vld [vmem:[#allocation2 + $0xf2] sm:$0xff]
      %v5553 = vld [vmem:[#allocation2 + $0xfa] sm:$0xff]
      %v5554 = vld [vmem:[#allocation2 + $0x102] sm:$0xff]
      %v5555 = vld [vmem:[#allocation2 + $0x10a] sm:$0xff]
      %v5556 = vld [vmem:[#allocation2 + $0x112] sm:$0xff]
      %v5557 = vld [vmem:[#allocation2 + $0x11a] sm:$0xff]
      %v5558 = vld [vmem:[#allocation2 + $0x122] sm:$0xff]
      %v5559 = vld [vmem:[#allocation2 + $0x12a] sm:$0x3f]
      %v5560 = vpack.c.bf16 %v5525, %v5524
      %v5561 = vpack.c.bf16 %v5527, %v5526
      %v5562 = vpack.c.bf16 %v5529, %v5528
      %v5563 = vpack.c.bf16 %v5531, %v5530
      %v5564 = vpack.c.bf16 %v5533, %v5532
      %v5565 = vpack.c.bf16 %v5535, %v5534
      %v5566 = vpack.c.bf16 %v5537, %v5536
      %v5567 = vpack.c.bf16 %v5539, %v5538
      %v5568 = vpack.c.bf16 %v5541, %v5540
      %v5569 = vpack.c.bf16 %v5543, %v5542
      %v5570 = vpack.c.bf16 %v5545, %v5544
      %v5571 = vpack.c.bf16 %v5547, %v5546
      %v5572 = vpack.c.bf16 %v5549, %v5548
      %v5573 = vpack.c.bf16 %v5551, %v5550
      %v5574 = vpack.c.bf16 %v5553, %v5552
      %v5575 = vpack.c.bf16 %v5555, %v5554
      %v5576 = vpack.c.bf16 %v5557, %v5556
      %v5577 = vpack.c.bf16 %v5559, %v5558
      %v5578 = vld [vmem:[#allocation3] sm:$0xff]
      %v5579 = vld [vmem:[#allocation3 + $0x8] sm:$0xff]
      %v5580 = vld [vmem:[#allocation3 + $0x10] sm:$0xff]
      %v5581 = vld [vmem:[#allocation3 + $0x18] sm:$0xff]
      %v5582 = vld [vmem:[#allocation3 + $0x20] sm:$0xff]
      %v5583 = vld [vmem:[#allocation3 + $0x28] sm:$0xff]
      %v5584 = vld [vmem:[#allocation3 + $0x30] sm:$0xff]
      %v5585 = vld [vmem:[#allocation3 + $0x38] sm:$0xff]
      %v5586 = vld [vmem:[#allocation3 + $0x40] sm:$0xff]
      %v5587 = vld [vmem:[#allocation3 + $0x48] sm:$0xff]
      %v5588 = vld [vmem:[#allocation3 + $0x50] sm:$0xff]
      %v5589 = vld [vmem:[#allocation3 + $0x58] sm:$0xff]
      %v5590 = vld [vmem:[#allocation3 + $0x60] sm:$0xff]
      %v5591 = vld [vmem:[#allocation3 + $0x68] sm:$0xff]
      %v5592 = vld [vmem:[#allocation3 + $0x70] sm:$0xff]
      %v5593 = vld [vmem:[#allocation3 + $0x78] sm:$0xff]
      %v5594 = vld [vmem:[#allocation3 + $0x80] sm:$0xff]
      %v5595 = vld [vmem:[#allocation3 + $0x88] sm:$0xff]
      %v5596 = vld [vmem:[#allocation3 + $0x90] sm:$0xff]
      %v5597 = vld [vmem:[#allocation3 + $0x98] sm:$0xff]
      %v5598 = vld [vmem:[#allocation3 + $0xa0] sm:$0xff]
      %v5599 = vld [vmem:[#allocation3 + $0xa8] sm:$0xff]
      %v5600 = vld [vmem:[#allocation3 + $0xb0] sm:$0xff]
      %v5601 = vld [vmem:[#allocation3 + $0xb8] sm:$0xff]
      %v5602 = vld [vmem:[#allocation3 + $0xc0] sm:$0xff]
      %v5603 = vld [vmem:[#allocation3 + $0xc8] sm:$0xff]
      %v5604 = vld [vmem:[#allocation3 + $0xd0] sm:$0xff]
      %v5605 = vld [vmem:[#allocation3 + $0xd8] sm:$0xff]
      %v5606 = vld [vmem:[#allocation3 + $0xe0] sm:$0xff]
      %v5607 = vld [vmem:[#allocation3 + $0xe8] sm:$0xff]
      %v5608 = vld [vmem:[#allocation3 + $0xf0] sm:$0xff]
      %v5609 = vld [vmem:[#allocation3 + $0xf8] sm:$0xff]
      %v5610 = vld [vmem:[#allocation3 + $0x100] sm:$0xff]
      %v5611 = vld [vmem:[#allocation3 + $0x108] sm:$0xff]
      %v5612 = vld [vmem:[#allocation3 + $0x110] sm:$0xff]
      %v5613 = vld [vmem:[#allocation3 + $0x118] sm:$0x3f]
      %s5614 = scalar_lea.vmem %s2, 6
      %v5615 = vld [vmem:[%s5614] sm:$0x3]
      %v5617 = vsel %vm226, %v5560, 0
      %v5620 = vsel %vm226, %v5561, 0
      %v5623 = vsel %vm226, %v5562, 0
      %v5626 = vsel %vm226, %v5563, 0
      %v5629 = vsel %vm226, %v5564, 0
      %v5632 = vsel %vm226, %v5565, 0
      %v5635 = vsel %vm226, %v5566, 0
      %v5638 = vsel %vm226, %v5567, 0
      %v5641 = vsel %vm226, %v5568, 0
      %v5644 = vsel %vm226, %v5569, 0
      %v5647 = vsel %vm226, %v5570, 0
      %v5650 = vsel %vm226, %v5571, 0
      %v5653 = vsel %vm226, %v5572, 0
      %v5656 = vsel %vm226, %v5573, 0
      %v5659 = vsel %vm226, %v5574, 0
      %v5662 = vsel %vm226, %v5575, 0
      %v5665 = vsel %vm226, %v5576, 0
      %v5668 = vsel %vm226, %v5577, 0
      %v5671 = vsel %vm416, %v5615, 0
      %5673 = vmatprep.subr.bf16.mxu0 0
      %5674 = vmatpush1.bf16.msra.mxu0 %v5671
      %5675 = vmatprep.subr.bf16.mxu0 0
      %5676 = vmatpush1.bf16.msra.mxu0 0
      %5677 = vmatprep.subr.bf16.mxu0 0
      %5678 = vmatpush1.bf16.msra.mxu0 0
      %5679 = vmatprep.subr.bf16.mxu0 0
      %5680 = vmatpush1.bf16.msra.mxu0 0
      %5681 = vmatprep.subr.bf16.mxu0 0
      %5682 = vmatpush1.bf16.msra.mxu0 0
      %5683 = vmatprep.subr.bf16.mxu0 0
      %5684 = vmatpush1.bf16.msra.mxu0 0
      %5685 = vmatprep.subr.bf16.mxu0 0
      %5686 = vmatpush1.bf16.msra.mxu0 0
      %5687 = vmatprep.subr.bf16.mxu0 0
      %5688 = vmatpush1.bf16.msra.mxu0 0
      %5689 = vmatprep.subr.bf16.mxu0 0
      %5690 = vmatpush1.bf16.msra.mxu0 0
      %5691 = vmatprep.subr.bf16.mxu0 0
      %5692 = vmatpush1.bf16.msra.mxu0 0
      %5693 = vmatprep.subr.bf16.mxu0 0
      %5694 = vmatpush1.bf16.msra.mxu0 0
      %5695 = vmatprep.subr.bf16.mxu0 0
      %5696 = vmatpush1.bf16.msra.mxu0 0
      %5697 = vmatprep.subr.bf16.mxu0 0
      %5698 = vmatpush1.bf16.msra.mxu0 0
      %5699 = vmatprep.subr.bf16.mxu0 0
      %5700 = vmatpush1.bf16.msra.mxu0 0
      %5701 = vmatprep.subr.bf16.mxu0 0
      %5702 = vmatpush1.bf16.msra.mxu0 0
      %5703 = vmatprep.subr.bf16.mxu0 0
      %5704 = vmatpush1.bf16.msra.mxu0 0
      %5705 = vmatprep.mubr.bf16.mxu0 0
      %5706 = vmatmul.mubr.bf16.gmra.mrb[0].mxu0 %v5617
      %v5707 = vpop.f32.mrb[0].mxu0
      %v5708 = vadd.f32 0.0, %v5707
      %v5709 = vpop.f32.mrb[0].mxu0
      %v5710 = vpop.f32.mrb[0].mxu0
      %v5711 = vadd.f32 0.0, %v5710
      %v5712 = vpop.f32.mrb[0].mxu0
      %5713 = vmatprep.mubr.bf16.mxu0 0
      %5714 = vmatmul.mubr.bf16.gmra.mrb[0].mxu0 %v5620
      %v5715 = vpop.f32.mrb[0].mxu0
      %v5716 = vadd.f32 0.0, %v5715
      %v5717 = vpop.f32.mrb[0].mxu0
      %v5718 = vpop.f32.mrb[0].mxu0
      %v5719 = vadd.f32 0.0, %v5718
      %v5720 = vpop.f32.mrb[0].mxu0
      %5721 = vmatprep.mubr.bf16.mxu0 0
      %5722 = vmatmul.mubr.bf16.gmra.mrb[0].mxu0 %v5623
      %v5723 = vpop.f32.mrb[0].mxu0
      %v5724 = vadd.f32 0.0, %v5723
      %v5725 = vpop.f32.mrb[0].mxu0
      %v5726 = vpop.f32.mrb[0].mxu0
      %v5727 = vadd.f32 0.0, %v5726
      %v5728 = vpop.f32.mrb[0].mxu0
      %5729 = vmatprep.mubr.bf16.mxu0 0
      %5730 = vmatmul.mubr.bf16.gmra.mrb[0].mxu0 %v5626
      %v5731 = vpop.f32.mrb[0].mxu0
      %v5732 = vadd.f32 0.0, %v5731
      %v5733 = vpop.f32.mrb[0].mxu0
      %v5734 = vpop.f32.mrb[0].mxu0
      %v5735 = vadd.f32 0.0, %v5734
      %v5736 = vpop.f32.mrb[0].mxu0
      %5737 = vmatprep.mubr.bf16.mxu0 0
      %5738 = vmatmul.mubr.bf16.gmra.mrb[0].mxu0 %v5629
      %v5739 = vpop.f32.mrb[0].mxu0
      %v5740 = vadd.f32 0.0, %v5739
      %v5741 = vpop.f32.mrb[0].mxu0
      %v5742 = vpop.f32.mrb[0].mxu0
      %v5743 = vadd.f32 0.0, %v5742
      %v5744 = vpop.f32.mrb[0].mxu0
      %5745 = vmatprep.mubr.bf16.mxu0 0
      %5746 = vmatmul.mubr.bf16.gmra.mrb[0].mxu0 %v5632
      %v5747 = vpop.f32.mrb[0].mxu0
      %v5748 = vadd.f32 0.0, %v5747
      %v5749 = vpop.f32.mrb[0].mxu0
      %v5750 = vpop.f32.mrb[0].mxu0
      %v5751 = vadd.f32 0.0, %v5750
      %v5752 = vpop.f32.mrb[0].mxu0
      %5753 = vmatprep.mubr.bf16.mxu0 0
      %5754 = vmatmul.mubr.bf16.gmra.mrb[0].mxu0 %v5635
      %v5755 = vpop.f32.mrb[0].mxu0
      %v5756 = vadd.f32 0.0, %v5755
      %v5757 = vpop.f32.mrb[0].mxu0
      %v5758 = vpop.f32.mrb[0].mxu0
      %v5759 = vadd.f32 0.0, %v5758
      %v5760 = vpop.f32.mrb[0].mxu0
      %5761 = vmatprep.mubr.bf16.mxu0 0
      %5762 = vmatmul.mubr.bf16.gmra.mrb[0].mxu0 %v5638
      %v5763 = vpop.f32.mrb[0].mxu0
      %v5764 = vadd.f32 0.0, %v5763
      %v5765 = vpop.f32.mrb[0].mxu0
      %v5766 = vpop.f32.mrb[0].mxu0
      %v5767 = vadd.f32 0.0, %v5766
      %v5768 = vpop.f32.mrb[0].mxu0
      %5769 = vmatprep.mubr.bf16.mxu0 0
      %5770 = vmatmul.mubr.bf16.gmra.mrb[0].mxu0 %v5641
      %v5771 = vpop.f32.mrb[0].mxu0
      %v5772 = vadd.f32 0.0, %v5771
      %v5773 = vpop.f32.mrb[0].mxu0
      %v5774 = vpop.f32.mrb[0].mxu0
      %v5775 = vadd.f32 0.0, %v5774
      %v5776 = vpop.f32.mrb[0].mxu0
      %5777 = vmatprep.mubr.bf16.mxu0 0
      %5778 = vmatmul.mubr.bf16.gmra.mrb[0].mxu0 %v5644
      %v5779 = vpop.f32.mrb[0].mxu0
      %v5780 = vadd.f32 0.0, %v5779
      %v5781 = vpop.f32.mrb[0].mxu0
      %v5782 = vpop.f32.mrb[0].mxu0
      %v5783 = vadd.f32 0.0, %v5782
      %v5784 = vpop.f32.mrb[0].mxu0
      %5785 = vmatprep.mubr.bf16.mxu0 0
      %5786 = vmatmul.mubr.bf16.gmra.mrb[0].mxu0 %v5647
      %v5787 = vpop.f32.mrb[0].mxu0
      %v5788 = vadd.f32 0.0, %v5787
      %v5789 = vpop.f32.mrb[0].mxu0
      %v5790 = vpop.f32.mrb[0].mxu0
      %v5791 = vadd.f32 0.0, %v5790
      %v5792 = vpop.f32.mrb[0].mxu0
      %5793 = vmatprep.mubr.bf16.mxu0 0
      %5794 = vmatmul.mubr.bf16.gmra.mrb[0].mxu0 %v5650
      %v5795 = vpop.f32.mrb[0].mxu0
      %v5796 = vadd.f32 0.0, %v5795
      %v5797 = vpop.f32.mrb[0].mxu0
      %v5798 = vpop.f32.mrb[0].mxu0
      %v5799 = vadd.f32 0.0, %v5798
      %v5800 = vpop.f32.mrb[0].mxu0
      %5801 = vmatprep.mubr.bf16.mxu0 0
      %5802 = vmatmul.mubr.bf16.gmra.mrb[0].mxu0 %v5653
      %v5803 = vpop.f32.mrb[0].mxu0
      %v5804 = vadd.f32 0.0, %v5803
      %v5805 = vpop.f32.mrb[0].mxu0
      %v5806 = vpop.f32.mrb[0].mxu0
      %v5807 = vadd.f32 0.0, %v5806
      %v5808 = vpop.f32.mrb[0].mxu0
      %5809 = vmatprep.mubr.bf16.mxu0 0
      %5810 = vmatmul.mubr.bf16.gmra.mrb[0].mxu0 %v5656
      %v5811 = vpop.f32.mrb[0].mxu0
      %v5812 = vadd.f32 0.0, %v5811
      %v5813 = vpop.f32.mrb[0].mxu0
      %v5814 = vpop.f32.mrb[0].mxu0
      %v5815 = vadd.f32 0.0, %v5814
      %v5816 = vpop.f32.mrb[0].mxu0
      %5817 = vmatprep.mubr.bf16.mxu0 0
      %5818 = vmatmul.mubr.bf16.gmra.mrb[0].mxu0 %v5659
      %v5819 = vpop.f32.mrb[0].mxu0
      %v5820 = vadd.f32 0.0, %v5819
      %v5821 = vpop.f32.mrb[0].mxu0
      %v5822 = vpop.f32.mrb[0].mxu0
      %v5823 = vadd.f32 0.0, %v5822
      %v5824 = vpop.f32.mrb[0].mxu0
      %5825 = vmatprep.mubr.bf16.mxu0 0
      %5826 = vmatmul.mubr.bf16.gmra.mrb[0].mxu0 %v5662
      %v5827 = vpop.f32.mrb[0].mxu0
      %v5828 = vadd.f32 0.0, %v5827
      %v5829 = vpop.f32.mrb[0].mxu0
      %v5830 = vpop.f32.mrb[0].mxu0
      %v5831 = vadd.f32 0.0, %v5830
      %v5832 = vpop.f32.mrb[0].mxu0
      %5833 = vmatprep.mubr.bf16.mxu0 0
      %5834 = vmatmul.mubr.bf16.gmra.mrb[0].mxu0 %v5665
      %v5835 = vpop.f32.mrb[0].mxu0
      %v5836 = vadd.f32 0.0, %v5835
      %v5837 = vpop.f32.mrb[0].mxu0
      %v5838 = vpop.f32.mrb[0].mxu0
      %v5839 = vadd.f32 0.0, %v5838
      %v5840 = vpop.f32.mrb[0].mxu0
      %5841 = vmatprep.mubr.bf16.mxu0 0
      %5842 = vmatmul.mubr.bf16.gmra.mrb[0].mxu0 %v5668
      %v5843 = vpop.f32.mrb[0].mxu0
      %v5844 = vadd.f32 0.0, %v5843
      %v5845 = vpop.f32.mrb[0].mxu0
      %v5846 = vpop.f32.mrb[0].mxu0
      %v5847 = vadd.f32 0.0, %v5846
      %v5848 = vpop.f32.mrb[0].mxu0
      %5849 = vdwg.mxu0
      %v5850 = vadd.f32 %v5578, %v5708
      %v5851 = vadd.f32 %v5579, %v5711
      %v5852 = vadd.f32 %v5580, %v5716
      %v5853 = vadd.f32 %v5581, %v5719
      %v5854 = vadd.f32 %v5582, %v5724
      %v5855 = vadd.f32 %v5583, %v5727
      %v5856 = vadd.f32 %v5584, %v5732
      %v5857 = vadd.f32 %v5585, %v5735
      %v5858 = vadd.f32 %v5586, %v5740
      %v5859 = vadd.f32 %v5587, %v5743
      %v5860 = vadd.f32 %v5588, %v5748
      %v5861 = vadd.f32 %v5589, %v5751
      %v5862 = vadd.f32 %v5590, %v5756
      %v5863 = vadd.f32 %v5591, %v5759
      %v5864 = vadd.f32 %v5592, %v5764
      %v5865 = vadd.f32 %v5593, %v5767
      %v5866 = vadd.f32 %v5594, %v5772
      %v5867 = vadd.f32 %v5595, %v5775
      %v5868 = vadd.f32 %v5596, %v5780
      %v5869 = vadd.f32 %v5597, %v5783
      %v5870 = vadd.f32 %v5598, %v5788
      %v5871 = vadd.f32 %v5599, %v5791
      %v5872 = vadd.f32 %v5600, %v5796
      %v5873 = vadd.f32 %v5601, %v5799
      %v5874 = vadd.f32 %v5602, %v5804
      %v5875 = vadd.f32 %v5603, %v5807
      %v5876 = vadd.f32 %v5604, %v5812
      %v5877 = vadd.f32 %v5605, %v5815
      %v5878 = vadd.f32 %v5606, %v5820
      %v5879 = vadd.f32 %v5607, %v5823
      %v5880 = vadd.f32 %v5608, %v5828
      %v5881 = vadd.f32 %v5609, %v5831
      %v5882 = vadd.f32 %v5610, %v5836
      %v5883 = vadd.f32 %v5611, %v5839
      %v5884 = vadd.f32 %v5612, %v5844
      %v5885 = vadd.f32 %v5613, %v5847
      %5886 = vst.msk [vmem:[#allocation3] sm:$0xff] %vm226, %v5850
      %5887 = vst.msk [vmem:[#allocation3 + $0x8] sm:$0xff] %vm226, %v5851
      %5888 = vst.msk [vmem:[#allocation3 + $0x10] sm:$0xff] %vm226, %v5852
      %5889 = vst.msk [vmem:[#allocation3 + $0x18] sm:$0xff] %vm226, %v5853
      %5890 = vst.msk [vmem:[#allocation3 + $0x20] sm:$0xff] %vm226, %v5854
      %5891 = vst.msk [vmem:[#allocation3 + $0x28] sm:$0xff] %vm226, %v5855
      %5892 = vst.msk [vmem:[#allocation3 + $0x30] sm:$0xff] %vm226, %v5856
      %5893 = vst.msk [vmem:[#allocation3 + $0x38] sm:$0xff] %vm226, %v5857
      %5894 = vst.msk [vmem:[#allocation3 + $0x40] sm:$0xff] %vm226, %v5858
      %5895 = vst.msk [vmem:[#allocation3 + $0x48] sm:$0xff] %vm226, %v5859
      %5896 = vst.msk [vmem:[#allocation3 + $0x50] sm:$0xff] %vm226, %v5860
      %5897 = vst.msk [vmem:[#allocation3 + $0x58] sm:$0xff] %vm226, %v5861
      %5898 = vst.msk [vmem:[#allocation3 + $0x60] sm:$0xff] %vm226, %v5862
      %5899 = vst.msk [vmem:[#allocation3 + $0x68] sm:$0xff] %vm226, %v5863
      %5900 = vst.msk [vmem:[#allocation3 + $0x70] sm:$0xff] %vm226, %v5864
      %5901 = vst.msk [vmem:[#allocation3 + $0x78] sm:$0xff] %vm226, %v5865
      %5902 = vst.msk [vmem:[#allocation3 + $0x80] sm:$0xff] %vm226, %v5866
      %5903 = vst.msk [vmem:[#allocation3 + $0x88] sm:$0xff] %vm226, %v5867
      %5904 = vst.msk [vmem:[#allocation3 + $0x90] sm:$0xff] %vm226, %v5868
      %5905 = vst.msk [vmem:[#allocation3 + $0x98] sm:$0xff] %vm226, %v5869
      %5906 = vst.msk [vmem:[#allocation3 + $0xa0] sm:$0xff] %vm226, %v5870
      %5907 = vst.msk [vmem:[#allocation3 + $0xa8] sm:$0xff] %vm226, %v5871
      %5908 = vst.msk [vmem:[#allocation3 + $0xb0] sm:$0xff] %vm226, %v5872
      %5909 = vst.msk [vmem:[#allocation3 + $0xb8] sm:$0xff] %vm226, %v5873
      %5910 = vst.msk [vmem:[#allocation3 + $0xc0] sm:$0xff] %vm226, %v5874
      %5911 = vst.msk [vmem:[#allocation3 + $0xc8] sm:$0xff] %vm226, %v5875
      %5912 = vst.msk [vmem:[#allocation3 + $0xd0] sm:$0xff] %vm226, %v5876
      %5913 = vst.msk [vmem:[#allocation3 + $0xd8] sm:$0xff] %vm226, %v5877
      %5914 = vst.msk [vmem:[#allocation3 + $0xe0] sm:$0xff] %vm226, %v5878
      %5915 = vst.msk [vmem:[#allocation3 + $0xe8] sm:$0xff] %vm226, %v5879
      %5916 = vst.msk [vmem:[#allocation3 + $0xf0] sm:$0xff] %vm226, %v5880
      %5917 = vst.msk [vmem:[#allocation3 + $0xf8] sm:$0xff] %vm226, %v5881
      %5918 = vst.msk [vmem:[#allocation3 + $0x100] sm:$0xff] %vm226, %v5882
      %5919 = vst.msk [vmem:[#allocation3 + $0x108] sm:$0xff] %vm226, %v5883
      %5920 = vst.msk [vmem:[#allocation3 + $0x110] sm:$0xff] %vm226, %v5884
      %5921 = vst.msk [vmem:[#allocation3 + $0x118] sm:$0x3f] %vm269, %v5885
      %v5922 = vld [vmem:[#allocation2 + $0x13] sm:$0xff]
      %v5923 = vld [vmem:[#allocation2 + $0x1b] sm:$0xff]
      %v5924 = vld [vmem:[#allocation2 + $0x23] sm:$0xff]
      %v5925 = vld [vmem:[#allocation2 + $0x2b] sm:$0xff]
      %v5926 = vld [vmem:[#allocation2 + $0x33] sm:$0xff]
      %v5927 = vld [vmem:[#allocation2 + $0x3b] sm:$0xff]
      %v5928 = vld [vmem:[#allocation2 + $0x43] sm:$0xff]
      %v5929 = vld [vmem:[#allocation2 + $0x4b] sm:$0xff]
      %v5930 = vld [vmem:[#allocation2 + $0x53] sm:$0xff]
      %v5931 = vld [vmem:[#allocation2 + $0x5b] sm:$0xff]
      %v5932 = vld [vmem:[#allocation2 + $0x63] sm:$0xff]
      %v5933 = vld [vmem:[#allocation2 + $0x6b] sm:$0xff]
      %v5934 = vld [vmem:[#allocation2 + $0x73] sm:$0xff]
      %v5935 = vld [vmem:[#allocation2 + $0x7b] sm:$0xff]
      %v5936 = vld [vmem:[#allocation2 + $0x83] sm:$0xff]
      %v5937 = vld [vmem:[#allocation2 + $0x8b] sm:$0xff]
      %v5938 = vld [vmem:[#allocation2 + $0x93] sm:$0xff]
      %v5939 = vld [vmem:[#allocation2 + $0x9b] sm:$0xff]
      %v5940 = vld [vmem:[#allocation2 + $0xa3] sm:$0xff]
      %v5941 = vld [vmem:[#allocation2 + $0xab] sm:$0xff]
      %v5942 = vld [vmem:[#allocation2 + $0xb3] sm:$0xff]
      %v5943 = vld [vmem:[#allocation2 + $0xbb] sm:$0xff]
      %v5944 = vld [vmem:[#allocation2 + $0xc3] sm:$0xff]
      %v5945 = vld [vmem:[#allocation2 + $0xcb] sm:$0xff]
      %v5946 = vld [vmem:[#allocation2 + $0xd3] sm:$0xff]
      %v5947 = vld [vmem:[#allocation2 + $0xdb] sm:$0xff]
      %v5948 = vld [vmem:[#allocation2 + $0xe3] sm:$0xff]
      %v5949 = vld [vmem:[#allocation2 + $0xeb] sm:$0xff]
      %v5950 = vld [vmem:[#allocation2 + $0xf3] sm:$0xff]
      %v5951 = vld [vmem:[#allocation2 + $0xfb] sm:$0xff]
      %v5952 = vld [vmem:[#allocation2 + $0x103] sm:$0xff]
      %v5953 = vld [vmem:[#allocation2 + $0x10b] sm:$0xff]
      %v5954 = vld [vmem:[#allocation2 + $0x113] sm:$0xff]
      %v5955 = vld [vmem:[#allocation2 + $0x11b] sm:$0xff]
      %v5956 = vld [vmem:[#allocation2 + $0x123] sm:$0xff]
      %v5957 = vld [vmem:[#allocation2 + $0x12b] sm:$0x3f]
      %v5958 = vpack.c.bf16 %v5923, %v5922
      %v5959 = vpack.c.bf16 %v5925, %v5924
      %v5960 = vpack.c.bf16 %v5927, %v5926
      %v5961 = vpack.c.bf16 %v5929, %v5928
      %v5962 = vpack.c.bf16 %v5931, %v5930
      %v5963 = vpack.c.bf16 %v5933, %v5932
      %v5964 = vpack.c.bf16 %v5935, %v5934
      %v5965 = vpack.c.bf16 %v5937, %v5936
      %v5966 = vpack.c.bf16 %v5939, %v5938
      %v5967 = vpack.c.bf16 %v5941, %v5940
      %v5968 = vpack.c.bf16 %v5943, %v5942
      %v5969 = vpack.c.bf16 %v5945, %v5944
      %v5970 = vpack.c.bf16 %v5947, %v5946
      %v5971 = vpack.c.bf16 %v5949, %v5948
      %v5972 = vpack.c.bf16 %v5951, %v5950
      %v5973 = vpack.c.bf16 %v5953, %v5952
      %v5974 = vpack.c.bf16 %v5955, %v5954
      %v5975 = vpack.c.bf16 %v5957, %v5956
      %v5976 = vld [vmem:[#allocation3] sm:$0xff]
      %v5977 = vld [vmem:[#allocation3 + $0x8] sm:$0xff]
      %v5978 = vld [vmem:[#allocation3 + $0x10] sm:$0xff]
      %v5979 = vld [vmem:[#allocation3 + $0x18] sm:$0xff]
      %v5980 = vld [vmem:[#allocation3 + $0x20] sm:$0xff]
      %v5981 = vld [vmem:[#allocation3 + $0x28] sm:$0xff]
      %v5982 = vld [vmem:[#allocation3 + $0x30] sm:$0xff]
      %v5983 = vld [vmem:[#allocation3 + $0x38] sm:$0xff]
      %v5984 = vld [vmem:[#allocation3 + $0x40] sm:$0xff]
      %v5985 = vld [vmem:[#allocation3 + $0x48] sm:$0xff]
      %v5986 = vld [vmem:[#allocation3 + $0x50] sm:$0xff]
      %v5987 = vld [vmem:[#allocation3 + $0x58] sm:$0xff]
      %v5988 = vld [vmem:[#allocation3 + $0x60] sm:$0xff]
      %v5989 = vld [vmem:[#allocation3 + $0x68] sm:$0xff]
      %v5990 = vld [vmem:[#allocation3 + $0x70] sm:$0xff]
      %v5991 = vld [vmem:[#allocation3 + $0x78] sm:$0xff]
      %v5992 = vld [vmem:[#allocation3 + $0x80] sm:$0xff]
      %v5993 = vld [vmem:[#allocation3 + $0x88] sm:$0xff]
      %v5994 = vld [vmem:[#allocation3 + $0x90] sm:$0xff]
      %v5995 = vld [vmem:[#allocation3 + $0x98] sm:$0xff]
      %v5996 = vld [vmem:[#allocation3 + $0xa0] sm:$0xff]
      %v5997 = vld [vmem:[#allocation3 + $0xa8] sm:$0xff]
      %v5998 = vld [vmem:[#allocation3 + $0xb0] sm:$0xff]
      %v5999 = vld [vmem:[#allocation3 + $0xb8] sm:$0xff]
      %v6000 = vld [vmem:[#allocation3 + $0xc0] sm:$0xff]
      %v6001 = vld [vmem:[#allocation3 + $0xc8] sm:$0xff]
      %v6002 = vld [vmem:[#allocation3 + $0xd0] sm:$0xff]
      %v6003 = vld [vmem:[#allocation3 + $0xd8] sm:$0xff]
      %v6004 = vld [vmem:[#allocation3 + $0xe0] sm:$0xff]
      %v6005 = vld [vmem:[#allocation3 + $0xe8] sm:$0xff]
      %v6006 = vld [vmem:[#allocation3 + $0xf0] sm:$0xff]
      %v6007 = vld [vmem:[#allocation3 + $0xf8] sm:$0xff]
      %v6008 = vld [vmem:[#allocation3 + $0x100] sm:$0xff]
      %v6009 = vld [vmem:[#allocation3 + $0x108] sm:$0xff]
      %v6010 = vld [vmem:[#allocation3 + $0x110] sm:$0xff]
      %v6011 = vld [vmem:[#allocation3 + $0x118] sm:$0x3f]
      %s6012 = scalar_lea.vmem %s2, 8
      %v6013 = vld [vmem:[%s6012] sm:$0x3]
      %v6015 = vsel %vm226, %v5958, 0
      %v6018 = vsel %vm226, %v5959, 0
      %v6021 = vsel %vm226, %v5960, 0
      %v6024 = vsel %vm226, %v5961, 0
      %v6027 = vsel %vm226, %v5962, 0
      %v6030 = vsel %vm226, %v5963, 0
      %v6033 = vsel %vm226, %v5964, 0
      %v6036 = vsel %vm226, %v5965, 0
      %v6039 = vsel %vm226, %v5966, 0
      %v6042 = vsel %vm226, %v5967, 0
      %v6045 = vsel %vm226, %v5968, 0
      %v6048 = vsel %vm226, %v5969, 0
      %v6051 = vsel %vm226, %v5970, 0
      %v6054 = vsel %vm226, %v5971, 0
      %v6057 = vsel %vm226, %v5972, 0
      %v6060 = vsel %vm226, %v5973, 0
      %v6063 = vsel %vm226, %v5974, 0
      %v6066 = vsel %vm226, %v5975, 0
      %v6069 = vsel %vm416, %v6013, 0
      %6071 = vmatprep.subr.bf16.mxu0 0
      %6072 = vmatpush1.bf16.msra.mxu0 %v6069
      %6073 = vmatprep.subr.bf16.mxu0 0
      %6074 = vmatpush1.bf16.msra.mxu0 0
      %6075 = vmatprep.subr.bf16.mxu0 0
      %6076 = vmatpush1.bf16.msra.mxu0 0
      %6077 = vmatprep.subr.bf16.mxu0 0
      %6078 = vmatpush1.bf16.msra.mxu0 0
      %6079 = vmatprep.subr.bf16.mxu0 0
      %6080 = vmatpush1.bf16.msra.mxu0 0
      %6081 = vmatprep.subr.bf16.mxu0 0
      %6082 = vmatpush1.bf16.msra.mxu0 0
      %6083 = vmatprep.subr.bf16.mxu0 0
      %6084 = vmatpush1.bf16.msra.mxu0 0
      %6085 = vmatprep.subr.bf16.mxu0 0
      %6086 = vmatpush1.bf16.msra.mxu0 0
      %6087 = vmatprep.subr.bf16.mxu0 0
      %6088 = vmatpush1.bf16.msra.mxu0 0
      %6089 = vmatprep.subr.bf16.mxu0 0
      %6090 = vmatpush1.bf16.msra.mxu0 0
      %6091 = vmatprep.subr.bf16.mxu0 0
      %6092 = vmatpush1.bf16.msra.mxu0 0
      %6093 = vmatprep.subr.bf16.mxu0 0
      %6094 = vmatpush1.bf16.msra.mxu0 0
      %6095 = vmatprep.subr.bf16.mxu0 0
      %6096 = vmatpush1.bf16.msra.mxu0 0
      %6097 = vmatprep.subr.bf16.mxu0 0
      %6098 = vmatpush1.bf16.msra.mxu0 0
      %6099 = vmatprep.subr.bf16.mxu0 0
      %6100 = vmatpush1.bf16.msra.mxu0 0
      %6101 = vmatprep.subr.bf16.mxu0 0
      %6102 = vmatpush1.bf16.msra.mxu0 0
      %6103 = vmatprep.mubr.bf16.mxu0 0
      %6104 = vmatmul.mubr.bf16.gmra.mrb[0].mxu0 %v6015
      %v6105 = vpop.f32.mrb[0].mxu0
      %v6106 = vadd.f32 0.0, %v6105
      %v6107 = vpop.f32.mrb[0].mxu0
      %v6108 = vpop.f32.mrb[0].mxu0
      %v6109 = vadd.f32 0.0, %v6108
      %v6110 = vpop.f32.mrb[0].mxu0
      %6111 = vmatprep.mubr.bf16.mxu0 0
      %6112 = vmatmul.mubr.bf16.gmra.mrb[0].mxu0 %v6018
      %v6113 = vpop.f32.mrb[0].mxu0
      %v6114 = vadd.f32 0.0, %v6113
      %v6115 = vpop.f32.mrb[0].mxu0
      %v6116 = vpop.f32.mrb[0].mxu0
      %v6117 = vadd.f32 0.0, %v6116
      %v6118 = vpop.f32.mrb[0].mxu0
      %6119 = vmatprep.mubr.bf16.mxu0 0
      %6120 = vmatmul.mubr.bf16.gmra.mrb[0].mxu0 %v6021
      %v6121 = vpop.f32.mrb[0].mxu0
      %v6122 = vadd.f32 0.0, %v6121
      %v6123 = vpop.f32.mrb[0].mxu0
      %v6124 = vpop.f32.mrb[0].mxu0
      %v6125 = vadd.f32 0.0, %v6124
      %v6126 = vpop.f32.mrb[0].mxu0
      %6127 = vmatprep.mubr.bf16.mxu0 0
      %6128 = vmatmul.mubr.bf16.gmra.mrb[0].mxu0 %v6024
      %v6129 = vpop.f32.mrb[0].mxu0
      %v6130 = vadd.f32 0.0, %v6129
      %v6131 = vpop.f32.mrb[0].mxu0
      %v6132 = vpop.f32.mrb[0].mxu0
      %v6133 = vadd.f32 0.0, %v6132
      %v6134 = vpop.f32.mrb[0].mxu0
      %6135 = vmatprep.mubr.bf16.mxu0 0
      %6136 = vmatmul.mubr.bf16.gmra.mrb[0].mxu0 %v6027
      %v6137 = vpop.f32.mrb[0].mxu0
      %v6138 = vadd.f32 0.0, %v6137
      %v6139 = vpop.f32.mrb[0].mxu0
      %v6140 = vpop.f32.mrb[0].mxu0
      %v6141 = vadd.f32 0.0, %v6140
      %v6142 = vpop.f32.mrb[0].mxu0
      %6143 = vmatprep.mubr.bf16.mxu0 0
      %6144 = vmatmul.mubr.bf16.gmra.mrb[0].mxu0 %v6030
      %v6145 = vpop.f32.mrb[0].mxu0
      %v6146 = vadd.f32 0.0, %v6145
      %v6147 = vpop.f32.mrb[0].mxu0
      %v6148 = vpop.f32.mrb[0].mxu0
      %v6149 = vadd.f32 0.0, %v6148
      %v6150 = vpop.f32.mrb[0].mxu0
      %6151 = vmatprep.mubr.bf16.mxu0 0
      %6152 = vmatmul.mubr.bf16.gmra.mrb[0].mxu0 %v6033
      %v6153 = vpop.f32.mrb[0].mxu0
      %v6154 = vadd.f32 0.0, %v6153
      %v6155 = vpop.f32.mrb[0].mxu0
      %v6156 = vpop.f32.mrb[0].mxu0
      %v6157 = vadd.f32 0.0, %v6156
      %v6158 = vpop.f32.mrb[0].mxu0
      %6159 = vmatprep.mubr.bf16.mxu0 0
      %6160 = vmatmul.mubr.bf16.gmra.mrb[0].mxu0 %v6036
      %v6161 = vpop.f32.mrb[0].mxu0
      %v6162 = vadd.f32 0.0, %v6161
      %v6163 = vpop.f32.mrb[0].mxu0
      %v6164 = vpop.f32.mrb[0].mxu0
      %v6165 = vadd.f32 0.0, %v6164
      %v6166 = vpop.f32.mrb[0].mxu0
      %6167 = vmatprep.mubr.bf16.mxu0 0
      %6168 = vmatmul.mubr.bf16.gmra.mrb[0].mxu0 %v6039
      %v6169 = vpop.f32.mrb[0].mxu0
      %v6170 = vadd.f32 0.0, %v6169
      %v6171 = vpop.f32.mrb[0].mxu0
      %v6172 = vpop.f32.mrb[0].mxu0
      %v6173 = vadd.f32 0.0, %v6172
      %v6174 = vpop.f32.mrb[0].mxu0
      %6175 = vmatprep.mubr.bf16.mxu0 0
      %6176 = vmatmul.mubr.bf16.gmra.mrb[0].mxu0 %v6042
      %v6177 = vpop.f32.mrb[0].mxu0
      %v6178 = vadd.f32 0.0, %v6177
      %v6179 = vpop.f32.mrb[0].mxu0
      %v6180 = vpop.f32.mrb[0].mxu0
      %v6181 = vadd.f32 0.0, %v6180
      %v6182 = vpop.f32.mrb[0].mxu0
      %6183 = vmatprep.mubr.bf16.mxu0 0
      %6184 = vmatmul.mubr.bf16.gmra.mrb[0].mxu0 %v6045
      %v6185 = vpop.f32.mrb[0].mxu0
      %v6186 = vadd.f32 0.0, %v6185
      %v6187 = vpop.f32.mrb[0].mxu0
      %v6188 = vpop.f32.mrb[0].mxu0
      %v6189 = vadd.f32 0.0, %v6188
      %v6190 = vpop.f32.mrb[0].mxu0
      %6191 = vmatprep.mubr.bf16.mxu0 0
      %6192 = vmatmul.mubr.bf16.gmra.mrb[0].mxu0 %v6048
      %v6193 = vpop.f32.mrb[0].mxu0
      %v6194 = vadd.f32 0.0, %v6193
      %v6195 = vpop.f32.mrb[0].mxu0
      %v6196 = vpop.f32.mrb[0].mxu0
      %v6197 = vadd.f32 0.0, %v6196
      %v6198 = vpop.f32.mrb[0].mxu0
      %6199 = vmatprep.mubr.bf16.mxu0 0
      %6200 = vmatmul.mubr.bf16.gmra.mrb[0].mxu0 %v6051
      %v6201 = vpop.f32.mrb[0].mxu0
      %v6202 = vadd.f32 0.0, %v6201
      %v6203 = vpop.f32.mrb[0].mxu0
      %v6204 = vpop.f32.mrb[0].mxu0
      %v6205 = vadd.f32 0.0, %v6204
      %v6206 = vpop.f32.mrb[0].mxu0
      %6207 = vmatprep.mubr.bf16.mxu0 0
      %6208 = vmatmul.mubr.bf16.gmra.mrb[0].mxu0 %v6054
      %v6209 = vpop.f32.mrb[0].mxu0
      %v6210 = vadd.f32 0.0, %v6209
      %v6211 = vpop.f32.mrb[0].mxu0
      %v6212 = vpop.f32.mrb[0].mxu0
      %v6213 = vadd.f32 0.0, %v6212
      %v6214 = vpop.f32.mrb[0].mxu0
      %6215 = vmatprep.mubr.bf16.mxu0 0
      %6216 = vmatmul.mubr.bf16.gmra.mrb[0].mxu0 %v6057
      %v6217 = vpop.f32.mrb[0].mxu0
      %v6218 = vadd.f32 0.0, %v6217
      %v6219 = vpop.f32.mrb[0].mxu0
      %v6220 = vpop.f32.mrb[0].mxu0
      %v6221 = vadd.f32 0.0, %v6220
      %v6222 = vpop.f32.mrb[0].mxu0
      %6223 = vmatprep.mubr.bf16.mxu0 0
      %6224 = vmatmul.mubr.bf16.gmra.mrb[0].mxu0 %v6060
      %v6225 = vpop.f32.mrb[0].mxu0
      %v6226 = vadd.f32 0.0, %v6225
      %v6227 = vpop.f32.mrb[0].mxu0
      %v6228 = vpop.f32.mrb[0].mxu0
      %v6229 = vadd.f32 0.0, %v6228
      %v6230 = vpop.f32.mrb[0].mxu0
      %6231 = vmatprep.mubr.bf16.mxu0 0
      %6232 = vmatmul.mubr.bf16.gmra.mrb[0].mxu0 %v6063
      %v6233 = vpop.f32.mrb[0].mxu0
      %v6234 = vadd.f32 0.0, %v6233
      %v6235 = vpop.f32.mrb[0].mxu0
      %v6236 = vpop.f32.mrb[0].mxu0
      %v6237 = vadd.f32 0.0, %v6236
      %v6238 = vpop.f32.mrb[0].mxu0
      %6239 = vmatprep.mubr.bf16.mxu0 0
      %6240 = vmatmul.mubr.bf16.gmra.mrb[0].mxu0 %v6066
      %v6241 = vpop.f32.mrb[0].mxu0
      %v6242 = vadd.f32 0.0, %v6241
      %v6243 = vpop.f32.mrb[0].mxu0
      %v6244 = vpop.f32.mrb[0].mxu0
      %v6245 = vadd.f32 0.0, %v6244
      %v6246 = vpop.f32.mrb[0].mxu0
      %6247 = vdwg.mxu0
      %v6248 = vadd.f32 %v5976, %v6106
      %v6249 = vadd.f32 %v5977, %v6109
      %v6250 = vadd.f32 %v5978, %v6114
      %v6251 = vadd.f32 %v5979, %v6117
      %v6252 = vadd.f32 %v5980, %v6122
      %v6253 = vadd.f32 %v5981, %v6125
      %v6254 = vadd.f32 %v5982, %v6130
      %v6255 = vadd.f32 %v5983, %v6133
      %v6256 = vadd.f32 %v5984, %v6138
      %v6257 = vadd.f32 %v5985, %v6141
      %v6258 = vadd.f32 %v5986, %v6146
      %v6259 = vadd.f32 %v5987, %v6149
      %v6260 = vadd.f32 %v5988, %v6154
      %v6261 = vadd.f32 %v5989, %v6157
      %v6262 = vadd.f32 %v5990, %v6162
      %v6263 = vadd.f32 %v5991, %v6165
      %v6264 = vadd.f32 %v5992, %v6170
      %v6265 = vadd.f32 %v5993, %v6173
      %v6266 = vadd.f32 %v5994, %v6178
      %v6267 = vadd.f32 %v5995, %v6181
      %v6268 = vadd.f32 %v5996, %v6186
      %v6269 = vadd.f32 %v5997, %v6189
      %v6270 = vadd.f32 %v5998, %v6194
      %v6271 = vadd.f32 %v5999, %v6197
      %v6272 = vadd.f32 %v6000, %v6202
      %v6273 = vadd.f32 %v6001, %v6205
      %v6274 = vadd.f32 %v6002, %v6210
      %v6275 = vadd.f32 %v6003, %v6213
      %v6276 = vadd.f32 %v6004, %v6218
      %v6277 = vadd.f32 %v6005, %v6221
      %v6278 = vadd.f32 %v6006, %v6226
      %v6279 = vadd.f32 %v6007, %v6229
      %v6280 = vadd.f32 %v6008, %v6234
      %v6281 = vadd.f32 %v6009, %v6237
      %v6282 = vadd.f32 %v6010, %v6242
      %v6283 = vadd.f32 %v6011, %v6245
      %6284 = vst.msk [vmem:[#allocation3] sm:$0xff] %vm226, %v6248
      %6285 = vst.msk [vmem:[#allocation3 + $0x8] sm:$0xff] %vm226, %v6249
      %6286 = vst.msk [vmem:[#allocation3 + $0x10] sm:$0xff] %vm226, %v6250
      %6287 = vst.msk [vmem:[#allocation3 + $0x18] sm:$0xff] %vm226, %v6251
      %6288 = vst.msk [vmem:[#allocation3 + $0x20] sm:$0xff] %vm226, %v6252
      %6289 = vst.msk [vmem:[#allocation3 + $0x28] sm:$0xff] %vm226, %v6253
      %6290 = vst.msk [vmem:[#allocation3 + $0x30] sm:$0xff] %vm226, %v6254
      %6291 = vst.msk [vmem:[#allocation3 + $0x38] sm:$0xff] %vm226, %v6255
      %6292 = vst.msk [vmem:[#allocation3 + $0x40] sm:$0xff] %vm226, %v6256
      %6293 = vst.msk [vmem:[#allocation3 + $0x48] sm:$0xff] %vm226, %v6257
      %6294 = vst.msk [vmem:[#allocation3 + $0x50] sm:$0xff] %vm226, %v6258
      %6295 = vst.msk [vmem:[#allocation3 + $0x58] sm:$0xff] %vm226, %v6259
      %6296 = vst.msk [vmem:[#allocation3 + $0x60] sm:$0xff] %vm226, %v6260
      %6297 = vst.msk [vmem:[#allocation3 + $0x68] sm:$0xff] %vm226, %v6261
      %6298 = vst.msk [vmem:[#allocation3 + $0x70] sm:$0xff] %vm226, %v6262
      %6299 = vst.msk [vmem:[#allocation3 + $0x78] sm:$0xff] %vm226, %v6263
      %6300 = vst.msk [vmem:[#allocation3 + $0x80] sm:$0xff] %vm226, %v6264
      %6301 = vst.msk [vmem:[#allocation3 + $0x88] sm:$0xff] %vm226, %v6265
      %6302 = vst.msk [vmem:[#allocation3 + $0x90] sm:$0xff] %vm226, %v6266
      %6303 = vst.msk [vmem:[#allocation3 + $0x98] sm:$0xff] %vm226, %v6267
      %6304 = vst.msk [vmem:[#allocation3 + $0xa0] sm:$0xff] %vm226, %v6268
      %6305 = vst.msk [vmem:[#allocation3 + $0xa8] sm:$0xff] %vm226, %v6269
      %6306 = vst.msk [vmem:[#allocation3 + $0xb0] sm:$0xff] %vm226, %v6270
      %6307 = vst.msk [vmem:[#allocation3 + $0xb8] sm:$0xff] %vm226, %v6271
      %6308 = vst.msk [vmem:[#allocation3 + $0xc0] sm:$0xff] %vm226, %v6272
      %6309 = vst.msk [vmem:[#allocation3 + $0xc8] sm:$0xff] %vm226, %v6273
      %6310 = vst.msk [vmem:[#allocation3 + $0xd0] sm:$0xff] %vm226, %v6274
      %6311 = vst.msk [vmem:[#allocation3 + $0xd8] sm:$0xff] %vm226, %v6275
      %6312 = vst.msk [vmem:[#allocation3 + $0xe0] sm:$0xff] %vm226, %v6276
      %6313 = vst.msk [vmem:[#allocation3 + $0xe8] sm:$0xff] %vm226, %v6277
      %6314 = vst.msk [vmem:[#allocation3 + $0xf0] sm:$0xff] %vm226, %v6278
      %6315 = vst.msk [vmem:[#allocation3 + $0xf8] sm:$0xff] %vm226, %v6279
      %6316 = vst.msk [vmem:[#allocation3 + $0x100] sm:$0xff] %vm226, %v6280
      %6317 = vst.msk [vmem:[#allocation3 + $0x108] sm:$0xff] %vm226, %v6281
      %6318 = vst.msk [vmem:[#allocation3 + $0x110] sm:$0xff] %vm226, %v6282
      %6319 = vst.msk [vmem:[#allocation3 + $0x118] sm:$0x3f] %vm269, %v6283
      %v6320 = vld [vmem:[#allocation2 + $0x14] sm:$0xff]
      %v6321 = vld [vmem:[#allocation2 + $0x1c] sm:$0xff]
      %v6322 = vld [vmem:[#allocation2 + $0x24] sm:$0xff]
      %v6323 = vld [vmem:[#allocation2 + $0x2c] sm:$0xff]
      %v6324 = vld [vmem:[#allocation2 + $0x34] sm:$0xff]
      %v6325 = vld [vmem:[#allocation2 + $0x3c] sm:$0xff]
      %v6326 = vld [vmem:[#allocation2 + $0x44] sm:$0xff]
      %v6327 = vld [vmem:[#allocation2 + $0x4c] sm:$0xff]
      %v6328 = vld [vmem:[#allocation2 + $0x54] sm:$0xff]
      %v6329 = vld [vmem:[#allocation2 + $0x5c] sm:$0xff]
      %v6330 = vld [vmem:[#allocation2 + $0x64] sm:$0xff]
      %v6331 = vld [vmem:[#allocation2 + $0x6c] sm:$0xff]
      %v6332 = vld [vmem:[#allocation2 + $0x74] sm:$0xff]
      %v6333 = vld [vmem:[#allocation2 + $0x7c] sm:$0xff]
      %v6334 = vld [vmem:[#allocation2 + $0x84] sm:$0xff]
      %v6335 = vld [vmem:[#allocation2 + $0x8c] sm:$0xff]
      %v6336 = vld [vmem:[#allocation2 + $0x94] sm:$0xff]
      %v6337 = vld [vmem:[#allocation2 + $0x9c] sm:$0xff]
      %v6338 = vld [vmem:[#allocation2 + $0xa4] sm:$0xff]
      %v6339 = vld [vmem:[#allocation2 + $0xac] sm:$0xff]
      %v6340 = vld [vmem:[#allocation2 + $0xb4] sm:$0xff]
      %v6341 = vld [vmem:[#allocation2 + $0xbc] sm:$0xff]
      %v6342 = vld [vmem:[#allocation2 + $0xc4] sm:$0xff]
      %v6343 = vld [vmem:[#allocation2 + $0xcc] sm:$0xff]
      %v6344 = vld [vmem:[#allocation2 + $0xd4] sm:$0xff]
      %v6345 = vld [vmem:[#allocation2 + $0xdc] sm:$0xff]
      %v6346 = vld [vmem:[#allocation2 + $0xe4] sm:$0xff]
      %v6347 = vld [vmem:[#allocation2 + $0xec] sm:$0xff]
      %v6348 = vld [vmem:[#allocation2 + $0xf4] sm:$0xff]
      %v6349 = vld [vmem:[#allocation2 + $0xfc] sm:$0xff]
      %v6350 = vld [vmem:[#allocation2 + $0x104] sm:$0xff]
      %v6351 = vld [vmem:[#allocation2 + $0x10c] sm:$0xff]
      %v6352 = vld [vmem:[#allocation2 + $0x114] sm:$0xff]
      %v6353 = vld [vmem:[#allocation2 + $0x11c] sm:$0xff]
      %v6354 = vld [vmem:[#allocation2 + $0x124] sm:$0xff]
      %v6355 = vld [vmem:[#allocation2 + $0x12c] sm:$0x3f]
      %v6356 = vpack.c.bf16 %v6321, %v6320
      %v6357 = vpack.c.bf16 %v6323, %v6322
      %v6358 = vpack.c.bf16 %v6325, %v6324
      %v6359 = vpack.c.bf16 %v6327, %v6326
      %v6360 = vpack.c.bf16 %v6329, %v6328
      %v6361 = vpack.c.bf16 %v6331, %v6330
      %v6362 = vpack.c.bf16 %v6333, %v6332
      %v6363 = vpack.c.bf16 %v6335, %v6334
      %v6364 = vpack.c.bf16 %v6337, %v6336
      %v6365 = vpack.c.bf16 %v6339, %v6338
      %v6366 = vpack.c.bf16 %v6341, %v6340
      %v6367 = vpack.c.bf16 %v6343, %v6342
      %v6368 = vpack.c.bf16 %v6345, %v6344
      %v6369 = vpack.c.bf16 %v6347, %v6346
      %v6370 = vpack.c.bf16 %v6349, %v6348
      %v6371 = vpack.c.bf16 %v6351, %v6350
      %v6372 = vpack.c.bf16 %v6353, %v6352
      %v6373 = vpack.c.bf16 %v6355, %v6354
      %v6374 = vld [vmem:[#allocation3] sm:$0xff]
      %v6375 = vld [vmem:[#allocation3 + $0x8] sm:$0xff]
      %v6376 = vld [vmem:[#allocation3 + $0x10] sm:$0xff]
      %v6377 = vld [vmem:[#allocation3 + $0x18] sm:$0xff]
      %v6378 = vld [vmem:[#allocation3 + $0x20] sm:$0xff]
      %v6379 = vld [vmem:[#allocation3 + $0x28] sm:$0xff]
      %v6380 = vld [vmem:[#allocation3 + $0x30] sm:$0xff]
      %v6381 = vld [vmem:[#allocation3 + $0x38] sm:$0xff]
      %v6382 = vld [vmem:[#allocation3 + $0x40] sm:$0xff]
      %v6383 = vld [vmem:[#allocation3 + $0x48] sm:$0xff]
      %v6384 = vld [vmem:[#allocation3 + $0x50] sm:$0xff]
      %v6385 = vld [vmem:[#allocation3 + $0x58] sm:$0xff]
      %v6386 = vld [vmem:[#allocation3 + $0x60] sm:$0xff]
      %v6387 = vld [vmem:[#allocation3 + $0x68] sm:$0xff]
      %v6388 = vld [vmem:[#allocation3 + $0x70] sm:$0xff]
      %v6389 = vld [vmem:[#allocation3 + $0x78] sm:$0xff]
      %v6390 = vld [vmem:[#allocation3 + $0x80] sm:$0xff]
      %v6391 = vld [vmem:[#allocation3 + $0x88] sm:$0xff]
      %v6392 = vld [vmem:[#allocation3 + $0x90] sm:$0xff]
      %v6393 = vld [vmem:[#allocation3 + $0x98] sm:$0xff]
      %v6394 = vld [vmem:[#allocation3 + $0xa0] sm:$0xff]
      %v6395 = vld [vmem:[#allocation3 + $0xa8] sm:$0xff]
      %v6396 = vld [vmem:[#allocation3 + $0xb0] sm:$0xff]
      %v6397 = vld [vmem:[#allocation3 + $0xb8] sm:$0xff]
      %v6398 = vld [vmem:[#allocation3 + $0xc0] sm:$0xff]
      %v6399 = vld [vmem:[#allocation3 + $0xc8] sm:$0xff]
      %v6400 = vld [vmem:[#allocation3 + $0xd0] sm:$0xff]
      %v6401 = vld [vmem:[#allocation3 + $0xd8] sm:$0xff]
      %v6402 = vld [vmem:[#allocation3 + $0xe0] sm:$0xff]
      %v6403 = vld [vmem:[#allocation3 + $0xe8] sm:$0xff]
      %v6404 = vld [vmem:[#allocation3 + $0xf0] sm:$0xff]
      %v6405 = vld [vmem:[#allocation3 + $0xf8] sm:$0xff]
      %v6406 = vld [vmem:[#allocation3 + $0x100] sm:$0xff]
      %v6407 = vld [vmem:[#allocation3 + $0x108] sm:$0xff]
      %v6408 = vld [vmem:[#allocation3 + $0x110] sm:$0xff]
      %v6409 = vld [vmem:[#allocation3 + $0x118] sm:$0x3f]
      %s6410 = scalar_lea.vmem %s2, 10
      %v6411 = vld [vmem:[%s6410] sm:$0x3]
      %v6413 = vsel %vm226, %v6356, 0
      %v6416 = vsel %vm226, %v6357, 0
      %v6419 = vsel %vm226, %v6358, 0
      %v6422 = vsel %vm226, %v6359, 0
      %v6425 = vsel %vm226, %v6360, 0
      %v6428 = vsel %vm226, %v6361, 0
      %v6431 = vsel %vm226, %v6362, 0
      %v6434 = vsel %vm226, %v6363, 0
      %v6437 = vsel %vm226, %v6364, 0
      %v6440 = vsel %vm226, %v6365, 0
      %v6443 = vsel %vm226, %v6366, 0
      %v6446 = vsel %vm226, %v6367, 0
      %v6449 = vsel %vm226, %v6368, 0
      %v6452 = vsel %vm226, %v6369, 0
      %v6455 = vsel %vm226, %v6370, 0
      %v6458 = vsel %vm226, %v6371, 0
      %v6461 = vsel %vm226, %v6372, 0
      %v6464 = vsel %vm226, %v6373, 0
      %v6467 = vsel %vm416, %v6411, 0
      %6469 = vmatprep.subr.bf16.mxu0 0
      %6470 = vmatpush1.bf16.msra.mxu0 %v6467
      %6471 = vmatprep.subr.bf16.mxu0 0
      %6472 = vmatpush1.bf16.msra.mxu0 0
      %6473 = vmatprep.subr.bf16.mxu0 0
      %6474 = vmatpush1.bf16.msra.mxu0 0
      %6475 = vmatprep.subr.bf16.mxu0 0
      %6476 = vmatpush1.bf16.msra.mxu0 0
      %6477 = vmatprep.subr.bf16.mxu0 0
      %6478 = vmatpush1.bf16.msra.mxu0 0
      %6479 = vmatprep.subr.bf16.mxu0 0
      %6480 = vmatpush1.bf16.msra.mxu0 0
      %6481 = vmatprep.subr.bf16.mxu0 0
      %6482 = vmatpush1.bf16.msra.mxu0 0
      %6483 = vmatprep.subr.bf16.mxu0 0
      %6484 = vmatpush1.bf16.msra.mxu0 0
      %6485 = vmatprep.subr.bf16.mxu0 0
      %6486 = vmatpush1.bf16.msra.mxu0 0
      %6487 = vmatprep.subr.bf16.mxu0 0
      %6488 = vmatpush1.bf16.msra.mxu0 0
      %6489 = vmatprep.subr.bf16.mxu0 0
      %6490 = vmatpush1.bf16.msra.mxu0 0
      %6491 = vmatprep.subr.bf16.mxu0 0
      %6492 = vmatpush1.bf16.msra.mxu0 0
      %6493 = vmatprep.subr.bf16.mxu0 0
      %6494 = vmatpush1.bf16.msra.mxu0 0
      %6495 = vmatprep.subr.bf16.mxu0 0
      %6496 = vmatpush1.bf16.msra.mxu0 0
      %6497 = vmatprep.subr.bf16.mxu0 0
      %6498 = vmatpush1.bf16.msra.mxu0 0
      %6499 = vmatprep.subr.bf16.mxu0 0
      %6500 = vmatpush1.bf16.msra.mxu0 0
      %6501 = vmatprep.mubr.bf16.mxu0 0
      %6502 = vmatmul.mubr.bf16.gmra.mrb[0].mxu0 %v6413
      %v6503 = vpop.f32.mrb[0].mxu0
      %v6504 = vadd.f32 0.0, %v6503
      %v6505 = vpop.f32.mrb[0].mxu0
      %v6506 = vpop.f32.mrb[0].mxu0
      %v6507 = vadd.f32 0.0, %v6506
      %v6508 = vpop.f32.mrb[0].mxu0
      %6509 = vmatprep.mubr.bf16.mxu0 0
      %6510 = vmatmul.mubr.bf16.gmra.mrb[0].mxu0 %v6416
      %v6511 = vpop.f32.mrb[0].mxu0
      %v6512 = vadd.f32 0.0, %v6511
      %v6513 = vpop.f32.mrb[0].mxu0
      %v6514 = vpop.f32.mrb[0].mxu0
      %v6515 = vadd.f32 0.0, %v6514
      %v6516 = vpop.f32.mrb[0].mxu0
      %6517 = vmatprep.mubr.bf16.mxu0 0
      %6518 = vmatmul.mubr.bf16.gmra.mrb[0].mxu0 %v6419
      %v6519 = vpop.f32.mrb[0].mxu0
      %v6520 = vadd.f32 0.0, %v6519
      %v6521 = vpop.f32.mrb[0].mxu0
      %v6522 = vpop.f32.mrb[0].mxu0
      %v6523 = vadd.f32 0.0, %v6522
      %v6524 = vpop.f32.mrb[0].mxu0
      %6525 = vmatprep.mubr.bf16.mxu0 0
      %6526 = vmatmul.mubr.bf16.gmra.mrb[0].mxu0 %v6422
      %v6527 = vpop.f32.mrb[0].mxu0
      %v6528 = vadd.f32 0.0, %v6527
      %v6529 = vpop.f32.mrb[0].mxu0
      %v6530 = vpop.f32.mrb[0].mxu0
      %v6531 = vadd.f32 0.0, %v6530
      %v6532 = vpop.f32.mrb[0].mxu0
      %6533 = vmatprep.mubr.bf16.mxu0 0
      %6534 = vmatmul.mubr.bf16.gmra.mrb[0].mxu0 %v6425
      %v6535 = vpop.f32.mrb[0].mxu0
      %v6536 = vadd.f32 0.0, %v6535
      %v6537 = vpop.f32.mrb[0].mxu0
      %v6538 = vpop.f32.mrb[0].mxu0
      %v6539 = vadd.f32 0.0, %v6538
      %v6540 = vpop.f32.mrb[0].mxu0
      %6541 = vmatprep.mubr.bf16.mxu0 0
      %6542 = vmatmul.mubr.bf16.gmra.mrb[0].mxu0 %v6428
      %v6543 = vpop.f32.mrb[0].mxu0
      %v6544 = vadd.f32 0.0, %v6543
      %v6545 = vpop.f32.mrb[0].mxu0
      %v6546 = vpop.f32.mrb[0].mxu0
      %v6547 = vadd.f32 0.0, %v6546
      %v6548 = vpop.f32.mrb[0].mxu0
      %6549 = vmatprep.mubr.bf16.mxu0 0
      %6550 = vmatmul.mubr.bf16.gmra.mrb[0].mxu0 %v6431
      %v6551 = vpop.f32.mrb[0].mxu0
      %v6552 = vadd.f32 0.0, %v6551
      %v6553 = vpop.f32.mrb[0].mxu0
      %v6554 = vpop.f32.mrb[0].mxu0
      %v6555 = vadd.f32 0.0, %v6554
      %v6556 = vpop.f32.mrb[0].mxu0
      %6557 = vmatprep.mubr.bf16.mxu0 0
      %6558 = vmatmul.mubr.bf16.gmra.mrb[0].mxu0 %v6434
      %v6559 = vpop.f32.mrb[0].mxu0
      %v6560 = vadd.f32 0.0, %v6559
      %v6561 = vpop.f32.mrb[0].mxu0
      %v6562 = vpop.f32.mrb[0].mxu0
      %v6563 = vadd.f32 0.0, %v6562
      %v6564 = vpop.f32.mrb[0].mxu0
      %6565 = vmatprep.mubr.bf16.mxu0 0
      %6566 = vmatmul.mubr.bf16.gmra.mrb[0].mxu0 %v6437
      %v6567 = vpop.f32.mrb[0].mxu0
      %v6568 = vadd.f32 0.0, %v6567
      %v6569 = vpop.f32.mrb[0].mxu0
      %v6570 = vpop.f32.mrb[0].mxu0
      %v6571 = vadd.f32 0.0, %v6570
      %v6572 = vpop.f32.mrb[0].mxu0
      %6573 = vmatprep.mubr.bf16.mxu0 0
      %6574 = vmatmul.mubr.bf16.gmra.mrb[0].mxu0 %v6440
      %v6575 = vpop.f32.mrb[0].mxu0
      %v6576 = vadd.f32 0.0, %v6575
      %v6577 = vpop.f32.mrb[0].mxu0
      %v6578 = vpop.f32.mrb[0].mxu0
      %v6579 = vadd.f32 0.0, %v6578
      %v6580 = vpop.f32.mrb[0].mxu0
      %6581 = vmatprep.mubr.bf16.mxu0 0
      %6582 = vmatmul.mubr.bf16.gmra.mrb[0].mxu0 %v6443
      %v6583 = vpop.f32.mrb[0].mxu0
      %v6584 = vadd.f32 0.0, %v6583
      %v6585 = vpop.f32.mrb[0].mxu0
      %v6586 = vpop.f32.mrb[0].mxu0
      %v6587 = vadd.f32 0.0, %v6586
      %v6588 = vpop.f32.mrb[0].mxu0
      %6589 = vmatprep.mubr.bf16.mxu0 0
      %6590 = vmatmul.mubr.bf16.gmra.mrb[0].mxu0 %v6446
      %v6591 = vpop.f32.mrb[0].mxu0
      %v6592 = vadd.f32 0.0, %v6591
      %v6593 = vpop.f32.mrb[0].mxu0
      %v6594 = vpop.f32.mrb[0].mxu0
      %v6595 = vadd.f32 0.0, %v6594
      %v6596 = vpop.f32.mrb[0].mxu0
      %6597 = vmatprep.mubr.bf16.mxu0 0
      %6598 = vmatmul.mubr.bf16.gmra.mrb[0].mxu0 %v6449
      %v6599 = vpop.f32.mrb[0].mxu0
      %v6600 = vadd.f32 0.0, %v6599
      %v6601 = vpop.f32.mrb[0].mxu0
      %v6602 = vpop.f32.mrb[0].mxu0
      %v6603 = vadd.f32 0.0, %v6602
      %v6604 = vpop.f32.mrb[0].mxu0
      %6605 = vmatprep.mubr.bf16.mxu0 0
      %6606 = vmatmul.mubr.bf16.gmra.mrb[0].mxu0 %v6452
      %v6607 = vpop.f32.mrb[0].mxu0
      %v6608 = vadd.f32 0.0, %v6607
      %v6609 = vpop.f32.mrb[0].mxu0
      %v6610 = vpop.f32.mrb[0].mxu0
      %v6611 = vadd.f32 0.0, %v6610
      %v6612 = vpop.f32.mrb[0].mxu0
      %6613 = vmatprep.mubr.bf16.mxu0 0
      %6614 = vmatmul.mubr.bf16.gmra.mrb[0].mxu0 %v6455
      %v6615 = vpop.f32.mrb[0].mxu0
      %v6616 = vadd.f32 0.0, %v6615
      %v6617 = vpop.f32.mrb[0].mxu0
      %v6618 = vpop.f32.mrb[0].mxu0
      %v6619 = vadd.f32 0.0, %v6618
      %v6620 = vpop.f32.mrb[0].mxu0
      %6621 = vmatprep.mubr.bf16.mxu0 0
      %6622 = vmatmul.mubr.bf16.gmra.mrb[0].mxu0 %v6458
      %v6623 = vpop.f32.mrb[0].mxu0
      %v6624 = vadd.f32 0.0, %v6623
      %v6625 = vpop.f32.mrb[0].mxu0
      %v6626 = vpop.f32.mrb[0].mxu0
      %v6627 = vadd.f32 0.0, %v6626
      %v6628 = vpop.f32.mrb[0].mxu0
      %6629 = vmatprep.mubr.bf16.mxu0 0
      %6630 = vmatmul.mubr.bf16.gmra.mrb[0].mxu0 %v6461
      %v6631 = vpop.f32.mrb[0].mxu0
      %v6632 = vadd.f32 0.0, %v6631
      %v6633 = vpop.f32.mrb[0].mxu0
      %v6634 = vpop.f32.mrb[0].mxu0
      %v6635 = vadd.f32 0.0, %v6634
      %v6636 = vpop.f32.mrb[0].mxu0
      %6637 = vmatprep.mubr.bf16.mxu0 0
      %6638 = vmatmul.mubr.bf16.gmra.mrb[0].mxu0 %v6464
      %v6639 = vpop.f32.mrb[0].mxu0
      %v6640 = vadd.f32 0.0, %v6639
      %v6641 = vpop.f32.mrb[0].mxu0
      %v6642 = vpop.f32.mrb[0].mxu0
      %v6643 = vadd.f32 0.0, %v6642
      %v6644 = vpop.f32.mrb[0].mxu0
      %6645 = vdwg.mxu0
      %v6646 = vadd.f32 %v6374, %v6504
      %v6647 = vadd.f32 %v6375, %v6507
      %v6648 = vadd.f32 %v6376, %v6512
      %v6649 = vadd.f32 %v6377, %v6515
      %v6650 = vadd.f32 %v6378, %v6520
      %v6651 = vadd.f32 %v6379, %v6523
      %v6652 = vadd.f32 %v6380, %v6528
      %v6653 = vadd.f32 %v6381, %v6531
      %v6654 = vadd.f32 %v6382, %v6536
      %v6655 = vadd.f32 %v6383, %v6539
      %v6656 = vadd.f32 %v6384, %v6544
      %v6657 = vadd.f32 %v6385, %v6547
      %v6658 = vadd.f32 %v6386, %v6552
      %v6659 = vadd.f32 %v6387, %v6555
      %v6660 = vadd.f32 %v6388, %v6560
      %v6661 = vadd.f32 %v6389, %v6563
      %v6662 = vadd.f32 %v6390, %v6568
      %v6663 = vadd.f32 %v6391, %v6571
      %v6664 = vadd.f32 %v6392, %v6576
      %v6665 = vadd.f32 %v6393, %v6579
      %v6666 = vadd.f32 %v6394, %v6584
      %v6667 = vadd.f32 %v6395, %v6587
      %v6668 = vadd.f32 %v6396, %v6592
      %v6669 = vadd.f32 %v6397, %v6595
      %v6670 = vadd.f32 %v6398, %v6600
      %v6671 = vadd.f32 %v6399, %v6603
      %v6672 = vadd.f32 %v6400, %v6608
      %v6673 = vadd.f32 %v6401, %v6611
      %v6674 = vadd.f32 %v6402, %v6616
      %v6675 = vadd.f32 %v6403, %v6619
      %v6676 = vadd.f32 %v6404, %v6624
      %v6677 = vadd.f32 %v6405, %v6627
      %v6678 = vadd.f32 %v6406, %v6632
      %v6679 = vadd.f32 %v6407, %v6635
      %v6680 = vadd.f32 %v6408, %v6640
      %v6681 = vadd.f32 %v6409, %v6643
      %6682 = vst.msk [vmem:[#allocation3] sm:$0xff] %vm226, %v6646
      %6683 = vst.msk [vmem:[#allocation3 + $0x8] sm:$0xff] %vm226, %v6647
      %6684 = vst.msk [vmem:[#allocation3 + $0x10] sm:$0xff] %vm226, %v6648
      %6685 = vst.msk [vmem:[#allocation3 + $0x18] sm:$0xff] %vm226, %v6649
      %6686 = vst.msk [vmem:[#allocation3 + $0x20] sm:$0xff] %vm226, %v6650
      %6687 = vst.msk [vmem:[#allocation3 + $0x28] sm:$0xff] %vm226, %v6651
      %6688 = vst.msk [vmem:[#allocation3 + $0x30] sm:$0xff] %vm226, %v6652
      %6689 = vst.msk [vmem:[#allocation3 + $0x38] sm:$0xff] %vm226, %v6653
      %6690 = vst.msk [vmem:[#allocation3 + $0x40] sm:$0xff] %vm226, %v6654
      %6691 = vst.msk [vmem:[#allocation3 + $0x48] sm:$0xff] %vm226, %v6655
      %6692 = vst.msk [vmem:[#allocation3 + $0x50] sm:$0xff] %vm226, %v6656
      %6693 = vst.msk [vmem:[#allocation3 + $0x58] sm:$0xff] %vm226, %v6657
      %6694 = vst.msk [vmem:[#allocation3 + $0x60] sm:$0xff] %vm226, %v6658
      %6695 = vst.msk [vmem:[#allocation3 + $0x68] sm:$0xff] %vm226, %v6659
      %6696 = vst.msk [vmem:[#allocation3 + $0x70] sm:$0xff] %vm226, %v6660
      %6697 = vst.msk [vmem:[#allocation3 + $0x78] sm:$0xff] %vm226, %v6661
      %6698 = vst.msk [vmem:[#allocation3 + $0x80] sm:$0xff] %vm226, %v6662
      %6699 = vst.msk [vmem:[#allocation3 + $0x88] sm:$0xff] %vm226, %v6663
      %6700 = vst.msk [vmem:[#allocation3 + $0x90] sm:$0xff] %vm226, %v6664
      %6701 = vst.msk [vmem:[#allocation3 + $0x98] sm:$0xff] %vm226, %v6665
      %6702 = vst.msk [vmem:[#allocation3 + $0xa0] sm:$0xff] %vm226, %v6666
      %6703 = vst.msk [vmem:[#allocation3 + $0xa8] sm:$0xff] %vm226, %v6667
      %6704 = vst.msk [vmem:[#allocation3 + $0xb0] sm:$0xff] %vm226, %v6668
      %6705 = vst.msk [vmem:[#allocation3 + $0xb8] sm:$0xff] %vm226, %v6669
      %6706 = vst.msk [vmem:[#allocation3 + $0xc0] sm:$0xff] %vm226, %v6670
      %6707 = vst.msk [vmem:[#allocation3 + $0xc8] sm:$0xff] %vm226, %v6671
      %6708 = vst.msk [vmem:[#allocation3 + $0xd0] sm:$0xff] %vm226, %v6672
      %6709 = vst.msk [vmem:[#allocation3 + $0xd8] sm:$0xff] %vm226, %v6673
      %6710 = vst.msk [vmem:[#allocation3 + $0xe0] sm:$0xff] %vm226, %v6674
      %6711 = vst.msk [vmem:[#allocation3 + $0xe8] sm:$0xff] %vm226, %v6675
      %6712 = vst.msk [vmem:[#allocation3 + $0xf0] sm:$0xff] %vm226, %v6676
      %6713 = vst.msk [vmem:[#allocation3 + $0xf8] sm:$0xff] %vm226, %v6677
      %6714 = vst.msk [vmem:[#allocation3 + $0x100] sm:$0xff] %vm226, %v6678
      %6715 = vst.msk [vmem:[#allocation3 + $0x108] sm:$0xff] %vm226, %v6679
      %6716 = vst.msk [vmem:[#allocation3 + $0x110] sm:$0xff] %vm226, %v6680
      %6717 = vst.msk [vmem:[#allocation3 + $0x118] sm:$0x3f] %vm269, %v6681
      %v6718 = vld [vmem:[#allocation2 + $0x24] sm:$0xff]
      %v6719 = vld [vmem:[#allocation2 + $0x2c] sm:$0xff]
      %v6720 = vld [vmem:[#allocation2 + $0x34] sm:$0xff]
      %v6721 = vld [vmem:[#allocation2 + $0x3c] sm:$0xff]
      %v6722 = vld [vmem:[#allocation2 + $0x44] sm:$0xff]
      %v6723 = vld [vmem:[#allocation2 + $0x4c] sm:$0xff]
      %v6724 = vld [vmem:[#allocation2 + $0x54] sm:$0xff]
      %v6725 = vld [vmem:[#allocation2 + $0x5c] sm:$0xff]
      %v6726 = vld [vmem:[#allocation2 + $0x64] sm:$0xff]
      %v6727 = vld [vmem:[#allocation2 + $0x6c] sm:$0xff]
      %v6728 = vld [vmem:[#allocation2 + $0x74] sm:$0xff]
      %v6729 = vld [vmem:[#allocation2 + $0x7c] sm:$0xff]
      %v6730 = vld [vmem:[#allocation2 + $0x84] sm:$0xff]
      %v6731 = vld [vmem:[#allocation2 + $0x8c] sm:$0xff]
      %v6732 = vld [vmem:[#allocation2 + $0x94] sm:$0xff]
      %v6733 = vld [vmem:[#allocation2 + $0x9c] sm:$0xff]
      %v6734 = vld [vmem:[#allocation2 + $0xa4] sm:$0xff]
      %v6735 = vld [vmem:[#allocation2 + $0xac] sm:$0xff]
      %v6736 = vld [vmem:[#allocation2 + $0xb4] sm:$0xff]
      %v6737 = vld [vmem:[#allocation2 + $0xbc] sm:$0xff]
      %v6738 = vld [vmem:[#allocation2 + $0xc4] sm:$0xff]
      %v6739 = vld [vmem:[#allocation2 + $0xcc] sm:$0xff]
      %v6740 = vld [vmem:[#allocation2 + $0xd4] sm:$0xff]
      %v6741 = vld [vmem:[#allocation2 + $0xdc] sm:$0xff]
      %v6742 = vld [vmem:[#allocation2 + $0xe4] sm:$0xff]
      %v6743 = vld [vmem:[#allocation2 + $0xec] sm:$0xff]
      %v6744 = vld [vmem:[#allocation2 + $0xf4] sm:$0xff]
      %v6745 = vld [vmem:[#allocation2 + $0xfc] sm:$0xff]
      %v6746 = vld [vmem:[#allocation2 + $0x104] sm:$0xff]
      %v6747 = vld [vmem:[#allocation2 + $0x10c] sm:$0xff]
      %v6748 = vld [vmem:[#allocation2 + $0x114] sm:$0xff]
      %v6749 = vld [vmem:[#allocation2 + $0x11c] sm:$0xff]
      %v6750 = vld [vmem:[#allocation2 + $0x124] sm:$0xff]
      %v6751 = vld [vmem:[#allocation2 + $0x12c] sm:$0xff]
      %v6752 = vld [vmem:[#allocation2 + $0x134] sm:$0xff]
      %v6753 = vld [vmem:[#allocation2 + $0x13c] sm:$0x3f]
      %v6754 = vpack.c.bf16 %v6719, %v6718
      %v6755 = vpack.c.bf16 %v6721, %v6720
      %v6756 = vpack.c.bf16 %v6723, %v6722
      %v6757 = vpack.c.bf16 %v6725, %v6724
      %v6758 = vpack.c.bf16 %v6727, %v6726
      %v6759 = vpack.c.bf16 %v6729, %v6728
      %v6760 = vpack.c.bf16 %v6731, %v6730
      %v6761 = vpack.c.bf16 %v6733, %v6732
      %v6762 = vpack.c.bf16 %v6735, %v6734
      %v6763 = vpack.c.bf16 %v6737, %v6736
      %v6764 = vpack.c.bf16 %v6739, %v6738
      %v6765 = vpack.c.bf16 %v6741, %v6740
      %v6766 = vpack.c.bf16 %v6743, %v6742
      %v6767 = vpack.c.bf16 %v6745, %v6744
      %v6768 = vpack.c.bf16 %v6747, %v6746
      %v6769 = vpack.c.bf16 %v6749, %v6748
      %v6770 = vpack.c.bf16 %v6751, %v6750
      %v6771 = vpack.c.bf16 %v6753, %v6752
      %v6772 = vld [vmem:[#allocation3] sm:$0xff]
      %v6773 = vld [vmem:[#allocation3 + $0x8] sm:$0xff]
      %v6774 = vld [vmem:[#allocation3 + $0x10] sm:$0xff]
      %v6775 = vld [vmem:[#allocation3 + $0x18] sm:$0xff]
      %v6776 = vld [vmem:[#allocation3 + $0x20] sm:$0xff]
      %v6777 = vld [vmem:[#allocation3 + $0x28] sm:$0xff]
      %v6778 = vld [vmem:[#allocation3 + $0x30] sm:$0xff]
      %v6779 = vld [vmem:[#allocation3 + $0x38] sm:$0xff]
      %v6780 = vld [vmem:[#allocation3 + $0x40] sm:$0xff]
      %v6781 = vld [vmem:[#allocation3 + $0x48] sm:$0xff]
      %v6782 = vld [vmem:[#allocation3 + $0x50] sm:$0xff]
      %v6783 = vld [vmem:[#allocation3 + $0x58] sm:$0xff]
      %v6784 = vld [vmem:[#allocation3 + $0x60] sm:$0xff]
      %v6785 = vld [vmem:[#allocation3 + $0x68] sm:$0xff]
      %v6786 = vld [vmem:[#allocation3 + $0x70] sm:$0xff]
      %v6787 = vld [vmem:[#allocation3 + $0x78] sm:$0xff]
      %v6788 = vld [vmem:[#allocation3 + $0x80] sm:$0xff]
      %v6789 = vld [vmem:[#allocation3 + $0x88] sm:$0xff]
      %v6790 = vld [vmem:[#allocation3 + $0x90] sm:$0xff]
      %v6791 = vld [vmem:[#allocation3 + $0x98] sm:$0xff]
      %v6792 = vld [vmem:[#allocation3 + $0xa0] sm:$0xff]
      %v6793 = vld [vmem:[#allocation3 + $0xa8] sm:$0xff]
      %v6794 = vld [vmem:[#allocation3 + $0xb0] sm:$0xff]
      %v6795 = vld [vmem:[#allocation3 + $0xb8] sm:$0xff]
      %v6796 = vld [vmem:[#allocation3 + $0xc0] sm:$0xff]
      %v6797 = vld [vmem:[#allocation3 + $0xc8] sm:$0xff]
      %v6798 = vld [vmem:[#allocation3 + $0xd0] sm:$0xff]
      %v6799 = vld [vmem:[#allocation3 + $0xd8] sm:$0xff]
      %v6800 = vld [vmem:[#allocation3 + $0xe0] sm:$0xff]
      %v6801 = vld [vmem:[#allocation3 + $0xe8] sm:$0xff]
      %v6802 = vld [vmem:[#allocation3 + $0xf0] sm:$0xff]
      %v6803 = vld [vmem:[#allocation3 + $0xf8] sm:$0xff]
      %v6804 = vld [vmem:[#allocation3 + $0x100] sm:$0xff]
      %v6805 = vld [vmem:[#allocation3 + $0x108] sm:$0xff]
      %v6806 = vld [vmem:[#allocation3 + $0x110] sm:$0xff]
      %v6807 = vld [vmem:[#allocation3 + $0x118] sm:$0x3f]
      %s6808 = scalar_lea.vmem %s2, 12
      %v6809 = vld [vmem:[%s6808] sm:$0x3]
      %v6811 = vsel %vm226, %v6754, 0
      %v6814 = vsel %vm226, %v6755, 0
      %v6817 = vsel %vm226, %v6756, 0
      %v6820 = vsel %vm226, %v6757, 0
      %v6823 = vsel %vm226, %v6758, 0
      %v6826 = vsel %vm226, %v6759, 0
      %v6829 = vsel %vm226, %v6760, 0
      %v6832 = vsel %vm226, %v6761, 0
      %v6835 = vsel %vm226, %v6762, 0
      %v6838 = vsel %vm226, %v6763, 0
      %v6841 = vsel %vm226, %v6764, 0
      %v6844 = vsel %vm226, %v6765, 0
      %v6847 = vsel %vm226, %v6766, 0
      %v6850 = vsel %vm226, %v6767, 0
      %v6853 = vsel %vm226, %v6768, 0
      %v6856 = vsel %vm226, %v6769, 0
      %v6859 = vsel %vm226, %v6770, 0
      %v6862 = vsel %vm226, %v6771, 0
      %v6865 = vsel %vm416, %v6809, 0
      %6867 = vmatprep.subr.bf16.mxu0 0
      %6868 = vmatpush1.bf16.msra.mxu0 %v6865
      %6869 = vmatprep.subr.bf16.mxu0 0
      %6870 = vmatpush1.bf16.msra.mxu0 0
      %6871 = vmatprep.subr.bf16.mxu0 0
      %6872 = vmatpush1.bf16.msra.mxu0 0
      %6873 = vmatprep.subr.bf16.mxu0 0
      %6874 = vmatpush1.bf16.msra.mxu0 0
      %6875 = vmatprep.subr.bf16.mxu0 0
      %6876 = vmatpush1.bf16.msra.mxu0 0
      %6877 = vmatprep.subr.bf16.mxu0 0
      %6878 = vmatpush1.bf16.msra.mxu0 0
      %6879 = vmatprep.subr.bf16.mxu0 0
      %6880 = vmatpush1.bf16.msra.mxu0 0
      %6881 = vmatprep.subr.bf16.mxu0 0
      %6882 = vmatpush1.bf16.msra.mxu0 0
      %6883 = vmatprep.subr.bf16.mxu0 0
      %6884 = vmatpush1.bf16.msra.mxu0 0
      %6885 = vmatprep.subr.bf16.mxu0 0
      %6886 = vmatpush1.bf16.msra.mxu0 0
      %6887 = vmatprep.subr.bf16.mxu0 0
      %6888 = vmatpush1.bf16.msra.mxu0 0
      %6889 = vmatprep.subr.bf16.mxu0 0
      %6890 = vmatpush1.bf16.msra.mxu0 0
      %6891 = vmatprep.subr.bf16.mxu0 0
      %6892 = vmatpush1.bf16.msra.mxu0 0
      %6893 = vmatprep.subr.bf16.mxu0 0
      %6894 = vmatpush1.bf16.msra.mxu0 0
      %6895 = vmatprep.subr.bf16.mxu0 0
      %6896 = vmatpush1.bf16.msra.mxu0 0
      %6897 = vmatprep.subr.bf16.mxu0 0
      %6898 = vmatpush1.bf16.msra.mxu0 0
      %6899 = vmatprep.mubr.bf16.mxu0 0
      %6900 = vmatmul.mubr.bf16.gmra.mrb[0].mxu0 %v6811
      %v6901 = vpop.f32.mrb[0].mxu0
      %v6902 = vadd.f32 0.0, %v6901
      %v6903 = vpop.f32.mrb[0].mxu0
      %v6904 = vpop.f32.mrb[0].mxu0
      %v6905 = vadd.f32 0.0, %v6904
      %v6906 = vpop.f32.mrb[0].mxu0
      %6907 = vmatprep.mubr.bf16.mxu0 0
      %6908 = vmatmul.mubr.bf16.gmra.mrb[0].mxu0 %v6814
      %v6909 = vpop.f32.mrb[0].mxu0
      %v6910 = vadd.f32 0.0, %v6909
      %v6911 = vpop.f32.mrb[0].mxu0
      %v6912 = vpop.f32.mrb[0].mxu0
      %v6913 = vadd.f32 0.0, %v6912
      %v6914 = vpop.f32.mrb[0].mxu0
      %6915 = vmatprep.mubr.bf16.mxu0 0
      %6916 = vmatmul.mubr.bf16.gmra.mrb[0].mxu0 %v6817
      %v6917 = vpop.f32.mrb[0].mxu0
      %v6918 = vadd.f32 0.0, %v6917
      %v6919 = vpop.f32.mrb[0].mxu0
      %v6920 = vpop.f32.mrb[0].mxu0
      %v6921 = vadd.f32 0.0, %v6920
      %v6922 = vpop.f32.mrb[0].mxu0
      %6923 = vmatprep.mubr.bf16.mxu0 0
      %6924 = vmatmul.mubr.bf16.gmra.mrb[0].mxu0 %v6820
      %v6925 = vpop.f32.mrb[0].mxu0
      %v6926 = vadd.f32 0.0, %v6925
      %v6927 = vpop.f32.mrb[0].mxu0
      %v6928 = vpop.f32.mrb[0].mxu0
      %v6929 = vadd.f32 0.0, %v6928
      %v6930 = vpop.f32.mrb[0].mxu0
      %6931 = vmatprep.mubr.bf16.mxu0 0
      %6932 = vmatmul.mubr.bf16.gmra.mrb[0].mxu0 %v6823
      %v6933 = vpop.f32.mrb[0].mxu0
      %v6934 = vadd.f32 0.0, %v6933
      %v6935 = vpop.f32.mrb[0].mxu0
      %v6936 = vpop.f32.mrb[0].mxu0
      %v6937 = vadd.f32 0.0, %v6936
      %v6938 = vpop.f32.mrb[0].mxu0
      %6939 = vmatprep.mubr.bf16.mxu0 0
      %6940 = vmatmul.mubr.bf16.gmra.mrb[0].mxu0 %v6826
      %v6941 = vpop.f32.mrb[0].mxu0
      %v6942 = vadd.f32 0.0, %v6941
      %v6943 = vpop.f32.mrb[0].mxu0
      %v6944 = vpop.f32.mrb[0].mxu0
      %v6945 = vadd.f32 0.0, %v6944
      %v6946 = vpop.f32.mrb[0].mxu0
      %6947 = vmatprep.mubr.bf16.mxu0 0
      %6948 = vmatmul.mubr.bf16.gmra.mrb[0].mxu0 %v6829
      %v6949 = vpop.f32.mrb[0].mxu0
      %v6950 = vadd.f32 0.0, %v6949
      %v6951 = vpop.f32.mrb[0].mxu0
      %v6952 = vpop.f32.mrb[0].mxu0
      %v6953 = vadd.f32 0.0, %v6952
      %v6954 = vpop.f32.mrb[0].mxu0
      %6955 = vmatprep.mubr.bf16.mxu0 0
      %6956 = vmatmul.mubr.bf16.gmra.mrb[0].mxu0 %v6832
      %v6957 = vpop.f32.mrb[0].mxu0
      %v6958 = vadd.f32 0.0, %v6957
      %v6959 = vpop.f32.mrb[0].mxu0
      %v6960 = vpop.f32.mrb[0].mxu0
      %v6961 = vadd.f32 0.0, %v6960
      %v6962 = vpop.f32.mrb[0].mxu0
      %6963 = vmatprep.mubr.bf16.mxu0 0
      %6964 = vmatmul.mubr.bf16.gmra.mrb[0].mxu0 %v6835
      %v6965 = vpop.f32.mrb[0].mxu0
      %v6966 = vadd.f32 0.0, %v6965
      %v6967 = vpop.f32.mrb[0].mxu0
      %v6968 = vpop.f32.mrb[0].mxu0
      %v6969 = vadd.f32 0.0, %v6968
      %v6970 = vpop.f32.mrb[0].mxu0
      %6971 = vmatprep.mubr.bf16.mxu0 0
      %6972 = vmatmul.mubr.bf16.gmra.mrb[0].mxu0 %v6838
      %v6973 = vpop.f32.mrb[0].mxu0
      %v6974 = vadd.f32 0.0, %v6973
      %v6975 = vpop.f32.mrb[0].mxu0
      %v6976 = vpop.f32.mrb[0].mxu0
      %v6977 = vadd.f32 0.0, %v6976
      %v6978 = vpop.f32.mrb[0].mxu0
      %6979 = vmatprep.mubr.bf16.mxu0 0
      %6980 = vmatmul.mubr.bf16.gmra.mrb[0].mxu0 %v6841
      %v6981 = vpop.f32.mrb[0].mxu0
      %v6982 = vadd.f32 0.0, %v6981
      %v6983 = vpop.f32.mrb[0].mxu0
      %v6984 = vpop.f32.mrb[0].mxu0
      %v6985 = vadd.f32 0.0, %v6984
      %v6986 = vpop.f32.mrb[0].mxu0
      %6987 = vmatprep.mubr.bf16.mxu0 0
      %6988 = vmatmul.mubr.bf16.gmra.mrb[0].mxu0 %v6844
      %v6989 = vpop.f32.mrb[0].mxu0
      %v6990 = vadd.f32 0.0, %v6989
      %v6991 = vpop.f32.mrb[0].mxu0
      %v6992 = vpop.f32.mrb[0].mxu0
      %v6993 = vadd.f32 0.0, %v6992
      %v6994 = vpop.f32.mrb[0].mxu0
      %6995 = vmatprep.mubr.bf16.mxu0 0
      %6996 = vmatmul.mubr.bf16.gmra.mrb[0].mxu0 %v6847
      %v6997 = vpop.f32.mrb[0].mxu0
      %v6998 = vadd.f32 0.0, %v6997
      %v6999 = vpop.f32.mrb[0].mxu0
      %v7000 = vpop.f32.mrb[0].mxu0
      %v7001 = vadd.f32 0.0, %v7000
      %v7002 = vpop.f32.mrb[0].mxu0
      %7003 = vmatprep.mubr.bf16.mxu0 0
      %7004 = vmatmul.mubr.bf16.gmra.mrb[0].mxu0 %v6850
      %v7005 = vpop.f32.mrb[0].mxu0
      %v7006 = vadd.f32 0.0, %v7005
      %v7007 = vpop.f32.mrb[0].mxu0
      %v7008 = vpop.f32.mrb[0].mxu0
      %v7009 = vadd.f32 0.0, %v7008
      %v7010 = vpop.f32.mrb[0].mxu0
      %7011 = vmatprep.mubr.bf16.mxu0 0
      %7012 = vmatmul.mubr.bf16.gmra.mrb[0].mxu0 %v6853
      %v7013 = vpop.f32.mrb[0].mxu0
      %v7014 = vadd.f32 0.0, %v7013
      %v7015 = vpop.f32.mrb[0].mxu0
      %v7016 = vpop.f32.mrb[0].mxu0
      %v7017 = vadd.f32 0.0, %v7016
      %v7018 = vpop.f32.mrb[0].mxu0
      %7019 = vmatprep.mubr.bf16.mxu0 0
      %7020 = vmatmul.mubr.bf16.gmra.mrb[0].mxu0 %v6856
      %v7021 = vpop.f32.mrb[0].mxu0
      %v7022 = vadd.f32 0.0, %v7021
      %v7023 = vpop.f32.mrb[0].mxu0
      %v7024 = vpop.f32.mrb[0].mxu0
      %v7025 = vadd.f32 0.0, %v7024
      %v7026 = vpop.f32.mrb[0].mxu0
      %7027 = vmatprep.mubr.bf16.mxu0 0
      %7028 = vmatmul.mubr.bf16.gmra.mrb[0].mxu0 %v6859
      %v7029 = vpop.f32.mrb[0].mxu0
      %v7030 = vadd.f32 0.0, %v7029
      %v7031 = vpop.f32.mrb[0].mxu0
      %v7032 = vpop.f32.mrb[0].mxu0
      %v7033 = vadd.f32 0.0, %v7032
      %v7034 = vpop.f32.mrb[0].mxu0
      %7035 = vmatprep.mubr.bf16.mxu0 0
      %7036 = vmatmul.mubr.bf16.gmra.mrb[0].mxu0 %v6862
      %v7037 = vpop.f32.mrb[0].mxu0
      %v7038 = vadd.f32 0.0, %v7037
      %v7039 = vpop.f32.mrb[0].mxu0
      %v7040 = vpop.f32.mrb[0].mxu0
      %v7041 = vadd.f32 0.0, %v7040
      %v7042 = vpop.f32.mrb[0].mxu0
      %7043 = vdwg.mxu0
      %v7044 = vadd.f32 %v6772, %v6902
      %v7045 = vadd.f32 %v6773, %v6905
      %v7046 = vadd.f32 %v6774, %v6910
      %v7047 = vadd.f32 %v6775, %v6913
      %v7048 = vadd.f32 %v6776, %v6918
      %v7049 = vadd.f32 %v6777, %v6921
      %v7050 = vadd.f32 %v6778, %v6926
      %v7051 = vadd.f32 %v6779, %v6929
      %v7052 = vadd.f32 %v6780, %v6934
      %v7053 = vadd.f32 %v6781, %v6937
      %v7054 = vadd.f32 %v6782, %v6942
      %v7055 = vadd.f32 %v6783, %v6945
      %v7056 = vadd.f32 %v6784, %v6950
      %v7057 = vadd.f32 %v6785, %v6953
      %v7058 = vadd.f32 %v6786, %v6958
      %v7059 = vadd.f32 %v6787, %v6961
      %v7060 = vadd.f32 %v6788, %v6966
      %v7061 = vadd.f32 %v6789, %v6969
      %v7062 = vadd.f32 %v6790, %v6974
      %v7063 = vadd.f32 %v6791, %v6977
      %v7064 = vadd.f32 %v6792, %v6982
      %v7065 = vadd.f32 %v6793, %v6985
      %v7066 = vadd.f32 %v6794, %v6990
      %v7067 = vadd.f32 %v6795, %v6993
      %v7068 = vadd.f32 %v6796, %v6998
      %v7069 = vadd.f32 %v6797, %v7001
      %v7070 = vadd.f32 %v6798, %v7006
      %v7071 = vadd.f32 %v6799, %v7009
      %v7072 = vadd.f32 %v6800, %v7014
      %v7073 = vadd.f32 %v6801, %v7017
      %v7074 = vadd.f32 %v6802, %v7022
      %v7075 = vadd.f32 %v6803, %v7025
      %v7076 = vadd.f32 %v6804, %v7030
      %v7077 = vadd.f32 %v6805, %v7033
      %v7078 = vadd.f32 %v6806, %v7038
      %v7079 = vadd.f32 %v6807, %v7041
      %7080 = vst.msk [vmem:[#allocation3] sm:$0xff] %vm226, %v7044
      %7081 = vst.msk [vmem:[#allocation3 + $0x8] sm:$0xff] %vm226, %v7045
      %7082 = vst.msk [vmem:[#allocation3 + $0x10] sm:$0xff] %vm226, %v7046
      %7083 = vst.msk [vmem:[#allocation3 + $0x18] sm:$0xff] %vm226, %v7047
      %7084 = vst.msk [vmem:[#allocation3 + $0x20] sm:$0xff] %vm226, %v7048
      %7085 = vst.msk [vmem:[#allocation3 + $0x28] sm:$0xff] %vm226, %v7049
      %7086 = vst.msk [vmem:[#allocation3 + $0x30] sm:$0xff] %vm226, %v7050
      %7087 = vst.msk [vmem:[#allocation3 + $0x38] sm:$0xff] %vm226, %v7051
      %7088 = vst.msk [vmem:[#allocation3 + $0x40] sm:$0xff] %vm226, %v7052
      %7089 = vst.msk [vmem:[#allocation3 + $0x48] sm:$0xff] %vm226, %v7053
      %7090 = vst.msk [vmem:[#allocation3 + $0x50] sm:$0xff] %vm226, %v7054
      %7091 = vst.msk [vmem:[#allocation3 + $0x58] sm:$0xff] %vm226, %v7055
      %7092 = vst.msk [vmem:[#allocation3 + $0x60] sm:$0xff] %vm226, %v7056
      %7093 = vst.msk [vmem:[#allocation3 + $0x68] sm:$0xff] %vm226, %v7057
      %7094 = vst.msk [vmem:[#allocation3 + $0x70] sm:$0xff] %vm226, %v7058
      %7095 = vst.msk [vmem:[#allocation3 + $0x78] sm:$0xff] %vm226, %v7059
      %7096 = vst.msk [vmem:[#allocation3 + $0x80] sm:$0xff] %vm226, %v7060
      %7097 = vst.msk [vmem:[#allocation3 + $0x88] sm:$0xff] %vm226, %v7061
      %7098 = vst.msk [vmem:[#allocation3 + $0x90] sm:$0xff] %vm226, %v7062
      %7099 = vst.msk [vmem:[#allocation3 + $0x98] sm:$0xff] %vm226, %v7063
      %7100 = vst.msk [vmem:[#allocation3 + $0xa0] sm:$0xff] %vm226, %v7064
      %7101 = vst.msk [vmem:[#allocation3 + $0xa8] sm:$0xff] %vm226, %v7065
      %7102 = vst.msk [vmem:[#allocation3 + $0xb0] sm:$0xff] %vm226, %v7066
      %7103 = vst.msk [vmem:[#allocation3 + $0xb8] sm:$0xff] %vm226, %v7067
      %7104 = vst.msk [vmem:[#allocation3 + $0xc0] sm:$0xff] %vm226, %v7068
      %7105 = vst.msk [vmem:[#allocation3 + $0xc8] sm:$0xff] %vm226, %v7069
      %7106 = vst.msk [vmem:[#allocation3 + $0xd0] sm:$0xff] %vm226, %v7070
      %7107 = vst.msk [vmem:[#allocation3 + $0xd8] sm:$0xff] %vm226, %v7071
      %7108 = vst.msk [vmem:[#allocation3 + $0xe0] sm:$0xff] %vm226, %v7072
      %7109 = vst.msk [vmem:[#allocation3 + $0xe8] sm:$0xff] %vm226, %v7073
      %7110 = vst.msk [vmem:[#allocation3 + $0xf0] sm:$0xff] %vm226, %v7074
      %7111 = vst.msk [vmem:[#allocation3 + $0xf8] sm:$0xff] %vm226, %v7075
      %7112 = vst.msk [vmem:[#allocation3 + $0x100] sm:$0xff] %vm226, %v7076
      %7113 = vst.msk [vmem:[#allocation3 + $0x108] sm:$0xff] %vm226, %v7077
      %7114 = vst.msk [vmem:[#allocation3 + $0x110] sm:$0xff] %vm226, %v7078
      %7115 = vst.msk [vmem:[#allocation3 + $0x118] sm:$0x3f] %vm269, %v7079
      %v7116 = vld [vmem:[#allocation2 + $0x25] sm:$0xff]
      %v7117 = vld [vmem:[#allocation2 + $0x2d] sm:$0xff]
      %v7118 = vld [vmem:[#allocation2 + $0x35] sm:$0xff]
      %v7119 = vld [vmem:[#allocation2 + $0x3d] sm:$0xff]
      %v7120 = vld [vmem:[#allocation2 + $0x45] sm:$0xff]
      %v7121 = vld [vmem:[#allocation2 + $0x4d] sm:$0xff]
      %v7122 = vld [vmem:[#allocation2 + $0x55] sm:$0xff]
      %v7123 = vld [vmem:[#allocation2 + $0x5d] sm:$0xff]
      %v7124 = vld [vmem:[#allocation2 + $0x65] sm:$0xff]
      %v7125 = vld [vmem:[#allocation2 + $0x6d] sm:$0xff]
      %v7126 = vld [vmem:[#allocation2 + $0x75] sm:$0xff]
      %v7127 = vld [vmem:[#allocation2 + $0x7d] sm:$0xff]
      %v7128 = vld [vmem:[#allocation2 + $0x85] sm:$0xff]
      %v7129 = vld [vmem:[#allocation2 + $0x8d] sm:$0xff]
      %v7130 = vld [vmem:[#allocation2 + $0x95] sm:$0xff]
      %v7131 = vld [vmem:[#allocation2 + $0x9d] sm:$0xff]
      %v7132 = vld [vmem:[#allocation2 + $0xa5] sm:$0xff]
      %v7133 = vld [vmem:[#allocation2 + $0xad] sm:$0xff]
      %v7134 = vld [vmem:[#allocation2 + $0xb5] sm:$0xff]
      %v7135 = vld [vmem:[#allocation2 + $0xbd] sm:$0xff]
      %v7136 = vld [vmem:[#allocation2 + $0xc5] sm:$0xff]
      %v7137 = vld [vmem:[#allocation2 + $0xcd] sm:$0xff]
      %v7138 = vld [vmem:[#allocation2 + $0xd5] sm:$0xff]
      %v7139 = vld [vmem:[#allocation2 + $0xdd] sm:$0xff]
      %v7140 = vld [vmem:[#allocation2 + $0xe5] sm:$0xff]
      %v7141 = vld [vmem:[#allocation2 + $0xed] sm:$0xff]
      %v7142 = vld [vmem:[#allocation2 + $0xf5] sm:$0xff]
      %v7143 = vld [vmem:[#allocation2 + $0xfd] sm:$0xff]
      %v7144 = vld [vmem:[#allocation2 + $0x105] sm:$0xff]
      %v7145 = vld [vmem:[#allocation2 + $0x10d] sm:$0xff]
      %v7146 = vld [vmem:[#allocation2 + $0x115] sm:$0xff]
      %v7147 = vld [vmem:[#allocation2 + $0x11d] sm:$0xff]
      %v7148 = vld [vmem:[#allocation2 + $0x125] sm:$0xff]
      %v7149 = vld [vmem:[#allocation2 + $0x12d] sm:$0xff]
      %v7150 = vld [vmem:[#allocation2 + $0x135] sm:$0xff]
      %v7151 = vld [vmem:[#allocation2 + $0x13d] sm:$0x3f]
      %v7152 = vpack.c.bf16 %v7117, %v7116
      %v7153 = vpack.c.bf16 %v7119, %v7118
      %v7154 = vpack.c.bf16 %v7121, %v7120
      %v7155 = vpack.c.bf16 %v7123, %v7122
      %v7156 = vpack.c.bf16 %v7125, %v7124
      %v7157 = vpack.c.bf16 %v7127, %v7126
      %v7158 = vpack.c.bf16 %v7129, %v7128
      %v7159 = vpack.c.bf16 %v7131, %v7130
      %v7160 = vpack.c.bf16 %v7133, %v7132
      %v7161 = vpack.c.bf16 %v7135, %v7134
      %v7162 = vpack.c.bf16 %v7137, %v7136
      %v7163 = vpack.c.bf16 %v7139, %v7138
      %v7164 = vpack.c.bf16 %v7141, %v7140
      %v7165 = vpack.c.bf16 %v7143, %v7142
      %v7166 = vpack.c.bf16 %v7145, %v7144
      %v7167 = vpack.c.bf16 %v7147, %v7146
      %v7168 = vpack.c.bf16 %v7149, %v7148
      %v7169 = vpack.c.bf16 %v7151, %v7150
      %v7170 = vld [vmem:[#allocation3] sm:$0xff]
      %v7171 = vld [vmem:[#allocation3 + $0x8] sm:$0xff]
      %v7172 = vld [vmem:[#allocation3 + $0x10] sm:$0xff]
      %v7173 = vld [vmem:[#allocation3 + $0x18] sm:$0xff]
      %v7174 = vld [vmem:[#allocation3 + $0x20] sm:$0xff]
      %v7175 = vld [vmem:[#allocation3 + $0x28] sm:$0xff]
      %v7176 = vld [vmem:[#allocation3 + $0x30] sm:$0xff]
      %v7177 = vld [vmem:[#allocation3 + $0x38] sm:$0xff]
      %v7178 = vld [vmem:[#allocation3 + $0x40] sm:$0xff]
      %v7179 = vld [vmem:[#allocation3 + $0x48] sm:$0xff]
      %v7180 = vld [vmem:[#allocation3 + $0x50] sm:$0xff]
      %v7181 = vld [vmem:[#allocation3 + $0x58] sm:$0xff]
      %v7182 = vld [vmem:[#allocation3 + $0x60] sm:$0xff]
      %v7183 = vld [vmem:[#allocation3 + $0x68] sm:$0xff]
      %v7184 = vld [vmem:[#allocation3 + $0x70] sm:$0xff]
      %v7185 = vld [vmem:[#allocation3 + $0x78] sm:$0xff]
      %v7186 = vld [vmem:[#allocation3 + $0x80] sm:$0xff]
      %v7187 = vld [vmem:[#allocation3 + $0x88] sm:$0xff]
      %v7188 = vld [vmem:[#allocation3 + $0x90] sm:$0xff]
      %v7189 = vld [vmem:[#allocation3 + $0x98] sm:$0xff]
      %v7190 = vld [vmem:[#allocation3 + $0xa0] sm:$0xff]
      %v7191 = vld [vmem:[#allocation3 + $0xa8] sm:$0xff]
      %v7192 = vld [vmem:[#allocation3 + $0xb0] sm:$0xff]
      %v7193 = vld [vmem:[#allocation3 + $0xb8] sm:$0xff]
      %v7194 = vld [vmem:[#allocation3 + $0xc0] sm:$0xff]
      %v7195 = vld [vmem:[#allocation3 + $0xc8] sm:$0xff]
      %v7196 = vld [vmem:[#allocation3 + $0xd0] sm:$0xff]
      %v7197 = vld [vmem:[#allocation3 + $0xd8] sm:$0xff]
      %v7198 = vld [vmem:[#allocation3 + $0xe0] sm:$0xff]
      %v7199 = vld [vmem:[#allocation3 + $0xe8] sm:$0xff]
      %v7200 = vld [vmem:[#allocation3 + $0xf0] sm:$0xff]
      %v7201 = vld [vmem:[#allocation3 + $0xf8] sm:$0xff]
      %v7202 = vld [vmem:[#allocation3 + $0x100] sm:$0xff]
      %v7203 = vld [vmem:[#allocation3 + $0x108] sm:$0xff]
      %v7204 = vld [vmem:[#allocation3 + $0x110] sm:$0xff]
      %v7205 = vld [vmem:[#allocation3 + $0x118] sm:$0x3f]
      %s7206 = scalar_lea.vmem %s2, 14
      %v7207 = vld [vmem:[%s7206] sm:$0x3]
      %v7209 = vsel %vm226, %v7152, 0
      %v7212 = vsel %vm226, %v7153, 0
      %v7215 = vsel %vm226, %v7154, 0
      %v7218 = vsel %vm226, %v7155, 0
      %v7221 = vsel %vm226, %v7156, 0
      %v7224 = vsel %vm226, %v7157, 0
      %v7227 = vsel %vm226, %v7158, 0
      %v7230 = vsel %vm226, %v7159, 0
      %v7233 = vsel %vm226, %v7160, 0
      %v7236 = vsel %vm226, %v7161, 0
      %v7239 = vsel %vm226, %v7162, 0
      %v7242 = vsel %vm226, %v7163, 0
      %v7245 = vsel %vm226, %v7164, 0
      %v7248 = vsel %vm226, %v7165, 0
      %v7251 = vsel %vm226, %v7166, 0
      %v7254 = vsel %vm226, %v7167, 0
      %v7257 = vsel %vm226, %v7168, 0
      %v7260 = vsel %vm226, %v7169, 0
      %v7263 = vsel %vm416, %v7207, 0
      %7265 = vmatprep.subr.bf16.mxu0 0
      %7266 = vmatpush1.bf16.msra.mxu0 %v7263
      %7267 = vmatprep.subr.bf16.mxu0 0
      %7268 = vmatpush1.bf16.msra.mxu0 0
      %7269 = vmatprep.subr.bf16.mxu0 0
      %7270 = vmatpush1.bf16.msra.mxu0 0
      %7271 = vmatprep.subr.bf16.mxu0 0
      %7272 = vmatpush1.bf16.msra.mxu0 0
      %7273 = vmatprep.subr.bf16.mxu0 0
      %7274 = vmatpush1.bf16.msra.mxu0 0
      %7275 = vmatprep.subr.bf16.mxu0 0
      %7276 = vmatpush1.bf16.msra.mxu0 0
      %7277 = vmatprep.subr.bf16.mxu0 0
      %7278 = vmatpush1.bf16.msra.mxu0 0
      %7279 = vmatprep.subr.bf16.mxu0 0
      %7280 = vmatpush1.bf16.msra.mxu0 0
      %7281 = vmatprep.subr.bf16.mxu0 0
      %7282 = vmatpush1.bf16.msra.mxu0 0
      %7283 = vmatprep.subr.bf16.mxu0 0
      %7284 = vmatpush1.bf16.msra.mxu0 0
      %7285 = vmatprep.subr.bf16.mxu0 0
      %7286 = vmatpush1.bf16.msra.mxu0 0
      %7287 = vmatprep.subr.bf16.mxu0 0
      %7288 = vmatpush1.bf16.msra.mxu0 0
      %7289 = vmatprep.subr.bf16.mxu0 0
      %7290 = vmatpush1.bf16.msra.mxu0 0
      %7291 = vmatprep.subr.bf16.mxu0 0
      %7292 = vmatpush1.bf16.msra.mxu0 0
      %7293 = vmatprep.subr.bf16.mxu0 0
      %7294 = vmatpush1.bf16.msra.mxu0 0
      %7295 = vmatprep.subr.bf16.mxu0 0
      %7296 = vmatpush1.bf16.msra.mxu0 0
      %7297 = vmatprep.mubr.bf16.mxu0 0
      %7298 = vmatmul.mubr.bf16.gmra.mrb[0].mxu0 %v7209
      %v7299 = vpop.f32.mrb[0].mxu0
      %v7300 = vadd.f32 0.0, %v7299
      %v7301 = vpop.f32.mrb[0].mxu0
      %v7302 = vpop.f32.mrb[0].mxu0
      %v7303 = vadd.f32 0.0, %v7302
      %v7304 = vpop.f32.mrb[0].mxu0
      %7305 = vmatprep.mubr.bf16.mxu0 0
      %7306 = vmatmul.mubr.bf16.gmra.mrb[0].mxu0 %v7212
      %v7307 = vpop.f32.mrb[0].mxu0
      %v7308 = vadd.f32 0.0, %v7307
      %v7309 = vpop.f32.mrb[0].mxu0
      %v7310 = vpop.f32.mrb[0].mxu0
      %v7311 = vadd.f32 0.0, %v7310
      %v7312 = vpop.f32.mrb[0].mxu0
      %7313 = vmatprep.mubr.bf16.mxu0 0
      %7314 = vmatmul.mubr.bf16.gmra.mrb[0].mxu0 %v7215
      %v7315 = vpop.f32.mrb[0].mxu0
      %v7316 = vadd.f32 0.0, %v7315
      %v7317 = vpop.f32.mrb[0].mxu0
      %v7318 = vpop.f32.mrb[0].mxu0
      %v7319 = vadd.f32 0.0, %v7318
      %v7320 = vpop.f32.mrb[0].mxu0
      %7321 = vmatprep.mubr.bf16.mxu0 0
      %7322 = vmatmul.mubr.bf16.gmra.mrb[0].mxu0 %v7218
      %v7323 = vpop.f32.mrb[0].mxu0
      %v7324 = vadd.f32 0.0, %v7323
      %v7325 = vpop.f32.mrb[0].mxu0
      %v7326 = vpop.f32.mrb[0].mxu0
      %v7327 = vadd.f32 0.0, %v7326
      %v7328 = vpop.f32.mrb[0].mxu0
      %7329 = vmatprep.mubr.bf16.mxu0 0
      %7330 = vmatmul.mubr.bf16.gmra.mrb[0].mxu0 %v7221
      %v7331 = vpop.f32.mrb[0].mxu0
      %v7332 = vadd.f32 0.0, %v7331
      %v7333 = vpop.f32.mrb[0].mxu0
      %v7334 = vpop.f32.mrb[0].mxu0
      %v7335 = vadd.f32 0.0, %v7334
      %v7336 = vpop.f32.mrb[0].mxu0
      %7337 = vmatprep.mubr.bf16.mxu0 0
      %7338 = vmatmul.mubr.bf16.gmra.mrb[0].mxu0 %v7224
      %v7339 = vpop.f32.mrb[0].mxu0
      %v7340 = vadd.f32 0.0, %v7339
      %v7341 = vpop.f32.mrb[0].mxu0
      %v7342 = vpop.f32.mrb[0].mxu0
      %v7343 = vadd.f32 0.0, %v7342
      %v7344 = vpop.f32.mrb[0].mxu0
      %7345 = vmatprep.mubr.bf16.mxu0 0
      %7346 = vmatmul.mubr.bf16.gmra.mrb[0].mxu0 %v7227
      %v7347 = vpop.f32.mrb[0].mxu0
      %v7348 = vadd.f32 0.0, %v7347
      %v7349 = vpop.f32.mrb[0].mxu0
      %v7350 = vpop.f32.mrb[0].mxu0
      %v7351 = vadd.f32 0.0, %v7350
      %v7352 = vpop.f32.mrb[0].mxu0
      %7353 = vmatprep.mubr.bf16.mxu0 0
      %7354 = vmatmul.mubr.bf16.gmra.mrb[0].mxu0 %v7230
      %v7355 = vpop.f32.mrb[0].mxu0
      %v7356 = vadd.f32 0.0, %v7355
      %v7357 = vpop.f32.mrb[0].mxu0
      %v7358 = vpop.f32.mrb[0].mxu0
      %v7359 = vadd.f32 0.0, %v7358
      %v7360 = vpop.f32.mrb[0].mxu0
      %7361 = vmatprep.mubr.bf16.mxu0 0
      %7362 = vmatmul.mubr.bf16.gmra.mrb[0].mxu0 %v7233
      %v7363 = vpop.f32.mrb[0].mxu0
      %v7364 = vadd.f32 0.0, %v7363
      %v7365 = vpop.f32.mrb[0].mxu0
      %v7366 = vpop.f32.mrb[0].mxu0
      %v7367 = vadd.f32 0.0, %v7366
      %v7368 = vpop.f32.mrb[0].mxu0
      %7369 = vmatprep.mubr.bf16.mxu0 0
      %7370 = vmatmul.mubr.bf16.gmra.mrb[0].mxu0 %v7236
      %v7371 = vpop.f32.mrb[0].mxu0
      %v7372 = vadd.f32 0.0, %v7371
      %v7373 = vpop.f32.mrb[0].mxu0
      %v7374 = vpop.f32.mrb[0].mxu0
      %v7375 = vadd.f32 0.0, %v7374
      %v7376 = vpop.f32.mrb[0].mxu0
      %7377 = vmatprep.mubr.bf16.mxu0 0
      %7378 = vmatmul.mubr.bf16.gmra.mrb[0].mxu0 %v7239
      %v7379 = vpop.f32.mrb[0].mxu0
      %v7380 = vadd.f32 0.0, %v7379
      %v7381 = vpop.f32.mrb[0].mxu0
      %v7382 = vpop.f32.mrb[0].mxu0
      %v7383 = vadd.f32 0.0, %v7382
      %v7384 = vpop.f32.mrb[0].mxu0
      %7385 = vmatprep.mubr.bf16.mxu0 0
      %7386 = vmatmul.mubr.bf16.gmra.mrb[0].mxu0 %v7242
      %v7387 = vpop.f32.mrb[0].mxu0
      %v7388 = vadd.f32 0.0, %v7387
      %v7389 = vpop.f32.mrb[0].mxu0
      %v7390 = vpop.f32.mrb[0].mxu0
      %v7391 = vadd.f32 0.0, %v7390
      %v7392 = vpop.f32.mrb[0].mxu0
      %7393 = vmatprep.mubr.bf16.mxu0 0
      %7394 = vmatmul.mubr.bf16.gmra.mrb[0].mxu0 %v7245
      %v7395 = vpop.f32.mrb[0].mxu0
      %v7396 = vadd.f32 0.0, %v7395
      %v7397 = vpop.f32.mrb[0].mxu0
      %v7398 = vpop.f32.mrb[0].mxu0
      %v7399 = vadd.f32 0.0, %v7398
      %v7400 = vpop.f32.mrb[0].mxu0
      %7401 = vmatprep.mubr.bf16.mxu0 0
      %7402 = vmatmul.mubr.bf16.gmra.mrb[0].mxu0 %v7248
      %v7403 = vpop.f32.mrb[0].mxu0
      %v7404 = vadd.f32 0.0, %v7403
      %v7405 = vpop.f32.mrb[0].mxu0
      %v7406 = vpop.f32.mrb[0].mxu0
      %v7407 = vadd.f32 0.0, %v7406
      %v7408 = vpop.f32.mrb[0].mxu0
      %7409 = vmatprep.mubr.bf16.mxu0 0
      %7410 = vmatmul.mubr.bf16.gmra.mrb[0].mxu0 %v7251
      %v7411 = vpop.f32.mrb[0].mxu0
      %v7412 = vadd.f32 0.0, %v7411
      %v7413 = vpop.f32.mrb[0].mxu0
      %v7414 = vpop.f32.mrb[0].mxu0
      %v7415 = vadd.f32 0.0, %v7414
      %v7416 = vpop.f32.mrb[0].mxu0
      %7417 = vmatprep.mubr.bf16.mxu0 0
      %7418 = vmatmul.mubr.bf16.gmra.mrb[0].mxu0 %v7254
      %v7419 = vpop.f32.mrb[0].mxu0
      %v7420 = vadd.f32 0.0, %v7419
      %v7421 = vpop.f32.mrb[0].mxu0
      %v7422 = vpop.f32.mrb[0].mxu0
      %v7423 = vadd.f32 0.0, %v7422
      %v7424 = vpop.f32.mrb[0].mxu0
      %7425 = vmatprep.mubr.bf16.mxu0 0
      %7426 = vmatmul.mubr.bf16.gmra.mrb[0].mxu0 %v7257
      %v7427 = vpop.f32.mrb[0].mxu0
      %v7428 = vadd.f32 0.0, %v7427
      %v7429 = vpop.f32.mrb[0].mxu0
      %v7430 = vpop.f32.mrb[0].mxu0
      %v7431 = vadd.f32 0.0, %v7430
      %v7432 = vpop.f32.mrb[0].mxu0
      %7433 = vmatprep.mubr.bf16.mxu0 0
      %7434 = vmatmul.mubr.bf16.gmra.mrb[0].mxu0 %v7260
      %v7435 = vpop.f32.mrb[0].mxu0
      %v7436 = vadd.f32 0.0, %v7435
      %v7437 = vpop.f32.mrb[0].mxu0
      %v7438 = vpop.f32.mrb[0].mxu0
      %v7439 = vadd.f32 0.0, %v7438
      %v7440 = vpop.f32.mrb[0].mxu0
      %7441 = vdwg.mxu0
      %v7442 = vadd.f32 %v7170, %v7300
      %v7443 = vadd.f32 %v7171, %v7303
      %v7444 = vadd.f32 %v7172, %v7308
      %v7445 = vadd.f32 %v7173, %v7311
      %v7446 = vadd.f32 %v7174, %v7316
      %v7447 = vadd.f32 %v7175, %v7319
      %v7448 = vadd.f32 %v7176, %v7324
      %v7449 = vadd.f32 %v7177, %v7327
      %v7450 = vadd.f32 %v7178, %v7332
      %v7451 = vadd.f32 %v7179, %v7335
      %v7452 = vadd.f32 %v7180, %v7340
      %v7453 = vadd.f32 %v7181, %v7343
      %v7454 = vadd.f32 %v7182, %v7348
      %v7455 = vadd.f32 %v7183, %v7351
      %v7456 = vadd.f32 %v7184, %v7356
      %v7457 = vadd.f32 %v7185, %v7359
      %v7458 = vadd.f32 %v7186, %v7364
      %v7459 = vadd.f32 %v7187, %v7367
      %v7460 = vadd.f32 %v7188, %v7372
      %v7461 = vadd.f32 %v7189, %v7375
      %v7462 = vadd.f32 %v7190, %v7380
      %v7463 = vadd.f32 %v7191, %v7383
      %v7464 = vadd.f32 %v7192, %v7388
      %v7465 = vadd.f32 %v7193, %v7391
      %v7466 = vadd.f32 %v7194, %v7396
      %v7467 = vadd.f32 %v7195, %v7399
      %v7468 = vadd.f32 %v7196, %v7404
      %v7469 = vadd.f32 %v7197, %v7407
      %v7470 = vadd.f32 %v7198, %v7412
      %v7471 = vadd.f32 %v7199, %v7415
      %v7472 = vadd.f32 %v7200, %v7420
      %v7473 = vadd.f32 %v7201, %v7423
      %v7474 = vadd.f32 %v7202, %v7428
      %v7475 = vadd.f32 %v7203, %v7431
      %v7476 = vadd.f32 %v7204, %v7436
      %v7477 = vadd.f32 %v7205, %v7439
      %7478 = vst.msk [vmem:[#allocation3] sm:$0xff] %vm226, %v7442
      %7479 = vst.msk [vmem:[#allocation3 + $0x8] sm:$0xff] %vm226, %v7443
      %7480 = vst.msk [vmem:[#allocation3 + $0x10] sm:$0xff] %vm226, %v7444
      %7481 = vst.msk [vmem:[#allocation3 + $0x18] sm:$0xff] %vm226, %v7445
      %7482 = vst.msk [vmem:[#allocation3 + $0x20] sm:$0xff] %vm226, %v7446
      %7483 = vst.msk [vmem:[#allocation3 + $0x28] sm:$0xff] %vm226, %v7447
      %7484 = vst.msk [vmem:[#allocation3 + $0x30] sm:$0xff] %vm226, %v7448
      %7485 = vst.msk [vmem:[#allocation3 + $0x38] sm:$0xff] %vm226, %v7449
      %7486 = vst.msk [vmem:[#allocation3 + $0x40] sm:$0xff] %vm226, %v7450
      %7487 = vst.msk [vmem:[#allocation3 + $0x48] sm:$0xff] %vm226, %v7451
      %7488 = vst.msk [vmem:[#allocation3 + $0x50] sm:$0xff] %vm226, %v7452
      %7489 = vst.msk [vmem:[#allocation3 + $0x58] sm:$0xff] %vm226, %v7453
      %7490 = vst.msk [vmem:[#allocation3 + $0x60] sm:$0xff] %vm226, %v7454
      %7491 = vst.msk [vmem:[#allocation3 + $0x68] sm:$0xff] %vm226, %v7455
      %7492 = vst.msk [vmem:[#allocation3 + $0x70] sm:$0xff] %vm226, %v7456
      %7493 = vst.msk [vmem:[#allocation3 + $0x78] sm:$0xff] %vm226, %v7457
      %7494 = vst.msk [vmem:[#allocation3 + $0x80] sm:$0xff] %vm226, %v7458
      %7495 = vst.msk [vmem:[#allocation3 + $0x88] sm:$0xff] %vm226, %v7459
      %7496 = vst.msk [vmem:[#allocation3 + $0x90] sm:$0xff] %vm226, %v7460
      %7497 = vst.msk [vmem:[#allocation3 + $0x98] sm:$0xff] %vm226, %v7461
      %7498 = vst.msk [vmem:[#allocation3 + $0xa0] sm:$0xff] %vm226, %v7462
      %7499 = vst.msk [vmem:[#allocation3 + $0xa8] sm:$0xff] %vm226, %v7463
      %7500 = vst.msk [vmem:[#allocation3 + $0xb0] sm:$0xff] %vm226, %v7464
      %7501 = vst.msk [vmem:[#allocation3 + $0xb8] sm:$0xff] %vm226, %v7465
      %7502 = vst.msk [vmem:[#allocation3 + $0xc0] sm:$0xff] %vm226, %v7466
      %7503 = vst.msk [vmem:[#allocation3 + $0xc8] sm:$0xff] %vm226, %v7467
      %7504 = vst.msk [vmem:[#allocation3 + $0xd0] sm:$0xff] %vm226, %v7468
      %7505 = vst.msk [vmem:[#allocation3 + $0xd8] sm:$0xff] %vm226, %v7469
      %7506 = vst.msk [vmem:[#allocation3 + $0xe0] sm:$0xff] %vm226, %v7470
      %7507 = vst.msk [vmem:[#allocation3 + $0xe8] sm:$0xff] %vm226, %v7471
      %7508 = vst.msk [vmem:[#allocation3 + $0xf0] sm:$0xff] %vm226, %v7472
      %7509 = vst.msk [vmem:[#allocation3 + $0xf8] sm:$0xff] %vm226, %v7473
      %7510 = vst.msk [vmem:[#allocation3 + $0x100] sm:$0xff] %vm226, %v7474
      %7511 = vst.msk [vmem:[#allocation3 + $0x108] sm:$0xff] %vm226, %v7475
      %7512 = vst.msk [vmem:[#allocation3 + $0x110] sm:$0xff] %vm226, %v7476
      %7513 = vst.msk [vmem:[#allocation3 + $0x118] sm:$0x3f] %vm269, %v7477
      %v7514 = vld [vmem:[#allocation2 + $0x26] sm:$0xff]
      %v7515 = vld [vmem:[#allocation2 + $0x2e] sm:$0xff]
      %v7516 = vld [vmem:[#allocation2 + $0x36] sm:$0xff]
      %v7517 = vld [vmem:[#allocation2 + $0x3e] sm:$0xff]
      %v7518 = vld [vmem:[#allocation2 + $0x46] sm:$0xff]
      %v7519 = vld [vmem:[#allocation2 + $0x4e] sm:$0xff]
      %v7520 = vld [vmem:[#allocation2 + $0x56] sm:$0xff]
      %v7521 = vld [vmem:[#allocation2 + $0x5e] sm:$0xff]
      %v7522 = vld [vmem:[#allocation2 + $0x66] sm:$0xff]
      %v7523 = vld [vmem:[#allocation2 + $0x6e] sm:$0xff]
      %v7524 = vld [vmem:[#allocation2 + $0x76] sm:$0xff]
      %v7525 = vld [vmem:[#allocation2 + $0x7e] sm:$0xff]
      %v7526 = vld [vmem:[#allocation2 + $0x86] sm:$0xff]
      %v7527 = vld [vmem:[#allocation2 + $0x8e] sm:$0xff]
      %v7528 = vld [vmem:[#allocation2 + $0x96] sm:$0xff]
      %v7529 = vld [vmem:[#allocation2 + $0x9e] sm:$0xff]
      %v7530 = vld [vmem:[#allocation2 + $0xa6] sm:$0xff]
      %v7531 = vld [vmem:[#allocation2 + $0xae] sm:$0xff]
      %v7532 = vld [vmem:[#allocation2 + $0xb6] sm:$0xff]
      %v7533 = vld [vmem:[#allocation2 + $0xbe] sm:$0xff]
      %v7534 = vld [vmem:[#allocation2 + $0xc6] sm:$0xff]
      %v7535 = vld [vmem:[#allocation2 + $0xce] sm:$0xff]
      %v7536 = vld [vmem:[#allocation2 + $0xd6] sm:$0xff]
      %v7537 = vld [vmem:[#allocation2 + $0xde] sm:$0xff]
      %v7538 = vld [vmem:[#allocation2 + $0xe6] sm:$0xff]
      %v7539 = vld [vmem:[#allocation2 + $0xee] sm:$0xff]
      %v7540 = vld [vmem:[#allocation2 + $0xf6] sm:$0xff]
      %v7541 = vld [vmem:[#allocation2 + $0xfe] sm:$0xff]
      %v7542 = vld [vmem:[#allocation2 + $0x106] sm:$0xff]
      %v7543 = vld [vmem:[#allocation2 + $0x10e] sm:$0xff]
      %v7544 = vld [vmem:[#allocation2 + $0x116] sm:$0xff]
      %v7545 = vld [vmem:[#allocation2 + $0x11e] sm:$0xff]
      %v7546 = vld [vmem:[#allocation2 + $0x126] sm:$0xff]
      %v7547 = vld [vmem:[#allocation2 + $0x12e] sm:$0xff]
      %v7548 = vld [vmem:[#allocation2 + $0x136] sm:$0xff]
      %v7549 = vld [vmem:[#allocation2 + $0x13e] sm:$0x3f]
      %v7550 = vpack.c.bf16 %v7515, %v7514
      %v7551 = vpack.c.bf16 %v7517, %v7516
      %v7552 = vpack.c.bf16 %v7519, %v7518
      %v7553 = vpack.c.bf16 %v7521, %v7520
      %v7554 = vpack.c.bf16 %v7523, %v7522
      %v7555 = vpack.c.bf16 %v7525, %v7524
      %v7556 = vpack.c.bf16 %v7527, %v7526
      %v7557 = vpack.c.bf16 %v7529, %v7528
      %v7558 = vpack.c.bf16 %v7531, %v7530
      %v7559 = vpack.c.bf16 %v7533, %v7532
      %v7560 = vpack.c.bf16 %v7535, %v7534
      %v7561 = vpack.c.bf16 %v7537, %v7536
      %v7562 = vpack.c.bf16 %v7539, %v7538
      %v7563 = vpack.c.bf16 %v7541, %v7540
      %v7564 = vpack.c.bf16 %v7543, %v7542
      %v7565 = vpack.c.bf16 %v7545, %v7544
      %v7566 = vpack.c.bf16 %v7547, %v7546
      %v7567 = vpack.c.bf16 %v7549, %v7548
      %v7568 = vld [vmem:[#allocation3] sm:$0xff]
      %v7569 = vld [vmem:[#allocation3 + $0x8] sm:$0xff]
      %v7570 = vld [vmem:[#allocation3 + $0x10] sm:$0xff]
      %v7571 = vld [vmem:[#allocation3 + $0x18] sm:$0xff]
      %v7572 = vld [vmem:[#allocation3 + $0x20] sm:$0xff]
      %v7573 = vld [vmem:[#allocation3 + $0x28] sm:$0xff]
      %v7574 = vld [vmem:[#allocation3 + $0x30] sm:$0xff]
      %v7575 = vld [vmem:[#allocation3 + $0x38] sm:$0xff]
      %v7576 = vld [vmem:[#allocation3 + $0x40] sm:$0xff]
      %v7577 = vld [vmem:[#allocation3 + $0x48] sm:$0xff]
      %v7578 = vld [vmem:[#allocation3 + $0x50] sm:$0xff]
      %v7579 = vld [vmem:[#allocation3 + $0x58] sm:$0xff]
      %v7580 = vld [vmem:[#allocation3 + $0x60] sm:$0xff]
      %v7581 = vld [vmem:[#allocation3 + $0x68] sm:$0xff]
      %v7582 = vld [vmem:[#allocation3 + $0x70] sm:$0xff]
      %v7583 = vld [vmem:[#allocation3 + $0x78] sm:$0xff]
      %v7584 = vld [vmem:[#allocation3 + $0x80] sm:$0xff]
      %v7585 = vld [vmem:[#allocation3 + $0x88] sm:$0xff]
      %v7586 = vld [vmem:[#allocation3 + $0x90] sm:$0xff]
      %v7587 = vld [vmem:[#allocation3 + $0x98] sm:$0xff]
      %v7588 = vld [vmem:[#allocation3 + $0xa0] sm:$0xff]
      %v7589 = vld [vmem:[#allocation3 + $0xa8] sm:$0xff]
      %v7590 = vld [vmem:[#allocation3 + $0xb0] sm:$0xff]
      %v7591 = vld [vmem:[#allocation3 + $0xb8] sm:$0xff]
      %v7592 = vld [vmem:[#allocation3 + $0xc0] sm:$0xff]
      %v7593 = vld [vmem:[#allocation3 + $0xc8] sm:$0xff]
      %v7594 = vld [vmem:[#allocation3 + $0xd0] sm:$0xff]
      %v7595 = vld [vmem:[#allocation3 + $0xd8] sm:$0xff]
      %v7596 = vld [vmem:[#allocation3 + $0xe0] sm:$0xff]
      %v7597 = vld [vmem:[#allocation3 + $0xe8] sm:$0xff]
      %v7598 = vld [vmem:[#allocation3 + $0xf0] sm:$0xff]
      %v7599 = vld [vmem:[#allocation3 + $0xf8] sm:$0xff]
      %v7600 = vld [vmem:[#allocation3 + $0x100] sm:$0xff]
      %v7601 = vld [vmem:[#allocation3 + $0x108] sm:$0xff]
      %v7602 = vld [vmem:[#allocation3 + $0x110] sm:$0xff]
      %v7603 = vld [vmem:[#allocation3 + $0x118] sm:$0x3f]
      %s7604 = scalar_lea.vmem %s2, 16
      %v7605 = vld [vmem:[%s7604] sm:$0x3]
      %v7607 = vsel %vm226, %v7550, 0
      %v7610 = vsel %vm226, %v7551, 0
      %v7613 = vsel %vm226, %v7552, 0
      %v7616 = vsel %vm226, %v7553, 0
      %v7619 = vsel %vm226, %v7554, 0
      %v7622 = vsel %vm226, %v7555, 0
      %v7625 = vsel %vm226, %v7556, 0
      %v7628 = vsel %vm226, %v7557, 0
      %v7631 = vsel %vm226, %v7558, 0
      %v7634 = vsel %vm226, %v7559, 0
      %v7637 = vsel %vm226, %v7560, 0
      %v7640 = vsel %vm226, %v7561, 0
      %v7643 = vsel %vm226, %v7562, 0
      %v7646 = vsel %vm226, %v7563, 0
      %v7649 = vsel %vm226, %v7564, 0
      %v7652 = vsel %vm226, %v7565, 0
      %v7655 = vsel %vm226, %v7566, 0
      %v7658 = vsel %vm226, %v7567, 0
      %v7661 = vsel %vm416, %v7605, 0
      %7663 = vmatprep.subr.bf16.mxu0 0
      %7664 = vmatpush1.bf16.msra.mxu0 %v7661
      %7665 = vmatprep.subr.bf16.mxu0 0
      %7666 = vmatpush1.bf16.msra.mxu0 0
      %7667 = vmatprep.subr.bf16.mxu0 0
      %7668 = vmatpush1.bf16.msra.mxu0 0
      %7669 = vmatprep.subr.bf16.mxu0 0
      %7670 = vmatpush1.bf16.msra.mxu0 0
      %7671 = vmatprep.subr.bf16.mxu0 0
      %7672 = vmatpush1.bf16.msra.mxu0 0
      %7673 = vmatprep.subr.bf16.mxu0 0
      %7674 = vmatpush1.bf16.msra.mxu0 0
      %7675 = vmatprep.subr.bf16.mxu0 0
      %7676 = vmatpush1.bf16.msra.mxu0 0
      %7677 = vmatprep.subr.bf16.mxu0 0
      %7678 = vmatpush1.bf16.msra.mxu0 0
      %7679 = vmatprep.subr.bf16.mxu0 0
      %7680 = vmatpush1.bf16.msra.mxu0 0
      %7681 = vmatprep.subr.bf16.mxu0 0
      %7682 = vmatpush1.bf16.msra.mxu0 0
      %7683 = vmatprep.subr.bf16.mxu0 0
      %7684 = vmatpush1.bf16.msra.mxu0 0
      %7685 = vmatprep.subr.bf16.mxu0 0
      %7686 = vmatpush1.bf16.msra.mxu0 0
      %7687 = vmatprep.subr.bf16.mxu0 0
      %7688 = vmatpush1.bf16.msra.mxu0 0
      %7689 = vmatprep.subr.bf16.mxu0 0
      %7690 = vmatpush1.bf16.msra.mxu0 0
      %7691 = vmatprep.subr.bf16.mxu0 0
      %7692 = vmatpush1.bf16.msra.mxu0 0
      %7693 = vmatprep.subr.bf16.mxu0 0
      %7694 = vmatpush1.bf16.msra.mxu0 0
      %7695 = vmatprep.mubr.bf16.mxu0 0
      %7696 = vmatmul.mubr.bf16.gmra.mrb[0].mxu0 %v7607
      %v7697 = vpop.f32.mrb[0].mxu0
      %v7698 = vadd.f32 0.0, %v7697
      %v7699 = vpop.f32.mrb[0].mxu0
      %v7700 = vpop.f32.mrb[0].mxu0
      %v7701 = vadd.f32 0.0, %v7700
      %v7702 = vpop.f32.mrb[0].mxu0
      %7703 = vmatprep.mubr.bf16.mxu0 0
      %7704 = vmatmul.mubr.bf16.gmra.mrb[0].mxu0 %v7610
      %v7705 = vpop.f32.mrb[0].mxu0
      %v7706 = vadd.f32 0.0, %v7705
      %v7707 = vpop.f32.mrb[0].mxu0
      %v7708 = vpop.f32.mrb[0].mxu0
      %v7709 = vadd.f32 0.0, %v7708
      %v7710 = vpop.f32.mrb[0].mxu0
      %7711 = vmatprep.mubr.bf16.mxu0 0
      %7712 = vmatmul.mubr.bf16.gmra.mrb[0].mxu0 %v7613
      %v7713 = vpop.f32.mrb[0].mxu0
      %v7714 = vadd.f32 0.0, %v7713
      %v7715 = vpop.f32.mrb[0].mxu0
      %v7716 = vpop.f32.mrb[0].mxu0
      %v7717 = vadd.f32 0.0, %v7716
      %v7718 = vpop.f32.mrb[0].mxu0
      %7719 = vmatprep.mubr.bf16.mxu0 0
      %7720 = vmatmul.mubr.bf16.gmra.mrb[0].mxu0 %v7616
      %v7721 = vpop.f32.mrb[0].mxu0
      %v7722 = vadd.f32 0.0, %v7721
      %v7723 = vpop.f32.mrb[0].mxu0
      %v7724 = vpop.f32.mrb[0].mxu0
      %v7725 = vadd.f32 0.0, %v7724
      %v7726 = vpop.f32.mrb[0].mxu0
      %7727 = vmatprep.mubr.bf16.mxu0 0
      %7728 = vmatmul.mubr.bf16.gmra.mrb[0].mxu0 %v7619
      %v7729 = vpop.f32.mrb[0].mxu0
      %v7730 = vadd.f32 0.0, %v7729
      %v7731 = vpop.f32.mrb[0].mxu0
      %v7732 = vpop.f32.mrb[0].mxu0
      %v7733 = vadd.f32 0.0, %v7732
      %v7734 = vpop.f32.mrb[0].mxu0
      %7735 = vmatprep.mubr.bf16.mxu0 0
      %7736 = vmatmul.mubr.bf16.gmra.mrb[0].mxu0 %v7622
      %v7737 = vpop.f32.mrb[0].mxu0
      %v7738 = vadd.f32 0.0, %v7737
      %v7739 = vpop.f32.mrb[0].mxu0
      %v7740 = vpop.f32.mrb[0].mxu0
      %v7741 = vadd.f32 0.0, %v7740
      %v7742 = vpop.f32.mrb[0].mxu0
      %7743 = vmatprep.mubr.bf16.mxu0 0
      %7744 = vmatmul.mubr.bf16.gmra.mrb[0].mxu0 %v7625
      %v7745 = vpop.f32.mrb[0].mxu0
      %v7746 = vadd.f32 0.0, %v7745
      %v7747 = vpop.f32.mrb[0].mxu0
      %v7748 = vpop.f32.mrb[0].mxu0
      %v7749 = vadd.f32 0.0, %v7748
      %v7750 = vpop.f32.mrb[0].mxu0
      %7751 = vmatprep.mubr.bf16.mxu0 0
      %7752 = vmatmul.mubr.bf16.gmra.mrb[0].mxu0 %v7628
      %v7753 = vpop.f32.mrb[0].mxu0
      %v7754 = vadd.f32 0.0, %v7753
      %v7755 = vpop.f32.mrb[0].mxu0
      %v7756 = vpop.f32.mrb[0].mxu0
      %v7757 = vadd.f32 0.0, %v7756
      %v7758 = vpop.f32.mrb[0].mxu0
      %7759 = vmatprep.mubr.bf16.mxu0 0
      %7760 = vmatmul.mubr.bf16.gmra.mrb[0].mxu0 %v7631
      %v7761 = vpop.f32.mrb[0].mxu0
      %v7762 = vadd.f32 0.0, %v7761
      %v7763 = vpop.f32.mrb[0].mxu0
      %v7764 = vpop.f32.mrb[0].mxu0
      %v7765 = vadd.f32 0.0, %v7764
      %v7766 = vpop.f32.mrb[0].mxu0
      %7767 = vmatprep.mubr.bf16.mxu0 0
      %7768 = vmatmul.mubr.bf16.gmra.mrb[0].mxu0 %v7634
      %v7769 = vpop.f32.mrb[0].mxu0
      %v7770 = vadd.f32 0.0, %v7769
      %v7771 = vpop.f32.mrb[0].mxu0
      %v7772 = vpop.f32.mrb[0].mxu0
      %v7773 = vadd.f32 0.0, %v7772
      %v7774 = vpop.f32.mrb[0].mxu0
      %7775 = vmatprep.mubr.bf16.mxu0 0
      %7776 = vmatmul.mubr.bf16.gmra.mrb[0].mxu0 %v7637
      %v7777 = vpop.f32.mrb[0].mxu0
      %v7778 = vadd.f32 0.0, %v7777
      %v7779 = vpop.f32.mrb[0].mxu0
      %v7780 = vpop.f32.mrb[0].mxu0
      %v7781 = vadd.f32 0.0, %v7780
      %v7782 = vpop.f32.mrb[0].mxu0
      %7783 = vmatprep.mubr.bf16.mxu0 0
      %7784 = vmatmul.mubr.bf16.gmra.mrb[0].mxu0 %v7640
      %v7785 = vpop.f32.mrb[0].mxu0
      %v7786 = vadd.f32 0.0, %v7785
      %v7787 = vpop.f32.mrb[0].mxu0
      %v7788 = vpop.f32.mrb[0].mxu0
      %v7789 = vadd.f32 0.0, %v7788
      %v7790 = vpop.f32.mrb[0].mxu0
      %7791 = vmatprep.mubr.bf16.mxu0 0
      %7792 = vmatmul.mubr.bf16.gmra.mrb[0].mxu0 %v7643
      %v7793 = vpop.f32.mrb[0].mxu0
      %v7794 = vadd.f32 0.0, %v7793
      %v7795 = vpop.f32.mrb[0].mxu0
      %v7796 = vpop.f32.mrb[0].mxu0
      %v7797 = vadd.f32 0.0, %v7796
      %v7798 = vpop.f32.mrb[0].mxu0
      %7799 = vmatprep.mubr.bf16.mxu0 0
      %7800 = vmatmul.mubr.bf16.gmra.mrb[0].mxu0 %v7646
      %v7801 = vpop.f32.mrb[0].mxu0
      %v7802 = vadd.f32 0.0, %v7801
      %v7803 = vpop.f32.mrb[0].mxu0
      %v7804 = vpop.f32.mrb[0].mxu0
      %v7805 = vadd.f32 0.0, %v7804
      %v7806 = vpop.f32.mrb[0].mxu0
      %7807 = vmatprep.mubr.bf16.mxu0 0
      %7808 = vmatmul.mubr.bf16.gmra.mrb[0].mxu0 %v7649
      %v7809 = vpop.f32.mrb[0].mxu0
      %v7810 = vadd.f32 0.0, %v7809
      %v7811 = vpop.f32.mrb[0].mxu0
      %v7812 = vpop.f32.mrb[0].mxu0
      %v7813 = vadd.f32 0.0, %v7812
      %v7814 = vpop.f32.mrb[0].mxu0
      %7815 = vmatprep.mubr.bf16.mxu0 0
      %7816 = vmatmul.mubr.bf16.gmra.mrb[0].mxu0 %v7652
      %v7817 = vpop.f32.mrb[0].mxu0
      %v7818 = vadd.f32 0.0, %v7817
      %v7819 = vpop.f32.mrb[0].mxu0
      %v7820 = vpop.f32.mrb[0].mxu0
      %v7821 = vadd.f32 0.0, %v7820
      %v7822 = vpop.f32.mrb[0].mxu0
      %7823 = vmatprep.mubr.bf16.mxu0 0
      %7824 = vmatmul.mubr.bf16.gmra.mrb[0].mxu0 %v7655
      %v7825 = vpop.f32.mrb[0].mxu0
      %v7826 = vadd.f32 0.0, %v7825
      %v7827 = vpop.f32.mrb[0].mxu0
      %v7828 = vpop.f32.mrb[0].mxu0
      %v7829 = vadd.f32 0.0, %v7828
      %v7830 = vpop.f32.mrb[0].mxu0
      %7831 = vmatprep.mubr.bf16.mxu0 0
      %7832 = vmatmul.mubr.bf16.gmra.mrb[0].mxu0 %v7658
      %v7833 = vpop.f32.mrb[0].mxu0
      %v7834 = vadd.f32 0.0, %v7833
      %v7835 = vpop.f32.mrb[0].mxu0
      %v7836 = vpop.f32.mrb[0].mxu0
      %v7837 = vadd.f32 0.0, %v7836
      %v7838 = vpop.f32.mrb[0].mxu0
      %7839 = vdwg.mxu0
      %v7840 = vadd.f32 %v7568, %v7698
      %v7841 = vadd.f32 %v7569, %v7701
      %v7842 = vadd.f32 %v7570, %v7706
      %v7843 = vadd.f32 %v7571, %v7709
      %v7844 = vadd.f32 %v7572, %v7714
      %v7845 = vadd.f32 %v7573, %v7717
      %v7846 = vadd.f32 %v7574, %v7722
      %v7847 = vadd.f32 %v7575, %v7725
      %v7848 = vadd.f32 %v7576, %v7730
      %v7849 = vadd.f32 %v7577, %v7733
      %v7850 = vadd.f32 %v7578, %v7738
      %v7851 = vadd.f32 %v7579, %v7741
      %v7852 = vadd.f32 %v7580, %v7746
      %v7853 = vadd.f32 %v7581, %v7749
      %v7854 = vadd.f32 %v7582, %v7754
      %v7855 = vadd.f32 %v7583, %v7757
      %v7856 = vadd.f32 %v7584, %v7762
      %v7857 = vadd.f32 %v7585, %v7765
      %v7858 = vadd.f32 %v7586, %v7770
      %v7859 = vadd.f32 %v7587, %v7773
      %v7860 = vadd.f32 %v7588, %v7778
      %v7861 = vadd.f32 %v7589, %v7781
      %v7862 = vadd.f32 %v7590, %v7786
      %v7863 = vadd.f32 %v7591, %v7789
      %v7864 = vadd.f32 %v7592, %v7794
      %v7865 = vadd.f32 %v7593, %v7797
      %v7866 = vadd.f32 %v7594, %v7802
      %v7867 = vadd.f32 %v7595, %v7805
      %v7868 = vadd.f32 %v7596, %v7810
      %v7869 = vadd.f32 %v7597, %v7813
      %v7870 = vadd.f32 %v7598, %v7818
      %v7871 = vadd.f32 %v7599, %v7821
      %v7872 = vadd.f32 %v7600, %v7826
      %v7873 = vadd.f32 %v7601, %v7829
      %v7874 = vadd.f32 %v7602, %v7834
      %v7875 = vadd.f32 %v7603, %v7837
      %7876 = vst.msk [vmem:[#allocation3] sm:$0xff] %vm226, %v7840
      %7877 = vst.msk [vmem:[#allocation3 + $0x8] sm:$0xff] %vm226, %v7841
      %7878 = vst.msk [vmem:[#allocation3 + $0x10] sm:$0xff] %vm226, %v7842
      %7879 = vst.msk [vmem:[#allocation3 + $0x18] sm:$0xff] %vm226, %v7843
      %7880 = vst.msk [vmem:[#allocation3 + $0x20] sm:$0xff] %vm226, %v7844
      %7881 = vst.msk [vmem:[#allocation3 + $0x28] sm:$0xff] %vm226, %v7845
      %7882 = vst.msk [vmem:[#allocation3 + $0x30] sm:$0xff] %vm226, %v7846
      %7883 = vst.msk [vmem:[#allocation3 + $0x38] sm:$0xff] %vm226, %v7847
      %7884 = vst.msk [vmem:[#allocation3 + $0x40] sm:$0xff] %vm226, %v7848
      %7885 = vst.msk [vmem:[#allocation3 + $0x48] sm:$0xff] %vm226, %v7849
      %7886 = vst.msk [vmem:[#allocation3 + $0x50] sm:$0xff] %vm226, %v7850
      %7887 = vst.msk [vmem:[#allocation3 + $0x58] sm:$0xff] %vm226, %v7851
      %7888 = vst.msk [vmem:[#allocation3 + $0x60] sm:$0xff] %vm226, %v7852
      %7889 = vst.msk [vmem:[#allocation3 + $0x68] sm:$0xff] %vm226, %v7853
      %7890 = vst.msk [vmem:[#allocation3 + $0x70] sm:$0xff] %vm226, %v7854
      %7891 = vst.msk [vmem:[#allocation3 + $0x78] sm:$0xff] %vm226, %v7855
      %7892 = vst.msk [vmem:[#allocation3 + $0x80] sm:$0xff] %vm226, %v7856
      %7893 = vst.msk [vmem:[#allocation3 + $0x88] sm:$0xff] %vm226, %v7857
      %7894 = vst.msk [vmem:[#allocation3 + $0x90] sm:$0xff] %vm226, %v7858
      %7895 = vst.msk [vmem:[#allocation3 + $0x98] sm:$0xff] %vm226, %v7859
      %7896 = vst.msk [vmem:[#allocation3 + $0xa0] sm:$0xff] %vm226, %v7860
      %7897 = vst.msk [vmem:[#allocation3 + $0xa8] sm:$0xff] %vm226, %v7861
      %7898 = vst.msk [vmem:[#allocation3 + $0xb0] sm:$0xff] %vm226, %v7862
      %7899 = vst.msk [vmem:[#allocation3 + $0xb8] sm:$0xff] %vm226, %v7863
      %7900 = vst.msk [vmem:[#allocation3 + $0xc0] sm:$0xff] %vm226, %v7864
      %7901 = vst.msk [vmem:[#allocation3 + $0xc8] sm:$0xff] %vm226, %v7865
      %7902 = vst.msk [vmem:[#allocation3 + $0xd0] sm:$0xff] %vm226, %v7866
      %7903 = vst.msk [vmem:[#allocation3 + $0xd8] sm:$0xff] %vm226, %v7867
      %7904 = vst.msk [vmem:[#allocation3 + $0xe0] sm:$0xff] %vm226, %v7868
      %7905 = vst.msk [vmem:[#allocation3 + $0xe8] sm:$0xff] %vm226, %v7869
      %7906 = vst.msk [vmem:[#allocation3 + $0xf0] sm:$0xff] %vm226, %v7870
      %7907 = vst.msk [vmem:[#allocation3 + $0xf8] sm:$0xff] %vm226, %v7871
      %7908 = vst.msk [vmem:[#allocation3 + $0x100] sm:$0xff] %vm226, %v7872
      %7909 = vst.msk [vmem:[#allocation3 + $0x108] sm:$0xff] %vm226, %v7873
      %7910 = vst.msk [vmem:[#allocation3 + $0x110] sm:$0xff] %vm226, %v7874
      %7911 = vst.msk [vmem:[#allocation3 + $0x118] sm:$0x3f] %vm269, %v7875
      %v7912 = vld [vmem:[#allocation3] sm:$0xff]
      %v7913 = vld [vmem:[#allocation3 + $0x8] sm:$0xff]
      %v7914 = vld [vmem:[#allocation3 + $0x10] sm:$0xff]
      %v7915 = vld [vmem:[#allocation3 + $0x18] sm:$0xff]
      %v7916 = vld [vmem:[#allocation3 + $0x20] sm:$0xff]
      %v7917 = vld [vmem:[#allocation3 + $0x28] sm:$0xff]
      %v7918 = vld [vmem:[#allocation3 + $0x30] sm:$0xff]
      %v7919 = vld [vmem:[#allocation3 + $0x38] sm:$0xff]
      %v7920 = vld [vmem:[#allocation3 + $0x40] sm:$0xff]
      %v7921 = vld [vmem:[#allocation3 + $0x48] sm:$0xff]
      %v7922 = vld [vmem:[#allocation3 + $0x50] sm:$0xff]
      %v7923 = vld [vmem:[#allocation3 + $0x58] sm:$0xff]
      %v7924 = vld [vmem:[#allocation3 + $0x60] sm:$0xff]
      %v7925 = vld [vmem:[#allocation3 + $0x68] sm:$0xff]
      %v7926 = vld [vmem:[#allocation3 + $0x70] sm:$0xff]
      %v7927 = vld [vmem:[#allocation3 + $0x78] sm:$0xff]
      %v7928 = vld [vmem:[#allocation3 + $0x80] sm:$0xff]
      %v7929 = vld [vmem:[#allocation3 + $0x88] sm:$0xff]
      %v7930 = vld [vmem:[#allocation3 + $0x90] sm:$0xff]
      %v7931 = vld [vmem:[#allocation3 + $0x98] sm:$0xff]
      %v7932 = vld [vmem:[#allocation3 + $0xa0] sm:$0xff]
      %v7933 = vld [vmem:[#allocation3 + $0xa8] sm:$0xff]
      %v7934 = vld [vmem:[#allocation3 + $0xb0] sm:$0xff]
      %v7935 = vld [vmem:[#allocation3 + $0xb8] sm:$0xff]
      %v7936 = vld [vmem:[#allocation3 + $0xc0] sm:$0xff]
      %v7937 = vld [vmem:[#allocation3 + $0xc8] sm:$0xff]
      %v7938 = vld [vmem:[#allocation3 + $0xd0] sm:$0xff]
      %v7939 = vld [vmem:[#allocation3 + $0xd8] sm:$0xff]
      %v7940 = vld [vmem:[#allocation3 + $0xe0] sm:$0xff]
      %v7941 = vld [vmem:[#allocation3 + $0xe8] sm:$0xff]
      %v7942 = vld [vmem:[#allocation3 + $0xf0] sm:$0xff]
      %v7943 = vld [vmem:[#allocation3 + $0xf8] sm:$0xff]
      %v7944 = vld [vmem:[#allocation3 + $0x100] sm:$0xff]
      %v7945 = vld [vmem:[#allocation3 + $0x108] sm:$0xff]
      %v7946 = vld [vmem:[#allocation3 + $0x110] sm:$0xff]
      %v7947 = vld [vmem:[#allocation3 + $0x118] sm:$0x3f]
      %v7948 = vld [vmem:[%s3 + $0x2] sm:$0x1]
      %v7949 = vlaneseq
      %v7950 = vshrl.u32 %v7949, 7
      %v7951 = vsub.s32 0, %v7950
      %v7952 = vrot.slane %v7948, %v7951
      %v7953 = vmul.f32 %v7912, %v7952
      %v7954 = vmul.f32 %v7913, %v7952
      %v7955 = vmul.f32 %v7914, %v7952
      %v7956 = vmul.f32 %v7915, %v7952
      %v7957 = vmul.f32 %v7916, %v7952
      %v7958 = vmul.f32 %v7917, %v7952
      %v7959 = vmul.f32 %v7918, %v7952
      %v7960 = vmul.f32 %v7919, %v7952
      %v7961 = vmul.f32 %v7920, %v7952
      %v7962 = vmul.f32 %v7921, %v7952
      %v7963 = vmul.f32 %v7922, %v7952
      %v7964 = vmul.f32 %v7923, %v7952
      %v7965 = vmul.f32 %v7924, %v7952
      %v7966 = vmul.f32 %v7925, %v7952
      %v7967 = vmul.f32 %v7926, %v7952
      %v7968 = vmul.f32 %v7927, %v7952
      %v7969 = vmul.f32 %v7928, %v7952
      %v7970 = vmul.f32 %v7929, %v7952
      %v7971 = vmul.f32 %v7930, %v7952
      %v7972 = vmul.f32 %v7931, %v7952
      %v7973 = vmul.f32 %v7932, %v7952
      %v7974 = vmul.f32 %v7933, %v7952
      %v7975 = vmul.f32 %v7934, %v7952
      %v7976 = vmul.f32 %v7935, %v7952
      %v7977 = vmul.f32 %v7936, %v7952
      %v7978 = vmul.f32 %v7937, %v7952
      %v7979 = vmul.f32 %v7938, %v7952
      %v7980 = vmul.f32 %v7939, %v7952
      %v7981 = vmul.f32 %v7940, %v7952
      %v7982 = vmul.f32 %v7941, %v7952
      %v7983 = vmul.f32 %v7942, %v7952
      %v7984 = vmul.f32 %v7943, %v7952
      %v7985 = vmul.f32 %v7944, %v7952
      %v7986 = vmul.f32 %v7945, %v7952
      %v7987 = vmul.f32 %v7946, %v7952
      %v7988 = vmul.f32 %v7947, %v7952
      %v7989 = vld [vmem:[%s3 + $0x3] sm:$0x1]
      %v7990 = vlaneseq
      %v7991 = vshrl.u32 %v7990, 7
      %v7992 = vsub.s32 0, %v7991
      %v7993 = vrot.slane %v7989, %v7992
      %v7994 = vadd.f32 %v7953, %v7993
      %v7995 = vadd.f32 %v7954, %v7993
      %v7996 = vadd.f32 %v7955, %v7993
      %v7997 = vadd.f32 %v7956, %v7993
      %v7998 = vadd.f32 %v7957, %v7993
      %v7999 = vadd.f32 %v7958, %v7993
      %v8000 = vadd.f32 %v7959, %v7993
      %v8001 = vadd.f32 %v7960, %v7993
      %v8002 = vadd.f32 %v7961, %v7993
      %v8003 = vadd.f32 %v7962, %v7993
      %v8004 = vadd.f32 %v7963, %v7993
      %v8005 = vadd.f32 %v7964, %v7993
      %v8006 = vadd.f32 %v7965, %v7993
      %v8007 = vadd.f32 %v7966, %v7993
      %v8008 = vadd.f32 %v7967, %v7993
      %v8009 = vadd.f32 %v7968, %v7993
      %v8010 = vadd.f32 %v7969, %v7993
      %v8011 = vadd.f32 %v7970, %v7993
      %v8012 = vadd.f32 %v7971, %v7993
      %v8013 = vadd.f32 %v7972, %v7993
      %v8014 = vadd.f32 %v7973, %v7993
      %v8015 = vadd.f32 %v7974, %v7993
      %v8016 = vadd.f32 %v7975, %v7993
      %v8017 = vadd.f32 %v7976, %v7993
      %v8018 = vadd.f32 %v7977, %v7993
      %v8019 = vadd.f32 %v7978, %v7993
      %v8020 = vadd.f32 %v7979, %v7993
      %v8021 = vadd.f32 %v7980, %v7993
      %v8022 = vadd.f32 %v7981, %v7993
      %v8023 = vadd.f32 %v7982, %v7993
      %v8024 = vadd.f32 %v7983, %v7993
      %v8025 = vadd.f32 %v7984, %v7993
      %v8026 = vadd.f32 %v7985, %v7993
      %v8027 = vadd.f32 %v7986, %v7993
      %v8028 = vadd.f32 %v7987, %v7993
      %v8029 = vadd.f32 %v7988, %v7993
      %v8030 = vld [vmem:[%s219 + $0x13] sm:$0xff]
      %v8031 = vld [vmem:[%s219 + $0x1b] sm:$0xff]
      %v8032 = vld [vmem:[%s219 + $0x23] sm:$0xff]
      %v8033 = vld [vmem:[%s219 + $0x2b] sm:$0xff]
      %v8034 = vld [vmem:[%s219 + $0x33] sm:$0xff]
      %v8035 = vld [vmem:[%s219 + $0x3b] sm:$0xff]
      %v8036 = vld [vmem:[%s219 + $0x43] sm:$0xff]
      %v8037 = vld [vmem:[%s219 + $0x4b] sm:$0xff]
      %v8038 = vld [vmem:[%s219 + $0x53] sm:$0xff]
      %v8039 = vld [vmem:[%s219 + $0x5b] sm:$0xff]
      %v8040 = vld [vmem:[%s219 + $0x63] sm:$0xff]
      %v8041 = vld [vmem:[%s219 + $0x6b] sm:$0xff]
      %v8042 = vld [vmem:[%s219 + $0x73] sm:$0xff]
      %v8043 = vld [vmem:[%s219 + $0x7b] sm:$0xff]
      %v8044 = vld [vmem:[%s219 + $0x83] sm:$0xff]
      %v8045 = vld [vmem:[%s219 + $0x8b] sm:$0xff]
      %v8046 = vld [vmem:[%s219 + $0x93] sm:$0xff]
      %v8047 = vld [vmem:[%s219 + $0x9b] sm:$0xff]
      %v8048 = vld [vmem:[%s219 + $0xa3] sm:$0xff]
      %v8049 = vld [vmem:[%s219 + $0xab] sm:$0xff]
      %v8050 = vld [vmem:[%s219 + $0xb3] sm:$0xff]
      %v8051 = vld [vmem:[%s219 + $0xbb] sm:$0xff]
      %v8052 = vld [vmem:[%s219 + $0xc3] sm:$0xff]
      %v8053 = vld [vmem:[%s219 + $0xcb] sm:$0xff]
      %v8054 = vld [vmem:[%s219 + $0xd3] sm:$0xff]
      %v8055 = vld [vmem:[%s219 + $0xdb] sm:$0xff]
      %v8056 = vld [vmem:[%s219 + $0xe3] sm:$0xff]
      %v8057 = vld [vmem:[%s219 + $0xeb] sm:$0xff]
      %v8058 = vld [vmem:[%s219 + $0xf3] sm:$0xff]
      %v8059 = vld [vmem:[%s219 + $0xfb] sm:$0xff]
      %v8060 = vld [vmem:[%s219 + $0x103] sm:$0xff]
      %v8061 = vld [vmem:[%s219 + $0x10b] sm:$0xff]
      %v8062 = vld [vmem:[%s219 + $0x113] sm:$0xff]
      %v8063 = vld [vmem:[%s219 + $0x11b] sm:$0xff]
      %v8064 = vld [vmem:[%s219 + $0x123] sm:$0xff]
      %v8065 = vld [vmem:[%s219 + $0x12b] sm:$0x3f]
      %v8066 = vadd.f32 %v7994, %v8030
      %v8067 = vadd.f32 %v7995, %v8031
      %v8068 = vadd.f32 %v7996, %v8032
      %v8069 = vadd.f32 %v7997, %v8033
      %v8070 = vadd.f32 %v7998, %v8034
      %v8071 = vadd.f32 %v7999, %v8035
      %v8072 = vadd.f32 %v8000, %v8036
      %v8073 = vadd.f32 %v8001, %v8037
      %v8074 = vadd.f32 %v8002, %v8038
      %v8075 = vadd.f32 %v8003, %v8039
      %v8076 = vadd.f32 %v8004, %v8040
      %v8077 = vadd.f32 %v8005, %v8041
      %v8078 = vadd.f32 %v8006, %v8042
      %v8079 = vadd.f32 %v8007, %v8043
      %v8080 = vadd.f32 %v8008, %v8044
      %v8081 = vadd.f32 %v8009, %v8045
      %v8082 = vadd.f32 %v8010, %v8046
      %v8083 = vadd.f32 %v8011, %v8047
      %v8084 = vadd.f32 %v8012, %v8048
      %v8085 = vadd.f32 %v8013, %v8049
      %v8086 = vadd.f32 %v8014, %v8050
      %v8087 = vadd.f32 %v8015, %v8051
      %v8088 = vadd.f32 %v8016, %v8052
      %v8089 = vadd.f32 %v8017, %v8053
      %v8090 = vadd.f32 %v8018, %v8054
      %v8091 = vadd.f32 %v8019, %v8055
      %v8092 = vadd.f32 %v8020, %v8056
      %v8093 = vadd.f32 %v8021, %v8057
      %v8094 = vadd.f32 %v8022, %v8058
      %v8095 = vadd.f32 %v8023, %v8059
      %v8096 = vadd.f32 %v8024, %v8060
      %v8097 = vadd.f32 %v8025, %v8061
      %v8098 = vadd.f32 %v8026, %v8062
      %v8099 = vadd.f32 %v8027, %v8063
      %v8100 = vadd.f32 %v8028, %v8064
      %v8101 = vadd.f32 %v8029, %v8065
      %v8102 = vmax.f32 %v8066, 0.0
      %v8103 = vmax.f32 %v8067, 0.0
      %v8104 = vmax.f32 %v8068, 0.0
      %v8105 = vmax.f32 %v8069, 0.0
      %v8106 = vmax.f32 %v8070, 0.0
      %v8107 = vmax.f32 %v8071, 0.0
      %v8108 = vmax.f32 %v8072, 0.0
      %v8109 = vmax.f32 %v8073, 0.0
      %v8110 = vmax.f32 %v8074, 0.0
      %v8111 = vmax.f32 %v8075, 0.0
      %v8112 = vmax.f32 %v8076, 0.0
      %v8113 = vmax.f32 %v8077, 0.0
      %v8114 = vmax.f32 %v8078, 0.0
      %v8115 = vmax.f32 %v8079, 0.0
      %v8116 = vmax.f32 %v8080, 0.0
      %v8117 = vmax.f32 %v8081, 0.0
      %v8118 = vmax.f32 %v8082, 0.0
      %v8119 = vmax.f32 %v8083, 0.0
      %v8120 = vmax.f32 %v8084, 0.0
      %v8121 = vmax.f32 %v8085, 0.0
      %v8122 = vmax.f32 %v8086, 0.0
      %v8123 = vmax.f32 %v8087, 0.0
      %v8124 = vmax.f32 %v8088, 0.0
      %v8125 = vmax.f32 %v8089, 0.0
      %v8126 = vmax.f32 %v8090, 0.0
      %v8127 = vmax.f32 %v8091, 0.0
      %v8128 = vmax.f32 %v8092, 0.0
      %v8129 = vmax.f32 %v8093, 0.0
      %v8130 = vmax.f32 %v8094, 0.0
      %v8131 = vmax.f32 %v8095, 0.0
      %v8132 = vmax.f32 %v8096, 0.0
      %v8133 = vmax.f32 %v8097, 0.0
      %v8134 = vmax.f32 %v8098, 0.0
      %v8135 = vmax.f32 %v8099, 0.0
      %v8136 = vmax.f32 %v8100, 0.0
      %v8137 = vmax.f32 %v8101, 0.0
      %8138 = vst.msk [vmem:[%s224 + $0x13] sm:$0xff] %vm226, %v8102
      %8139 = vst.msk [vmem:[%s224 + $0x1b] sm:$0xff] %vm226, %v8103
      %8140 = vst.msk [vmem:[%s224 + $0x23] sm:$0xff] %vm226, %v8104
      %8141 = vst.msk [vmem:[%s224 + $0x2b] sm:$0xff] %vm226, %v8105
      %8142 = vst.msk [vmem:[%s224 + $0x33] sm:$0xff] %vm226, %v8106
      %8143 = vst.msk [vmem:[%s224 + $0x3b] sm:$0xff] %vm226, %v8107
      %8144 = vst.msk [vmem:[%s224 + $0x43] sm:$0xff] %vm226, %v8108
      %8145 = vst.msk [vmem:[%s224 + $0x4b] sm:$0xff] %vm226, %v8109
      %8146 = vst.msk [vmem:[%s224 + $0x53] sm:$0xff] %vm226, %v8110
      %8147 = vst.msk [vmem:[%s224 + $0x5b] sm:$0xff] %vm226, %v8111
      %8148 = vst.msk [vmem:[%s224 + $0x63] sm:$0xff] %vm226, %v8112
      %8149 = vst.msk [vmem:[%s224 + $0x6b] sm:$0xff] %vm226, %v8113
      %8150 = vst.msk [vmem:[%s224 + $0x73] sm:$0xff] %vm226, %v8114
      %8151 = vst.msk [vmem:[%s224 + $0x7b] sm:$0xff] %vm226, %v8115
      %8152 = vst.msk [vmem:[%s224 + $0x83] sm:$0xff] %vm226, %v8116
      %8153 = vst.msk [vmem:[%s224 + $0x8b] sm:$0xff] %vm226, %v8117
      %8154 = vst.msk [vmem:[%s224 + $0x93] sm:$0xff] %vm226, %v8118
      %8155 = vst.msk [vmem:[%s224 + $0x9b] sm:$0xff] %vm226, %v8119
      %8156 = vst.msk [vmem:[%s224 + $0xa3] sm:$0xff] %vm226, %v8120
      %8157 = vst.msk [vmem:[%s224 + $0xab] sm:$0xff] %vm226, %v8121
      %8158 = vst.msk [vmem:[%s224 + $0xb3] sm:$0xff] %vm226, %v8122
      %8159 = vst.msk [vmem:[%s224 + $0xbb] sm:$0xff] %vm226, %v8123
      %8160 = vst.msk [vmem:[%s224 + $0xc3] sm:$0xff] %vm226, %v8124
      %8161 = vst.msk [vmem:[%s224 + $0xcb] sm:$0xff] %vm226, %v8125
      %8162 = vst.msk [vmem:[%s224 + $0xd3] sm:$0xff] %vm226, %v8126
      %8163 = vst.msk [vmem:[%s224 + $0xdb] sm:$0xff] %vm226, %v8127
      %8164 = vst.msk [vmem:[%s224 + $0xe3] sm:$0xff] %vm226, %v8128
      %8165 = vst.msk [vmem:[%s224 + $0xeb] sm:$0xff] %vm226, %v8129
      %8166 = vst.msk [vmem:[%s224 + $0xf3] sm:$0xff] %vm226, %v8130
      %8167 = vst.msk [vmem:[%s224 + $0xfb] sm:$0xff] %vm226, %v8131
      %8168 = vst.msk [vmem:[%s224 + $0x103] sm:$0xff] %vm226, %v8132
      %8169 = vst.msk [vmem:[%s224 + $0x10b] sm:$0xff] %vm226, %v8133
      %8170 = vst.msk [vmem:[%s224 + $0x113] sm:$0xff] %vm226, %v8134
      %8171 = vst.msk [vmem:[%s224 + $0x11b] sm:$0xff] %vm226, %v8135
      %8172 = vst.msk [vmem:[%s224 + $0x123] sm:$0xff] %vm226, %v8136
      %8173 = vst.msk [vmem:[%s224 + $0x12b] sm:$0x3f] %vm269, %v8137
      %p8174 = scmp.lt.s32.totalorder %s16, 1
      %s8175 = scalar_select %p8174, %s16, 1
      %s8176 = smul.addr %s8175, 41
      %s8177 = smul.addr %s8176, 8
      %s8178 = scalar_lea.vmem %s5, %s8177
      // Predicated region
      $region41: #{tpu_custom_call.1} parent=39 // pred_check
        %p8179 = pneg %p144
      $region42: #{tpu_custom_call.1} parent=39 // pred_check_branch
        %8181 = sbr.rel (%p8179) target = $region44
      $region43: #{tpu_custom_call.1} parent=39 // pred_region
        _
      $region44: #{tpu_custom_call.1} parent=39 // pred_fallthru
        _
    $region40: #{tpu_custom_call.1} parent=5 // pred_fallthru
      _
    %p8182 = scmp.le.s32.totalorder 2, %s11
    // Predicated region
    $region45: #{tpu_custom_call.1} parent=5 // pred_check
      %p8183 = pneg %p8182
    $region46: #{tpu_custom_call.1} parent=5 // pred_check_branch
      %8185 = sbr.rel (%p8183) target = $region48
    $region47: #{tpu_custom_call.1} parent=5 // pred_region
      %s8186 = ssub.s32 %s11, 2
      // Predicated region
      $region49: #{tpu_custom_call.1} parent=47 // pred_check
        %p8187 = pneg %p150
      $region50: #{tpu_custom_call.1} parent=47 // pred_check_branch
        %8189 = sbr.rel (%p8187) target = $region52
      $region51: #{tpu_custom_call.1} parent=47 // pred_region
        %p8190 = scmp.lt.s32.totalorder %s17, 1
        %s8191 = scalar_select %p8190, %s17, 1
        %s8192 = smul.addr %s8191, 41
        %s8193 = smul.addr %s8192, 8
        %s8194 = scalar_lea.vmem %s5, %s8193
      $region52: #{tpu_custom_call.1} parent=47 // pred_fallthru
        _
    $region48: #{tpu_custom_call.1} parent=5 // pred_fallthru
      _
  $region6: #{tpu_custom_call.1} parent=0 // loop_footer
    %s15 = sadd.s32 1, %s11
  $region7: #{tpu_custom_call.1} parent=0 // loop_footer_branch
    %10 = sbr.rel target = $region3
  $region8: #{tpu_custom_call.1} parent=0 // loop_exit
    _

</llo_original>
